<compile_context>
chip_gen: v7x
topology: tpu7x:2x2x1
jax: 0.10.0
libtpu: 0.0.40
codegen_flags: <defaults>
</compile_context>

<pallas_src>
import functools
import math

import jax
import jax.numpy as jnp
from jax import lax
from jax.experimental import pallas as pl
from jax.experimental.pallas import tpu as pltpu

BAND_NHEAD = 8
TIME_NHEAD = 4
TIME_NUM_LAYERS = 4          # hard-coded in SpectralTemporalTransformer.__init__
BAND_DIM_FF = 512
TIME_DIM_FF = 256

WEIGHT_DTYPE = jnp.bfloat16  # MXU operand dtype; accumulation stays f32.


# ----------------------------------------------------------------------------
# Helpers usable inside kernels
# ----------------------------------------------------------------------------
def _mm_t(a, b):
    """a @ b.T (contract last dims), bf16 MXU operands, f32 accumulation."""
    return lax.dot_general(
        a.astype(WEIGHT_DTYPE), b.astype(WEIGHT_DTYPE),
        (((1,), (1,)), ((), ())),
        preferred_element_type=jnp.float32)


def _layernorm(x, w, b, eps=1e-5):
    mu = jnp.mean(x, axis=-1, keepdims=True)
    xc = x - mu
    var = jnp.mean(xc * xc, axis=-1, keepdims=True)
    return xc * lax.rsqrt(var + eps) * w + b


def _softmax_last_approx(s):
    # approx reciprocal -> ~1e-3 relative error; fine at inference (documented
    # tolerance vs the PyTorch reference).
    s = s - jnp.max(s, axis=-1, keepdims=True)
    p = jnp.exp(s)
    return p * pl.reciprocal(jnp.sum(p, axis=-1, keepdims=True), approx=True)


def _softmax_last_exact(s):
    s = s - jnp.max(s, axis=-1, keepdims=True)
    p = jnp.exp(s)
    return p / jnp.sum(p, axis=-1, keepdims=True)


# ----------------------------------------------------------------------------
# Fused single-modality kernel, gridded over encoder layers:
#   l==0 : embedding + positional encoding      -> VMEM scratch h
#   all l: encoder layer l (post-norm, relu)    -> h
#   l==L-1: attention pooling + out_proj (+ optional concat fusion) -> output
# ----------------------------------------------------------------------------
def _modality_kernel(*refs, nhead, num_layers, fuse):
    (x_ref, emb_wT_ref, hpos_ref,
     wqkv_ref, bqkv_ref, wo_ref, bo_ref,
     ln1w_ref, ln1b_ref, wff1_ref, bff1_ref,
     wff2_ref, bff2_ref, ln2w_ref, ln2b_ref,
     qw_ref, qb_ref, outw_ref, outb_ref) = refs[:19]
    if fuse:
        bandf_ref, fwb_ref, fwt_ref, fb_ref = refs[19:23]
    o_ref, h_ref = refs[-2], refs[-1]

    B, S, In = x_ref.shape
    D = hpos_ref.shape[-1]
    hd = D // nhead
    M = B * S
    scale = 1.0 / math.sqrt(hd)
    l = pl.program_id(0)

    # ---- first grid step: embedding + (pre-folded) bias+pos ----------------
    @pl.when(l == 0)
    def _():
        x2d = x_ref[...].reshape(M, In).astype(jnp.float32)
        wt = emb_wT_ref[...]                         # (In, D) f32
        h0 = jnp.tile(hpos_ref[...], (B, 1))         # (M, D): emb_b + pos
        for kk in range(In):                         # static, In <= 4 -> VPU FMAs
            h0 = h0 + x2d[:, kk:kk + 1] * wt[kk:kk + 1, :]
        h_ref[...] = h0

    # ---- encoder layer l (only this layer's weights are VMEM-resident) -----
    h = h_ref[...]                                   # (M, D) f32
    h_bf = h.astype(WEIGHT_DTYPE)                    # single cast, reused below

    # QKV projection computed output-transposed: (3D, M).  With the feature
    # dim on the sublane axis the per-head split is a free leading-dim
    # reshape (no sub-128-lane slicing, no head concatenate).
    qkv_t = _mm_t(wqkv_ref[0], h_bf) + bqkv_ref[0]   # (3D, M) f32
    qkv_bf = qkv_t.astype(WEIGHT_DTYPE)

    def _to_heads(x_t):                              # (D, M) -> (nhead*B, S, hd)
        xh = x_t.reshape(nhead, hd, M)               # free leading split
        xh = jnp.swapaxes(xh, 1, 2)                  # batched minor-two transpose
        return xh.reshape(nhead * B, S, hd)          # free re-chunk (M = B*S)

    qg = _to_heads(qkv_bf[:D])
    kg = _to_heads(qkv_bf[D:2 * D])
    vg = _to_heads(qkv_bf[2 * D:])

    # One batched einsum per matmul per layer (batch = nhead*B).
    s = jnp.einsum('gqd,gkd->gqk', qg, kg,
                   preferred_element_type=jnp.float32) * scale
    p = _softmax_last_approx(s)
    og = jnp.einsum('gqk,gkd->gqd', p.astype(WEIGHT_DTYPE), vg,
                    preferred_element_type=jnp.float32)      # (nhead*B, S, hd)

    attn_t = jnp.swapaxes(og.reshape(nhead, M, hd), 1, 2).reshape(D, M)
    out_t = jnp.dot(wo_ref[0], attn_t.astype(WEIGHT_DTYPE),
                    preferred_element_type=jnp.float32) + bo_ref[0]   # (D, M)
    attn = out_t.T                                                     # (M, D)

    h = _layernorm(h + attn, ln1w_ref[0], ln1b_ref[0])
    ff = jnp.maximum(_mm_t(h, wff1_ref[0]) + bff1_ref[0], 0.0)
    ff = _mm_t(ff, wff2_ref[0]) + bff2_ref[0]
    h = _layernorm(h + ff, ln2w_ref[0], ln2b_ref[0])
    h_ref[...] = h

    # ---- last grid step: attention pooling + out_proj (+ concat fusion) ----
    @pl.when(l == num_layers - 1)
    def _():
        h3 = h.reshape(B, S, D)
        sc = jnp.sum(h3 * qw_ref[...], axis=-1) + qb_ref[...]   # (B, S)
        w = _softmax_last_exact(sc)
        pooled = jnp.sum(w[:, :, None] * h3, axis=1)             # (B, D)
        y = _mm_t(pooled, outw_ref[...]) + outb_ref[...]         # (B, D)
        if fuse:
            # concat fusion: cat([band, time]) @ W.T == band @ Wb.T + time @ Wt.T
            y = (_mm_t(bandf_ref[...], fwb_ref[...])
                 + _mm_t(y, fwt_ref[...]) + fb_ref[...])
        o_ref[...] = y.astype(o_ref.dtype)


# ----------------------------------------------------------------------------
# Wrapper: one pallas_call per modality (layer-grid pipelined weights)
# ----------------------------------------------------------------------------
def _const_spec(shape):
    n = len(shape)
    return pl.BlockSpec(tuple(shape), lambda l, _n=n: (0,) * _n)


def _layer_spec(shape):
    n = len(shape) - 1
    return pl.BlockSpec((1,) + tuple(shape[1:]), lambda l, _n=n: (l,) + (0,) * _n)


def modality_forward(x, p, nhead, *, band_feat=None, fuse_w_band=None,
                     fuse_w_time=None, fuse_b=None):
    """Whole SingleModalityTransformer (+ optional concat fusion) in one call."""
    B, S, _ = x.shape
    D = p['pos'].shape[-1]
    L = p['wqkv'].shape[0]
    M = B * S
    fuse = band_feat is not None
    # Fold embedding bias + positional encoding into one (S, D) table.
    hpos = p['pos'][:S] + p['emb_b']

    inputs = [
        (x, False), (p['emb_wT'], False), (hpos, False),
        (p['wqkv'], True), (p['bqkv'], True),
        (p['wo'], True), (p['bo'], True),
        (p['ln1w'], True), (p['ln1b'], True),
        (p['wff1'], True), (p['bff1'], True),
        (p['wff2'], True), (p['bff2'], True),
        (p['ln2w'], True), (p['ln2b'], True),
        (p['qw'], False), (p['qb'], False),
        (p['out_w'], False), (p['out_b'], False),
    ]
    if fuse:
        inputs += [(band_feat, False), (fuse_w_band, False),
                   (fuse_w_time, False), (fuse_b, False)]
    args = [a for a, _ in inputs]
    in_specs = [(_layer_spec(a.shape) if is_layer else _const_spec(a.shape))
                for a, is_layer in inputs]

    kernel = functools.partial(_modality_kernel, nhead=nhead,
                               num_layers=L, fuse=fuse)
    # TODO(synk): on v7x (2 TCs/chip), shard the batch (or the two modalities)
    # across cores via an extra "parallel" grid axis / pl.core_map; the layer
    # axis itself must stay "arbitrary" (sequential dependence through h).
    return pl.pallas_call(
        kernel,
        out_shape=jax.ShapeDtypeStruct((B, D), jnp.float32),
        grid_spec=pltpu.PrefetchScalarGridSpec(
            num_scalar_prefetch=0,
            grid=(L,),
            in_specs=in_specs,
            out_specs=pl.BlockSpec((B, D), lambda l: (0, 0)),
            scratch_shapes=[pltpu.VMEM((M, D), jnp.float32)]),
        compiler_params=pltpu.CompilerParams(
            dimension_semantics=("arbitrary",)),
    )(*args)


# ----------------------------------------------------------------------------
# Parameter init (deterministic, synthetic — not a checkpoint load)
# ----------------------------------------------------------------------------
def _init_linear(key, out_dim, in_dim, scale=0.05, dtype=jnp.float32):
    kw, kb = jax.random.split(key)
    w = (jax.random.normal(kw, (out_dim, in_dim), jnp.float32) * scale).astype(dtype)
    b = jax.random.normal(kb, (1, out_dim), jnp.float32) * scale
    return w, b


def init_single_modality(key, input_dim, latent_dim, num_layers, dim_ff, max_seq_len):
    keys = jax.random.split(key, 4 + num_layers)
    emb_w, emb_b = _init_linear(keys[0], latent_dim, input_dim)
    p = {
        'emb_wT': jnp.transpose(emb_w),          # (In, D), f32 (VPU path)
        'emb_b': emb_b,                          # (1, D)
        'pos': jax.random.normal(keys[1], (max_seq_len, latent_dim), jnp.float32) * 0.02,
    }
    names = ('wqkv', 'bqkv', 'wo', 'bo', 'wff1', 'bff1', 'wff2', 'bff2')
    stacks = {k: [] for k in names}
    for i in range(num_layers):
        lk = jax.random.split(keys[2 + i], 4)
        w, b = _init_linear(lk[0], 3 * latent_dim, latent_dim, dtype=WEIGHT_DTYPE)
        stacks['wqkv'].append(w); stacks['bqkv'].append(jnp.transpose(b))   # (3D, 1)
        w, b = _init_linear(lk[1], latent_dim, latent_dim, dtype=WEIGHT_DTYPE)
        stacks['wo'].append(w); stacks['bo'].append(jnp.transpose(b))       # (D, 1)
        w, b = _init_linear(lk[2], dim_ff, latent_dim, dtype=WEIGHT_DTYPE)
        stacks['wff1'].append(w); stacks['bff1'].append(b)
        w, b = _init_linear(lk[3], latent_dim, dim_ff, dtype=WEIGHT_DTYPE)
        stacks['wff2'].append(w); stacks['bff2'].append(b)
    for k, v in stacks.items():
        p[k] = jnp.stack(v)                      # (L, ...) stacked per-layer weights
    p['ln1w'] = jnp.ones((num_layers, 1, latent_dim), jnp.float32)
    p['ln1b'] = jnp.zeros((num_layers, 1, latent_dim), jnp.float32)
    p['ln2w'] = jnp.ones((num_layers, 1, latent_dim), jnp.float32)
    p['ln2b'] = jnp.zeros((num_layers, 1, latent_dim), jnp.float32)
    p['qw'], p['qb'] = _init_linear(keys[2 + num_layers], 1, latent_dim)
    p['out_w'], p['out_b'] = _init_linear(keys[3 + num_layers], latent_dim, latent_dim,
                                          dtype=WEIGHT_DTYPE)
    return p


def init_spectral_temporal(key, data_dim, latent_dim, num_layers,
                           max_seq_len=20, time_dim=2):
    kb, kt, kf = jax.random.split(key, 3)
    band = init_single_modality(kb, data_dim - 2, latent_dim, num_layers,
                                BAND_DIM_FF, max_seq_len)
    time = init_single_modality(kt, time_dim, latent_dim, TIME_NUM_LAYERS,
                                TIME_DIM_FF, max_seq_len)
    fuse_w, fuse_b = _init_linear(kf, latent_dim, 2 * latent_dim)
    return dict(
        band=band, time=time,
        fuse_w_band=fuse_w[:, :latent_dim].astype(WEIGHT_DTYPE),   # pre-split
        fuse_w_time=fuse_w[:, latent_dim:].astype(WEIGHT_DTYPE),
        fuse_b=fuse_b)


# ----------------------------------------------------------------------------
# Forward pass: band call, then time call with fusion folded in (2 launches)
# ----------------------------------------------------------------------------
def spectral_temporal_forward(x, params):
    band_x = x[..., :-2]
    time_x = x[..., -2:]
    band_feat = modality_forward(band_x, params['band'], BAND_NHEAD)
    # fusion_method == 'concat'; the fuse linear runs inside the time call.
    return modality_forward(time_x, params['time'], TIME_NHEAD,
                            band_feat=band_feat,
                            fuse_w_band=params['fuse_w_band'],
                            fuse_w_time=params['fuse_w_time'],
                            fuse_b=params['fuse_b'])


# ----------------------------------------------------------------------------
if __name__ == "__main__":
    B, S = 2, 8
    data_dim = 6            # band input = data_dim - 2 = 4, time input = 2
    latent_dim = 128
    num_band_layers = 2     # constructor arg (default is 16; kept small here)

    key = jax.random.PRNGKey(0)
    k_params, k_x = jax.random.split(key)
    params = init_spectral_temporal(k_params, data_dim=data_dim,
                                    latent_dim=latent_dim,
                                    num_layers=num_band_layers, max_seq_len=20)
    x = jax.random.normal(k_x, (B, S, data_dim), jnp.float32)

    out = jax.jit(spectral_temporal_forward)(x, params)
    out = jax.block_until_ready(out)

    assert out.shape == (B, latent_dim), out.shape
    assert bool(jnp.all(jnp.isfinite(out)))
    print("KERNEL_OK")
</pallas_src>

<mosaic_0001>
module attributes {stable_mosaic.version = 11 : i64} {
  func.func @_modality_kernel(%arg0: i32, %arg1: memref<2x8x4xf32, #tpu.memory_space<vmem>>, %arg2: memref<4x128xf32, #tpu.memory_space<vmem>>, %arg3: memref<8x128xf32, #tpu.memory_space<vmem>>, %arg4: memref<1x384x128xbf16, #tpu.memory_space<vmem>>, %arg5: memref<1x384x1xf32, #tpu.memory_space<vmem>>, %arg6: memref<1x128x128xbf16, #tpu.memory_space<vmem>>, %arg7: memref<1x128x1xf32, #tpu.memory_space<vmem>>, %arg8: memref<1x1x128xf32, #tpu.memory_space<vmem>>, %arg9: memref<1x1x128xf32, #tpu.memory_space<vmem>>, %arg10: memref<1x512x128xbf16, #tpu.memory_space<vmem>>, %arg11: memref<1x1x512xf32, #tpu.memory_space<vmem>>, %arg12: memref<1x128x512xbf16, #tpu.memory_space<vmem>>, %arg13: memref<1x1x128xf32, #tpu.memory_space<vmem>>, %arg14: memref<1x1x128xf32, #tpu.memory_space<vmem>>, %arg15: memref<1x1x128xf32, #tpu.memory_space<vmem>>, %arg16: memref<1x128xf32, #tpu.memory_space<vmem>>, %arg17: memref<1x1xf32, #tpu.memory_space<vmem>>, %arg18: memref<128x128xbf16, #tpu.memory_space<vmem>>, %arg19: memref<1x128xf32, #tpu.memory_space<vmem>>, %arg20: memref<2x128xf32, #tpu.memory_space<vmem>>, %arg21: memref<16x128xf32, #tpu.memory_space<vmem>>) attributes {dimension_semantics = [#tpu.dimension_semantics<arbitrary>], iteration_bounds = array<i64: 2>, scalar_prefetch = 0 : i64, scratch_operands = 1 : i64, tpu.core_type = #tpu.core_type<tc>, window_params = [{pipeline_mode = #tpu.pipeline_mode<synchronous>, transform_indices = @transform_0, window_bounds = array<i64: 2, 8, 4>}, {pipeline_mode = #tpu.pipeline_mode<synchronous>, transform_indices = @transform_1, window_bounds = array<i64: 4, 128>}, {pipeline_mode = #tpu.pipeline_mode<synchronous>, transform_indices = @transform_2, window_bounds = array<i64: 8, 128>}, {transform_indices = @transform_3, window_bounds = array<i64: 1, 384, 128>}, {transform_indices = @transform_4, window_bounds = array<i64: 1, 384, 1>}, {transform_indices = @transform_5, window_bounds = array<i64: 1, 128, 128>}, {transform_indices = @transform_6, window_bounds = array<i64: 1, 128, 1>}, {transform_indices = @transform_7, window_bounds = array<i64: 1, 1, 128>}, {transform_indices = @transform_8, window_bounds = array<i64: 1, 1, 128>}, {transform_indices = @transform_9, window_bounds = array<i64: 1, 512, 128>}, {transform_indices = @transform_10, window_bounds = array<i64: 1, 1, 512>}, {transform_indices = @transform_11, window_bounds = array<i64: 1, 128, 512>}, {transform_indices = @transform_12, window_bounds = array<i64: 1, 1, 128>}, {transform_indices = @transform_13, window_bounds = array<i64: 1, 1, 128>}, {transform_indices = @transform_14, window_bounds = array<i64: 1, 1, 128>}, {pipeline_mode = #tpu.pipeline_mode<synchronous>, transform_indices = @transform_15, window_bounds = array<i64: 1, 128>}, {pipeline_mode = #tpu.pipeline_mode<synchronous>, transform_indices = @transform_16, window_bounds = array<i64: 1, 1>}, {pipeline_mode = #tpu.pipeline_mode<synchronous>, transform_indices = @transform_17, window_bounds = array<i64: 128, 128>}, {pipeline_mode = #tpu.pipeline_mode<synchronous>, transform_indices = @transform_18, window_bounds = array<i64: 1, 128>}, {pipeline_mode = #tpu.pipeline_mode<synchronous>, transform_indices = @transform_19, window_bounds = array<i64: 2, 128>}]} {
    %c0_i32 = arith.constant 0 : i32
    %0 = arith.cmpi eq, %arg0, %c0_i32 : i32
    %1 = arith.extui %0 : i1 to i32
    %c0_i32_0 = arith.constant 0 : i32
    %2 = arith.cmpi ne, %1, %c0_i32_0 : i32
    scf.if %2 {
      %c0_60 = arith.constant 0 : index
      %c0_61 = arith.constant 0 : index
      %c0_62 = arith.constant 0 : index
      %124 = vector.load %arg1[%c0_60, %c0_61, %c0_62] : memref<2x8x4xf32, #tpu.memory_space<vmem>>, vector<2x8x4xf32>
      %125 = vector.shape_cast %124 : vector<2x8x4xf32> to vector<16x4xf32>
      %c0_63 = arith.constant 0 : index
      %c0_64 = arith.constant 0 : index
      %126 = vector.load %arg2[%c0_63, %c0_64] : memref<4x128xf32, #tpu.memory_space<vmem>>, vector<4x128xf32>
      %c0_65 = arith.constant 0 : index
      %c0_66 = arith.constant 0 : index
      %127 = vector.load %arg3[%c0_65, %c0_66] : memref<8x128xf32, #tpu.memory_space<vmem>>, vector<8x128xf32>
      %128 = tpu.concatenate %127, %127 in 0 : vector<8x128xf32>, vector<8x128xf32> -> vector<16x128xf32>
      %129 = vector.extract_strided_slice %125 {offsets = [0, 0], sizes = [16, 1], strides = [1, 1]} : vector<16x4xf32> to vector<16x1xf32>
      %130 = vector.extract_strided_slice %126 {offsets = [0, 0], sizes = [1, 128], strides = [1, 1]} : vector<4x128xf32> to vector<1x128xf32>
      %131 = vector.broadcast %129 : vector<16x1xf32> to vector<16x128xf32>
      %132 = vector.broadcast %130 : vector<1x128xf32> to vector<16x128xf32>
      %133 = arith.mulf %131, %132 : vector<16x128xf32>
      %134 = arith.addf %128, %133 : vector<16x128xf32>
      %135 = vector.extract_strided_slice %125 {offsets = [0, 1], sizes = [16, 1], strides = [1, 1]} : vector<16x4xf32> to vector<16x1xf32>
      %136 = vector.extract_strided_slice %126 {offsets = [1, 0], sizes = [1, 128], strides = [1, 1]} : vector<4x128xf32> to vector<1x128xf32>
      %137 = vector.broadcast %135 : vector<16x1xf32> to vector<16x128xf32>
      %138 = vector.broadcast %136 : vector<1x128xf32> to vector<16x128xf32>
      %139 = arith.mulf %137, %138 : vector<16x128xf32>
      %140 = arith.addf %134, %139 : vector<16x128xf32>
      %141 = vector.extract_strided_slice %125 {offsets = [0, 2], sizes = [16, 1], strides = [1, 1]} : vector<16x4xf32> to vector<16x1xf32>
      %142 = vector.extract_strided_slice %126 {offsets = [2, 0], sizes = [1, 128], strides = [1, 1]} : vector<4x128xf32> to vector<1x128xf32>
      %143 = vector.broadcast %141 : vector<16x1xf32> to vector<16x128xf32>
      %144 = vector.broadcast %142 : vector<1x128xf32> to vector<16x128xf32>
      %145 = arith.mulf %143, %144 : vector<16x128xf32>
      %146 = arith.addf %140, %145 : vector<16x128xf32>
      %147 = vector.extract_strided_slice %125 {offsets = [0, 3], sizes = [16, 1], strides = [1, 1]} : vector<16x4xf32> to vector<16x1xf32>
      %148 = vector.extract_strided_slice %126 {offsets = [3, 0], sizes = [1, 128], strides = [1, 1]} : vector<4x128xf32> to vector<1x128xf32>
      %149 = vector.broadcast %147 : vector<16x1xf32> to vector<16x128xf32>
      %150 = vector.broadcast %148 : vector<1x128xf32> to vector<16x128xf32>
      %151 = arith.mulf %149, %150 : vector<16x128xf32>
      %152 = arith.addf %146, %151 : vector<16x128xf32>
      %c0_67 = arith.constant 0 : index
      %c0_68 = arith.constant 0 : index
      %153 = vector.load %arg21[%c0_67, %c0_68] : memref<16x128xf32, #tpu.memory_space<vmem>>, vector<16x128xf32>
      tpu.vector_store %arg21[%c0_67, %c0_68], %152 {strides = array<i32>} : memref<16x128xf32, #tpu.memory_space<vmem>>, vector<16x128xf32>,
    } else {
    }
    %c0 = arith.constant 0 : index
    %c0_1 = arith.constant 0 : index
    %3 = vector.load %arg21[%c0, %c0_1] : memref<16x128xf32, #tpu.memory_space<vmem>>, vector<16x128xf32>
    %4 = arith.truncf %3 : vector<16x128xf32> to vector<16x128xbf16>
    %c0_2 = arith.constant 0 : index
    %c0_3 = arith.constant 0 : index
    %c0_4 = arith.constant 0 : index
    %5 = vector.load %arg4[%c0_2, %c0_3, %c0_4] : memref<1x384x128xbf16, #tpu.memory_space<vmem>>, vector<1x384x128xbf16>
    %6 = vector.shape_cast %5 : vector<1x384x128xbf16> to vector<384x128xbf16>
    %cst = arith.constant dense<0.000000e+00> : vector<384x16xf32>
    %7 = tpu.matmul %6, %4, %cst {dimension_numbers = #tpu.dot_dimension_numbers<[1], [1], [0], [0], [0, 0, 1, 0], [], []>} : vector<384x128xbf16>, vector<16x128xbf16>, vector<384x16xf32> -> vector<384x16xf32>
    %c0_5 = arith.constant 0 : index
    %c0_6 = arith.constant 0 : index
    %c0_7 = arith.constant 0 : index
    %8 = vector.load %arg5[%c0_5, %c0_6, %c0_7] : memref<1x384x1xf32, #tpu.memory_space<vmem>>, vector<1x384x1xf32>
    %9 = vector.shape_cast %8 : vector<1x384x1xf32> to vector<384x1xf32>
    %10 = vector.broadcast %9 : vector<384x1xf32> to vector<384x16xf32>
    %11 = arith.addf %7, %10 : vector<384x16xf32>
    %12 = arith.truncf %11 : vector<384x16xf32> to vector<384x16xbf16>
    %13 = vector.extract_strided_slice %12 {offsets = [0, 0], sizes = [128, 16], strides = [1, 1]} : vector<384x16xbf16> to vector<128x16xbf16>
    %14 = vector.shape_cast %13 : vector<128x16xbf16> to vector<8x16x16xbf16>
    %15 = tpu.transpose %14, [0, 2, 1] : vector<8x16x16xbf16> -> vector<8x16x16xbf16>
    %16 = vector.shape_cast %15 : vector<8x16x16xbf16> to vector<16x8x16xbf16>
    %17 = vector.extract_strided_slice %12 {offsets = [128, 0], sizes = [128, 16], strides = [1, 1]} : vector<384x16xbf16> to vector<128x16xbf16>
    %18 = vector.shape_cast %17 : vector<128x16xbf16> to vector<8x16x16xbf16>
    %19 = tpu.transpose %18, [0, 2, 1] : vector<8x16x16xbf16> -> vector<8x16x16xbf16>
    %20 = vector.shape_cast %19 : vector<8x16x16xbf16> to vector<16x8x16xbf16>
    %21 = vector.extract_strided_slice %12 {offsets = [256, 0], sizes = [128, 16], strides = [1, 1]} : vector<384x16xbf16> to vector<128x16xbf16>
    %22 = vector.shape_cast %21 : vector<128x16xbf16> to vector<8x16x16xbf16>
    %23 = tpu.transpose %22, [0, 2, 1] : vector<8x16x16xbf16> -> vector<8x16x16xbf16>
    %24 = vector.shape_cast %23 : vector<8x16x16xbf16> to vector<16x8x16xbf16>
    "tpu.trace_start"() <{level = 10 : i32, message = "gqd,gkd->gqk"}> : () -> ()
    %cst_8 = arith.constant dense<0.000000e+00> : vector<16x8x8xf32>
    %25 = tpu.matmul %16, %20, %cst_8 {dimension_numbers = #tpu.dot_dimension_numbers<[2], [2], [1], [1], [0, 0, 0, 1, 1, 1], [0], [0]>} : vector<16x8x16xbf16>, vector<16x8x16xbf16>, vector<16x8x8xf32> -> vector<16x8x8xf32>
    "tpu.trace_stop"() : () -> ()
    %cst_9 = arith.constant 2.500000e-01 : f32
    %26 = vector.broadcast %cst_9 : f32 to vector<16x8x8xf32>
    %27 = arith.mulf %25, %26 : vector<16x8x8xf32>
    %cst_10 = arith.constant dense<0xFF800000> : vector<16x8xf32>
    %28 = vector.multi_reduction <maximumf>, %27, %cst_10 [2] : vector<16x8x8xf32> to vector<16x8xf32>
    %29 = vector.shape_cast %28 : vector<16x8xf32> to vector<16x8x1xf32>
    %30 = vector.broadcast %29 : vector<16x8x1xf32> to vector<16x8x8xf32>
    %31 = arith.subf %27, %30 : vector<16x8x8xf32>
    %32 = math.exp %31 : vector<16x8x8xf32>
    %cst_11 = arith.constant dense<0.000000e+00> : vector<16x8xf32>
    %33 = vector.multi_reduction <add>, %32, %cst_11 [2] : vector<16x8x8xf32> to vector<16x8xf32>
    %34 = vector.shape_cast %33 : vector<16x8xf32> to vector<16x8x1xf32>
    %35 = tpu.reciprocal %34 {approx = true} : vector<16x8x1xf32> -> vector<16x8x1xf32>
    %36 = vector.broadcast %35 : vector<16x8x1xf32> to vector<16x8x8xf32>
    %37 = arith.mulf %32, %36 : vector<16x8x8xf32>
    %38 = arith.truncf %37 : vector<16x8x8xf32> to vector<16x8x8xbf16>
    "tpu.trace_start"() <{level = 10 : i32, message = "gqk,gkd->gqd"}> : () -> ()
    %cst_12 = arith.constant dense<0.000000e+00> : vector<16x8x16xf32>
    %39 = tpu.matmul %38, %24, %cst_12 {dimension_numbers = #tpu.dot_dimension_numbers<[2], [1], [1], [2], [0, 0, 0, 1, 1, 2], [0], [0]>} : vector<16x8x8xbf16>, vector<16x8x16xbf16>, vector<16x8x16xf32> -> vector<16x8x16xf32>
    "tpu.trace_stop"() : () -> ()
    %40 = vector.shape_cast %39 : vector<16x8x16xf32> to vector<8x16x16xf32>
    %41 = tpu.transpose %40, [0, 2, 1] : vector<8x16x16xf32> -> vector<8x16x16xf32>
    %42 = vector.shape_cast %41 : vector<8x16x16xf32> to vector<128x16xf32>
    %c0_13 = arith.constant 0 : index
    %c0_14 = arith.constant 0 : index
    %c0_15 = arith.constant 0 : index
    %43 = vector.load %arg6[%c0_13, %c0_14, %c0_15] : memref<1x128x128xbf16, #tpu.memory_space<vmem>>, vector<1x128x128xbf16>
    %44 = vector.shape_cast %43 : vector<1x128x128xbf16> to vector<128x128xbf16>
    %45 = arith.truncf %42 : vector<128x16xf32> to vector<128x16xbf16>
    %cst_16 = arith.constant dense<0.000000e+00> : vector<128x16xf32>
    %46 = tpu.matmul %44, %45, %cst_16 {dimension_numbers = #tpu.dot_dimension_numbers<[1], [0], [0], [1], [0, 0, 1, 1], [], []>} : vector<128x128xbf16>, vector<128x16xbf16>, vector<128x16xf32> -> vector<128x16xf32>
    %c0_17 = arith.constant 0 : index
    %c0_18 = arith.constant 0 : index
    %c0_19 = arith.constant 0 : index
    %47 = vector.load %arg7[%c0_17, %c0_18, %c0_19] : memref<1x128x1xf32, #tpu.memory_space<vmem>>, vector<1x128x1xf32>
    %48 = vector.shape_cast %47 : vector<1x128x1xf32> to vector<128x1xf32>
    %49 = vector.broadcast %48 : vector<128x1xf32> to vector<128x16xf32>
    %50 = arith.addf %46, %49 : vector<128x16xf32>
    %51 = tpu.transpose %50, [1, 0] : vector<128x16xf32> -> vector<16x128xf32>
    %52 = arith.addf %3, %51 : vector<16x128xf32>
    %c0_20 = arith.constant 0 : index
    %c0_21 = arith.constant 0 : index
    %c0_22 = arith.constant 0 : index
    %53 = vector.load %arg8[%c0_20, %c0_21, %c0_22] : memref<1x1x128xf32, #tpu.memory_space<vmem>>, vector<1x1x128xf32>
    %54 = vector.shape_cast %53 : vector<1x1x128xf32> to vector<1x128xf32>
    %c0_23 = arith.constant 0 : index
    %c0_24 = arith.constant 0 : index
    %c0_25 = arith.constant 0 : index
    %55 = vector.load %arg9[%c0_23, %c0_24, %c0_25] : memref<1x1x128xf32, #tpu.memory_space<vmem>>, vector<1x1x128xf32>
    %56 = vector.shape_cast %55 : vector<1x1x128xf32> to vector<1x128xf32>
    %cst_26 = arith.constant dense<0.000000e+00> : vector<16xf32>
    %57 = vector.multi_reduction <add>, %52, %cst_26 [1] : vector<16x128xf32> to vector<16xf32>
    %58 = vector.shape_cast %57 : vector<16xf32> to vector<16x1xf32>
    %cst_27 = arith.constant 1.280000e+02 : f32
    %59 = vector.broadcast %cst_27 : f32 to vector<16x1xf32>
    %60 = arith.divf %58, %59 : vector<16x1xf32>
    %61 = vector.broadcast %60 : vector<16x1xf32> to vector<16x128xf32>
    %62 = arith.subf %52, %61 : vector<16x128xf32>
    %63 = arith.mulf %62, %62 : vector<16x128xf32>
    %cst_28 = arith.constant dense<0.000000e+00> : vector<16xf32>
    %64 = vector.multi_reduction <add>, %63, %cst_28 [1] : vector<16x128xf32> to vector<16xf32>
    %65 = vector.shape_cast %64 : vector<16xf32> to vector<16x1xf32>
    %cst_29 = arith.constant 1.280000e+02 : f32
    %66 = vector.broadcast %cst_29 : f32 to vector<16x1xf32>
    %67 = arith.divf %65, %66 : vector<16x1xf32>
    %cst_30 = arith.constant 9.99999974E-6 : f32
    %68 = vector.broadcast %cst_30 : f32 to vector<16x1xf32>
    %69 = arith.addf %67, %68 : vector<16x1xf32>
    %70 = math.rsqrt %69 : vector<16x1xf32>
    %71 = vector.broadcast %70 : vector<16x1xf32> to vector<16x128xf32>
    %72 = arith.mulf %62, %71 : vector<16x128xf32>
    %73 = vector.broadcast %54 : vector<1x128xf32> to vector<16x128xf32>
    %74 = arith.mulf %72, %73 : vector<16x128xf32>
    %75 = vector.broadcast %56 : vector<1x128xf32> to vector<16x128xf32>
    %76 = arith.addf %74, %75 : vector<16x128xf32>
    %c0_31 = arith.constant 0 : index
    %c0_32 = arith.constant 0 : index
    %c0_33 = arith.constant 0 : index
    %77 = vector.load %arg10[%c0_31, %c0_32, %c0_33] : memref<1x512x128xbf16, #tpu.memory_space<vmem>>, vector<1x512x128xbf16>
    %78 = vector.shape_cast %77 : vector<1x512x128xbf16> to vector<512x128xbf16>
    %79 = arith.truncf %76 : vector<16x128xf32> to vector<16x128xbf16>
    %cst_34 = arith.constant dense<0.000000e+00> : vector<16x512xf32>
    %80 = tpu.matmul %79, %78, %cst_34 {dimension_numbers = #tpu.dot_dimension_numbers<[1], [1], [0], [0], [0, 0, 1, 0], [], []>} : vector<16x128xbf16>, vector<512x128xbf16>, vector<16x512xf32> -> vector<16x512xf32>
    %c0_35 = arith.constant 0 : index
    %c0_36 = arith.constant 0 : index
    %c0_37 = arith.constant 0 : index
    %81 = vector.load %arg11[%c0_35, %c0_36, %c0_37] : memref<1x1x512xf32, #tpu.memory_space<vmem>>, vector<1x1x512xf32>
    %82 = vector.shape_cast %81 : vector<1x1x512xf32> to vector<1x512xf32>
    %83 = vector.broadcast %82 : vector<1x512xf32> to vector<16x512xf32>
    %84 = arith.addf %80, %83 : vector<16x512xf32>
    %cst_38 = arith.constant 0.000000e+00 : f32
    %85 = vector.broadcast %cst_38 : f32 to vector<16x512xf32>
    %86 = arith.maximumf %84, %85 : vector<16x512xf32>
    %c0_39 = arith.constant 0 : index
    %c0_40 = arith.constant 0 : index
    %c0_41 = arith.constant 0 : index
    %87 = vector.load %arg12[%c0_39, %c0_40, %c0_41] : memref<1x128x512xbf16, #tpu.memory_space<vmem>>, vector<1x128x512xbf16>
    %88 = vector.shape_cast %87 : vector<1x128x512xbf16> to vector<128x512xbf16>
    %89 = arith.truncf %86 : vector<16x512xf32> to vector<16x512xbf16>
    %cst_42 = arith.constant dense<0.000000e+00> : vector<16x128xf32>
    %90 = tpu.matmul %89, %88, %cst_42 {dimension_numbers = #tpu.dot_dimension_numbers<[1], [1], [0], [0], [0, 0, 1, 0], [], []>} : vector<16x512xbf16>, vector<128x512xbf16>, vector<16x128xf32> -> vector<16x128xf32>
    %c0_43 = arith.constant 0 : index
    %c0_44 = arith.constant 0 : index
    %c0_45 = arith.constant 0 : index
    %91 = vector.load %arg13[%c0_43, %c0_44, %c0_45] : memref<1x1x128xf32, #tpu.memory_space<vmem>>, vector<1x1x128xf32>
    %92 = vector.shape_cast %91 : vector<1x1x128xf32> to vector<1x128xf32>
    %93 = vector.broadcast %92 : vector<1x128xf32> to vector<16x128xf32>
    %94 = arith.addf %90, %93 : vector<16x128xf32>
    %95 = arith.addf %76, %94 : vector<16x128xf32>
    %c0_46 = arith.constant 0 : index
    %c0_47 = arith.constant 0 : index
    %c0_48 = arith.constant 0 : index
    %96 = vector.load %arg14[%c0_46, %c0_47, %c0_48] : memref<1x1x128xf32, #tpu.memory_space<vmem>>, vector<1x1x128xf32>
    %97 = vector.shape_cast %96 : vector<1x1x128xf32> to vector<1x128xf32>
    %c0_49 = arith.constant 0 : index
    %c0_50 = arith.constant 0 : index
    %c0_51 = arith.constant 0 : index
    %98 = vector.load %arg15[%c0_49, %c0_50, %c0_51] : memref<1x1x128xf32, #tpu.memory_space<vmem>>, vector<1x1x128xf32>
    %99 = vector.shape_cast %98 : vector<1x1x128xf32> to vector<1x128xf32>
    %cst_52 = arith.constant dense<0.000000e+00> : vector<16xf32>
    %100 = vector.multi_reduction <add>, %95, %cst_52 [1] : vector<16x128xf32> to vector<16xf32>
    %101 = vector.shape_cast %100 : vector<16xf32> to vector<16x1xf32>
    %cst_53 = arith.constant 1.280000e+02 : f32
    %102 = vector.broadcast %cst_53 : f32 to vector<16x1xf32>
    %103 = arith.divf %101, %102 : vector<16x1xf32>
    %104 = vector.broadcast %103 : vector<16x1xf32> to vector<16x128xf32>
    %105 = arith.subf %95, %104 : vector<16x128xf32>
    %106 = arith.mulf %105, %105 : vector<16x128xf32>
    %cst_54 = arith.constant dense<0.000000e+00> : vector<16xf32>
    %107 = vector.multi_reduction <add>, %106, %cst_54 [1] : vector<16x128xf32> to vector<16xf32>
    %108 = vector.shape_cast %107 : vector<16xf32> to vector<16x1xf32>
    %cst_55 = arith.constant 1.280000e+02 : f32
    %109 = vector.broadcast %cst_55 : f32 to vector<16x1xf32>
    %110 = arith.divf %108, %109 : vector<16x1xf32>
    %cst_56 = arith.constant 9.99999974E-6 : f32
    %111 = vector.broadcast %cst_56 : f32 to vector<16x1xf32>
    %112 = arith.addf %110, %111 : vector<16x1xf32>
    %113 = math.rsqrt %112 : vector<16x1xf32>
    %114 = vector.broadcast %113 : vector<16x1xf32> to vector<16x128xf32>
    %115 = arith.mulf %105, %114 : vector<16x128xf32>
    %116 = vector.broadcast %97 : vector<1x128xf32> to vector<16x128xf32>
    %117 = arith.mulf %115, %116 : vector<16x128xf32>
    %118 = vector.broadcast %99 : vector<1x128xf32> to vector<16x128xf32>
    %119 = arith.addf %117, %118 : vector<16x128xf32>
    %c0_57 = arith.constant 0 : index
    %c0_58 = arith.constant 0 : index
    %120 = vector.load %arg21[%c0_57, %c0_58] : memref<16x128xf32, #tpu.memory_space<vmem>>, vector<16x128xf32>
    tpu.vector_store %arg21[%c0_57, %c0_58], %119 {strides = array<i32>} : memref<16x128xf32, #tpu.memory_space<vmem>>, vector<16x128xf32>,
    %c1_i32 = arith.constant 1 : i32
    %121 = arith.cmpi eq, %arg0, %c1_i32 : i32
    %122 = arith.extui %121 : i1 to i32
    %c0_i32_59 = arith.constant 0 : i32
    %123 = arith.cmpi ne, %122, %c0_i32_59 : i32
    scf.if %123 {
      %124 = vector.shape_cast %119 : vector<16x128xf32> to vector<2x8x128xf32>
      %c0_60 = arith.constant 0 : index
      %c0_61 = arith.constant 0 : index
      %125 = vector.load %arg16[%c0_60, %c0_61] : memref<1x128xf32, #tpu.memory_space<vmem>>, vector<1x128xf32>
      %126 = vector.shape_cast %125 : vector<1x128xf32> to vector<1x1x128xf32>
      %127 = vector.broadcast %126 : vector<1x1x128xf32> to vector<2x8x128xf32>
      %128 = arith.mulf %124, %127 : vector<2x8x128xf32>
      %cst_62 = arith.constant dense<0.000000e+00> : vector<2x8xf32>
      %129 = vector.multi_reduction <add>, %128, %cst_62 [2] : vector<2x8x128xf32> to vector<2x8xf32>
      %c0_63 = arith.constant 0 : index
      %c0_64 = arith.constant 0 : index
      %130 = vector.load %arg17[%c0_63, %c0_64] : memref<1x1xf32, #tpu.memory_space<vmem>>, vector<1x1xf32>
      %131 = vector.broadcast %130 : vector<1x1xf32> to vector<2x8xf32>
      %132 = arith.addf %129, %131 : vector<2x8xf32>
      %cst_65 = arith.constant dense<0xFF800000> : vector<2xf32>
      %133 = vector.multi_reduction <maximumf>, %132, %cst_65 [1] : vector<2x8xf32> to vector<2xf32>
      %134 = vector.shape_cast %133 : vector<2xf32> to vector<2x1xf32>
      %135 = vector.broadcast %134 : vector<2x1xf32> to vector<2x8xf32>
      %136 = arith.subf %132, %135 : vector<2x8xf32>
      %137 = math.exp %136 : vector<2x8xf32>
      %cst_66 = arith.constant dense<0.000000e+00> : vector<2xf32>
      %138 = vector.multi_reduction <add>, %137, %cst_66 [1] : vector<2x8xf32> to vector<2xf32>
      %139 = vector.shape_cast %138 : vector<2xf32> to vector<2x1xf32>
      %140 = vector.broadcast %139 : vector<2x1xf32> to vector<2x8xf32>
      %141 = arith.divf %137, %140 : vector<2x8xf32>
      %142 = vector.shape_cast %141 : vector<2x8xf32> to vector<2x8x1xf32>
      %143 = vector.broadcast %142 : vector<2x8x1xf32> to vector<2x8x128xf32>
      %144 = arith.mulf %143, %124 : vector<2x8x128xf32>
      %cst_67 = arith.constant dense<0.000000e+00> : vector<2x128xf32>
      %145 = vector.multi_reduction <add>, %144, %cst_67 [1] : vector<2x8x128xf32> to vector<2x128xf32>
      %c0_68 = arith.constant 0 : index
      %c0_69 = arith.constant 0 : index
      %146 = vector.load %arg18[%c0_68, %c0_69] : memref<128x128xbf16, #tpu.memory_space<vmem>>, vector<128x128xbf16>
      %147 = arith.truncf %145 : vector<2x128xf32> to vector<2x128xbf16>
      %cst_70 = arith.constant dense<0.000000e+00> : vector<2x128xf32>
      %148 = tpu.matmul %147, %146, %cst_70 {dimension_numbers = #tpu.dot_dimension_numbers<[1], [1], [0], [0], [0, 0, 1, 0], [], []>} : vector<2x128xbf16>, vector<128x128xbf16>, vector<2x128xf32> -> vector<2x128xf32>
      %c0_71 = arith.constant 0 : index
      %c0_72 = arith.constant 0 : index
      %149 = vector.load %arg19[%c0_71, %c0_72] : memref<1x128xf32, #tpu.memory_space<vmem>>, vector<1x128xf32>
      %150 = vector.broadcast %149 : vector<1x128xf32> to vector<2x128xf32>
      %151 = arith.addf %148, %150 : vector<2x128xf32>
      %c0_73 = arith.constant 0 : index
      %c0_74 = arith.constant 0 : index
      %152 = vector.load %arg20[%c0_73, %c0_74] : memref<2x128xf32, #tpu.memory_space<vmem>>, vector<2x128xf32>
      tpu.vector_store %arg20[%c0_73, %c0_74], %151 {strides = array<i32>} : memref<2x128xf32, #tpu.memory_space<vmem>>, vector<2x128xf32>,
    } else {
    }
    return
  }
  func.func @transform_0(%arg0: i32) -> (i32, i32, i32) {
    %c0_i32 = arith.constant 0 : i32
    %c0_i32_0 = arith.constant 0 : i32
    %c0_i32_1 = arith.constant 0 : i32
    %c0_i32_2 = arith.constant 0 : i32
    return %c0_i32, %c0_i32_0, %c0_i32_1 : i32, i32, i32
  }
  func.func @transform_1(%arg0: i32) -> (i32, i32) {
    %c0_i32 = arith.constant 0 : i32
    %c0_i32_0 = arith.constant 0 : i32
    %c0_i32_1 = arith.constant 0 : i32
    return %c0_i32, %c0_i32_0 : i32, i32
  }
  func.func @transform_2(%arg0: i32) -> (i32, i32) {
    %c0_i32 = arith.constant 0 : i32
    %c0_i32_0 = arith.constant 0 : i32
    %c0_i32_1 = arith.constant 0 : i32
    return %c0_i32, %c0_i32_0 : i32, i32
  }
  func.func @transform_3(%arg0: i32) -> (i32, i32, i32) {
    %c0_i32 = arith.constant 0 : i32
    %c0_i32_0 = arith.constant 0 : i32
    %c0_i32_1 = arith.constant 0 : i32
    return %arg0, %c0_i32, %c0_i32_0 : i32, i32, i32
  }
  func.func @transform_4(%arg0: i32) -> (i32, i32, i32) {
    %c0_i32 = arith.constant 0 : i32
    %c0_i32_0 = arith.constant 0 : i32
    %c0_i32_1 = arith.constant 0 : i32
    return %arg0, %c0_i32, %c0_i32_0 : i32, i32, i32
  }
  func.func @transform_5(%arg0: i32) -> (i32, i32, i32) {
    %c0_i32 = arith.constant 0 : i32
    %c0_i32_0 = arith.constant 0 : i32
    %c0_i32_1 = arith.constant 0 : i32
    return %arg0, %c0_i32, %c0_i32_0 : i32, i32, i32
  }
  func.func @transform_6(%arg0: i32) -> (i32, i32, i32) {
    %c0_i32 = arith.constant 0 : i32
    %c0_i32_0 = arith.constant 0 : i32
    %c0_i32_1 = arith.constant 0 : i32
    return %arg0, %c0_i32, %c0_i32_0 : i32, i32, i32
  }
  func.func @transform_7(%arg0: i32) -> (i32, i32, i32) {
    %c0_i32 = arith.constant 0 : i32
    %c0_i32_0 = arith.constant 0 : i32
    %c0_i32_1 = arith.constant 0 : i32
    return %arg0, %c0_i32, %c0_i32_0 : i32, i32, i32
  }
  func.func @transform_8(%arg0: i32) -> (i32, i32, i32) {
    %c0_i32 = arith.constant 0 : i32
    %c0_i32_0 = arith.constant 0 : i32
    %c0_i32_1 = arith.constant 0 : i32
    return %arg0, %c0_i32, %c0_i32_0 : i32, i32, i32
  }
  func.func @transform_9(%arg0: i32) -> (i32, i32, i32) {
    %c0_i32 = arith.constant 0 : i32
    %c0_i32_0 = arith.constant 0 : i32
    %c0_i32_1 = arith.constant 0 : i32
    return %arg0, %c0_i32, %c0_i32_0 : i32, i32, i32
  }
  func.func @transform_10(%arg0: i32) -> (i32, i32, i32) {
    %c0_i32 = arith.constant 0 : i32
    %c0_i32_0 = arith.constant 0 : i32
    %c0_i32_1 = arith.constant 0 : i32
    return %arg0, %c0_i32, %c0_i32_0 : i32, i32, i32
  }
  func.func @transform_11(%arg0: i32) -> (i32, i32, i32) {
    %c0_i32 = arith.constant 0 : i32
    %c0_i32_0 = arith.constant 0 : i32
    %c0_i32_1 = arith.constant 0 : i32
    return %arg0, %c0_i32, %c0_i32_0 : i32, i32, i32
  }
  func.func @transform_12(%arg0: i32) -> (i32, i32, i32) {
    %c0_i32 = arith.constant 0 : i32
    %c0_i32_0 = arith.constant 0 : i32
    %c0_i32_1 = arith.constant 0 : i32
    return %arg0, %c0_i32, %c0_i32_0 : i32, i32, i32
  }
  func.func @transform_13(%arg0: i32) -> (i32, i32, i32) {
    %c0_i32 = arith.constant 0 : i32
    %c0_i32_0 = arith.constant 0 : i32
    %c0_i32_1 = arith.constant 0 : i32
    return %arg0, %c0_i32, %c0_i32_0 : i32, i32, i32
  }
  func.func @transform_14(%arg0: i32) -> (i32, i32, i32) {
    %c0_i32 = arith.constant 0 : i32
    %c0_i32_0 = arith.constant 0 : i32
    %c0_i32_1 = arith.constant 0 : i32
    return %arg0, %c0_i32, %c0_i32_0 : i32, i32, i32
  }
  func.func @transform_15(%arg0: i32) -> (i32, i32) {
    %c0_i32 = arith.constant 0 : i32
    %c0_i32_0 = arith.constant 0 : i32
    %c0_i32_1 = arith.constant 0 : i32
    return %c0_i32, %c0_i32_0 : i32, i32
  }
  func.func @transform_16(%arg0: i32) -> (i32, i32) {
    %c0_i32 = arith.constant 0 : i32
    %c0_i32_0 = arith.constant 0 : i32
    %c0_i32_1 = arith.constant 0 : i32
    return %c0_i32, %c0_i32_0 : i32, i32
  }
  func.func @transform_17(%arg0: i32) -> (i32, i32) {
    %c0_i32 = arith.constant 0 : i32
    %c0_i32_0 = arith.constant 0 : i32
    %c0_i32_1 = arith.constant 0 : i32
    return %c0_i32, %c0_i32_0 : i32, i32
  }
  func.func @transform_18(%arg0: i32) -> (i32, i32) {
    %c0_i32 = arith.constant 0 : i32
    %c0_i32_0 = arith.constant 0 : i32
    %c0_i32_1 = arith.constant 0 : i32
    return %c0_i32, %c0_i32_0 : i32, i32
  }
  func.func @transform_19(%arg0: i32) -> (i32, i32) {
    %c0_i32 = arith.constant 0 : i32
    %c0_i32_0 = arith.constant 0 : i32
    %c0_i32_1 = arith.constant 0 : i32
    return %c0_i32, %c0_i32_0 : i32, i32
  }
}

module attributes {stable_mosaic.version = 11 : i64} {
  func.func @_modality_kernel(%arg0: i32, %arg1: memref<2x8x2xf32, #tpu.memory_space<vmem>>, %arg2: memref<2x128xf32, #tpu.memory_space<vmem>>, %arg3: memref<8x128xf32, #tpu.memory_space<vmem>>, %arg4: memref<1x384x128xbf16, #tpu.memory_space<vmem>>, %arg5: memref<1x384x1xf32, #tpu.memory_space<vmem>>, %arg6: memref<1x128x128xbf16, #tpu.memory_space<vmem>>, %arg7: memref<1x128x1xf32, #tpu.memory_space<vmem>>, %arg8: memref<1x1x128xf32, #tpu.memory_space<vmem>>, %arg9: memref<1x1x128xf32, #tpu.memory_space<vmem>>, %arg10: memref<1x256x128xbf16, #tpu.memory_space<vmem>>, %arg11: memref<1x1x256xf32, #tpu.memory_space<vmem>>, %arg12: memref<1x128x256xbf16, #tpu.memory_space<vmem>>, %arg13: memref<1x1x128xf32, #tpu.memory_space<vmem>>, %arg14: memref<1x1x128xf32, #tpu.memory_space<vmem>>, %arg15: memref<1x1x128xf32, #tpu.memory_space<vmem>>, %arg16: memref<1x128xf32, #tpu.memory_space<vmem>>, %arg17: memref<1x1xf32, #tpu.memory_space<vmem>>, %arg18: memref<128x128xbf16, #tpu.memory_space<vmem>>, %arg19: memref<1x128xf32, #tpu.memory_space<vmem>>, %arg20: memref<2x128xf32, #tpu.memory_space<vmem>>, %arg21: memref<128x128xbf16, #tpu.memory_space<vmem>>, %arg22: memref<128x128xbf16, #tpu.memory_space<vmem>>, %arg23: memref<1x128xf32, #tpu.memory_space<vmem>>, %arg24: memref<2x128xf32, #tpu.memory_space<vmem>>, %arg25: memref<16x128xf32, #tpu.memory_space<vmem>>) attributes {dimension_semantics = [#tpu.dimension_semantics<arbitrary>], iteration_bounds = array<i64: 4>, scalar_prefetch = 0 : i64, scratch_operands = 1 : i64, tpu.core_type = #tpu.core_type<tc>, window_params = [{pipeline_mode = #tpu.pipeline_mode<synchronous>, transform_indices = @transform_0, window_bounds = array<i64: 2, 8, 2>}, {pipeline_mode = #tpu.pipeline_mode<synchronous>, transform_indices = @transform_1, window_bounds = array<i64: 2, 128>}, {pipeline_mode = #tpu.pipeline_mode<synchronous>, transform_indices = @transform_2, window_bounds = array<i64: 8, 128>}, {transform_indices = @transform_3, window_bounds = array<i64: 1, 384, 128>}, {transform_indices = @transform_4, window_bounds = array<i64: 1, 384, 1>}, {transform_indices = @transform_5, window_bounds = array<i64: 1, 128, 128>}, {transform_indices = @transform_6, window_bounds = array<i64: 1, 128, 1>}, {transform_indices = @transform_7, window_bounds = array<i64: 1, 1, 128>}, {transform_indices = @transform_8, window_bounds = array<i64: 1, 1, 128>}, {transform_indices = @transform_9, window_bounds = array<i64: 1, 256, 128>}, {transform_indices = @transform_10, window_bounds = array<i64: 1, 1, 256>}, {transform_indices = @transform_11, window_bounds = array<i64: 1, 128, 256>}, {transform_indices = @transform_12, window_bounds = array<i64: 1, 1, 128>}, {transform_indices = @transform_13, window_bounds = array<i64: 1, 1, 128>}, {transform_indices = @transform_14, window_bounds = array<i64: 1, 1, 128>}, {pipeline_mode = #tpu.pipeline_mode<synchronous>, transform_indices = @transform_15, window_bounds = array<i64: 1, 128>}, {pipeline_mode = #tpu.pipeline_mode<synchronous>, transform_indices = @transform_16, window_bounds = array<i64: 1, 1>}, {pipeline_mode = #tpu.pipeline_mode<synchronous>, transform_indices = @transform_17, window_bounds = array<i64: 128, 128>}, {pipeline_mode = #tpu.pipeline_mode<synchronous>, transform_indices = @transform_18, window_bounds = array<i64: 1, 128>}, {pipeline_mode = #tpu.pipeline_mode<synchronous>, transform_indices = @transform_19, window_bounds = array<i64: 2, 128>}, {pipeline_mode = #tpu.pipeline_mode<synchronous>, transform_indices = @transform_20, window_bounds = array<i64: 128, 128>}, {pipeline_mode = #tpu.pipeline_mode<synchronous>, transform_indices = @transform_21, window_bounds = array<i64: 128, 128>}, {pipeline_mode = #tpu.pipeline_mode<synchronous>, transform_indices = @transform_22, window_bounds = array<i64: 1, 128>}, {pipeline_mode = #tpu.pipeline_mode<synchronous>, transform_indices = @transform_23, window_bounds = array<i64: 2, 128>}]} {
    %c0_i32 = arith.constant 0 : i32
    %0 = arith.cmpi eq, %arg0, %c0_i32 : i32
    %1 = arith.extui %0 : i1 to i32
    %c0_i32_0 = arith.constant 0 : i32
    %2 = arith.cmpi ne, %1, %c0_i32_0 : i32
    scf.if %2 {
      %c0_60 = arith.constant 0 : index
      %c0_61 = arith.constant 0 : index
      %c0_62 = arith.constant 0 : index
      %124 = vector.load %arg1[%c0_60, %c0_61, %c0_62] : memref<2x8x2xf32, #tpu.memory_space<vmem>>, vector<2x8x2xf32>
      %125 = vector.shape_cast %124 : vector<2x8x2xf32> to vector<16x2xf32>
      %c0_63 = arith.constant 0 : index
      %c0_64 = arith.constant 0 : index
      %126 = vector.load %arg2[%c0_63, %c0_64] : memref<2x128xf32, #tpu.memory_space<vmem>>, vector<2x128xf32>
      %c0_65 = arith.constant 0 : index
      %c0_66 = arith.constant 0 : index
      %127 = vector.load %arg3[%c0_65, %c0_66] : memref<8x128xf32, #tpu.memory_space<vmem>>, vector<8x128xf32>
      %128 = tpu.concatenate %127, %127 in 0 : vector<8x128xf32>, vector<8x128xf32> -> vector<16x128xf32>
      %129 = vector.extract_strided_slice %125 {offsets = [0, 0], sizes = [16, 1], strides = [1, 1]} : vector<16x2xf32> to vector<16x1xf32>
      %130 = vector.extract_strided_slice %126 {offsets = [0, 0], sizes = [1, 128], strides = [1, 1]} : vector<2x128xf32> to vector<1x128xf32>
      %131 = vector.broadcast %129 : vector<16x1xf32> to vector<16x128xf32>
      %132 = vector.broadcast %130 : vector<1x128xf32> to vector<16x128xf32>
      %133 = arith.mulf %131, %132 : vector<16x128xf32>
      %134 = arith.addf %128, %133 : vector<16x128xf32>
      %135 = vector.extract_strided_slice %125 {offsets = [0, 1], sizes = [16, 1], strides = [1, 1]} : vector<16x2xf32> to vector<16x1xf32>
      %136 = vector.extract_strided_slice %126 {offsets = [1, 0], sizes = [1, 128], strides = [1, 1]} : vector<2x128xf32> to vector<1x128xf32>
      %137 = vector.broadcast %135 : vector<16x1xf32> to vector<16x128xf32>
      %138 = vector.broadcast %136 : vector<1x128xf32> to vector<16x128xf32>
      %139 = arith.mulf %137, %138 : vector<16x128xf32>
      %140 = arith.addf %134, %139 : vector<16x128xf32>
      %c0_67 = arith.constant 0 : index
      %c0_68 = arith.constant 0 : index
      %141 = vector.load %arg25[%c0_67, %c0_68] : memref<16x128xf32, #tpu.memory_space<vmem>>, vector<16x128xf32>
      tpu.vector_store %arg25[%c0_67, %c0_68], %140 {strides = array<i32>} : memref<16x128xf32, #tpu.memory_space<vmem>>, vector<16x128xf32>,
    } else {
    }
    %c0 = arith.constant 0 : index
    %c0_1 = arith.constant 0 : index
    %3 = vector.load %arg25[%c0, %c0_1] : memref<16x128xf32, #tpu.memory_space<vmem>>, vector<16x128xf32>
    %4 = arith.truncf %3 : vector<16x128xf32> to vector<16x128xbf16>
    %c0_2 = arith.constant 0 : index
    %c0_3 = arith.constant 0 : index
    %c0_4 = arith.constant 0 : index
    %5 = vector.load %arg4[%c0_2, %c0_3, %c0_4] : memref<1x384x128xbf16, #tpu.memory_space<vmem>>, vector<1x384x128xbf16>
    %6 = vector.shape_cast %5 : vector<1x384x128xbf16> to vector<384x128xbf16>
    %cst = arith.constant dense<0.000000e+00> : vector<384x16xf32>
    %7 = tpu.matmul %6, %4, %cst {dimension_numbers = #tpu.dot_dimension_numbers<[1], [1], [0], [0], [0, 0, 1, 0], [], []>} : vector<384x128xbf16>, vector<16x128xbf16>, vector<384x16xf32> -> vector<384x16xf32>
    %c0_5 = arith.constant 0 : index
    %c0_6 = arith.constant 0 : index
    %c0_7 = arith.constant 0 : index
    %8 = vector.load %arg5[%c0_5, %c0_6, %c0_7] : memref<1x384x1xf32, #tpu.memory_space<vmem>>, vector<1x384x1xf32>
    %9 = vector.shape_cast %8 : vector<1x384x1xf32> to vector<384x1xf32>
    %10 = vector.broadcast %9 : vector<384x1xf32> to vector<384x16xf32>
    %11 = arith.addf %7, %10 : vector<384x16xf32>
    %12 = arith.truncf %11 : vector<384x16xf32> to vector<384x16xbf16>
    %13 = vector.extract_strided_slice %12 {offsets = [0, 0], sizes = [128, 16], strides = [1, 1]} : vector<384x16xbf16> to vector<128x16xbf16>
    %14 = vector.shape_cast %13 : vector<128x16xbf16> to vector<4x32x16xbf16>
    %15 = tpu.transpose %14, [0, 2, 1] : vector<4x32x16xbf16> -> vector<4x16x32xbf16>
    %16 = vector.shape_cast %15 : vector<4x16x32xbf16> to vector<8x8x32xbf16>
    %17 = vector.extract_strided_slice %12 {offsets = [128, 0], sizes = [128, 16], strides = [1, 1]} : vector<384x16xbf16> to vector<128x16xbf16>
    %18 = vector.shape_cast %17 : vector<128x16xbf16> to vector<4x32x16xbf16>
    %19 = tpu.transpose %18, [0, 2, 1] : vector<4x32x16xbf16> -> vector<4x16x32xbf16>
    %20 = vector.shape_cast %19 : vector<4x16x32xbf16> to vector<8x8x32xbf16>
    %21 = vector.extract_strided_slice %12 {offsets = [256, 0], sizes = [128, 16], strides = [1, 1]} : vector<384x16xbf16> to vector<128x16xbf16>
    %22 = vector.shape_cast %21 : vector<128x16xbf16> to vector<4x32x16xbf16>
    %23 = tpu.transpose %22, [0, 2, 1] : vector<4x32x16xbf16> -> vector<4x16x32xbf16>
    %24 = vector.shape_cast %23 : vector<4x16x32xbf16> to vector<8x8x32xbf16>
    "tpu.trace_start"() <{level = 10 : i32, message = "gqd,gkd->gqk"}> : () -> ()
    %cst_8 = arith.constant dense<0.000000e+00> : vector<8x8x8xf32>
    %25 = tpu.matmul %16, %20, %cst_8 {dimension_numbers = #tpu.dot_dimension_numbers<[2], [2], [1], [1], [0, 0, 0, 1, 1, 1], [0], [0]>} : vector<8x8x32xbf16>, vector<8x8x32xbf16>, vector<8x8x8xf32> -> vector<8x8x8xf32>
    "tpu.trace_stop"() : () -> ()
    %cst_9 = arith.constant 0.176776692 : f32
    %26 = vector.broadcast %cst_9 : f32 to vector<8x8x8xf32>
    %27 = arith.mulf %25, %26 : vector<8x8x8xf32>
    %cst_10 = arith.constant dense<0xFF800000> : vector<8x8xf32>
    %28 = vector.multi_reduction <maximumf>, %27, %cst_10 [2] : vector<8x8x8xf32> to vector<8x8xf32>
    %29 = vector.shape_cast %28 : vector<8x8xf32> to vector<8x8x1xf32>
    %30 = vector.broadcast %29 : vector<8x8x1xf32> to vector<8x8x8xf32>
    %31 = arith.subf %27, %30 : vector<8x8x8xf32>
    %32 = math.exp %31 : vector<8x8x8xf32>
    %cst_11 = arith.constant dense<0.000000e+00> : vector<8x8xf32>
    %33 = vector.multi_reduction <add>, %32, %cst_11 [2] : vector<8x8x8xf32> to vector<8x8xf32>
    %34 = vector.shape_cast %33 : vector<8x8xf32> to vector<8x8x1xf32>
    %35 = tpu.reciprocal %34 {approx = true} : vector<8x8x1xf32> -> vector<8x8x1xf32>
    %36 = vector.broadcast %35 : vector<8x8x1xf32> to vector<8x8x8xf32>
    %37 = arith.mulf %32, %36 : vector<8x8x8xf32>
    %38 = arith.truncf %37 : vector<8x8x8xf32> to vector<8x8x8xbf16>
    "tpu.trace_start"() <{level = 10 : i32, message = "gqk,gkd->gqd"}> : () -> ()
    %cst_12 = arith.constant dense<0.000000e+00> : vector<8x8x32xf32>
    %39 = tpu.matmul %38, %24, %cst_12 {dimension_numbers = #tpu.dot_dimension_numbers<[2], [1], [1], [2], [0, 0, 0, 1, 1, 2], [0], [0]>} : vector<8x8x8xbf16>, vector<8x8x32xbf16>, vector<8x8x32xf32> -> vector<8x8x32xf32>
    "tpu.trace_stop"() : () -> ()
    %40 = vector.shape_cast %39 : vector<8x8x32xf32> to vector<4x16x32xf32>
    %41 = tpu.transpose %40, [0, 2, 1] : vector<4x16x32xf32> -> vector<4x32x16xf32>
    %42 = vector.shape_cast %41 : vector<4x32x16xf32> to vector<128x16xf32>
    %c0_13 = arith.constant 0 : index
    %c0_14 = arith.constant 0 : index
    %c0_15 = arith.constant 0 : index
    %43 = vector.load %arg6[%c0_13, %c0_14, %c0_15] : memref<1x128x128xbf16, #tpu.memory_space<vmem>>, vector<1x128x128xbf16>
    %44 = vector.shape_cast %43 : vector<1x128x128xbf16> to vector<128x128xbf16>
    %45 = arith.truncf %42 : vector<128x16xf32> to vector<128x16xbf16>
    %cst_16 = arith.constant dense<0.000000e+00> : vector<128x16xf32>
    %46 = tpu.matmul %44, %45, %cst_16 {dimension_numbers = #tpu.dot_dimension_numbers<[1], [0], [0], [1], [0, 0, 1, 1], [], []>} : vector<128x128xbf16>, vector<128x16xbf16>, vector<128x16xf32> -> vector<128x16xf32>
    %c0_17 = arith.constant 0 : index
    %c0_18 = arith.constant 0 : index
    %c0_19 = arith.constant 0 : index
    %47 = vector.load %arg7[%c0_17, %c0_18, %c0_19] : memref<1x128x1xf32, #tpu.memory_space<vmem>>, vector<1x128x1xf32>
    %48 = vector.shape_cast %47 : vector<1x128x1xf32> to vector<128x1xf32>
    %49 = vector.broadcast %48 : vector<128x1xf32> to vector<128x16xf32>
    %50 = arith.addf %46, %49 : vector<128x16xf32>
    %51 = tpu.transpose %50, [1, 0] : vector<128x16xf32> -> vector<16x128xf32>
    %52 = arith.addf %3, %51 : vector<16x128xf32>
    %c0_20 = arith.constant 0 : index
    %c0_21 = arith.constant 0 : index
    %c0_22 = arith.constant 0 : index
    %53 = vector.load %arg8[%c0_20, %c0_21, %c0_22] : memref<1x1x128xf32, #tpu.memory_space<vmem>>, vector<1x1x128xf32>
    %54 = vector.shape_cast %53 : vector<1x1x128xf32> to vector<1x128xf32>
    %c0_23 = arith.constant 0 : index
    %c0_24 = arith.constant 0 : index
    %c0_25 = arith.constant 0 : index
    %55 = vector.load %arg9[%c0_23, %c0_24, %c0_25] : memref<1x1x128xf32, #tpu.memory_space<vmem>>, vector<1x1x128xf32>
    %56 = vector.shape_cast %55 : vector<1x1x128xf32> to vector<1x128xf32>
    %cst_26 = arith.constant dense<0.000000e+00> : vector<16xf32>
    %57 = vector.multi_reduction <add>, %52, %cst_26 [1] : vector<16x128xf32> to vector<16xf32>
    %58 = vector.shape_cast %57 : vector<16xf32> to vector<16x1xf32>
    %cst_27 = arith.constant 1.280000e+02 : f32
    %59 = vector.broadcast %cst_27 : f32 to vector<16x1xf32>
    %60 = arith.divf %58, %59 : vector<16x1xf32>
    %61 = vector.broadcast %60 : vector<16x1xf32> to vector<16x128xf32>
    %62 = arith.subf %52, %61 : vector<16x128xf32>
    %63 = arith.mulf %62, %62 : vector<16x128xf32>
    %cst_28 = arith.constant dense<0.000000e+00> : vector<16xf32>
    %64 = vector.multi_reduction <add>, %63, %cst_28 [1] : vector<16x128xf32> to vector<16xf32>
    %65 = vector.shape_cast %64 : vector<16xf32> to vector<16x1xf32>
    %cst_29 = arith.constant 1.280000e+02 : f32
    %66 = vector.broadcast %cst_29 : f32 to vector<16x1xf32>
    %67 = arith.divf %65, %66 : vector<16x1xf32>
    %cst_30 = arith.constant 9.99999974E-6 : f32
    %68 = vector.broadcast %cst_30 : f32 to vector<16x1xf32>
    %69 = arith.addf %67, %68 : vector<16x1xf32>
    %70 = math.rsqrt %69 : vector<16x1xf32>
    %71 = vector.broadcast %70 : vector<16x1xf32> to vector<16x128xf32>
    %72 = arith.mulf %62, %71 : vector<16x128xf32>
    %73 = vector.broadcast %54 : vector<1x128xf32> to vector<16x128xf32>
    %74 = arith.mulf %72, %73 : vector<16x128xf32>
    %75 = vector.broadcast %56 : vector<1x128xf32> to vector<16x128xf32>
    %76 = arith.addf %74, %75 : vector<16x128xf32>
    %c0_31 = arith.constant 0 : index
    %c0_32 = arith.constant 0 : index
    %c0_33 = arith.constant 0 : index
    %77 = vector.load %arg10[%c0_31, %c0_32, %c0_33] : memref<1x256x128xbf16, #tpu.memory_space<vmem>>, vector<1x256x128xbf16>
    %78 = vector.shape_cast %77 : vector<1x256x128xbf16> to vector<256x128xbf16>
    %79 = arith.truncf %76 : vector<16x128xf32> to vector<16x128xbf16>
    %cst_34 = arith.constant dense<0.000000e+00> : vector<16x256xf32>
    %80 = tpu.matmul %79, %78, %cst_34 {dimension_numbers = #tpu.dot_dimension_numbers<[1], [1], [0], [0], [0, 0, 1, 0], [], []>} : vector<16x128xbf16>, vector<256x128xbf16>, vector<16x256xf32> -> vector<16x256xf32>
    %c0_35 = arith.constant 0 : index
    %c0_36 = arith.constant 0 : index
    %c0_37 = arith.constant 0 : index
    %81 = vector.load %arg11[%c0_35, %c0_36, %c0_37] : memref<1x1x256xf32, #tpu.memory_space<vmem>>, vector<1x1x256xf32>
    %82 = vector.shape_cast %81 : vector<1x1x256xf32> to vector<1x256xf32>
    %83 = vector.broadcast %82 : vector<1x256xf32> to vector<16x256xf32>
    %84 = arith.addf %80, %83 : vector<16x256xf32>
    %cst_38 = arith.constant 0.000000e+00 : f32
    %85 = vector.broadcast %cst_38 : f32 to vector<16x256xf32>
    %86 = arith.maximumf %84, %85 : vector<16x256xf32>
    %c0_39 = arith.constant 0 : index
    %c0_40 = arith.constant 0 : index
    %c0_41 = arith.constant 0 : index
    %87 = vector.load %arg12[%c0_39, %c0_40, %c0_41] : memref<1x128x256xbf16, #tpu.memory_space<vmem>>, vector<1x128x256xbf16>
    %88 = vector.shape_cast %87 : vector<1x128x256xbf16> to vector<128x256xbf16>
    %89 = arith.truncf %86 : vector<16x256xf32> to vector<16x256xbf16>
    %cst_42 = arith.constant dense<0.000000e+00> : vector<16x128xf32>
    %90 = tpu.matmul %89, %88, %cst_42 {dimension_numbers = #tpu.dot_dimension_numbers<[1], [1], [0], [0], [0, 0, 1, 0], [], []>} : vector<16x256xbf16>, vector<128x256xbf16>, vector<16x128xf32> -> vector<16x128xf32>
    %c0_43 = arith.constant 0 : index
    %c0_44 = arith.constant 0 : index
    %c0_45 = arith.constant 0 : index
    %91 = vector.load %arg13[%c0_43, %c0_44, %c0_45] : memref<1x1x128xf32, #tpu.memory_space<vmem>>, vector<1x1x128xf32>
    %92 = vector.shape_cast %91 : vector<1x1x128xf32> to vector<1x128xf32>
    %93 = vector.broadcast %92 : vector<1x128xf32> to vector<16x128xf32>
    %94 = arith.addf %90, %93 : vector<16x128xf32>
    %95 = arith.addf %76, %94 : vector<16x128xf32>
    %c0_46 = arith.constant 0 : index
    %c0_47 = arith.constant 0 : index
    %c0_48 = arith.constant 0 : index
    %96 = vector.load %arg14[%c0_46, %c0_47, %c0_48] : memref<1x1x128xf32, #tpu.memory_space<vmem>>, vector<1x1x128xf32>
    %97 = vector.shape_cast %96 : vector<1x1x128xf32> to vector<1x128xf32>
    %c0_49 = arith.constant 0 : index
    %c0_50 = arith.constant 0 : index
    %c0_51 = arith.constant 0 : index
    %98 = vector.load %arg15[%c0_49, %c0_50, %c0_51] : memref<1x1x128xf32, #tpu.memory_space<vmem>>, vector<1x1x128xf32>
    %99 = vector.shape_cast %98 : vector<1x1x128xf32> to vector<1x128xf32>
    %cst_52 = arith.constant dense<0.000000e+00> : vector<16xf32>
    %100 = vector.multi_reduction <add>, %95, %cst_52 [1] : vector<16x128xf32> to vector<16xf32>
    %101 = vector.shape_cast %100 : vector<16xf32> to vector<16x1xf32>
    %cst_53 = arith.constant 1.280000e+02 : f32
    %102 = vector.broadcast %cst_53 : f32 to vector<16x1xf32>
    %103 = arith.divf %101, %102 : vector<16x1xf32>
    %104 = vector.broadcast %103 : vector<16x1xf32> to vector<16x128xf32>
    %105 = arith.subf %95, %104 : vector<16x128xf32>
    %106 = arith.mulf %105, %105 : vector<16x128xf32>
    %cst_54 = arith.constant dense<0.000000e+00> : vector<16xf32>
    %107 = vector.multi_reduction <add>, %106, %cst_54 [1] : vector<16x128xf32> to vector<16xf32>
    %108 = vector.shape_cast %107 : vector<16xf32> to vector<16x1xf32>
    %cst_55 = arith.constant 1.280000e+02 : f32
    %109 = vector.broadcast %cst_55 : f32 to vector<16x1xf32>
    %110 = arith.divf %108, %109 : vector<16x1xf32>
    %cst_56 = arith.constant 9.99999974E-6 : f32
    %111 = vector.broadcast %cst_56 : f32 to vector<16x1xf32>
    %112 = arith.addf %110, %111 : vector<16x1xf32>
    %113 = math.rsqrt %112 : vector<16x1xf32>
    %114 = vector.broadcast %113 : vector<16x1xf32> to vector<16x128xf32>
    %115 = arith.mulf %105, %114 : vector<16x128xf32>
    %116 = vector.broadcast %97 : vector<1x128xf32> to vector<16x128xf32>
    %117 = arith.mulf %115, %116 : vector<16x128xf32>
    %118 = vector.broadcast %99 : vector<1x128xf32> to vector<16x128xf32>
    %119 = arith.addf %117, %118 : vector<16x128xf32>
    %c0_57 = arith.constant 0 : index
    %c0_58 = arith.constant 0 : index
    %120 = vector.load %arg25[%c0_57, %c0_58] : memref<16x128xf32, #tpu.memory_space<vmem>>, vector<16x128xf32>
    tpu.vector_store %arg25[%c0_57, %c0_58], %119 {strides = array<i32>} : memref<16x128xf32, #tpu.memory_space<vmem>>, vector<16x128xf32>,
    %c3_i32 = arith.constant 3 : i32
    %121 = arith.cmpi eq, %arg0, %c3_i32 : i32
    %122 = arith.extui %121 : i1 to i32
    %c0_i32_59 = arith.constant 0 : i32
    %123 = arith.cmpi ne, %122, %c0_i32_59 : i32
    scf.if %123 {
      %124 = vector.shape_cast %119 : vector<16x128xf32> to vector<2x8x128xf32>
      %c0_60 = arith.constant 0 : index
      %c0_61 = arith.constant 0 : index
      %125 = vector.load %arg16[%c0_60, %c0_61] : memref<1x128xf32, #tpu.memory_space<vmem>>, vector<1x128xf32>
      %126 = vector.shape_cast %125 : vector<1x128xf32> to vector<1x1x128xf32>
      %127 = vector.broadcast %126 : vector<1x1x128xf32> to vector<2x8x128xf32>
      %128 = arith.mulf %124, %127 : vector<2x8x128xf32>
      %cst_62 = arith.constant dense<0.000000e+00> : vector<2x8xf32>
      %129 = vector.multi_reduction <add>, %128, %cst_62 [2] : vector<2x8x128xf32> to vector<2x8xf32>
      %c0_63 = arith.constant 0 : index
      %c0_64 = arith.constant 0 : index
      %130 = vector.load %arg17[%c0_63, %c0_64] : memref<1x1xf32, #tpu.memory_space<vmem>>, vector<1x1xf32>
      %131 = vector.broadcast %130 : vector<1x1xf32> to vector<2x8xf32>
      %132 = arith.addf %129, %131 : vector<2x8xf32>
      %cst_65 = arith.constant dense<0xFF800000> : vector<2xf32>
      %133 = vector.multi_reduction <maximumf>, %132, %cst_65 [1] : vector<2x8xf32> to vector<2xf32>
      %134 = vector.shape_cast %133 : vector<2xf32> to vector<2x1xf32>
      %135 = vector.broadcast %134 : vector<2x1xf32> to vector<2x8xf32>
      %136 = arith.subf %132, %135 : vector<2x8xf32>
      %137 = math.exp %136 : vector<2x8xf32>
      %cst_66 = arith.constant dense<0.000000e+00> : vector<2xf32>
      %138 = vector.multi_reduction <add>, %137, %cst_66 [1] : vector<2x8xf32> to vector<2xf32>
      %139 = vector.shape_cast %138 : vector<2xf32> to vector<2x1xf32>
      %140 = vector.broadcast %139 : vector<2x1xf32> to vector<2x8xf32>
      %141 = arith.divf %137, %140 : vector<2x8xf32>
      %142 = vector.shape_cast %141 : vector<2x8xf32> to vector<2x8x1xf32>
      %143 = vector.broadcast %142 : vector<2x8x1xf32> to vector<2x8x128xf32>
      %144 = arith.mulf %143, %124 : vector<2x8x128xf32>
      %cst_67 = arith.constant dense<0.000000e+00> : vector<2x128xf32>
      %145 = vector.multi_reduction <add>, %144, %cst_67 [1] : vector<2x8x128xf32> to vector<2x128xf32>
      %c0_68 = arith.constant 0 : index
      %c0_69 = arith.constant 0 : index
      %146 = vector.load %arg18[%c0_68, %c0_69] : memref<128x128xbf16, #tpu.memory_space<vmem>>, vector<128x128xbf16>
      %147 = arith.truncf %145 : vector<2x128xf32> to vector<2x128xbf16>
      %cst_70 = arith.constant dense<0.000000e+00> : vector<2x128xf32>
      %148 = tpu.matmul %147, %146, %cst_70 {dimension_numbers = #tpu.dot_dimension_numbers<[1], [1], [0], [0], [0, 0, 1, 0], [], []>} : vector<2x128xbf16>, vector<128x128xbf16>, vector<2x128xf32> -> vector<2x128xf32>
      %c0_71 = arith.constant 0 : index
      %c0_72 = arith.constant 0 : index
      %149 = vector.load %arg19[%c0_71, %c0_72] : memref<1x128xf32, #tpu.memory_space<vmem>>, vector<1x128xf32>
      %150 = vector.broadcast %149 : vector<1x128xf32> to vector<2x128xf32>
      %151 = arith.addf %148, %150 : vector<2x128xf32>
      %c0_73 = arith.constant 0 : index
      %c0_74 = arith.constant 0 : index
      %152 = vector.load %arg20[%c0_73, %c0_74] : memref<2x128xf32, #tpu.memory_space<vmem>>, vector<2x128xf32>
      %c0_75 = arith.constant 0 : index
      %c0_76 = arith.constant 0 : index
      %153 = vector.load %arg21[%c0_75, %c0_76] : memref<128x128xbf16, #tpu.memory_space<vmem>>, vector<128x128xbf16>
      %154 = arith.truncf %152 : vector<2x128xf32> to vector<2x128xbf16>
      %cst_77 = arith.constant dense<0.000000e+00> : vector<2x128xf32>
      %155 = tpu.matmul %154, %153, %cst_77 {dimension_numbers = #tpu.dot_dimension_numbers<[1], [1], [0], [0], [0, 0, 1, 0], [], []>} : vector<2x128xbf16>, vector<128x128xbf16>, vector<2x128xf32> -> vector<2x128xf32>
      %c0_78 = arith.constant 0 : index
      %c0_79 = arith.constant 0 : index
      %156 = vector.load %arg22[%c0_78, %c0_79] : memref<128x128xbf16, #tpu.memory_space<vmem>>, vector<128x128xbf16>
      %157 = arith.truncf %151 : vector<2x128xf32> to vector<2x128xbf16>
      %cst_80 = arith.constant dense<0.000000e+00> : vector<2x128xf32>
      %158 = tpu.matmul %157, %156, %cst_80 {dimension_numbers = #tpu.dot_dimension_numbers<[1], [1], [0], [0], [0, 0, 1, 0], [], []>} : vector<2x128xbf16>, vector<128x128xbf16>, vector<2x128xf32> -> vector<2x128xf32>
      %159 = arith.addf %155, %158 : vector<2x128xf32>
      %c0_81 = arith.constant 0 : index
      %c0_82 = arith.constant 0 : index
      %160 = vector.load %arg23[%c0_81, %c0_82] : memref<1x128xf32, #tpu.memory_space<vmem>>, vector<1x128xf32>
      %161 = vector.broadcast %160 : vector<1x128xf32> to vector<2x128xf32>
      %162 = arith.addf %159, %161 : vector<2x128xf32>
      %c0_83 = arith.constant 0 : index
      %c0_84 = arith.constant 0 : index
      %163 = vector.load %arg24[%c0_83, %c0_84] : memref<2x128xf32, #tpu.memory_space<vmem>>, vector<2x128xf32>
      tpu.vector_store %arg24[%c0_83, %c0_84], %162 {strides = array<i32>} : memref<2x128xf32, #tpu.memory_space<vmem>>, vector<2x128xf32>,
    } else {
    }
    return
  }
  func.func @transform_0(%arg0: i32) -> (i32, i32, i32) {
    %c0_i32 = arith.constant 0 : i32
    %c0_i32_0 = arith.constant 0 : i32
    %c0_i32_1 = arith.constant 0 : i32
    %c0_i32_2 = arith.constant 0 : i32
    return %c0_i32, %c0_i32_0, %c0_i32_1 : i32, i32, i32
  }
  func.func @transform_1(%arg0: i32) -> (i32, i32) {
    %c0_i32 = arith.constant 0 : i32
    %c0_i32_0 = arith.constant 0 : i32
    %c0_i32_1 = arith.constant 0 : i32
    return %c0_i32, %c0_i32_0 : i32, i32
  }
  func.func @transform_2(%arg0: i32) -> (i32, i32) {
    %c0_i32 = arith.constant 0 : i32
    %c0_i32_0 = arith.constant 0 : i32
    %c0_i32_1 = arith.constant 0 : i32
    return %c0_i32, %c0_i32_0 : i32, i32
  }
  func.func @transform_3(%arg0: i32) -> (i32, i32, i32) {
    %c0_i32 = arith.constant 0 : i32
    %c0_i32_0 = arith.constant 0 : i32
    %c0_i32_1 = arith.constant 0 : i32
    return %arg0, %c0_i32, %c0_i32_0 : i32, i32, i32
  }
  func.func @transform_4(%arg0: i32) -> (i32, i32, i32) {
    %c0_i32 = arith.constant 0 : i32
    %c0_i32_0 = arith.constant 0 : i32
    %c0_i32_1 = arith.constant 0 : i32
    return %arg0, %c0_i32, %c0_i32_0 : i32, i32, i32
  }
  func.func @transform_5(%arg0: i32) -> (i32, i32, i32) {
    %c0_i32 = arith.constant 0 : i32
    %c0_i32_0 = arith.constant 0 : i32
    %c0_i32_1 = arith.constant 0 : i32
    return %arg0, %c0_i32, %c0_i32_0 : i32, i32, i32
  }
  func.func @transform_6(%arg0: i32) -> (i32, i32, i32) {
    %c0_i32 = arith.constant 0 : i32
    %c0_i32_0 = arith.constant 0 : i32
    %c0_i32_1 = arith.constant 0 : i32
    return %arg0, %c0_i32, %c0_i32_0 : i32, i32, i32
  }
  func.func @transform_7(%arg0: i32) -> (i32, i32, i32) {
    %c0_i32 = arith.constant 0 : i32
    %c0_i32_0 = arith.constant 0 : i32
    %c0_i32_1 = arith.constant 0 : i32
    return %arg0, %c0_i32, %c0_i32_0 : i32, i32, i32
  }
  func.func @transform_8(%arg0: i32) -> (i32, i32, i32) {
    %c0_i32 = arith.constant 0 : i32
    %c0_i32_0 = arith.constant 0 : i32
    %c0_i32_1 = arith.constant 0 : i32
    return %arg0, %c0_i32, %c0_i32_0 : i32, i32, i32
  }
  func.func @transform_9(%arg0: i32) -> (i32, i32, i32) {
    %c0_i32 = arith.constant 0 : i32
    %c0_i32_0 = arith.constant 0 : i32
    %c0_i32_1 = arith.constant 0 : i32
    return %arg0, %c0_i32, %c0_i32_0 : i32, i32, i32
  }
  func.func @transform_10(%arg0: i32) -> (i32, i32, i32) {
    %c0_i32 = arith.constant 0 : i32
    %c0_i32_0 = arith.constant 0 : i32
    %c0_i32_1 = arith.constant 0 : i32
    return %arg0, %c0_i32, %c0_i32_0 : i32, i32, i32
  }
  func.func @transform_11(%arg0: i32) -> (i32, i32, i32) {
    %c0_i32 = arith.constant 0 : i32
    %c0_i32_0 = arith.constant 0 : i32
    %c0_i32_1 = arith.constant 0 : i32
    return %arg0, %c0_i32, %c0_i32_0 : i32, i32, i32
  }
  func.func @transform_12(%arg0: i32) -> (i32, i32, i32) {
    %c0_i32 = arith.constant 0 : i32
    %c0_i32_0 = arith.constant 0 : i32
    %c0_i32_1 = arith.constant 0 : i32
    return %arg0, %c0_i32, %c0_i32_0 : i32, i32, i32
  }
  func.func @transform_13(%arg0: i32) -> (i32, i32, i32) {
    %c0_i32 = arith.constant 0 : i32
    %c0_i32_0 = arith.constant 0 : i32
    %c0_i32_1 = arith.constant 0 : i32
    return %arg0, %c0_i32, %c0_i32_0 : i32, i32, i32
  }
  func.func @transform_14(%arg0: i32) -> (i32, i32, i32) {
    %c0_i32 = arith.constant 0 : i32
    %c0_i32_0 = arith.constant 0 : i32
    %c0_i32_1 = arith.constant 0 : i32
    return %arg0, %c0_i32, %c0_i32_0 : i32, i32, i32
  }
  func.func @transform_15(%arg0: i32) -> (i32, i32) {
    %c0_i32 = arith.constant 0 : i32
    %c0_i32_0 = arith.constant 0 : i32
    %c0_i32_1 = arith.constant 0 : i32
    return %c0_i32, %c0_i32_0 : i32, i32
  }
  func.func @transform_16(%arg0: i32) -> (i32, i32) {
    %c0_i32 = arith.constant 0 : i32
    %c0_i32_0 = arith.constant 0 : i32
    %c0_i32_1 = arith.constant 0 : i32
    return %c0_i32, %c0_i32_0 : i32, i32
  }
  func.func @transform_17(%arg0: i32) -> (i32, i32) {
    %c0_i32 = arith.constant 0 : i32
    %c0_i32_0 = arith.constant 0 : i32
    %c0_i32_1 = arith.constant 0 : i32
    return %c0_i32, %c0_i32_0 : i32, i32
  }
  func.func @transform_18(%arg0: i32) -> (i32, i32) {
    %c0_i32 = arith.constant 0 : i32
    %c0_i32_0 = arith.constant 0 : i32
    %c0_i32_1 = arith.constant 0 : i32
    return %c0_i32, %c0_i32_0 : i32, i32
  }
  func.func @transform_19(%arg0: i32) -> (i32, i32) {
    %c0_i32 = arith.constant 0 : i32
    %c0_i32_0 = arith.constant 0 : i32
    %c0_i32_1 = arith.constant 0 : i32
    return %c0_i32, %c0_i32_0 : i32, i32
  }
  func.func @transform_20(%arg0: i32) -> (i32, i32) {
    %c0_i32 = arith.constant 0 : i32
    %c0_i32_0 = arith.constant 0 : i32
    %c0_i32_1 = arith.constant 0 : i32
    return %c0_i32, %c0_i32_0 : i32, i32
  }
  func.func @transform_21(%arg0: i32) -> (i32, i32) {
    %c0_i32 = arith.constant 0 : i32
    %c0_i32_0 = arith.constant 0 : i32
    %c0_i32_1 = arith.constant 0 : i32
    return %c0_i32, %c0_i32_0 : i32, i32
  }
  func.func @transform_22(%arg0: i32) -> (i32, i32) {
    %c0_i32 = arith.constant 0 : i32
    %c0_i32_0 = arith.constant 0 : i32
    %c0_i32_1 = arith.constant 0 : i32
    return %c0_i32, %c0_i32_0 : i32, i32
  }
  func.func @transform_23(%arg0: i32) -> (i32, i32) {
    %c0_i32 = arith.constant 0 : i32
    %c0_i32_0 = arith.constant 0 : i32
    %c0_i32_1 = arith.constant 0 : i32
    return %c0_i32, %c0_i32_0 : i32, i32
  }
}

</mosaic_0001>

<llo_original>
// kernel: spectral_temporal_forward.3
$region0: #{spectral_temporal_forward.3}
  #allocation0 [shape = 'u32[]', space=smem, size = 0x4, offset = 0x4, fixed_abs, tag = 'smem constant byte address 0x4 - core index']
  #allocation1 [shape = 'u32[144,128]{1,0:T(1,128)}', space=vmem, size = 0x12000, scoped, tag = 'internal scratch']
  #allocation2 [shape = 'f32[16,128]{1,0:T(8,128)}', space=vmem, size = 0x2000, scoped, tag = 'scratch operand']
  #allocation3 [shape = 'f32[1,1]{1,0:T(1,128)S(1)}', space=vmem, size = 0x200, scoped, tag = 'scoped memory for spectral_temporal_forward.3']
  %s0 = inlined_call_operand.vmem [shape: f32[2,8,2], index: 0, kind: input, shape index: {}]
  %s1 = inlined_call_operand.vmem [shape: f32[2,128], index: 1, kind: input, shape index: {}]
  %s2 = inlined_call_operand.vmem [shape: f32[8,128], index: 2, kind: input, shape index: {}]
  %s3 = inlined_call_operand.vmem [shape: bf16[4,384,128], index: 3, kind: input, shape index: {}]
  %s4 = inlined_call_operand.vmem [shape: f32[4,384,1], index: 4, kind: input, shape index: {}]
  %s5 = inlined_call_operand.vmem [shape: bf16[4,128,128], index: 5, kind: input, shape index: {}]
  %s6 = inlined_call_operand.vmem [shape: f32[4,128,1], index: 6, kind: input, shape index: {}]
  %s7 = inlined_call_operand.vmem [shape: f32[4,1,128], index: 7, kind: input, shape index: {}]
  %s8 = inlined_call_operand.vmem [shape: f32[4,1,128], index: 8, kind: input, shape index: {}]
  %s9 = inlined_call_operand.vmem [shape: bf16[4,256,128], index: 9, kind: input, shape index: {}]
  %s10 = inlined_call_operand.vmem [shape: f32[4,1,256], index: 10, kind: input, shape index: {}]
  %s11 = inlined_call_operand.vmem [shape: bf16[4,128,256], index: 11, kind: input, shape index: {}]
  %s12 = inlined_call_operand.vmem [shape: f32[4,1,128], index: 12, kind: input, shape index: {}]
  %s13 = inlined_call_operand.vmem [shape: f32[4,1,128], index: 13, kind: input, shape index: {}]
  %s14 = inlined_call_operand.vmem [shape: f32[4,1,128], index: 14, kind: input, shape index: {}]
  %s15 = inlined_call_operand.vmem [shape: f32[1,128], index: 15, kind: input, shape index: {}]
  %s16 = inlined_call_operand.<no memory space> [shape: f32[1,1], index: 16, kind: input, shape index: {}]
  %s17 = inlined_call_operand.vmem [shape: bf16[128,128], index: 17, kind: input, shape index: {}]
  %s18 = inlined_call_operand.vmem [shape: f32[1,128], index: 18, kind: input, shape index: {}]
  %s19 = inlined_call_operand.vmem [shape: f32[2,128], index: 19, kind: input, shape index: {}]
  %s20 = inlined_call_operand.vmem [shape: bf16[128,128], index: 20, kind: input, shape index: {}]
  %s21 = inlined_call_operand.vmem [shape: bf16[128,128], index: 21, kind: input, shape index: {}]
  %s22 = inlined_call_operand.vmem [shape: f32[1,128], index: 22, kind: input, shape index: {}]
  %s23 = inlined_call_operand.hbm [shape: f32[2,128], index: 23, kind: output, shape index: {}]
  %s24 = sld [smem:[#allocation0]]
  $region133: #{spectral_temporal_forward.3} parent=0
    _
  %s26 = ssub.s32 1, %s24
  %s27 = scalar_select 0, %s26, %s24
  %v28 = vstv %s16
  %29 = vst [vmem:[#allocation3] sm:$0x1] %v28
  $region1: #{spectral_temporal_forward.3} parent=0
    #allocation4 [shape = 'u8[1024]{0}', space=vmem, size = 0x400, scoped, tag = 'output window, operand 0, single buffered']
    #allocation5 [shape = 's32[2]{0}', space=sflag, size = 0x8, scoped, tag = 'scoped memory for spectral_temporal_forward.3']
    %30 = vsyncpa [#allocation5], 0
    loop: start=0, step=1, limit=6
    $region2: #{spectral_temporal_forward.3} parent=1 // loop_pre_header
      _
    $region3: #{spectral_temporal_forward.3} parent=1 // loop_header
      %s32 = sphi 0, %s36
      %p33 = scmp.ge.s32.totalorder %s32, 6
      %s40 = sphi 0, %s40
      %s42 = sphi 0, %s40
      %s43 = sphi 0, %s42
      %s57 = sphi 0, %s43
      %s61 = sphi 0, %s61
      %s63 = sphi 0, %s61
      %s64 = sphi 0, %s63
      %s78 = sphi 0, %s64
      %s82 = sphi 0, %s82
      %s84 = sphi 0, %s82
      %s85 = sphi 0, %s84
      %s99 = sphi 0, %s85
      %s105 = sphi 0, %s107
      %s108 = sphi 0, %s105
      %s109 = sphi 0, %s108
      %s125 = sphi 0, %s109
      %s131 = sphi 0, %s133
      %s134 = sphi 0, %s131
      %s135 = sphi 0, %s134
      %s151 = sphi 0, %s135
      %s157 = sphi 0, %s159
      %s160 = sphi 0, %s157
      %s161 = sphi 0, %s160
      %s177 = sphi 0, %s161
      %s183 = sphi 0, %s185
      %s186 = sphi 0, %s183
      %s187 = sphi 0, %s186
      %s203 = sphi 0, %s187
      %s209 = sphi 0, %s211
      %s212 = sphi 0, %s209
      %s213 = sphi 0, %s212
      %s229 = sphi 0, %s213
      %s235 = sphi 0, %s237
      %s238 = sphi 0, %s235
      %s239 = sphi 0, %s238
      %s255 = sphi 0, %s239
      %s261 = sphi 0, %s263
      %s264 = sphi 0, %s261
      %s265 = sphi 0, %s264
      %s281 = sphi 0, %s265
      %s287 = sphi 0, %s289
      %s290 = sphi 0, %s287
      %s291 = sphi 0, %s290
      %s307 = sphi 0, %s291
      %s313 = sphi 0, %s315
      %s316 = sphi 0, %s313
      %s317 = sphi 0, %s316
      %s333 = sphi 0, %s317
      %s339 = sphi 0, %s341
      %s342 = sphi 0, %s339
      %s343 = sphi 0, %s342
      %s359 = sphi 0, %s343
      %s365 = sphi 0, %s367
      %s368 = sphi 0, %s365
      %s369 = sphi 0, %s368
      %s385 = sphi 0, %s369
      %s391 = sphi 0, %s393
      %s394 = sphi 0, %s391
      %s395 = sphi 0, %s394
      %s411 = sphi 0, %s395
      %s415 = sphi 0, %s415
      %s417 = sphi 0, %s415
      %s418 = sphi 0, %s417
      %s432 = sphi 0, %s418
      %s436 = sphi 0, %s436
      %s438 = sphi 0, %s436
      %s439 = sphi 0, %s438
      %s453 = sphi 0, %s439
      %s457 = sphi 0, %s457
      %s459 = sphi 0, %s457
      %s460 = sphi 0, %s459
      %s474 = sphi 0, %s460
      %s478 = sphi 0, %s478
      %s480 = sphi 0, %s478
      %s481 = sphi 0, %s480
      %s495 = sphi 0, %s481
      %s499 = sphi 0, %s499
      %s501 = sphi 0, %s499
      %s502 = sphi 0, %s501
      %s516 = sphi 0, %s502
      %s520 = sphi 0, %s520
      %s522 = sphi 0, %s520
      %s523 = sphi 0, %s522
      %s537 = sphi 0, %s523
      %s541 = sphi 0, %s541
      %s543 = sphi 0, %s541
      %s544 = sphi 0, %s543
      %s558 = sphi 0, %s544
      %s562 = sphi 0, %s562
      %s564 = sphi 0, %s562
      %s565 = sphi 0, %s564
      %s579 = sphi 0, %s565
      %s583 = sphi 0, %s583
      %s585 = sphi 0, %s583
      %s586 = sphi 0, %s585
      %s600 = sphi 0, %s586
    $region4: #{spectral_temporal_forward.3} parent=1 // loop_header_branch
      %35 = sbr.rel (%p33) target = $region8
    $region5: #{spectral_temporal_forward.3} parent=1 // loop_body
      %s37 = ssub.s32 %s32, 1
      %s38 = ssub.s32 %s32, 2
      %s39 = sadd.s32 %s32, 1
      %s41 = sadd.s32 %s40, 1
      %p44 = scmp.eq.s32.totalorder %s32, 3
      %p45 = scmp.ne.s32.totalorder %s40, %s42
      %p46 = scmp.eq.s32.totalorder %s32, 0
      %p47 = por %p45, %p46
      %p48 = scmp.ne.s32.totalorder %s40, %s42
      %p49 = scmp.eq.s32.totalorder %s37, 3
      %p50 = por %p48, %p49
      %p51 = scmp.ne.s32.totalorder %s42, %s43
      %p52 = scmp.eq.s32.totalorder %s37, 0
      %p53 = por %p51, %p52
      %p54 = scmp.ne.s32.totalorder %s42, %s43
      %p55 = scmp.eq.s32.totalorder %s38, 3
      %p56 = por %p54, %p55
      %p58 = scmp.ne.s32.totalorder %s43, %s57
      %p59 = scmp.eq.s32.totalorder %s38, 0
      %p60 = por %p58, %p59
      %s62 = sadd.s32 %s61, 1
      %p65 = scmp.eq.s32.totalorder %s32, 3
      %p66 = scmp.ne.s32.totalorder %s61, %s63
      %p67 = scmp.eq.s32.totalorder %s32, 0
      %p68 = por %p66, %p67
      %p69 = scmp.ne.s32.totalorder %s61, %s63
      %p70 = scmp.eq.s32.totalorder %s37, 3
      %p71 = por %p69, %p70
      %p72 = scmp.ne.s32.totalorder %s63, %s64
      %p73 = scmp.eq.s32.totalorder %s37, 0
      %p74 = por %p72, %p73
      %p75 = scmp.ne.s32.totalorder %s63, %s64
      %p76 = scmp.eq.s32.totalorder %s38, 3
      %p77 = por %p75, %p76
      %p79 = scmp.ne.s32.totalorder %s64, %s78
      %p80 = scmp.eq.s32.totalorder %s38, 0
      %p81 = por %p79, %p80
      %s83 = sadd.s32 %s82, 1
      %p86 = scmp.eq.s32.totalorder %s32, 3
      %p87 = scmp.ne.s32.totalorder %s82, %s84
      %p88 = scmp.eq.s32.totalorder %s32, 0
      %p89 = por %p87, %p88
      %p90 = scmp.ne.s32.totalorder %s82, %s84
      %p91 = scmp.eq.s32.totalorder %s37, 3
      %p92 = por %p90, %p91
      %p93 = scmp.ne.s32.totalorder %s84, %s85
      %p94 = scmp.eq.s32.totalorder %s37, 0
      %p95 = por %p93, %p94
      %p96 = scmp.ne.s32.totalorder %s84, %s85
      %p97 = scmp.eq.s32.totalorder %s38, 3
      %p98 = por %p96, %p97
      %p100 = scmp.ne.s32.totalorder %s85, %s99
      %p101 = scmp.eq.s32.totalorder %s38, 0
      %p102 = por %p100, %p101
      %s103 = ssub.s32 %s32, %s39
      %p104 = scmp.eq.s32.totalorder %s103, 0
      %s106 = sadd.s32 %s105, 1
      %s107 = scalar_select %p104, %s105, %s106
      %p110 = pneg %p104
      %p111 = scmp.eq.s32.totalorder %s32, 3
      %p112 = por %p110, %p111
      %p113 = scmp.ne.s32.totalorder %s105, %s108
      %p114 = scmp.eq.s32.totalorder %s32, 0
      %p115 = por %p113, %p114
      %p116 = scmp.ne.s32.totalorder %s105, %s108
      %p117 = scmp.eq.s32.totalorder %s37, 3
      %p118 = por %p116, %p117
      %p119 = scmp.ne.s32.totalorder %s108, %s109
      %p120 = scmp.eq.s32.totalorder %s37, 0
      %p121 = por %p119, %p120
      %p122 = scmp.ne.s32.totalorder %s108, %s109
      %p123 = scmp.eq.s32.totalorder %s38, 3
      %p124 = por %p122, %p123
      %p126 = scmp.ne.s32.totalorder %s109, %s125
      %p127 = scmp.eq.s32.totalorder %s38, 0
      %p128 = por %p126, %p127
      %s129 = ssub.s32 %s32, %s39
      %p130 = scmp.eq.s32.totalorder %s129, 0
      %s132 = sadd.s32 %s131, 1
      %s133 = scalar_select %p130, %s131, %s132
      %p136 = pneg %p130
      %p137 = scmp.eq.s32.totalorder %s32, 3
      %p138 = por %p136, %p137
      %p139 = scmp.ne.s32.totalorder %s131, %s134
      %p140 = scmp.eq.s32.totalorder %s32, 0
      %p141 = por %p139, %p140
      %p142 = scmp.ne.s32.totalorder %s131, %s134
      %p143 = scmp.eq.s32.totalorder %s37, 3
      %p144 = por %p142, %p143
      %p145 = scmp.ne.s32.totalorder %s134, %s135
      %p146 = scmp.eq.s32.totalorder %s37, 0
      %p147 = por %p145, %p146
      %p148 = scmp.ne.s32.totalorder %s134, %s135
      %p149 = scmp.eq.s32.totalorder %s38, 3
      %p150 = por %p148, %p149
      %p152 = scmp.ne.s32.totalorder %s135, %s151
      %p153 = scmp.eq.s32.totalorder %s38, 0
      %p154 = por %p152, %p153
      %s155 = ssub.s32 %s32, %s39
      %p156 = scmp.eq.s32.totalorder %s155, 0
      %s158 = sadd.s32 %s157, 1
      %s159 = scalar_select %p156, %s157, %s158
      %p162 = pneg %p156
      %p163 = scmp.eq.s32.totalorder %s32, 3
      %p164 = por %p162, %p163
      %p165 = scmp.ne.s32.totalorder %s157, %s160
      %p166 = scmp.eq.s32.totalorder %s32, 0
      %p167 = por %p165, %p166
      %p168 = scmp.ne.s32.totalorder %s157, %s160
      %p169 = scmp.eq.s32.totalorder %s37, 3
      %p170 = por %p168, %p169
      %p171 = scmp.ne.s32.totalorder %s160, %s161
      %p172 = scmp.eq.s32.totalorder %s37, 0
      %p173 = por %p171, %p172
      %p174 = scmp.ne.s32.totalorder %s160, %s161
      %p175 = scmp.eq.s32.totalorder %s38, 3
      %p176 = por %p174, %p175
      %p178 = scmp.ne.s32.totalorder %s161, %s177
      %p179 = scmp.eq.s32.totalorder %s38, 0
      %p180 = por %p178, %p179
      %s181 = ssub.s32 %s32, %s39
      %p182 = scmp.eq.s32.totalorder %s181, 0
      %s184 = sadd.s32 %s183, 1
      %s185 = scalar_select %p182, %s183, %s184
      %p188 = pneg %p182
      %p189 = scmp.eq.s32.totalorder %s32, 3
      %p190 = por %p188, %p189
      %p191 = scmp.ne.s32.totalorder %s183, %s186
      %p192 = scmp.eq.s32.totalorder %s32, 0
      %p193 = por %p191, %p192
      %p194 = scmp.ne.s32.totalorder %s183, %s186
      %p195 = scmp.eq.s32.totalorder %s37, 3
      %p196 = por %p194, %p195
      %p197 = scmp.ne.s32.totalorder %s186, %s187
      %p198 = scmp.eq.s32.totalorder %s37, 0
      %p199 = por %p197, %p198
      %p200 = scmp.ne.s32.totalorder %s186, %s187
      %p201 = scmp.eq.s32.totalorder %s38, 3
      %p202 = por %p200, %p201
      %p204 = scmp.ne.s32.totalorder %s187, %s203
      %p205 = scmp.eq.s32.totalorder %s38, 0
      %p206 = por %p204, %p205
      %s207 = ssub.s32 %s32, %s39
      %p208 = scmp.eq.s32.totalorder %s207, 0
      %s210 = sadd.s32 %s209, 1
      %s211 = scalar_select %p208, %s209, %s210
      %p214 = pneg %p208
      %p215 = scmp.eq.s32.totalorder %s32, 3
      %p216 = por %p214, %p215
      %p217 = scmp.ne.s32.totalorder %s209, %s212
      %p218 = scmp.eq.s32.totalorder %s32, 0
      %p219 = por %p217, %p218
      %p220 = scmp.ne.s32.totalorder %s209, %s212
      %p221 = scmp.eq.s32.totalorder %s37, 3
      %p222 = por %p220, %p221
      %p223 = scmp.ne.s32.totalorder %s212, %s213
      %p224 = scmp.eq.s32.totalorder %s37, 0
      %p225 = por %p223, %p224
      %p226 = scmp.ne.s32.totalorder %s212, %s213
      %p227 = scmp.eq.s32.totalorder %s38, 3
      %p228 = por %p226, %p227
      %p230 = scmp.ne.s32.totalorder %s213, %s229
      %p231 = scmp.eq.s32.totalorder %s38, 0
      %p232 = por %p230, %p231
      %s233 = ssub.s32 %s32, %s39
      %p234 = scmp.eq.s32.totalorder %s233, 0
      %s236 = sadd.s32 %s235, 1
      %s237 = scalar_select %p234, %s235, %s236
      %p240 = pneg %p234
      %p241 = scmp.eq.s32.totalorder %s32, 3
      %p242 = por %p240, %p241
      %p243 = scmp.ne.s32.totalorder %s235, %s238
      %p244 = scmp.eq.s32.totalorder %s32, 0
      %p245 = por %p243, %p244
      %p246 = scmp.ne.s32.totalorder %s235, %s238
      %p247 = scmp.eq.s32.totalorder %s37, 3
      %p248 = por %p246, %p247
      %p249 = scmp.ne.s32.totalorder %s238, %s239
      %p250 = scmp.eq.s32.totalorder %s37, 0
      %p251 = por %p249, %p250
      %p252 = scmp.ne.s32.totalorder %s238, %s239
      %p253 = scmp.eq.s32.totalorder %s38, 3
      %p254 = por %p252, %p253
      %p256 = scmp.ne.s32.totalorder %s239, %s255
      %p257 = scmp.eq.s32.totalorder %s38, 0
      %p258 = por %p256, %p257
      %s259 = ssub.s32 %s32, %s39
      %p260 = scmp.eq.s32.totalorder %s259, 0
      %s262 = sadd.s32 %s261, 1
      %s263 = scalar_select %p260, %s261, %s262
      %p266 = pneg %p260
      %p267 = scmp.eq.s32.totalorder %s32, 3
      %p268 = por %p266, %p267
      %p269 = scmp.ne.s32.totalorder %s261, %s264
      %p270 = scmp.eq.s32.totalorder %s32, 0
      %p271 = por %p269, %p270
      %p272 = scmp.ne.s32.totalorder %s261, %s264
      %p273 = scmp.eq.s32.totalorder %s37, 3
      %p274 = por %p272, %p273
      %p275 = scmp.ne.s32.totalorder %s264, %s265
      %p276 = scmp.eq.s32.totalorder %s37, 0
      %p277 = por %p275, %p276
      %p278 = scmp.ne.s32.totalorder %s264, %s265
      %p279 = scmp.eq.s32.totalorder %s38, 3
      %p280 = por %p278, %p279
      %p282 = scmp.ne.s32.totalorder %s265, %s281
      %p283 = scmp.eq.s32.totalorder %s38, 0
      %p284 = por %p282, %p283
      %s285 = ssub.s32 %s32, %s39
      %p286 = scmp.eq.s32.totalorder %s285, 0
      %s288 = sadd.s32 %s287, 1
      %s289 = scalar_select %p286, %s287, %s288
      %p292 = pneg %p286
      %p293 = scmp.eq.s32.totalorder %s32, 3
      %p294 = por %p292, %p293
      %p295 = scmp.ne.s32.totalorder %s287, %s290
      %p296 = scmp.eq.s32.totalorder %s32, 0
      %p297 = por %p295, %p296
      %p298 = scmp.ne.s32.totalorder %s287, %s290
      %p299 = scmp.eq.s32.totalorder %s37, 3
      %p300 = por %p298, %p299
      %p301 = scmp.ne.s32.totalorder %s290, %s291
      %p302 = scmp.eq.s32.totalorder %s37, 0
      %p303 = por %p301, %p302
      %p304 = scmp.ne.s32.totalorder %s290, %s291
      %p305 = scmp.eq.s32.totalorder %s38, 3
      %p306 = por %p304, %p305
      %p308 = scmp.ne.s32.totalorder %s291, %s307
      %p309 = scmp.eq.s32.totalorder %s38, 0
      %p310 = por %p308, %p309
      %s311 = ssub.s32 %s32, %s39
      %p312 = scmp.eq.s32.totalorder %s311, 0
      %s314 = sadd.s32 %s313, 1
      %s315 = scalar_select %p312, %s313, %s314
      %p318 = pneg %p312
      %p319 = scmp.eq.s32.totalorder %s32, 3
      %p320 = por %p318, %p319
      %p321 = scmp.ne.s32.totalorder %s313, %s316
      %p322 = scmp.eq.s32.totalorder %s32, 0
      %p323 = por %p321, %p322
      %p324 = scmp.ne.s32.totalorder %s313, %s316
      %p325 = scmp.eq.s32.totalorder %s37, 3
      %p326 = por %p324, %p325
      %p327 = scmp.ne.s32.totalorder %s316, %s317
      %p328 = scmp.eq.s32.totalorder %s37, 0
      %p329 = por %p327, %p328
      %p330 = scmp.ne.s32.totalorder %s316, %s317
      %p331 = scmp.eq.s32.totalorder %s38, 3
      %p332 = por %p330, %p331
      %p334 = scmp.ne.s32.totalorder %s317, %s333
      %p335 = scmp.eq.s32.totalorder %s38, 0
      %p336 = por %p334, %p335
      %s337 = ssub.s32 %s32, %s39
      %p338 = scmp.eq.s32.totalorder %s337, 0
      %s340 = sadd.s32 %s339, 1
      %s341 = scalar_select %p338, %s339, %s340
      %p344 = pneg %p338
      %p345 = scmp.eq.s32.totalorder %s32, 3
      %p346 = por %p344, %p345
      %p347 = scmp.ne.s32.totalorder %s339, %s342
      %p348 = scmp.eq.s32.totalorder %s32, 0
      %p349 = por %p347, %p348
      %p350 = scmp.ne.s32.totalorder %s339, %s342
      %p351 = scmp.eq.s32.totalorder %s37, 3
      %p352 = por %p350, %p351
      %p353 = scmp.ne.s32.totalorder %s342, %s343
      %p354 = scmp.eq.s32.totalorder %s37, 0
      %p355 = por %p353, %p354
      %p356 = scmp.ne.s32.totalorder %s342, %s343
      %p357 = scmp.eq.s32.totalorder %s38, 3
      %p358 = por %p356, %p357
      %p360 = scmp.ne.s32.totalorder %s343, %s359
      %p361 = scmp.eq.s32.totalorder %s38, 0
      %p362 = por %p360, %p361
      %s363 = ssub.s32 %s32, %s39
      %p364 = scmp.eq.s32.totalorder %s363, 0
      %s366 = sadd.s32 %s365, 1
      %s367 = scalar_select %p364, %s365, %s366
      %p370 = pneg %p364
      %p371 = scmp.eq.s32.totalorder %s32, 3
      %p372 = por %p370, %p371
      %p373 = scmp.ne.s32.totalorder %s365, %s368
      %p374 = scmp.eq.s32.totalorder %s32, 0
      %p375 = por %p373, %p374
      %p376 = scmp.ne.s32.totalorder %s365, %s368
      %p377 = scmp.eq.s32.totalorder %s37, 3
      %p378 = por %p376, %p377
      %p379 = scmp.ne.s32.totalorder %s368, %s369
      %p380 = scmp.eq.s32.totalorder %s37, 0
      %p381 = por %p379, %p380
      %p382 = scmp.ne.s32.totalorder %s368, %s369
      %p383 = scmp.eq.s32.totalorder %s38, 3
      %p384 = por %p382, %p383
      %p386 = scmp.ne.s32.totalorder %s369, %s385
      %p387 = scmp.eq.s32.totalorder %s38, 0
      %p388 = por %p386, %p387
      %s389 = ssub.s32 %s32, %s39
      %p390 = scmp.eq.s32.totalorder %s389, 0
      %s392 = sadd.s32 %s391, 1
      %s393 = scalar_select %p390, %s391, %s392
      %p396 = pneg %p390
      %p397 = scmp.eq.s32.totalorder %s32, 3
      %p398 = por %p396, %p397
      %p399 = scmp.ne.s32.totalorder %s391, %s394
      %p400 = scmp.eq.s32.totalorder %s32, 0
      %p401 = por %p399, %p400
      %p402 = scmp.ne.s32.totalorder %s391, %s394
      %p403 = scmp.eq.s32.totalorder %s37, 3
      %p404 = por %p402, %p403
      %p405 = scmp.ne.s32.totalorder %s394, %s395
      %p406 = scmp.eq.s32.totalorder %s37, 0
      %p407 = por %p405, %p406
      %p408 = scmp.ne.s32.totalorder %s394, %s395
      %p409 = scmp.eq.s32.totalorder %s38, 3
      %p410 = por %p408, %p409
      %p412 = scmp.ne.s32.totalorder %s395, %s411
      %p413 = scmp.eq.s32.totalorder %s38, 0
      %p414 = por %p412, %p413
      %s416 = sadd.s32 %s415, 1
      %p419 = scmp.eq.s32.totalorder %s32, 3
      %p420 = scmp.ne.s32.totalorder %s415, %s417
      %p421 = scmp.eq.s32.totalorder %s32, 0
      %p422 = por %p420, %p421
      %p423 = scmp.ne.s32.totalorder %s415, %s417
      %p424 = scmp.eq.s32.totalorder %s37, 3
      %p425 = por %p423, %p424
      %p426 = scmp.ne.s32.totalorder %s417, %s418
      %p427 = scmp.eq.s32.totalorder %s37, 0
      %p428 = por %p426, %p427
      %p429 = scmp.ne.s32.totalorder %s417, %s418
      %p430 = scmp.eq.s32.totalorder %s38, 3
      %p431 = por %p429, %p430
      %p433 = scmp.ne.s32.totalorder %s418, %s432
      %p434 = scmp.eq.s32.totalorder %s38, 0
      %p435 = por %p433, %p434
      %s437 = sadd.s32 %s436, 1
      %p440 = scmp.eq.s32.totalorder %s32, 3
      %p441 = scmp.ne.s32.totalorder %s436, %s438
      %p442 = scmp.eq.s32.totalorder %s32, 0
      %p443 = por %p441, %p442
      %p444 = scmp.ne.s32.totalorder %s436, %s438
      %p445 = scmp.eq.s32.totalorder %s37, 3
      %p446 = por %p444, %p445
      %p447 = scmp.ne.s32.totalorder %s438, %s439
      %p448 = scmp.eq.s32.totalorder %s37, 0
      %p449 = por %p447, %p448
      %p450 = scmp.ne.s32.totalorder %s438, %s439
      %p451 = scmp.eq.s32.totalorder %s38, 3
      %p452 = por %p450, %p451
      %p454 = scmp.ne.s32.totalorder %s439, %s453
      %p455 = scmp.eq.s32.totalorder %s38, 0
      %p456 = por %p454, %p455
      %s458 = sadd.s32 %s457, 1
      %p461 = scmp.eq.s32.totalorder %s32, 3
      %p462 = scmp.ne.s32.totalorder %s457, %s459
      %p463 = scmp.eq.s32.totalorder %s32, 0
      %p464 = por %p462, %p463
      %p465 = scmp.ne.s32.totalorder %s457, %s459
      %p466 = scmp.eq.s32.totalorder %s37, 3
      %p467 = por %p465, %p466
      %p468 = scmp.ne.s32.totalorder %s459, %s460
      %p469 = scmp.eq.s32.totalorder %s37, 0
      %p470 = por %p468, %p469
      %p471 = scmp.ne.s32.totalorder %s459, %s460
      %p472 = scmp.eq.s32.totalorder %s38, 3
      %p473 = por %p471, %p472
      %p475 = scmp.ne.s32.totalorder %s460, %s474
      %p476 = scmp.eq.s32.totalorder %s38, 0
      %p477 = por %p475, %p476
      %s479 = sadd.s32 %s478, 1
      %p482 = scmp.eq.s32.totalorder %s32, 3
      %p483 = scmp.ne.s32.totalorder %s478, %s480
      %p484 = scmp.eq.s32.totalorder %s32, 0
      %p485 = por %p483, %p484
      %p486 = scmp.ne.s32.totalorder %s478, %s480
      %p487 = scmp.eq.s32.totalorder %s37, 3
      %p488 = por %p486, %p487
      %p489 = scmp.ne.s32.totalorder %s480, %s481
      %p490 = scmp.eq.s32.totalorder %s37, 0
      %p491 = por %p489, %p490
      %p492 = scmp.ne.s32.totalorder %s480, %s481
      %p493 = scmp.eq.s32.totalorder %s38, 3
      %p494 = por %p492, %p493
      %p496 = scmp.ne.s32.totalorder %s481, %s495
      %p497 = scmp.eq.s32.totalorder %s38, 0
      %p498 = por %p496, %p497
      %s500 = sadd.s32 %s499, 1
      %p503 = scmp.eq.s32.totalorder %s32, 3
      %p504 = scmp.ne.s32.totalorder %s499, %s501
      %p505 = scmp.eq.s32.totalorder %s32, 0
      %p506 = por %p504, %p505
      %p507 = scmp.ne.s32.totalorder %s499, %s501
      %p508 = scmp.eq.s32.totalorder %s37, 3
      %p509 = por %p507, %p508
      %p510 = scmp.ne.s32.totalorder %s501, %s502
      %p511 = scmp.eq.s32.totalorder %s37, 0
      %p512 = por %p510, %p511
      %p513 = scmp.ne.s32.totalorder %s501, %s502
      %p514 = scmp.eq.s32.totalorder %s38, 3
      %p515 = por %p513, %p514
      %p517 = scmp.ne.s32.totalorder %s502, %s516
      %p518 = scmp.eq.s32.totalorder %s38, 0
      %p519 = por %p517, %p518
      %s521 = sadd.s32 %s520, 1
      %p524 = scmp.eq.s32.totalorder %s32, 3
      %p525 = scmp.ne.s32.totalorder %s520, %s522
      %p526 = scmp.eq.s32.totalorder %s32, 0
      %p527 = por %p525, %p526
      %p528 = scmp.ne.s32.totalorder %s520, %s522
      %p529 = scmp.eq.s32.totalorder %s37, 3
      %p530 = por %p528, %p529
      %p531 = scmp.ne.s32.totalorder %s522, %s523
      %p532 = scmp.eq.s32.totalorder %s37, 0
      %p533 = por %p531, %p532
      %p534 = scmp.ne.s32.totalorder %s522, %s523
      %p535 = scmp.eq.s32.totalorder %s38, 3
      %p536 = por %p534, %p535
      %p538 = scmp.ne.s32.totalorder %s523, %s537
      %p539 = scmp.eq.s32.totalorder %s38, 0
      %p540 = por %p538, %p539
      %s542 = sadd.s32 %s541, 1
      %p545 = scmp.eq.s32.totalorder %s32, 3
      %p546 = scmp.ne.s32.totalorder %s541, %s543
      %p547 = scmp.eq.s32.totalorder %s32, 0
      %p548 = por %p546, %p547
      %p549 = scmp.ne.s32.totalorder %s541, %s543
      %p550 = scmp.eq.s32.totalorder %s37, 3
      %p551 = por %p549, %p550
      %p552 = scmp.ne.s32.totalorder %s543, %s544
      %p553 = scmp.eq.s32.totalorder %s37, 0
      %p554 = por %p552, %p553
      %p555 = scmp.ne.s32.totalorder %s543, %s544
      %p556 = scmp.eq.s32.totalorder %s38, 3
      %p557 = por %p555, %p556
      %p559 = scmp.ne.s32.totalorder %s544, %s558
      %p560 = scmp.eq.s32.totalorder %s38, 0
      %p561 = por %p559, %p560
      %s563 = sadd.s32 %s562, 1
      %p566 = scmp.eq.s32.totalorder %s32, 3
      %p567 = scmp.ne.s32.totalorder %s562, %s564
      %p568 = scmp.eq.s32.totalorder %s32, 0
      %p569 = por %p567, %p568
      %p570 = scmp.ne.s32.totalorder %s562, %s564
      %p571 = scmp.eq.s32.totalorder %s37, 3
      %p572 = por %p570, %p571
      %p573 = scmp.ne.s32.totalorder %s564, %s565
      %p574 = scmp.eq.s32.totalorder %s37, 0
      %p575 = por %p573, %p574
      %p576 = scmp.ne.s32.totalorder %s564, %s565
      %p577 = scmp.eq.s32.totalorder %s38, 3
      %p578 = por %p576, %p577
      %p580 = scmp.ne.s32.totalorder %s565, %s579
      %p581 = scmp.eq.s32.totalorder %s38, 0
      %p582 = por %p580, %p581
      %s584 = sadd.s32 %s583, 1
      %p587 = scmp.eq.s32.totalorder %s32, 3
      %p588 = scmp.ne.s32.totalorder %s583, %s585
      %p589 = scmp.eq.s32.totalorder %s32, 0
      %p590 = por %p588, %p589
      %p591 = scmp.ne.s32.totalorder %s583, %s585
      %p592 = scmp.eq.s32.totalorder %s37, 3
      %p593 = por %p591, %p592
      %p594 = scmp.ne.s32.totalorder %s585, %s586
      %p595 = scmp.eq.s32.totalorder %s37, 0
      %p596 = por %p594, %p595
      %p597 = scmp.ne.s32.totalorder %s585, %s586
      %p598 = scmp.eq.s32.totalorder %s38, 3
      %p599 = por %p597, %p598
      %p601 = scmp.ne.s32.totalorder %s586, %s600
      %p602 = scmp.eq.s32.totalorder %s38, 0
      %p603 = por %p601, %p602
      %p604 = scmp.le.s32.totalorder 1, %s32
      %p605 = scmp.lt.s32.totalorder %s32, 5
      %p606 = pnand %p604, %p605
      %p607 = pneg %p606
      // Predicated region
      $region9: #{spectral_temporal_forward.3} parent=5 // pred_check
        _
      $region10: #{spectral_temporal_forward.3} parent=5 // pred_check_branch
        %609 = sbr.rel (%p606) target = $region12
      $region11: #{spectral_temporal_forward.3} parent=5 // pred_region
        %s610 = ssub.s32 %s32, 1
        // Predicated region
        $region13: #{spectral_temporal_forward.3} parent=11 // pred_check
          %p611 = pneg %p53
        $region14: #{spectral_temporal_forward.3} parent=11 // pred_check_branch
          %613 = sbr.rel (%p611) target = $region16
        $region15: #{spectral_temporal_forward.3} parent=11 // pred_region
          _
        $region16: #{spectral_temporal_forward.3} parent=11 // pred_fallthru
          _
        // Predicated region
        $region17: #{spectral_temporal_forward.3} parent=11 // pred_check
          %p614 = pneg %p74
        $region18: #{spectral_temporal_forward.3} parent=11 // pred_check_branch
          %616 = sbr.rel (%p614) target = $region20
        $region19: #{spectral_temporal_forward.3} parent=11 // pred_region
          _
        $region20: #{spectral_temporal_forward.3} parent=11 // pred_fallthru
          _
        // Predicated region
        $region21: #{spectral_temporal_forward.3} parent=11 // pred_check
          %p617 = pneg %p95
        $region22: #{spectral_temporal_forward.3} parent=11 // pred_check_branch
          %619 = sbr.rel (%p617) target = $region24
        $region23: #{spectral_temporal_forward.3} parent=11 // pred_region
          _
        $region24: #{spectral_temporal_forward.3} parent=11 // pred_fallthru
          _
        // Predicated region
        $region25: #{spectral_temporal_forward.3} parent=11 // pred_check
          %p620 = pneg %p428
        $region26: #{spectral_temporal_forward.3} parent=11 // pred_check_branch
          %622 = sbr.rel (%p620) target = $region28
        $region27: #{spectral_temporal_forward.3} parent=11 // pred_region
          _
        $region28: #{spectral_temporal_forward.3} parent=11 // pred_fallthru
          _
        // Predicated region
        $region29: #{spectral_temporal_forward.3} parent=11 // pred_check
          %p623 = pneg %p449
        $region30: #{spectral_temporal_forward.3} parent=11 // pred_check_branch
          %625 = sbr.rel (%p623) target = $region32
        $region31: #{spectral_temporal_forward.3} parent=11 // pred_region
          _
        $region32: #{spectral_temporal_forward.3} parent=11 // pred_fallthru
          _
        // Predicated region
        $region33: #{spectral_temporal_forward.3} parent=11 // pred_check
          %p626 = pneg %p470
        $region34: #{spectral_temporal_forward.3} parent=11 // pred_check_branch
          %628 = sbr.rel (%p626) target = $region36
        $region35: #{spectral_temporal_forward.3} parent=11 // pred_region
          _
        $region36: #{spectral_temporal_forward.3} parent=11 // pred_fallthru
          _
        // Predicated region
        $region37: #{spectral_temporal_forward.3} parent=11 // pred_check
          %p629 = pneg %p491
        $region38: #{spectral_temporal_forward.3} parent=11 // pred_check_branch
          %631 = sbr.rel (%p629) target = $region40
        $region39: #{spectral_temporal_forward.3} parent=11 // pred_region
          _
        $region40: #{spectral_temporal_forward.3} parent=11 // pred_fallthru
          _
        // Predicated region
        $region41: #{spectral_temporal_forward.3} parent=11 // pred_check
          %p632 = pneg %p512
        $region42: #{spectral_temporal_forward.3} parent=11 // pred_check_branch
          %634 = sbr.rel (%p632) target = $region44
        $region43: #{spectral_temporal_forward.3} parent=11 // pred_region
          _
        $region44: #{spectral_temporal_forward.3} parent=11 // pred_fallthru
          _
        // Predicated region
        $region45: #{spectral_temporal_forward.3} parent=11 // pred_check
          %p635 = pneg %p533
        $region46: #{spectral_temporal_forward.3} parent=11 // pred_check_branch
          %637 = sbr.rel (%p635) target = $region48
        $region47: #{spectral_temporal_forward.3} parent=11 // pred_region
          _
        $region48: #{spectral_temporal_forward.3} parent=11 // pred_fallthru
          _
        // Predicated region
        $region49: #{spectral_temporal_forward.3} parent=11 // pred_check
          %p638 = pneg %p554
        $region50: #{spectral_temporal_forward.3} parent=11 // pred_check_branch
          %640 = sbr.rel (%p638) target = $region52
        $region51: #{spectral_temporal_forward.3} parent=11 // pred_region
          _
        $region52: #{spectral_temporal_forward.3} parent=11 // pred_fallthru
          _
        // Predicated region
        $region53: #{spectral_temporal_forward.3} parent=11 // pred_check
          %p641 = pneg %p575
        $region54: #{spectral_temporal_forward.3} parent=11 // pred_check_branch
          %643 = sbr.rel (%p641) target = $region56
        $region55: #{spectral_temporal_forward.3} parent=11 // pred_region
          _
        $region56: #{spectral_temporal_forward.3} parent=11 // pred_fallthru
          _
      $region12: #{spectral_temporal_forward.3} parent=5 // pred_fallthru
        _
      %p644 = scmp.lt.s32.totalorder %s32, 4
      // Predicated region
      $region57: #{spectral_temporal_forward.3} parent=5 // pred_check
        %p645 = pneg %p644
      $region58: #{spectral_temporal_forward.3} parent=5 // pred_check_branch
        %647 = sbr.rel (%p645) target = $region60
      $region59: #{spectral_temporal_forward.3} parent=5 // pred_region
        // Predicated region
        $region61: #{spectral_temporal_forward.3} parent=59 // pred_check
          %p648 = pneg %p115
        $region62: #{spectral_temporal_forward.3} parent=59 // pred_check_branch
          %650 = sbr.rel (%p648) target = $region64
        $region63: #{spectral_temporal_forward.3} parent=59 // pred_region
          %p651 = scmp.lt.s32.totalorder %s32, 3
          %s652 = scalar_select %p651, %s32, 3
          %s653 = smul.addr %s652, 48
          %s654 = smul.addr %s653, 4
          %s655 = scalar_lea.vmem %s3, %s654
        $region64: #{spectral_temporal_forward.3} parent=59 // pred_fallthru
          _
        // Predicated region
        $region65: #{spectral_temporal_forward.3} parent=59 // pred_check
          %p656 = pneg %p141
        $region66: #{spectral_temporal_forward.3} parent=59 // pred_check_branch
          %658 = sbr.rel (%p656) target = $region68
        $region67: #{spectral_temporal_forward.3} parent=59 // pred_region
          %p659 = scmp.lt.s32.totalorder %s32, 3
          %s660 = scalar_select %p659, %s32, 3
          %s661 = smul.addr %s660, 48
          %s662 = smul.addr %s661, 8
          %s663 = scalar_lea.vmem %s4, %s662
        $region68: #{spectral_temporal_forward.3} parent=59 // pred_fallthru
          _
        // Predicated region
        $region69: #{spectral_temporal_forward.3} parent=59 // pred_check
          %p664 = pneg %p167
        $region70: #{spectral_temporal_forward.3} parent=59 // pred_check_branch
          %666 = sbr.rel (%p664) target = $region72
        $region71: #{spectral_temporal_forward.3} parent=59 // pred_region
          %p667 = scmp.lt.s32.totalorder %s32, 3
          %s668 = scalar_select %p667, %s32, 3
          %s669 = smul.addr %s668, 16
          %s670 = smul.addr %s669, 4
          %s671 = scalar_lea.vmem %s5, %s670
        $region72: #{spectral_temporal_forward.3} parent=59 // pred_fallthru
          _
        // Predicated region
        $region73: #{spectral_temporal_forward.3} parent=59 // pred_check
          %p672 = pneg %p193
        $region74: #{spectral_temporal_forward.3} parent=59 // pred_check_branch
          %674 = sbr.rel (%p672) target = $region76
        $region75: #{spectral_temporal_forward.3} parent=59 // pred_region
          %p675 = scmp.lt.s32.totalorder %s32, 3
          %s676 = scalar_select %p675, %s32, 3
          %s677 = smul.addr %s676, 16
          %s678 = smul.addr %s677, 8
          %s679 = scalar_lea.vmem %s6, %s678
        $region76: #{spectral_temporal_forward.3} parent=59 // pred_fallthru
          _
        // Predicated region
        $region77: #{spectral_temporal_forward.3} parent=59 // pred_check
          %p680 = pneg %p219
        $region78: #{spectral_temporal_forward.3} parent=59 // pred_check_branch
          %682 = sbr.rel (%p680) target = $region80
        $region79: #{spectral_temporal_forward.3} parent=59 // pred_region
          %p683 = scmp.lt.s32.totalorder %s32, 3
          %s684 = scalar_select %p683, %s32, 3
          %s685 = scalar_lea.vmem %s7, %s684
        $region80: #{spectral_temporal_forward.3} parent=59 // pred_fallthru
          _
        // Predicated region
        $region81: #{spectral_temporal_forward.3} parent=59 // pred_check
          %p686 = pneg %p245
        $region82: #{spectral_temporal_forward.3} parent=59 // pred_check_branch
          %688 = sbr.rel (%p686) target = $region84
        $region83: #{spectral_temporal_forward.3} parent=59 // pred_region
          %p689 = scmp.lt.s32.totalorder %s32, 3
          %s690 = scalar_select %p689, %s32, 3
          %s691 = scalar_lea.vmem %s8, %s690
        $region84: #{spectral_temporal_forward.3} parent=59 // pred_fallthru
          _
        // Predicated region
        $region85: #{spectral_temporal_forward.3} parent=59 // pred_check
          %p692 = pneg %p271
        $region86: #{spectral_temporal_forward.3} parent=59 // pred_check_branch
          %694 = sbr.rel (%p692) target = $region88
        $region87: #{spectral_temporal_forward.3} parent=59 // pred_region
          %p695 = scmp.lt.s32.totalorder %s32, 3
          %s696 = scalar_select %p695, %s32, 3
          %s697 = smul.addr %s696, 32
          %s698 = smul.addr %s697, 4
          %s699 = scalar_lea.vmem %s9, %s698
        $region88: #{spectral_temporal_forward.3} parent=59 // pred_fallthru
          _
        // Predicated region
        $region89: #{spectral_temporal_forward.3} parent=59 // pred_check
          %p700 = pneg %p297
        $region90: #{spectral_temporal_forward.3} parent=59 // pred_check_branch
          %702 = sbr.rel (%p700) target = $region92
        $region91: #{spectral_temporal_forward.3} parent=59 // pred_region
          %p703 = scmp.lt.s32.totalorder %s32, 3
          %s704 = scalar_select %p703, %s32, 3
          %s705 = smul.addr %s704, 2
          %s706 = scalar_lea.vmem %s10, %s705
        $region92: #{spectral_temporal_forward.3} parent=59 // pred_fallthru
          _
        // Predicated region
        $region93: #{spectral_temporal_forward.3} parent=59 // pred_check
          %p707 = pneg %p323
        $region94: #{spectral_temporal_forward.3} parent=59 // pred_check_branch
          %709 = sbr.rel (%p707) target = $region96
        $region95: #{spectral_temporal_forward.3} parent=59 // pred_region
          %p710 = scmp.lt.s32.totalorder %s32, 3
          %s711 = scalar_select %p710, %s32, 3
          %s712 = smul.addr %s711, 32
          %s713 = smul.addr %s712, 4
          %s714 = scalar_lea.vmem %s11, %s713
        $region96: #{spectral_temporal_forward.3} parent=59 // pred_fallthru
          _
        // Predicated region
        $region97: #{spectral_temporal_forward.3} parent=59 // pred_check
          %p715 = pneg %p349
        $region98: #{spectral_temporal_forward.3} parent=59 // pred_check_branch
          %717 = sbr.rel (%p715) target = $region100
        $region99: #{spectral_temporal_forward.3} parent=59 // pred_region
          %p718 = scmp.lt.s32.totalorder %s32, 3
          %s719 = scalar_select %p718, %s32, 3
          %s720 = scalar_lea.vmem %s12, %s719
        $region100: #{spectral_temporal_forward.3} parent=59 // pred_fallthru
          _
        // Predicated region
        $region101: #{spectral_temporal_forward.3} parent=59 // pred_check
          %p721 = pneg %p375
        $region102: #{spectral_temporal_forward.3} parent=59 // pred_check_branch
          %723 = sbr.rel (%p721) target = $region104
        $region103: #{spectral_temporal_forward.3} parent=59 // pred_region
          %p724 = scmp.lt.s32.totalorder %s32, 3
          %s725 = scalar_select %p724, %s32, 3
          %s726 = scalar_lea.vmem %s13, %s725
        $region104: #{spectral_temporal_forward.3} parent=59 // pred_fallthru
          _
        // Predicated region
        $region105: #{spectral_temporal_forward.3} parent=59 // pred_check
          %p727 = pneg %p401
        $region106: #{spectral_temporal_forward.3} parent=59 // pred_check_branch
          %729 = sbr.rel (%p727) target = $region108
        $region107: #{spectral_temporal_forward.3} parent=59 // pred_region
          %p730 = scmp.lt.s32.totalorder %s32, 3
          %s731 = scalar_select %p730, %s32, 3
          %s732 = scalar_lea.vmem %s14, %s731
        $region108: #{spectral_temporal_forward.3} parent=59 // pred_fallthru
          _
      $region60: #{spectral_temporal_forward.3} parent=5 // pred_fallthru
        _
      %p733 = scmp.le.s32.totalorder 1, %s32
      %p734 = scmp.lt.s32.totalorder %s32, 5
      %p735 = pnand %p733, %p734
      %p736 = pneg %p735
      // Predicated region
      $region109: #{spectral_temporal_forward.3} parent=5 // pred_check
        _
      $region110: #{spectral_temporal_forward.3} parent=5 // pred_check_branch
        %738 = sbr.rel (%p735) target = $region112
      $region111: #{spectral_temporal_forward.3} parent=5 // pred_region
        %s739 = ssub.s32 %s32, 1
        %p740 = pneg %p53
        %p741 = pneg %p50
        %p742 = pneg %p74
        %p743 = pneg %p71
        %p744 = pneg %p95
        %p745 = pneg %p92
        %p746 = scmp.lt.s32.totalorder %s37, 3
        %s747 = scalar_select %p746, %s37, 3
        %s748 = smul.addr %s747, 48
        %s749 = smul.addr %s748, 4
        %s750 = scalar_lea.vmem %s3, %s749
        %p751 = pneg %p121
        %p752 = pneg %p118
        %p753 = scmp.lt.s32.totalorder %s37, 3
        %s754 = scalar_select %p753, %s37, 3
        %s755 = smul.addr %s754, 48
        %s756 = smul.addr %s755, 8
        %s757 = scalar_lea.vmem %s4, %s756
        %p758 = pneg %p147
        %p759 = pneg %p144
        %p760 = scmp.lt.s32.totalorder %s37, 3
        %s761 = scalar_select %p760, %s37, 3
        %s762 = smul.addr %s761, 16
        %s763 = smul.addr %s762, 4
        %s764 = scalar_lea.vmem %s5, %s763
        %p765 = pneg %p173
        %p766 = pneg %p170
        %p767 = scmp.lt.s32.totalorder %s37, 3
        %s768 = scalar_select %p767, %s37, 3
        %s769 = smul.addr %s768, 16
        %s770 = smul.addr %s769, 8
        %s771 = scalar_lea.vmem %s6, %s770
        %p772 = pneg %p199
        %p773 = pneg %p196
        %p774 = scmp.lt.s32.totalorder %s37, 3
        %s775 = scalar_select %p774, %s37, 3
        %s776 = scalar_lea.vmem %s7, %s775
        %p777 = pneg %p225
        %p778 = pneg %p222
        %p779 = scmp.lt.s32.totalorder %s37, 3
        %s780 = scalar_select %p779, %s37, 3
        %s781 = scalar_lea.vmem %s8, %s780
        %p782 = pneg %p251
        %p783 = pneg %p248
        %p784 = scmp.lt.s32.totalorder %s37, 3
        %s785 = scalar_select %p784, %s37, 3
        %s786 = smul.addr %s785, 32
        %s787 = smul.addr %s786, 4
        %s788 = scalar_lea.vmem %s9, %s787
        %p789 = pneg %p277
        %p790 = pneg %p274
        %p791 = scmp.lt.s32.totalorder %s37, 3
        %s792 = scalar_select %p791, %s37, 3
        %s793 = smul.addr %s792, 2
        %s794 = scalar_lea.vmem %s10, %s793
        %p795 = pneg %p303
        %p796 = pneg %p300
        %p797 = scmp.lt.s32.totalorder %s37, 3
        %s798 = scalar_select %p797, %s37, 3
        %s799 = smul.addr %s798, 32
        %s800 = smul.addr %s799, 4
        %s801 = scalar_lea.vmem %s11, %s800
        %p802 = pneg %p329
        %p803 = pneg %p326
        %p804 = scmp.lt.s32.totalorder %s37, 3
        %s805 = scalar_select %p804, %s37, 3
        %s806 = scalar_lea.vmem %s12, %s805
        %p807 = pneg %p355
        %p808 = pneg %p352
        %p809 = scmp.lt.s32.totalorder %s37, 3
        %s810 = scalar_select %p809, %s37, 3
        %s811 = scalar_lea.vmem %s13, %s810
        %p812 = pneg %p381
        %p813 = pneg %p378
        %p814 = scmp.lt.s32.totalorder %s37, 3
        %s815 = scalar_select %p814, %s37, 3
        %s816 = scalar_lea.vmem %s14, %s815
        %p817 = pneg %p407
        %p818 = pneg %p404
        %p819 = pneg %p428
        %p820 = pneg %p425
        %p821 = pneg %p449
        %p822 = pneg %p446
        %p823 = pneg %p470
        %p824 = pneg %p467
        %p825 = pneg %p491
        %p826 = pneg %p488
        %p827 = pneg %p512
        %p828 = pneg %p509
        %p829 = pneg %p533
        %p830 = pneg %p530
        %p831 = pneg %p554
        %p832 = pneg %p551
        %p833 = pneg %p575
        %p834 = pneg %p572
        %p835 = pneg %p596
        %p836 = pneg %p593
        %p837 = scmp.lt.s32.totalorder %s37, 3
        %s838 = scalar_select %p837, %s37, 3
        %s839 = smul.addr %s838, 48
        %s840 = smul.addr %s839, 4
        %s841 = scalar_lea.vmem %s3, %s840
        %p842 = scmp.lt.s32.totalorder %s37, 3
        %s843 = scalar_select %p842, %s37, 3
        %s844 = smul.addr %s843, 48
        %s845 = smul.addr %s844, 8
        %s846 = scalar_lea.vmem %s4, %s845
        %p847 = scmp.lt.s32.totalorder %s37, 3
        %s848 = scalar_select %p847, %s37, 3
        %s849 = smul.addr %s848, 16
        %s850 = smul.addr %s849, 4
        %s851 = scalar_lea.vmem %s5, %s850
        %p852 = scmp.lt.s32.totalorder %s37, 3
        %s853 = scalar_select %p852, %s37, 3
        %s854 = smul.addr %s853, 16
        %s855 = smul.addr %s854, 8
        %s856 = scalar_lea.vmem %s6, %s855
        %p857 = scmp.lt.s32.totalorder %s37, 3
        %s858 = scalar_select %p857, %s37, 3
        %s859 = scalar_lea.vmem %s7, %s858
        %p860 = scmp.lt.s32.totalorder %s37, 3
        %s861 = scalar_select %p860, %s37, 3
        %s862 = scalar_lea.vmem %s8, %s861
        %p863 = scmp.lt.s32.totalorder %s37, 3
        %s864 = scalar_select %p863, %s37, 3
        %s865 = smul.addr %s864, 32
        %s866 = smul.addr %s865, 4
        %s867 = scalar_lea.vmem %s9, %s866
        %p868 = scmp.lt.s32.totalorder %s37, 3
        %s869 = scalar_select %p868, %s37, 3
        %s870 = smul.addr %s869, 2
        %s871 = scalar_lea.vmem %s10, %s870
        %p872 = scmp.lt.s32.totalorder %s37, 3
        %s873 = scalar_select %p872, %s37, 3
        %s874 = smul.addr %s873, 32
        %s875 = smul.addr %s874, 4
        %s876 = scalar_lea.vmem %s11, %s875
        %p877 = scmp.lt.s32.totalorder %s37, 3
        %s878 = scalar_select %p877, %s37, 3
        %s879 = scalar_lea.vmem %s12, %s878
        %p880 = scmp.lt.s32.totalorder %s37, 3
        %s881 = scalar_select %p880, %s37, 3
        %s882 = scalar_lea.vmem %s13, %s881
        %p883 = scmp.lt.s32.totalorder %s37, 3
        %s884 = scalar_select %p883, %s37, 3
        %s885 = scalar_lea.vmem %s14, %s884
        %p887 = scmp.eq.s32.totalorder %s37, 0
        // Predicated region
        $region113: #{spectral_temporal_forward.3} parent=111 // pred_check
          %p888 = pneg %p887
        $region114: #{spectral_temporal_forward.3} parent=111 // pred_check_branch
          %890 = sbr.rel (%p888) target = $region116
        $region115: #{spectral_temporal_forward.3} parent=111 // pred_region
          %v891 = vld [vmem:[%s0] sm:$0xff]
          %v892 = vld [vmem:[%s0 + $0x8] sm:$0xff]
          %v893 = vld [vmem:[%s1] sm:$0x3]
          %v894 = vld [vmem:[%s2] sm:$0xff]
          %896 = vset.pattern.permute.xlu0 0
          %897 = vperm.xlu0 %896, %v891
          %v898 = vpop.permute.xlu0 %897
          %901 = vset.pattern.permute.xlu0 0
          %902 = vperm.xlu0 %901, %v892
          %v903 = vpop.permute.xlu0 %902
          %v905 = vlaneseq
          %v906 = vshrl.u32 %v905, 7
          %v907 = vsub.s32 0, %v906
          %v908 = vrot.slane %v893, %v907
          %v909 = vmul.f32 %v898, %v908
          %v910 = vmul.f32 %v903, %v908
          %v911 = vadd.f32 %v894, %v909
          %v912 = vadd.f32 %v894, %v910
          %913 = vset.pattern.permute.xlu0 1
          %914 = vperm.xlu0 %913, %v891
          %v915 = vpop.permute.xlu0 %914
          %917 = vset.pattern.permute.xlu0 1
          %918 = vperm.xlu0 %917, %v892
          %v919 = vpop.permute.xlu0 %918
          %v921 = vlaneseq
          %v922 = vshrl.u32 %v921, 7
          %v923 = vsub.s32 1, %v922
          %v924 = vrot.slane %v893, %v923
          %v925 = vmul.f32 %v915, %v924
          %v926 = vmul.f32 %v919, %v924
          %v927 = vadd.f32 %v911, %v925
          %v928 = vadd.f32 %v912, %v926
          %929 = vst [vmem:[#allocation2] sm:$0xff] %v927
          %930 = vst [vmem:[#allocation2 + $0x8] sm:$0xff] %v928
        $region116: #{spectral_temporal_forward.3} parent=111 // pred_fallthru
          _
        %v931 = vld [vmem:[#allocation2] sm:$0xff]
        %v932 = vld [vmem:[#allocation2 + $0x8] sm:$0xff]
        %v933 = vpack.c.bf16 %v932, %v931
        %v934 = vld [vmem:[%s841] sm:$0xf]
        %v935 = vld [vmem:[%s841 + $0x4] sm:$0xf]
        %v936 = vld [vmem:[%s841 + $0x8] sm:$0xf]
        %v937 = vld [vmem:[%s841 + $0xc] sm:$0xf]
        %v938 = vld [vmem:[%s841 + $0x10] sm:$0xf]
        %v939 = vld [vmem:[%s841 + $0x14] sm:$0xf]
        %v940 = vld [vmem:[%s841 + $0x18] sm:$0xf]
        %v941 = vld [vmem:[%s841 + $0x1c] sm:$0xf]
        %v942 = vld [vmem:[%s841 + $0x20] sm:$0xf]
        %v943 = vld [vmem:[%s841 + $0x24] sm:$0xf]
        %v944 = vld [vmem:[%s841 + $0x28] sm:$0xf]
        %v945 = vld [vmem:[%s841 + $0x2c] sm:$0xf]
        %v946 = vld [vmem:[%s841 + $0x30] sm:$0xf]
        %v947 = vld [vmem:[%s841 + $0x34] sm:$0xf]
        %v948 = vld [vmem:[%s841 + $0x38] sm:$0xf]
        %v949 = vld [vmem:[%s841 + $0x3c] sm:$0xf]
        %v950 = vld [vmem:[%s841 + $0x40] sm:$0xf]
        %v951 = vld [vmem:[%s841 + $0x44] sm:$0xf]
        %v952 = vld [vmem:[%s841 + $0x48] sm:$0xf]
        %v953 = vld [vmem:[%s841 + $0x4c] sm:$0xf]
        %v954 = vld [vmem:[%s841 + $0x50] sm:$0xf]
        %v955 = vld [vmem:[%s841 + $0x54] sm:$0xf]
        %v956 = vld [vmem:[%s841 + $0x58] sm:$0xf]
        %v957 = vld [vmem:[%s841 + $0x5c] sm:$0xf]
        %v958 = vld [vmem:[%s841 + $0x60] sm:$0xf]
        %v959 = vld [vmem:[%s841 + $0x64] sm:$0xf]
        %v960 = vld [vmem:[%s841 + $0x68] sm:$0xf]
        %v961 = vld [vmem:[%s841 + $0x6c] sm:$0xf]
        %v962 = vld [vmem:[%s841 + $0x70] sm:$0xf]
        %v963 = vld [vmem:[%s841 + $0x74] sm:$0xf]
        %v964 = vld [vmem:[%s841 + $0x78] sm:$0xf]
        %v965 = vld [vmem:[%s841 + $0x7c] sm:$0xf]
        %v966 = vld [vmem:[%s841 + $0x80] sm:$0xf]
        %v967 = vld [vmem:[%s841 + $0x84] sm:$0xf]
        %v968 = vld [vmem:[%s841 + $0x88] sm:$0xf]
        %v969 = vld [vmem:[%s841 + $0x8c] sm:$0xf]
        %v970 = vld [vmem:[%s841 + $0x90] sm:$0xf]
        %v971 = vld [vmem:[%s841 + $0x94] sm:$0xf]
        %v972 = vld [vmem:[%s841 + $0x98] sm:$0xf]
        %v973 = vld [vmem:[%s841 + $0x9c] sm:$0xf]
        %v974 = vld [vmem:[%s841 + $0xa0] sm:$0xf]
        %v975 = vld [vmem:[%s841 + $0xa4] sm:$0xf]
        %v976 = vld [vmem:[%s841 + $0xa8] sm:$0xf]
        %v977 = vld [vmem:[%s841 + $0xac] sm:$0xf]
        %v978 = vld [vmem:[%s841 + $0xb0] sm:$0xf]
        %v979 = vld [vmem:[%s841 + $0xb4] sm:$0xf]
        %v980 = vld [vmem:[%s841 + $0xb8] sm:$0xf]
        %v981 = vld [vmem:[%s841 + $0xbc] sm:$0xf]
        %v982 = vld [vmem:[%s846] sm:$0xff]
        %v983 = vld [vmem:[%s846 + $0x8] sm:$0xff]
        %v984 = vld [vmem:[%s846 + $0x10] sm:$0xff]
        %v985 = vld [vmem:[%s846 + $0x18] sm:$0xff]
        %v986 = vld [vmem:[%s846 + $0x20] sm:$0xff]
        %v987 = vld [vmem:[%s846 + $0x28] sm:$0xff]
        %v988 = vld [vmem:[%s846 + $0x30] sm:$0xff]
        %v989 = vld [vmem:[%s846 + $0x38] sm:$0xff]
        %v990 = vld [vmem:[%s846 + $0x40] sm:$0xff]
        %v991 = vld [vmem:[%s846 + $0x48] sm:$0xff]
        %v992 = vld [vmem:[%s846 + $0x50] sm:$0xff]
        %v993 = vld [vmem:[%s846 + $0x58] sm:$0xff]
        %v994 = vld [vmem:[%s846 + $0x60] sm:$0xff]
        %v995 = vld [vmem:[%s846 + $0x68] sm:$0xff]
        %v996 = vld [vmem:[%s846 + $0x70] sm:$0xff]
        %v997 = vld [vmem:[%s846 + $0x78] sm:$0xff]
        %v998 = vld [vmem:[%s846 + $0x80] sm:$0xff]
        %v999 = vld [vmem:[%s846 + $0x88] sm:$0xff]
        %v1000 = vld [vmem:[%s846 + $0x90] sm:$0xff]
        %v1001 = vld [vmem:[%s846 + $0x98] sm:$0xff]
        %v1002 = vld [vmem:[%s846 + $0xa0] sm:$0xff]
        %v1003 = vld [vmem:[%s846 + $0xa8] sm:$0xff]
        %v1004 = vld [vmem:[%s846 + $0xb0] sm:$0xff]
        %v1005 = vld [vmem:[%s846 + $0xb8] sm:$0xff]
        %v1006 = vld [vmem:[%s846 + $0xc0] sm:$0xff]
        %v1007 = vld [vmem:[%s846 + $0xc8] sm:$0xff]
        %v1008 = vld [vmem:[%s846 + $0xd0] sm:$0xff]
        %v1009 = vld [vmem:[%s846 + $0xd8] sm:$0xff]
        %v1010 = vld [vmem:[%s846 + $0xe0] sm:$0xff]
        %v1011 = vld [vmem:[%s846 + $0xe8] sm:$0xff]
        %v1012 = vld [vmem:[%s846 + $0xf0] sm:$0xff]
        %v1013 = vld [vmem:[%s846 + $0xf8] sm:$0xff]
        %v1014 = vld [vmem:[%s846 + $0x100] sm:$0xff]
        %v1015 = vld [vmem:[%s846 + $0x108] sm:$0xff]
        %v1016 = vld [vmem:[%s846 + $0x110] sm:$0xff]
        %v1017 = vld [vmem:[%s846 + $0x118] sm:$0xff]
        %v1018 = vld [vmem:[%s846 + $0x120] sm:$0xff]
        %v1019 = vld [vmem:[%s846 + $0x128] sm:$0xff]
        %v1020 = vld [vmem:[%s846 + $0x130] sm:$0xff]
        %v1021 = vld [vmem:[%s846 + $0x138] sm:$0xff]
        %v1022 = vld [vmem:[%s846 + $0x140] sm:$0xff]
        %v1023 = vld [vmem:[%s846 + $0x148] sm:$0xff]
        %v1024 = vld [vmem:[%s846 + $0x150] sm:$0xff]
        %v1025 = vld [vmem:[%s846 + $0x158] sm:$0xff]
        %v1026 = vld [vmem:[%s846 + $0x160] sm:$0xff]
        %v1027 = vld [vmem:[%s846 + $0x168] sm:$0xff]
        %v1028 = vld [vmem:[%s846 + $0x170] sm:$0xff]
        %v1029 = vld [vmem:[%s846 + $0x178] sm:$0xff]
        %1031 = vset.pattern.permute.xlu0 0
        %1032 = vperm.xlu0 %1031, %v982
        %v1033 = vpop.permute.xlu0 %1032
        %1036 = vset.pattern.permute.xlu0 0
        %1037 = vperm.xlu0 %1036, %v983
        %v1038 = vpop.permute.xlu0 %1037
        %1041 = vset.pattern.permute.xlu0 0
        %1042 = vperm.xlu0 %1041, %v984
        %v1043 = vpop.permute.xlu0 %1042
        %1046 = vset.pattern.permute.xlu0 0
        %1047 = vperm.xlu0 %1046, %v985
        %v1048 = vpop.permute.xlu0 %1047
        %1051 = vset.pattern.permute.xlu0 0
        %1052 = vperm.xlu0 %1051, %v986
        %v1053 = vpop.permute.xlu0 %1052
        %1056 = vset.pattern.permute.xlu0 0
        %1057 = vperm.xlu0 %1056, %v987
        %v1058 = vpop.permute.xlu0 %1057
        %1061 = vset.pattern.permute.xlu0 0
        %1062 = vperm.xlu0 %1061, %v988
        %v1063 = vpop.permute.xlu0 %1062
        %1066 = vset.pattern.permute.xlu0 0
        %1067 = vperm.xlu0 %1066, %v989
        %v1068 = vpop.permute.xlu0 %1067
        %1071 = vset.pattern.permute.xlu0 0
        %1072 = vperm.xlu0 %1071, %v990
        %v1073 = vpop.permute.xlu0 %1072
        %1076 = vset.pattern.permute.xlu0 0
        %1077 = vperm.xlu0 %1076, %v991
        %v1078 = vpop.permute.xlu0 %1077
        %1081 = vset.pattern.permute.xlu0 0
        %1082 = vperm.xlu0 %1081, %v992
        %v1083 = vpop.permute.xlu0 %1082
        %1086 = vset.pattern.permute.xlu0 0
        %1087 = vperm.xlu0 %1086, %v993
        %v1088 = vpop.permute.xlu0 %1087
        %1091 = vset.pattern.permute.xlu0 0
        %1092 = vperm.xlu0 %1091, %v994
        %v1093 = vpop.permute.xlu0 %1092
        %1096 = vset.pattern.permute.xlu0 0
        %1097 = vperm.xlu0 %1096, %v995
        %v1098 = vpop.permute.xlu0 %1097
        %1101 = vset.pattern.permute.xlu0 0
        %1102 = vperm.xlu0 %1101, %v996
        %v1103 = vpop.permute.xlu0 %1102
        %1106 = vset.pattern.permute.xlu0 0
        %1107 = vperm.xlu0 %1106, %v997
        %v1108 = vpop.permute.xlu0 %1107
        %1111 = vset.pattern.permute.xlu0 0
        %1112 = vperm.xlu0 %1111, %v998
        %v1113 = vpop.permute.xlu0 %1112
        %1116 = vset.pattern.permute.xlu0 0
        %1117 = vperm.xlu0 %1116, %v999
        %v1118 = vpop.permute.xlu0 %1117
        %1121 = vset.pattern.permute.xlu0 0
        %1122 = vperm.xlu0 %1121, %v1000
        %v1123 = vpop.permute.xlu0 %1122
        %1126 = vset.pattern.permute.xlu0 0
        %1127 = vperm.xlu0 %1126, %v1001
        %v1128 = vpop.permute.xlu0 %1127
        %1131 = vset.pattern.permute.xlu0 0
        %1132 = vperm.xlu0 %1131, %v1002
        %v1133 = vpop.permute.xlu0 %1132
        %1136 = vset.pattern.permute.xlu0 0
        %1137 = vperm.xlu0 %1136, %v1003
        %v1138 = vpop.permute.xlu0 %1137
        %1141 = vset.pattern.permute.xlu0 0
        %1142 = vperm.xlu0 %1141, %v1004
        %v1143 = vpop.permute.xlu0 %1142
        %1146 = vset.pattern.permute.xlu0 0
        %1147 = vperm.xlu0 %1146, %v1005
        %v1148 = vpop.permute.xlu0 %1147
        %1151 = vset.pattern.permute.xlu0 0
        %1152 = vperm.xlu0 %1151, %v1006
        %v1153 = vpop.permute.xlu0 %1152
        %1156 = vset.pattern.permute.xlu0 0
        %1157 = vperm.xlu0 %1156, %v1007
        %v1158 = vpop.permute.xlu0 %1157
        %1161 = vset.pattern.permute.xlu0 0
        %1162 = vperm.xlu0 %1161, %v1008
        %v1163 = vpop.permute.xlu0 %1162
        %1166 = vset.pattern.permute.xlu0 0
        %1167 = vperm.xlu0 %1166, %v1009
        %v1168 = vpop.permute.xlu0 %1167
        %1171 = vset.pattern.permute.xlu0 0
        %1172 = vperm.xlu0 %1171, %v1010
        %v1173 = vpop.permute.xlu0 %1172
        %1176 = vset.pattern.permute.xlu0 0
        %1177 = vperm.xlu0 %1176, %v1011
        %v1178 = vpop.permute.xlu0 %1177
        %1181 = vset.pattern.permute.xlu0 0
        %1182 = vperm.xlu0 %1181, %v1012
        %v1183 = vpop.permute.xlu0 %1182
        %1186 = vset.pattern.permute.xlu0 0
        %1187 = vperm.xlu0 %1186, %v1013
        %v1188 = vpop.permute.xlu0 %1187
        %1191 = vset.pattern.permute.xlu0 0
        %1192 = vperm.xlu0 %1191, %v1014
        %v1193 = vpop.permute.xlu0 %1192
        %1196 = vset.pattern.permute.xlu0 0
        %1197 = vperm.xlu0 %1196, %v1015
        %v1198 = vpop.permute.xlu0 %1197
        %1201 = vset.pattern.permute.xlu0 0
        %1202 = vperm.xlu0 %1201, %v1016
        %v1203 = vpop.permute.xlu0 %1202
        %1206 = vset.pattern.permute.xlu0 0
        %1207 = vperm.xlu0 %1206, %v1017
        %v1208 = vpop.permute.xlu0 %1207
        %1211 = vset.pattern.permute.xlu0 0
        %1212 = vperm.xlu0 %1211, %v1018
        %v1213 = vpop.permute.xlu0 %1212
        %1216 = vset.pattern.permute.xlu0 0
        %1217 = vperm.xlu0 %1216, %v1019
        %v1218 = vpop.permute.xlu0 %1217
        %1221 = vset.pattern.permute.xlu0 0
        %1222 = vperm.xlu0 %1221, %v1020
        %v1223 = vpop.permute.xlu0 %1222
        %1226 = vset.pattern.permute.xlu0 0
        %1227 = vperm.xlu0 %1226, %v1021
        %v1228 = vpop.permute.xlu0 %1227
        %1231 = vset.pattern.permute.xlu0 0
        %1232 = vperm.xlu0 %1231, %v1022
        %v1233 = vpop.permute.xlu0 %1232
        %1236 = vset.pattern.permute.xlu0 0
        %1237 = vperm.xlu0 %1236, %v1023
        %v1238 = vpop.permute.xlu0 %1237
        %1241 = vset.pattern.permute.xlu0 0
        %1242 = vperm.xlu0 %1241, %v1024
        %v1243 = vpop.permute.xlu0 %1242
        %1246 = vset.pattern.permute.xlu0 0
        %1247 = vperm.xlu0 %1246, %v1025
        %v1248 = vpop.permute.xlu0 %1247
        %1251 = vset.pattern.permute.xlu0 0
        %1252 = vperm.xlu0 %1251, %v1026
        %v1253 = vpop.permute.xlu0 %1252
        %1256 = vset.pattern.permute.xlu0 0
        %1257 = vperm.xlu0 %1256, %v1027
        %v1258 = vpop.permute.xlu0 %1257
        %1261 = vset.pattern.permute.xlu0 0
        %1262 = vperm.xlu0 %1261, %v1028
        %v1263 = vpop.permute.xlu0 %1262
        %1266 = vset.pattern.permute.xlu0 0
        %1267 = vperm.xlu0 %1266, %v1029
        %v1268 = vpop.permute.xlu0 %1267
        %v1318 = vunpack.c.l.b16 %v934
        %v1319 = vunpack.c.l.b16 %v935
        %v1320 = vunpack.c.l.b16 %v936
        %v1321 = vunpack.c.l.b16 %v937
        %v1322 = vunpack.c.l.b16 %v938
        %v1323 = vunpack.c.l.b16 %v939
        %v1324 = vunpack.c.l.b16 %v940
        %v1325 = vunpack.c.l.b16 %v941
        %v1326 = vunpack.c.l.b16 %v942
        %v1327 = vunpack.c.l.b16 %v943
        %v1328 = vunpack.c.l.b16 %v944
        %v1329 = vunpack.c.l.b16 %v945
        %v1330 = vunpack.c.l.b16 %v946
        %v1331 = vunpack.c.l.b16 %v947
        %v1332 = vunpack.c.l.b16 %v948
        %v1333 = vunpack.c.l.b16 %v949
        %v1334 = vunpack.c.l.b16 %v950
        %v1335 = vunpack.c.l.b16 %v951
        %v1336 = vunpack.c.l.b16 %v952
        %v1337 = vunpack.c.l.b16 %v953
        %v1338 = vunpack.c.l.b16 %v954
        %v1339 = vunpack.c.l.b16 %v955
        %v1340 = vunpack.c.l.b16 %v956
        %v1341 = vunpack.c.l.b16 %v957
        %v1342 = vunpack.c.l.b16 %v958
        %v1343 = vunpack.c.l.b16 %v959
        %v1344 = vunpack.c.l.b16 %v960
        %v1345 = vunpack.c.l.b16 %v961
        %v1346 = vunpack.c.l.b16 %v962
        %v1347 = vunpack.c.l.b16 %v963
        %v1348 = vunpack.c.l.b16 %v964
        %v1349 = vunpack.c.l.b16 %v965
        %v1350 = vunpack.c.l.b16 %v966
        %v1351 = vunpack.c.l.b16 %v967
        %v1352 = vunpack.c.l.b16 %v968
        %v1353 = vunpack.c.l.b16 %v969
        %v1354 = vunpack.c.l.b16 %v970
        %v1355 = vunpack.c.l.b16 %v971
        %v1356 = vunpack.c.l.b16 %v972
        %v1357 = vunpack.c.l.b16 %v973
        %v1358 = vunpack.c.l.b16 %v974
        %v1359 = vunpack.c.l.b16 %v975
        %v1360 = vunpack.c.l.b16 %v976
        %v1361 = vunpack.c.l.b16 %v977
        %v1362 = vunpack.c.l.b16 %v978
        %v1363 = vunpack.c.l.b16 %v979
        %v1364 = vunpack.c.l.b16 %v980
        %v1365 = vunpack.c.l.b16 %v981
        %v1366 = vpack.c.b16 %v1319, %v1318
        %v1367 = vpack.c.b16 %v1321, %v1320
        %v1368 = vpack.c.b16 %v1323, %v1322
        %v1369 = vpack.c.b16 %v1325, %v1324
        %v1370 = vpack.c.b16 %v1327, %v1326
        %v1371 = vpack.c.b16 %v1329, %v1328
        %v1372 = vpack.c.b16 %v1331, %v1330
        %v1373 = vpack.c.b16 %v1333, %v1332
        %v1374 = vpack.c.b16 %v1335, %v1334
        %v1375 = vpack.c.b16 %v1337, %v1336
        %v1376 = vpack.c.b16 %v1339, %v1338
        %v1377 = vpack.c.b16 %v1341, %v1340
        %v1378 = vpack.c.b16 %v1343, %v1342
        %v1379 = vpack.c.b16 %v1345, %v1344
        %v1380 = vpack.c.b16 %v1347, %v1346
        %v1381 = vpack.c.b16 %v1349, %v1348
        %v1382 = vpack.c.b16 %v1351, %v1350
        %v1383 = vpack.c.b16 %v1353, %v1352
        %v1384 = vpack.c.b16 %v1355, %v1354
        %v1385 = vpack.c.b16 %v1357, %v1356
        %v1386 = vpack.c.b16 %v1359, %v1358
        %v1387 = vpack.c.b16 %v1361, %v1360
        %v1388 = vpack.c.b16 %v1363, %v1362
        %v1389 = vpack.c.b16 %v1365, %v1364
        %1414 = vmatprep.subr.bf16.mxu0 0
        %1415 = vmatpush1.bf16.xpose.msra.mxu0 %v933
        %1416 = vmatprep.subr.bf16.mxu0 0
        %1417 = vmatpush1.bf16.xpose.msra.mxu0 0
        %1418 = vmatprep.subr.bf16.mxu0 0
        %1419 = vmatpush1.bf16.xpose.msra.mxu0 0
        %1420 = vmatprep.subr.bf16.mxu0 0
        %1421 = vmatpush1.bf16.xpose.msra.mxu0 0
        %1422 = vmatprep.subr.bf16.mxu0 0
        %1423 = vmatpush1.bf16.xpose.msra.mxu0 0
        %1424 = vmatprep.subr.bf16.mxu0 0
        %1425 = vmatpush1.bf16.xpose.msra.mxu0 0
        %1426 = vmatprep.subr.bf16.mxu0 0
        %1427 = vmatpush1.bf16.xpose.msra.mxu0 0
        %1428 = vmatprep.subr.bf16.mxu0 0
        %1429 = vmatpush1.bf16.xpose.msra.mxu0 0
        %1430 = vmatprep.subr.bf16.mxu0 0
        %1431 = vmatpush1.bf16.xpose.msra.mxu0 0
        %1432 = vmatprep.subr.bf16.mxu0 0
        %1433 = vmatpush1.bf16.xpose.msra.mxu0 0
        %1434 = vmatprep.subr.bf16.mxu0 0
        %1435 = vmatpush1.bf16.xpose.msra.mxu0 0
        %1436 = vmatprep.subr.bf16.mxu0 0
        %1437 = vmatpush1.bf16.xpose.msra.mxu0 0
        %1438 = vmatprep.subr.bf16.mxu0 0
        %1439 = vmatpush1.bf16.xpose.msra.mxu0 0
        %1440 = vmatprep.subr.bf16.mxu0 0
        %1441 = vmatpush1.bf16.xpose.msra.mxu0 0
        %1442 = vmatprep.subr.bf16.mxu0 0
        %1443 = vmatpush1.bf16.xpose.msra.mxu0 0
        %1444 = vmatprep.subr.bf16.mxu0 0
        %1445 = vmatpush1.bf16.xpose.msra.mxu0 0
        %1446 = vmatprep.mubr.bf16.mxu0 0
        %1447 = vmatmul.mubr.bf16.gmra.mrb[0].mxu0 %v1366
        %v1448 = vpop.f32.mrb[0].mxu0
        %v1449 = vadd.f32 %v1033, %v1448
        %v1450 = vpop.f32.mrb[0].mxu0
        %v1451 = vpop.f32.mrb[0].mxu0
        %v1452 = vadd.f32 %v1038, %v1451
        %v1453 = vpop.f32.mrb[0].mxu0
        %1454 = vmatprep.mubr.bf16.mxu0 0
        %1455 = vmatmul.mubr.bf16.gmra.mrb[0].mxu0 %v1367
        %v1456 = vpop.f32.mrb[0].mxu0
        %v1457 = vadd.f32 %v1043, %v1456
        %v1458 = vpop.f32.mrb[0].mxu0
        %v1459 = vpop.f32.mrb[0].mxu0
        %v1460 = vadd.f32 %v1048, %v1459
        %v1461 = vpop.f32.mrb[0].mxu0
        %1462 = vmatprep.mubr.bf16.mxu0 0
        %1463 = vmatmul.mubr.bf16.gmra.mrb[0].mxu0 %v1368
        %v1464 = vpop.f32.mrb[0].mxu0
        %v1465 = vadd.f32 %v1053, %v1464
        %v1466 = vpop.f32.mrb[0].mxu0
        %v1467 = vpop.f32.mrb[0].mxu0
        %v1468 = vadd.f32 %v1058, %v1467
        %v1469 = vpop.f32.mrb[0].mxu0
        %1470 = vmatprep.mubr.bf16.mxu0 0
        %1471 = vmatmul.mubr.bf16.gmra.mrb[0].mxu0 %v1369
        %v1472 = vpop.f32.mrb[0].mxu0
        %v1473 = vadd.f32 %v1063, %v1472
        %v1474 = vpop.f32.mrb[0].mxu0
        %v1475 = vpop.f32.mrb[0].mxu0
        %v1476 = vadd.f32 %v1068, %v1475
        %v1477 = vpop.f32.mrb[0].mxu0
        %1478 = vmatprep.mubr.bf16.mxu0 0
        %1479 = vmatmul.mubr.bf16.gmra.mrb[0].mxu0 %v1370
        %v1480 = vpop.f32.mrb[0].mxu0
        %v1481 = vadd.f32 %v1073, %v1480
        %v1482 = vpop.f32.mrb[0].mxu0
        %v1483 = vpop.f32.mrb[0].mxu0
        %v1484 = vadd.f32 %v1078, %v1483
        %v1485 = vpop.f32.mrb[0].mxu0
        %1486 = vmatprep.mubr.bf16.mxu0 0
        %1487 = vmatmul.mubr.bf16.gmra.mrb[0].mxu0 %v1371
        %v1488 = vpop.f32.mrb[0].mxu0
        %v1489 = vadd.f32 %v1083, %v1488
        %v1490 = vpop.f32.mrb[0].mxu0
        %v1491 = vpop.f32.mrb[0].mxu0
        %v1492 = vadd.f32 %v1088, %v1491
        %v1493 = vpop.f32.mrb[0].mxu0
        %1494 = vmatprep.mubr.bf16.mxu0 0
        %1495 = vmatmul.mubr.bf16.gmra.mrb[0].mxu0 %v1372
        %v1496 = vpop.f32.mrb[0].mxu0
        %v1497 = vadd.f32 %v1093, %v1496
        %v1498 = vpop.f32.mrb[0].mxu0
        %v1499 = vpop.f32.mrb[0].mxu0
        %v1500 = vadd.f32 %v1098, %v1499
        %v1501 = vpop.f32.mrb[0].mxu0
        %1502 = vmatprep.mubr.bf16.mxu0 0
        %1503 = vmatmul.mubr.bf16.gmra.mrb[0].mxu0 %v1373
        %v1504 = vpop.f32.mrb[0].mxu0
        %v1505 = vadd.f32 %v1103, %v1504
        %v1506 = vpop.f32.mrb[0].mxu0
        %v1507 = vpop.f32.mrb[0].mxu0
        %v1508 = vadd.f32 %v1108, %v1507
        %v1509 = vpop.f32.mrb[0].mxu0
        %1510 = vmatprep.mubr.bf16.mxu0 0
        %1511 = vmatmul.mubr.bf16.gmra.mrb[0].mxu0 %v1374
        %v1512 = vpop.f32.mrb[0].mxu0
        %v1513 = vadd.f32 %v1113, %v1512
        %v1514 = vpop.f32.mrb[0].mxu0
        %v1515 = vpop.f32.mrb[0].mxu0
        %v1516 = vadd.f32 %v1118, %v1515
        %v1517 = vpop.f32.mrb[0].mxu0
        %1518 = vmatprep.mubr.bf16.mxu0 0
        %1519 = vmatmul.mubr.bf16.gmra.mrb[0].mxu0 %v1375
        %v1520 = vpop.f32.mrb[0].mxu0
        %v1521 = vadd.f32 %v1123, %v1520
        %v1522 = vpop.f32.mrb[0].mxu0
        %v1523 = vpop.f32.mrb[0].mxu0
        %v1524 = vadd.f32 %v1128, %v1523
        %v1525 = vpop.f32.mrb[0].mxu0
        %1526 = vmatprep.mubr.bf16.mxu0 0
        %1527 = vmatmul.mubr.bf16.gmra.mrb[0].mxu0 %v1376
        %v1528 = vpop.f32.mrb[0].mxu0
        %v1529 = vadd.f32 %v1133, %v1528
        %v1530 = vpop.f32.mrb[0].mxu0
        %v1531 = vpop.f32.mrb[0].mxu0
        %v1532 = vadd.f32 %v1138, %v1531
        %v1533 = vpop.f32.mrb[0].mxu0
        %1534 = vmatprep.mubr.bf16.mxu0 0
        %1535 = vmatmul.mubr.bf16.gmra.mrb[0].mxu0 %v1377
        %v1536 = vpop.f32.mrb[0].mxu0
        %v1537 = vadd.f32 %v1143, %v1536
        %v1538 = vpop.f32.mrb[0].mxu0
        %v1539 = vpop.f32.mrb[0].mxu0
        %v1540 = vadd.f32 %v1148, %v1539
        %v1541 = vpop.f32.mrb[0].mxu0
        %1542 = vmatprep.mubr.bf16.mxu0 0
        %1543 = vmatmul.mubr.bf16.gmra.mrb[0].mxu0 %v1378
        %v1544 = vpop.f32.mrb[0].mxu0
        %v1545 = vadd.f32 %v1153, %v1544
        %v1546 = vpop.f32.mrb[0].mxu0
        %v1547 = vpop.f32.mrb[0].mxu0
        %v1548 = vadd.f32 %v1158, %v1547
        %v1549 = vpop.f32.mrb[0].mxu0
        %1550 = vmatprep.mubr.bf16.mxu0 0
        %1551 = vmatmul.mubr.bf16.gmra.mrb[0].mxu0 %v1379
        %v1552 = vpop.f32.mrb[0].mxu0
        %v1553 = vadd.f32 %v1163, %v1552
        %v1554 = vpop.f32.mrb[0].mxu0
        %v1555 = vpop.f32.mrb[0].mxu0
        %v1556 = vadd.f32 %v1168, %v1555
        %v1557 = vpop.f32.mrb[0].mxu0
        %1558 = vmatprep.mubr.bf16.mxu0 0
        %1559 = vmatmul.mubr.bf16.gmra.mrb[0].mxu0 %v1380
        %v1560 = vpop.f32.mrb[0].mxu0
        %v1561 = vadd.f32 %v1173, %v1560
        %v1562 = vpop.f32.mrb[0].mxu0
        %v1563 = vpop.f32.mrb[0].mxu0
        %v1564 = vadd.f32 %v1178, %v1563
        %v1565 = vpop.f32.mrb[0].mxu0
        %1566 = vmatprep.mubr.bf16.mxu0 0
        %1567 = vmatmul.mubr.bf16.gmra.mrb[0].mxu0 %v1381
        %v1568 = vpop.f32.mrb[0].mxu0
        %v1569 = vadd.f32 %v1183, %v1568
        %v1570 = vpop.f32.mrb[0].mxu0
        %v1571 = vpop.f32.mrb[0].mxu0
        %v1572 = vadd.f32 %v1188, %v1571
        %v1573 = vpop.f32.mrb[0].mxu0
        %1574 = vmatprep.mubr.bf16.mxu0 0
        %1575 = vmatmul.mubr.bf16.gmra.mrb[0].mxu0 %v1382
        %v1576 = vpop.f32.mrb[0].mxu0
        %v1577 = vadd.f32 %v1193, %v1576
        %v1578 = vpop.f32.mrb[0].mxu0
        %v1579 = vpop.f32.mrb[0].mxu0
        %v1580 = vadd.f32 %v1198, %v1579
        %v1581 = vpop.f32.mrb[0].mxu0
        %1582 = vmatprep.mubr.bf16.mxu0 0
        %1583 = vmatmul.mubr.bf16.gmra.mrb[0].mxu0 %v1383
        %v1584 = vpop.f32.mrb[0].mxu0
        %v1585 = vadd.f32 %v1203, %v1584
        %v1586 = vpop.f32.mrb[0].mxu0
        %v1587 = vpop.f32.mrb[0].mxu0
        %v1588 = vadd.f32 %v1208, %v1587
        %v1589 = vpop.f32.mrb[0].mxu0
        %1590 = vmatprep.mubr.bf16.mxu0 0
        %1591 = vmatmul.mubr.bf16.gmra.mrb[0].mxu0 %v1384
        %v1592 = vpop.f32.mrb[0].mxu0
        %v1593 = vadd.f32 %v1213, %v1592
        %v1594 = vpop.f32.mrb[0].mxu0
        %v1595 = vpop.f32.mrb[0].mxu0
        %v1596 = vadd.f32 %v1218, %v1595
        %v1597 = vpop.f32.mrb[0].mxu0
        %1598 = vmatprep.mubr.bf16.mxu0 0
        %1599 = vmatmul.mubr.bf16.gmra.mrb[0].mxu0 %v1385
        %v1600 = vpop.f32.mrb[0].mxu0
        %v1601 = vadd.f32 %v1223, %v1600
        %v1602 = vpop.f32.mrb[0].mxu0
        %v1603 = vpop.f32.mrb[0].mxu0
        %v1604 = vadd.f32 %v1228, %v1603
        %v1605 = vpop.f32.mrb[0].mxu0
        %1606 = vmatprep.mubr.bf16.mxu0 0
        %1607 = vmatmul.mubr.bf16.gmra.mrb[0].mxu0 %v1386
        %v1608 = vpop.f32.mrb[0].mxu0
        %v1609 = vadd.f32 %v1233, %v1608
        %v1610 = vpop.f32.mrb[0].mxu0
        %v1611 = vpop.f32.mrb[0].mxu0
        %v1612 = vadd.f32 %v1238, %v1611
        %v1613 = vpop.f32.mrb[0].mxu0
        %1614 = vmatprep.mubr.bf16.mxu0 0
        %1615 = vmatmul.mubr.bf16.gmra.mrb[0].mxu0 %v1387
        %v1616 = vpop.f32.mrb[0].mxu0
        %v1617 = vadd.f32 %v1243, %v1616
        %v1618 = vpop.f32.mrb[0].mxu0
        %v1619 = vpop.f32.mrb[0].mxu0
        %v1620 = vadd.f32 %v1248, %v1619
        %v1621 = vpop.f32.mrb[0].mxu0
        %1622 = vmatprep.mubr.bf16.mxu0 0
        %1623 = vmatmul.mubr.bf16.gmra.mrb[0].mxu0 %v1388
        %v1624 = vpop.f32.mrb[0].mxu0
        %v1625 = vadd.f32 %v1253, %v1624
        %v1626 = vpop.f32.mrb[0].mxu0
        %v1627 = vpop.f32.mrb[0].mxu0
        %v1628 = vadd.f32 %v1258, %v1627
        %v1629 = vpop.f32.mrb[0].mxu0
        %1630 = vmatprep.mubr.bf16.mxu0 0
        %1631 = vmatmul.mubr.bf16.gmra.mrb[0].mxu0 %v1389
        %v1632 = vpop.f32.mrb[0].mxu0
        %v1633 = vadd.f32 %v1263, %v1632
        %v1634 = vpop.f32.mrb[0].mxu0
        %v1635 = vpop.f32.mrb[0].mxu0
        %v1636 = vadd.f32 %v1268, %v1635
        %v1637 = vpop.f32.mrb[0].mxu0
        %1638 = vdwg.mxu0
        %v1639 = vpack.c.bf16 %v1452, %v1449
        %v1640 = vpack.c.bf16 %v1460, %v1457
        %v1641 = vpack.c.bf16 %v1468, %v1465
        %v1642 = vpack.c.bf16 %v1476, %v1473
        %v1643 = vpack.c.bf16 %v1484, %v1481
        %v1644 = vpack.c.bf16 %v1492, %v1489
        %v1645 = vpack.c.bf16 %v1500, %v1497
        %v1646 = vpack.c.bf16 %v1508, %v1505
        %v1647 = vpack.c.bf16 %v1516, %v1513
        %v1648 = vpack.c.bf16 %v1524, %v1521
        %v1649 = vpack.c.bf16 %v1532, %v1529
        %v1650 = vpack.c.bf16 %v1540, %v1537
        %v1651 = vpack.c.bf16 %v1548, %v1545
        %v1652 = vpack.c.bf16 %v1556, %v1553
        %v1653 = vpack.c.bf16 %v1564, %v1561
        %v1654 = vpack.c.bf16 %v1572, %v1569
        %v1655 = vpack.c.bf16 %v1580, %v1577
        %v1656 = vpack.c.bf16 %v1588, %v1585
        %v1657 = vpack.c.bf16 %v1596, %v1593
        %v1658 = vpack.c.bf16 %v1604, %v1601
        %v1659 = vpack.c.bf16 %v1612, %v1609
        %v1660 = vpack.c.bf16 %v1620, %v1617
        %v1661 = vpack.c.bf16 %v1628, %v1625
        %v1662 = vpack.c.bf16 %v1636, %v1633
        %1663 = vxpose.xlu0.c.b16.start [1/8] %v1639, 128
        %1664 = vxpose.xlu0.c.b16.cont [2/8] %v1640, 128
        %1665 = vxpose.xlu0.c.b16.cont [3/8] 0, 128
        %1666 = vxpose.xlu0.c.b16.cont [4/8] 0, 128
        %1667 = vxpose.xlu0.c.b16.cont [5/8] 0, 128
        %1668 = vxpose.xlu0.c.b16.cont [6/8] 0, 128
        %1669 = vxpose.xlu0.c.b16.cont [7/8] 0, 128
        %1670 = vxpose.xlu0.c.b16.end [8/8] 0, 128
        %v1671 = vpop.trf.xlu0
        %v1672 = vpop.trf.xlu0
        %v1673 = vpop.trf.xlu0
        %v1674 = vpop.trf.xlu0
        %v1675 = vpop.trf.xlu0
        %v1676 = vpop.trf.xlu0
        %v1677 = vpop.trf.xlu0
        %v1678 = vpop.trf.xlu0
        %1679 = vxpose.xlu0.c.b16.start [1/8] %v1641, 128
        %1680 = vxpose.xlu0.c.b16.cont [2/8] %v1642, 128
        %1681 = vxpose.xlu0.c.b16.cont [3/8] 0, 128
        %1682 = vxpose.xlu0.c.b16.cont [4/8] 0, 128
        %1683 = vxpose.xlu0.c.b16.cont [5/8] 0, 128
        %1684 = vxpose.xlu0.c.b16.cont [6/8] 0, 128
        %1685 = vxpose.xlu0.c.b16.cont [7/8] 0, 128
        %1686 = vxpose.xlu0.c.b16.end [8/8] 0, 128
        %v1687 = vpop.trf.xlu0
        %v1688 = vpop.trf.xlu0
        %v1689 = vpop.trf.xlu0
        %v1690 = vpop.trf.xlu0
        %v1691 = vpop.trf.xlu0
        %v1692 = vpop.trf.xlu0
        %v1693 = vpop.trf.xlu0
        %v1694 = vpop.trf.xlu0
        %1695 = vxpose.xlu0.c.b16.start [1/8] %v1643, 128
        %1696 = vxpose.xlu0.c.b16.cont [2/8] %v1644, 128
        %1697 = vxpose.xlu0.c.b16.cont [3/8] 0, 128
        %1698 = vxpose.xlu0.c.b16.cont [4/8] 0, 128
        %1699 = vxpose.xlu0.c.b16.cont [5/8] 0, 128
        %1700 = vxpose.xlu0.c.b16.cont [6/8] 0, 128
        %1701 = vxpose.xlu0.c.b16.cont [7/8] 0, 128
        %1702 = vxpose.xlu0.c.b16.end [8/8] 0, 128
        %v1703 = vpop.trf.xlu0
        %v1704 = vpop.trf.xlu0
        %v1705 = vpop.trf.xlu0
        %v1706 = vpop.trf.xlu0
        %v1707 = vpop.trf.xlu0
        %v1708 = vpop.trf.xlu0
        %v1709 = vpop.trf.xlu0
        %v1710 = vpop.trf.xlu0
        %1711 = vxpose.xlu0.c.b16.start [1/8] %v1645, 128
        %1712 = vxpose.xlu0.c.b16.cont [2/8] %v1646, 128
        %1713 = vxpose.xlu0.c.b16.cont [3/8] 0, 128
        %1714 = vxpose.xlu0.c.b16.cont [4/8] 0, 128
        %1715 = vxpose.xlu0.c.b16.cont [5/8] 0, 128
        %1716 = vxpose.xlu0.c.b16.cont [6/8] 0, 128
        %1717 = vxpose.xlu0.c.b16.cont [7/8] 0, 128
        %1718 = vxpose.xlu0.c.b16.end [8/8] 0, 128
        %v1719 = vpop.trf.xlu0
        %v1720 = vpop.trf.xlu0
        %v1721 = vpop.trf.xlu0
        %v1722 = vpop.trf.xlu0
        %v1723 = vpop.trf.xlu0
        %v1724 = vpop.trf.xlu0
        %v1725 = vpop.trf.xlu0
        %v1726 = vpop.trf.xlu0
        %v1731 = vunpack.c.l.b16 %v1671
        %v1732 = vunpack.c.h.b16 %v1671
        %v1733 = vunpack.c.l.b16 %v1687
        %v1734 = vunpack.c.h.b16 %v1687
        %v1735 = vunpack.c.l.b16 %v1703
        %v1736 = vunpack.c.h.b16 %v1703
        %v1737 = vunpack.c.l.b16 %v1719
        %v1738 = vunpack.c.h.b16 %v1719
        %v1739 = vpack.c.b16 %v1731, %v1731
        %v1740 = vpack.c.b16 %v1732, %v1732
        %v1741 = vpack.c.b16 %v1733, %v1733
        %v1742 = vpack.c.b16 %v1734, %v1734
        %v1743 = vpack.c.b16 %v1735, %v1735
        %v1744 = vpack.c.b16 %v1736, %v1736
        %v1745 = vpack.c.b16 %v1737, %v1737
        %v1746 = vpack.c.b16 %v1738, %v1738
        %1747 = vxpose.xlu0.c.b16.start [1/8] %v1647, 128
        %1748 = vxpose.xlu0.c.b16.cont [2/8] %v1648, 128
        %1749 = vxpose.xlu0.c.b16.cont [3/8] 0, 128
        %1750 = vxpose.xlu0.c.b16.cont [4/8] 0, 128
        %1751 = vxpose.xlu0.c.b16.cont [5/8] 0, 128
        %1752 = vxpose.xlu0.c.b16.cont [6/8] 0, 128
        %1753 = vxpose.xlu0.c.b16.cont [7/8] 0, 128
        %1754 = vxpose.xlu0.c.b16.end [8/8] 0, 128
        %v1755 = vpop.trf.xlu0
        %v1756 = vpop.trf.xlu0
        %v1757 = vpop.trf.xlu0
        %v1758 = vpop.trf.xlu0
        %v1759 = vpop.trf.xlu0
        %v1760 = vpop.trf.xlu0
        %v1761 = vpop.trf.xlu0
        %v1762 = vpop.trf.xlu0
        %1763 = vxpose.xlu0.c.b16.start [1/8] %v1649, 128
        %1764 = vxpose.xlu0.c.b16.cont [2/8] %v1650, 128
        %1765 = vxpose.xlu0.c.b16.cont [3/8] 0, 128
        %1766 = vxpose.xlu0.c.b16.cont [4/8] 0, 128
        %1767 = vxpose.xlu0.c.b16.cont [5/8] 0, 128
        %1768 = vxpose.xlu0.c.b16.cont [6/8] 0, 128
        %1769 = vxpose.xlu0.c.b16.cont [7/8] 0, 128
        %1770 = vxpose.xlu0.c.b16.end [8/8] 0, 128
        %v1771 = vpop.trf.xlu0
        %v1772 = vpop.trf.xlu0
        %v1773 = vpop.trf.xlu0
        %v1774 = vpop.trf.xlu0
        %v1775 = vpop.trf.xlu0
        %v1776 = vpop.trf.xlu0
        %v1777 = vpop.trf.xlu0
        %v1778 = vpop.trf.xlu0
        %1779 = vxpose.xlu0.c.b16.start [1/8] %v1651, 128
        %1780 = vxpose.xlu0.c.b16.cont [2/8] %v1652, 128
        %1781 = vxpose.xlu0.c.b16.cont [3/8] 0, 128
        %1782 = vxpose.xlu0.c.b16.cont [4/8] 0, 128
        %1783 = vxpose.xlu0.c.b16.cont [5/8] 0, 128
        %1784 = vxpose.xlu0.c.b16.cont [6/8] 0, 128
        %1785 = vxpose.xlu0.c.b16.cont [7/8] 0, 128
        %1786 = vxpose.xlu0.c.b16.end [8/8] 0, 128
        %v1787 = vpop.trf.xlu0
        %v1788 = vpop.trf.xlu0
        %v1789 = vpop.trf.xlu0
        %v1790 = vpop.trf.xlu0
        %v1791 = vpop.trf.xlu0
        %v1792 = vpop.trf.xlu0
        %v1793 = vpop.trf.xlu0
        %v1794 = vpop.trf.xlu0
        %1795 = vxpose.xlu0.c.b16.start [1/8] %v1653, 128
        %1796 = vxpose.xlu0.c.b16.cont [2/8] %v1654, 128
        %1797 = vxpose.xlu0.c.b16.cont [3/8] 0, 128
        %1798 = vxpose.xlu0.c.b16.cont [4/8] 0, 128
        %1799 = vxpose.xlu0.c.b16.cont [5/8] 0, 128
        %1800 = vxpose.xlu0.c.b16.cont [6/8] 0, 128
        %1801 = vxpose.xlu0.c.b16.cont [7/8] 0, 128
        %1802 = vxpose.xlu0.c.b16.end [8/8] 0, 128
        %v1803 = vpop.trf.xlu0
        %v1804 = vpop.trf.xlu0
        %v1805 = vpop.trf.xlu0
        %v1806 = vpop.trf.xlu0
        %v1807 = vpop.trf.xlu0
        %v1808 = vpop.trf.xlu0
        %v1809 = vpop.trf.xlu0
        %v1810 = vpop.trf.xlu0
        %v1815 = vunpack.c.l.b16 %v1755
        %v1816 = vunpack.c.h.b16 %v1755
        %v1817 = vunpack.c.l.b16 %v1771
        %v1818 = vunpack.c.h.b16 %v1771
        %v1819 = vunpack.c.l.b16 %v1787
        %v1820 = vunpack.c.h.b16 %v1787
        %v1821 = vunpack.c.l.b16 %v1803
        %v1822 = vunpack.c.h.b16 %v1803
        %v1823 = vpack.c.b16 %v1815, %v1815
        %v1824 = vpack.c.b16 %v1816, %v1816
        %v1825 = vpack.c.b16 %v1817, %v1817
        %v1826 = vpack.c.b16 %v1818, %v1818
        %v1827 = vpack.c.b16 %v1819, %v1819
        %v1828 = vpack.c.b16 %v1820, %v1820
        %v1829 = vpack.c.b16 %v1821, %v1821
        %v1830 = vpack.c.b16 %v1822, %v1822
        %1831 = vxpose.xlu0.c.b16.start [1/8] %v1655, 128
        %1832 = vxpose.xlu0.c.b16.cont [2/8] %v1656, 128
        %1833 = vxpose.xlu0.c.b16.cont [3/8] 0, 128
        %1834 = vxpose.xlu0.c.b16.cont [4/8] 0, 128
        %1835 = vxpose.xlu0.c.b16.cont [5/8] 0, 128
        %1836 = vxpose.xlu0.c.b16.cont [6/8] 0, 128
        %1837 = vxpose.xlu0.c.b16.cont [7/8] 0, 128
        %1838 = vxpose.xlu0.c.b16.end [8/8] 0, 128
        %v1839 = vpop.trf.xlu0
        %v1840 = vpop.trf.xlu0
        %v1841 = vpop.trf.xlu0
        %v1842 = vpop.trf.xlu0
        %v1843 = vpop.trf.xlu0
        %v1844 = vpop.trf.xlu0
        %v1845 = vpop.trf.xlu0
        %v1846 = vpop.trf.xlu0
        %1847 = vxpose.xlu0.c.b16.start [1/8] %v1657, 128
        %1848 = vxpose.xlu0.c.b16.cont [2/8] %v1658, 128
        %1849 = vxpose.xlu0.c.b16.cont [3/8] 0, 128
        %1850 = vxpose.xlu0.c.b16.cont [4/8] 0, 128
        %1851 = vxpose.xlu0.c.b16.cont [5/8] 0, 128
        %1852 = vxpose.xlu0.c.b16.cont [6/8] 0, 128
        %1853 = vxpose.xlu0.c.b16.cont [7/8] 0, 128
        %1854 = vxpose.xlu0.c.b16.end [8/8] 0, 128
        %v1855 = vpop.trf.xlu0
        %v1856 = vpop.trf.xlu0
        %v1857 = vpop.trf.xlu0
        %v1858 = vpop.trf.xlu0
        %v1859 = vpop.trf.xlu0
        %v1860 = vpop.trf.xlu0
        %v1861 = vpop.trf.xlu0
        %v1862 = vpop.trf.xlu0
        %1863 = vxpose.xlu0.c.b16.start [1/8] %v1659, 128
        %1864 = vxpose.xlu0.c.b16.cont [2/8] %v1660, 128
        %1865 = vxpose.xlu0.c.b16.cont [3/8] 0, 128
        %1866 = vxpose.xlu0.c.b16.cont [4/8] 0, 128
        %1867 = vxpose.xlu0.c.b16.cont [5/8] 0, 128
        %1868 = vxpose.xlu0.c.b16.cont [6/8] 0, 128
        %1869 = vxpose.xlu0.c.b16.cont [7/8] 0, 128
        %1870 = vxpose.xlu0.c.b16.end [8/8] 0, 128
        %v1871 = vpop.trf.xlu0
        %v1872 = vpop.trf.xlu0
        %v1873 = vpop.trf.xlu0
        %v1874 = vpop.trf.xlu0
        %v1875 = vpop.trf.xlu0
        %v1876 = vpop.trf.xlu0
        %v1877 = vpop.trf.xlu0
        %v1878 = vpop.trf.xlu0
        %1879 = vxpose.xlu0.c.b16.start [1/8] %v1661, 128
        %1880 = vxpose.xlu0.c.b16.cont [2/8] %v1662, 128
        %1881 = vxpose.xlu0.c.b16.cont [3/8] 0, 128
        %1882 = vxpose.xlu0.c.b16.cont [4/8] 0, 128
        %1883 = vxpose.xlu0.c.b16.cont [5/8] 0, 128
        %1884 = vxpose.xlu0.c.b16.cont [6/8] 0, 128
        %1885 = vxpose.xlu0.c.b16.cont [7/8] 0, 128
        %1886 = vxpose.xlu0.c.b16.end [8/8] 0, 128
        %v1887 = vpop.trf.xlu0
        %v1888 = vpop.trf.xlu0
        %v1889 = vpop.trf.xlu0
        %v1890 = vpop.trf.xlu0
        %v1891 = vpop.trf.xlu0
        %v1892 = vpop.trf.xlu0
        %v1893 = vpop.trf.xlu0
        %v1894 = vpop.trf.xlu0
        %v1899 = vunpack.c.l.b16 %v1839
        %v1900 = vunpack.c.h.b16 %v1839
        %v1901 = vunpack.c.l.b16 %v1855
        %v1902 = vunpack.c.h.b16 %v1855
        %v1903 = vunpack.c.l.b16 %v1871
        %v1904 = vunpack.c.h.b16 %v1871
        %v1905 = vunpack.c.l.b16 %v1887
        %v1906 = vunpack.c.h.b16 %v1887
        %v1907 = vpack.c.b16 %v1899, %v1899
        %v1908 = vpack.c.b16 %v1900, %v1900
        %v1909 = vpack.c.b16 %v1901, %v1901
        %v1910 = vpack.c.b16 %v1902, %v1902
        %v1911 = vpack.c.b16 %v1903, %v1903
        %v1912 = vpack.c.b16 %v1904, %v1904
        %v1913 = vpack.c.b16 %v1905, %v1905
        %v1914 = vpack.c.b16 %v1906, %v1906
        %vm1915 = vcmask 261120
        %v1917 = vsel %vm1915, %v1739, 0
        %v1920 = vsel %vm1915, %v1823, 0
        %1922 = vmatprep.subr.bf16.mxu0 0
        %1923 = vmatpush1.bf16.xpose.msra.mxu0 %v1920
        %1924 = vmatprep.subr.bf16.mxu0 0
        %1925 = vmatpush1.bf16.xpose.msra.mxu0 0
        %1926 = vmatprep.subr.bf16.mxu0 0
        %1927 = vmatpush1.bf16.xpose.msra.mxu0 0
        %1928 = vmatprep.subr.bf16.mxu0 0
        %1929 = vmatpush1.bf16.xpose.msra.mxu0 0
        %1930 = vmatprep.subr.bf16.mxu0 0
        %1931 = vmatpush1.bf16.xpose.msra.mxu0 0
        %1932 = vmatprep.subr.bf16.mxu0 0
        %1933 = vmatpush1.bf16.xpose.msra.mxu0 0
        %1934 = vmatprep.subr.bf16.mxu0 0
        %1935 = vmatpush1.bf16.xpose.msra.mxu0 0
        %1936 = vmatprep.subr.bf16.mxu0 0
        %1937 = vmatpush1.bf16.xpose.msra.mxu0 0
        %1938 = vmatprep.subr.bf16.mxu0 0
        %1939 = vmatpush1.bf16.xpose.msra.mxu0 0
        %1940 = vmatprep.subr.bf16.mxu0 0
        %1941 = vmatpush1.bf16.xpose.msra.mxu0 0
        %1942 = vmatprep.subr.bf16.mxu0 0
        %1943 = vmatpush1.bf16.xpose.msra.mxu0 0
        %1944 = vmatprep.subr.bf16.mxu0 0
        %1945 = vmatpush1.bf16.xpose.msra.mxu0 0
        %1946 = vmatprep.subr.bf16.mxu0 0
        %1947 = vmatpush1.bf16.xpose.msra.mxu0 0
        %1948 = vmatprep.subr.bf16.mxu0 0
        %1949 = vmatpush1.bf16.xpose.msra.mxu0 0
        %1950 = vmatprep.subr.bf16.mxu0 0
        %1951 = vmatpush1.bf16.xpose.msra.mxu0 0
        %1952 = vmatprep.subr.bf16.mxu0 0
        %1953 = vmatpush1.bf16.xpose.msra.mxu0 0
        %1954 = vmatprep.mubr.bf16.mxu0 0
        %1955 = vmatmul.mubr.bf16.gmra.mrb[0].mxu0 %v1917
        %v1956 = vpop.f32.mrb[0].mxu0
        %v1957 = vadd.f32 0.0, %v1956
        %v1958 = vpop.f32.mrb[0].mxu0
        %v1959 = vpop.f32.mrb[0].mxu0
        %v1960 = vpop.f32.mrb[0].mxu0
        %1961 = vdwg.mxu0
        %v1963 = vsel %vm1915, %v1740, 0
        %v1966 = vsel %vm1915, %v1824, 0
        %1968 = vmatprep.subr.bf16.mxu0 0
        %1969 = vmatpush1.bf16.xpose.msra.mxu0 %v1966
        %1970 = vmatprep.subr.bf16.mxu0 0
        %1971 = vmatpush1.bf16.xpose.msra.mxu0 0
        %1972 = vmatprep.subr.bf16.mxu0 0
        %1973 = vmatpush1.bf16.xpose.msra.mxu0 0
        %1974 = vmatprep.subr.bf16.mxu0 0
        %1975 = vmatpush1.bf16.xpose.msra.mxu0 0
        %1976 = vmatprep.subr.bf16.mxu0 0
        %1977 = vmatpush1.bf16.xpose.msra.mxu0 0
        %1978 = vmatprep.subr.bf16.mxu0 0
        %1979 = vmatpush1.bf16.xpose.msra.mxu0 0
        %1980 = vmatprep.subr.bf16.mxu0 0
        %1981 = vmatpush1.bf16.xpose.msra.mxu0 0
        %1982 = vmatprep.subr.bf16.mxu0 0
        %1983 = vmatpush1.bf16.xpose.msra.mxu0 0
        %1984 = vmatprep.subr.bf16.mxu0 0
        %1985 = vmatpush1.bf16.xpose.msra.mxu0 0
        %1986 = vmatprep.subr.bf16.mxu0 0
        %1987 = vmatpush1.bf16.xpose.msra.mxu0 0
        %1988 = vmatprep.subr.bf16.mxu0 0
        %1989 = vmatpush1.bf16.xpose.msra.mxu0 0
        %1990 = vmatprep.subr.bf16.mxu0 0
        %1991 = vmatpush1.bf16.xpose.msra.mxu0 0
        %1992 = vmatprep.subr.bf16.mxu0 0
        %1993 = vmatpush1.bf16.xpose.msra.mxu0 0
        %1994 = vmatprep.subr.bf16.mxu0 0
        %1995 = vmatpush1.bf16.xpose.msra.mxu0 0
        %1996 = vmatprep.subr.bf16.mxu0 0
        %1997 = vmatpush1.bf16.xpose.msra.mxu0 0
        %1998 = vmatprep.subr.bf16.mxu0 0
        %1999 = vmatpush1.bf16.xpose.msra.mxu0 0
        %2000 = vmatprep.mubr.bf16.mxu0 0
        %2001 = vmatmul.mubr.bf16.gmra.mrb[0].mxu0 %v1963
        %v2002 = vpop.f32.mrb[0].mxu0
        %v2003 = vadd.f32 0.0, %v2002
        %v2004 = vpop.f32.mrb[0].mxu0
        %v2005 = vpop.f32.mrb[0].mxu0
        %v2006 = vpop.f32.mrb[0].mxu0
        %2007 = vdwg.mxu0
        %v2009 = vsel %vm1915, %v1741, 0
        %v2012 = vsel %vm1915, %v1825, 0
        %2014 = vmatprep.subr.bf16.mxu0 0
        %2015 = vmatpush1.bf16.xpose.msra.mxu0 %v2012
        %2016 = vmatprep.subr.bf16.mxu0 0
        %2017 = vmatpush1.bf16.xpose.msra.mxu0 0
        %2018 = vmatprep.subr.bf16.mxu0 0
        %2019 = vmatpush1.bf16.xpose.msra.mxu0 0
        %2020 = vmatprep.subr.bf16.mxu0 0
        %2021 = vmatpush1.bf16.xpose.msra.mxu0 0
        %2022 = vmatprep.subr.bf16.mxu0 0
        %2023 = vmatpush1.bf16.xpose.msra.mxu0 0
        %2024 = vmatprep.subr.bf16.mxu0 0
        %2025 = vmatpush1.bf16.xpose.msra.mxu0 0
        %2026 = vmatprep.subr.bf16.mxu0 0
        %2027 = vmatpush1.bf16.xpose.msra.mxu0 0
        %2028 = vmatprep.subr.bf16.mxu0 0
        %2029 = vmatpush1.bf16.xpose.msra.mxu0 0
        %2030 = vmatprep.subr.bf16.mxu0 0
        %2031 = vmatpush1.bf16.xpose.msra.mxu0 0
        %2032 = vmatprep.subr.bf16.mxu0 0
        %2033 = vmatpush1.bf16.xpose.msra.mxu0 0
        %2034 = vmatprep.subr.bf16.mxu0 0
        %2035 = vmatpush1.bf16.xpose.msra.mxu0 0
        %2036 = vmatprep.subr.bf16.mxu0 0
        %2037 = vmatpush1.bf16.xpose.msra.mxu0 0
        %2038 = vmatprep.subr.bf16.mxu0 0
        %2039 = vmatpush1.bf16.xpose.msra.mxu0 0
        %2040 = vmatprep.subr.bf16.mxu0 0
        %2041 = vmatpush1.bf16.xpose.msra.mxu0 0
        %2042 = vmatprep.subr.bf16.mxu0 0
        %2043 = vmatpush1.bf16.xpose.msra.mxu0 0
        %2044 = vmatprep.subr.bf16.mxu0 0
        %2045 = vmatpush1.bf16.xpose.msra.mxu0 0
        %2046 = vmatprep.mubr.bf16.mxu0 0
        %2047 = vmatmul.mubr.bf16.gmra.mrb[0].mxu0 %v2009
        %v2048 = vpop.f32.mrb[0].mxu0
        %v2049 = vadd.f32 0.0, %v2048
        %v2050 = vpop.f32.mrb[0].mxu0
        %v2051 = vpop.f32.mrb[0].mxu0
        %v2052 = vpop.f32.mrb[0].mxu0
        %2053 = vdwg.mxu0
        %v2055 = vsel %vm1915, %v1742, 0
        %v2058 = vsel %vm1915, %v1826, 0
        %2060 = vmatprep.subr.bf16.mxu0 0
        %2061 = vmatpush1.bf16.xpose.msra.mxu0 %v2058
        %2062 = vmatprep.subr.bf16.mxu0 0
        %2063 = vmatpush1.bf16.xpose.msra.mxu0 0
        %2064 = vmatprep.subr.bf16.mxu0 0
        %2065 = vmatpush1.bf16.xpose.msra.mxu0 0
        %2066 = vmatprep.subr.bf16.mxu0 0
        %2067 = vmatpush1.bf16.xpose.msra.mxu0 0
        %2068 = vmatprep.subr.bf16.mxu0 0
        %2069 = vmatpush1.bf16.xpose.msra.mxu0 0
        %2070 = vmatprep.subr.bf16.mxu0 0
        %2071 = vmatpush1.bf16.xpose.msra.mxu0 0
        %2072 = vmatprep.subr.bf16.mxu0 0
        %2073 = vmatpush1.bf16.xpose.msra.mxu0 0
        %2074 = vmatprep.subr.bf16.mxu0 0
        %2075 = vmatpush1.bf16.xpose.msra.mxu0 0
        %2076 = vmatprep.subr.bf16.mxu0 0
        %2077 = vmatpush1.bf16.xpose.msra.mxu0 0
        %2078 = vmatprep.subr.bf16.mxu0 0
        %2079 = vmatpush1.bf16.xpose.msra.mxu0 0
        %2080 = vmatprep.subr.bf16.mxu0 0
        %2081 = vmatpush1.bf16.xpose.msra.mxu0 0
        %2082 = vmatprep.subr.bf16.mxu0 0
        %2083 = vmatpush1.bf16.xpose.msra.mxu0 0
        %2084 = vmatprep.subr.bf16.mxu0 0
        %2085 = vmatpush1.bf16.xpose.msra.mxu0 0
        %2086 = vmatprep.subr.bf16.mxu0 0
        %2087 = vmatpush1.bf16.xpose.msra.mxu0 0
        %2088 = vmatprep.subr.bf16.mxu0 0
        %2089 = vmatpush1.bf16.xpose.msra.mxu0 0
        %2090 = vmatprep.subr.bf16.mxu0 0
        %2091 = vmatpush1.bf16.xpose.msra.mxu0 0
        %2092 = vmatprep.mubr.bf16.mxu0 0
        %2093 = vmatmul.mubr.bf16.gmra.mrb[0].mxu0 %v2055
        %v2094 = vpop.f32.mrb[0].mxu0
        %v2095 = vadd.f32 0.0, %v2094
        %v2096 = vpop.f32.mrb[0].mxu0
        %v2097 = vpop.f32.mrb[0].mxu0
        %v2098 = vpop.f32.mrb[0].mxu0
        %2099 = vdwg.mxu0
        %v2101 = vsel %vm1915, %v1743, 0
        %v2104 = vsel %vm1915, %v1827, 0
        %2106 = vmatprep.subr.bf16.mxu0 0
        %2107 = vmatpush1.bf16.xpose.msra.mxu0 %v2104
        %2108 = vmatprep.subr.bf16.mxu0 0
        %2109 = vmatpush1.bf16.xpose.msra.mxu0 0
        %2110 = vmatprep.subr.bf16.mxu0 0
        %2111 = vmatpush1.bf16.xpose.msra.mxu0 0
        %2112 = vmatprep.subr.bf16.mxu0 0
        %2113 = vmatpush1.bf16.xpose.msra.mxu0 0
        %2114 = vmatprep.subr.bf16.mxu0 0
        %2115 = vmatpush1.bf16.xpose.msra.mxu0 0
        %2116 = vmatprep.subr.bf16.mxu0 0
        %2117 = vmatpush1.bf16.xpose.msra.mxu0 0
        %2118 = vmatprep.subr.bf16.mxu0 0
        %2119 = vmatpush1.bf16.xpose.msra.mxu0 0
        %2120 = vmatprep.subr.bf16.mxu0 0
        %2121 = vmatpush1.bf16.xpose.msra.mxu0 0
        %2122 = vmatprep.subr.bf16.mxu0 0
        %2123 = vmatpush1.bf16.xpose.msra.mxu0 0
        %2124 = vmatprep.subr.bf16.mxu0 0
        %2125 = vmatpush1.bf16.xpose.msra.mxu0 0
        %2126 = vmatprep.subr.bf16.mxu0 0
        %2127 = vmatpush1.bf16.xpose.msra.mxu0 0
        %2128 = vmatprep.subr.bf16.mxu0 0
        %2129 = vmatpush1.bf16.xpose.msra.mxu0 0
        %2130 = vmatprep.subr.bf16.mxu0 0
        %2131 = vmatpush1.bf16.xpose.msra.mxu0 0
        %2132 = vmatprep.subr.bf16.mxu0 0
        %2133 = vmatpush1.bf16.xpose.msra.mxu0 0
        %2134 = vmatprep.subr.bf16.mxu0 0
        %2135 = vmatpush1.bf16.xpose.msra.mxu0 0
        %2136 = vmatprep.subr.bf16.mxu0 0
        %2137 = vmatpush1.bf16.xpose.msra.mxu0 0
        %2138 = vmatprep.mubr.bf16.mxu0 0
        %2139 = vmatmul.mubr.bf16.gmra.mrb[0].mxu0 %v2101
        %v2140 = vpop.f32.mrb[0].mxu0
        %v2141 = vadd.f32 0.0, %v2140
        %v2142 = vpop.f32.mrb[0].mxu0
        %v2143 = vpop.f32.mrb[0].mxu0
        %v2144 = vpop.f32.mrb[0].mxu0
        %2145 = vdwg.mxu0
        %v2147 = vsel %vm1915, %v1744, 0
        %v2150 = vsel %vm1915, %v1828, 0
        %2152 = vmatprep.subr.bf16.mxu0 0
        %2153 = vmatpush1.bf16.xpose.msra.mxu0 %v2150
        %2154 = vmatprep.subr.bf16.mxu0 0
        %2155 = vmatpush1.bf16.xpose.msra.mxu0 0
        %2156 = vmatprep.subr.bf16.mxu0 0
        %2157 = vmatpush1.bf16.xpose.msra.mxu0 0
        %2158 = vmatprep.subr.bf16.mxu0 0
        %2159 = vmatpush1.bf16.xpose.msra.mxu0 0
        %2160 = vmatprep.subr.bf16.mxu0 0
        %2161 = vmatpush1.bf16.xpose.msra.mxu0 0
        %2162 = vmatprep.subr.bf16.mxu0 0
        %2163 = vmatpush1.bf16.xpose.msra.mxu0 0
        %2164 = vmatprep.subr.bf16.mxu0 0
        %2165 = vmatpush1.bf16.xpose.msra.mxu0 0
        %2166 = vmatprep.subr.bf16.mxu0 0
        %2167 = vmatpush1.bf16.xpose.msra.mxu0 0
        %2168 = vmatprep.subr.bf16.mxu0 0
        %2169 = vmatpush1.bf16.xpose.msra.mxu0 0
        %2170 = vmatprep.subr.bf16.mxu0 0
        %2171 = vmatpush1.bf16.xpose.msra.mxu0 0
        %2172 = vmatprep.subr.bf16.mxu0 0
        %2173 = vmatpush1.bf16.xpose.msra.mxu0 0
        %2174 = vmatprep.subr.bf16.mxu0 0
        %2175 = vmatpush1.bf16.xpose.msra.mxu0 0
        %2176 = vmatprep.subr.bf16.mxu0 0
        %2177 = vmatpush1.bf16.xpose.msra.mxu0 0
        %2178 = vmatprep.subr.bf16.mxu0 0
        %2179 = vmatpush1.bf16.xpose.msra.mxu0 0
        %2180 = vmatprep.subr.bf16.mxu0 0
        %2181 = vmatpush1.bf16.xpose.msra.mxu0 0
        %2182 = vmatprep.subr.bf16.mxu0 0
        %2183 = vmatpush1.bf16.xpose.msra.mxu0 0
        %2184 = vmatprep.mubr.bf16.mxu0 0
        %2185 = vmatmul.mubr.bf16.gmra.mrb[0].mxu0 %v2147
        %v2186 = vpop.f32.mrb[0].mxu0
        %v2187 = vadd.f32 0.0, %v2186
        %v2188 = vpop.f32.mrb[0].mxu0
        %v2189 = vpop.f32.mrb[0].mxu0
        %v2190 = vpop.f32.mrb[0].mxu0
        %2191 = vdwg.mxu0
        %v2193 = vsel %vm1915, %v1745, 0
        %v2196 = vsel %vm1915, %v1829, 0
        %2198 = vmatprep.subr.bf16.mxu0 0
        %2199 = vmatpush1.bf16.xpose.msra.mxu0 %v2196
        %2200 = vmatprep.subr.bf16.mxu0 0
        %2201 = vmatpush1.bf16.xpose.msra.mxu0 0
        %2202 = vmatprep.subr.bf16.mxu0 0
        %2203 = vmatpush1.bf16.xpose.msra.mxu0 0
        %2204 = vmatprep.subr.bf16.mxu0 0
        %2205 = vmatpush1.bf16.xpose.msra.mxu0 0
        %2206 = vmatprep.subr.bf16.mxu0 0
        %2207 = vmatpush1.bf16.xpose.msra.mxu0 0
        %2208 = vmatprep.subr.bf16.mxu0 0
        %2209 = vmatpush1.bf16.xpose.msra.mxu0 0
        %2210 = vmatprep.subr.bf16.mxu0 0
        %2211 = vmatpush1.bf16.xpose.msra.mxu0 0
        %2212 = vmatprep.subr.bf16.mxu0 0
        %2213 = vmatpush1.bf16.xpose.msra.mxu0 0
        %2214 = vmatprep.subr.bf16.mxu0 0
        %2215 = vmatpush1.bf16.xpose.msra.mxu0 0
        %2216 = vmatprep.subr.bf16.mxu0 0
        %2217 = vmatpush1.bf16.xpose.msra.mxu0 0
        %2218 = vmatprep.subr.bf16.mxu0 0
        %2219 = vmatpush1.bf16.xpose.msra.mxu0 0
        %2220 = vmatprep.subr.bf16.mxu0 0
        %2221 = vmatpush1.bf16.xpose.msra.mxu0 0
        %2222 = vmatprep.subr.bf16.mxu0 0
        %2223 = vmatpush1.bf16.xpose.msra.mxu0 0
        %2224 = vmatprep.subr.bf16.mxu0 0
        %2225 = vmatpush1.bf16.xpose.msra.mxu0 0
        %2226 = vmatprep.subr.bf16.mxu0 0
        %2227 = vmatpush1.bf16.xpose.msra.mxu0 0
        %2228 = vmatprep.subr.bf16.mxu0 0
        %2229 = vmatpush1.bf16.xpose.msra.mxu0 0
        %2230 = vmatprep.mubr.bf16.mxu0 0
        %2231 = vmatmul.mubr.bf16.gmra.mrb[0].mxu0 %v2193
        %v2232 = vpop.f32.mrb[0].mxu0
        %v2233 = vadd.f32 0.0, %v2232
        %v2234 = vpop.f32.mrb[0].mxu0
        %v2235 = vpop.f32.mrb[0].mxu0
        %v2236 = vpop.f32.mrb[0].mxu0
        %2237 = vdwg.mxu0
        %v2239 = vsel %vm1915, %v1746, 0
        %v2242 = vsel %vm1915, %v1830, 0
        %2244 = vmatprep.subr.bf16.mxu0 0
        %2245 = vmatpush1.bf16.xpose.msra.mxu0 %v2242
        %2246 = vmatprep.subr.bf16.mxu0 0
        %2247 = vmatpush1.bf16.xpose.msra.mxu0 0
        %2248 = vmatprep.subr.bf16.mxu0 0
        %2249 = vmatpush1.bf16.xpose.msra.mxu0 0
        %2250 = vmatprep.subr.bf16.mxu0 0
        %2251 = vmatpush1.bf16.xpose.msra.mxu0 0
        %2252 = vmatprep.subr.bf16.mxu0 0
        %2253 = vmatpush1.bf16.xpose.msra.mxu0 0
        %2254 = vmatprep.subr.bf16.mxu0 0
        %2255 = vmatpush1.bf16.xpose.msra.mxu0 0
        %2256 = vmatprep.subr.bf16.mxu0 0
        %2257 = vmatpush1.bf16.xpose.msra.mxu0 0
        %2258 = vmatprep.subr.bf16.mxu0 0
        %2259 = vmatpush1.bf16.xpose.msra.mxu0 0
        %2260 = vmatprep.subr.bf16.mxu0 0
        %2261 = vmatpush1.bf16.xpose.msra.mxu0 0
        %2262 = vmatprep.subr.bf16.mxu0 0
        %2263 = vmatpush1.bf16.xpose.msra.mxu0 0
        %2264 = vmatprep.subr.bf16.mxu0 0
        %2265 = vmatpush1.bf16.xpose.msra.mxu0 0
        %2266 = vmatprep.subr.bf16.mxu0 0
        %2267 = vmatpush1.bf16.xpose.msra.mxu0 0
        %2268 = vmatprep.subr.bf16.mxu0 0
        %2269 = vmatpush1.bf16.xpose.msra.mxu0 0
        %2270 = vmatprep.subr.bf16.mxu0 0
        %2271 = vmatpush1.bf16.xpose.msra.mxu0 0
        %2272 = vmatprep.subr.bf16.mxu0 0
        %2273 = vmatpush1.bf16.xpose.msra.mxu0 0
        %2274 = vmatprep.subr.bf16.mxu0 0
        %2275 = vmatpush1.bf16.xpose.msra.mxu0 0
        %2276 = vmatprep.mubr.bf16.mxu0 0
        %2277 = vmatmul.mubr.bf16.gmra.mrb[0].mxu0 %v2239
        %v2278 = vpop.f32.mrb[0].mxu0
        %v2279 = vadd.f32 0.0, %v2278
        %v2280 = vpop.f32.mrb[0].mxu0
        %v2281 = vpop.f32.mrb[0].mxu0
        %v2282 = vpop.f32.mrb[0].mxu0
        %2283 = vdwg.mxu0
        %v2284 = vmul.f32 %v1957, 0.17677669
        %v2285 = vmul.f32 %v2003, 0.17677669
        %v2286 = vmul.f32 %v2049, 0.17677669
        %v2287 = vmul.f32 %v2095, 0.17677669
        %v2288 = vmul.f32 %v2141, 0.17677669
        %v2289 = vmul.f32 %v2187, 0.17677669
        %v2290 = vmul.f32 %v2233, 0.17677669
        %v2291 = vmul.f32 %v2279, 0.17677669
        %vm2292 = vcmask 64512
        %v2293 = vsel %vm2292, %v2284, -inf
        %2294 = vmax.xlane.f32.xlu0 %v2293
        %v2295 = vpop.xlane.xlu0 %2294
        %v2296 = vsel %vm2292, %v2285, -inf
        %2297 = vmax.xlane.f32.xlu0 %v2296
        %v2298 = vpop.xlane.xlu0 %2297
        %v2299 = vsel %vm2292, %v2286, -inf
        %2300 = vmax.xlane.f32.xlu0 %v2299
        %v2301 = vpop.xlane.xlu0 %2300
        %v2302 = vsel %vm2292, %v2287, -inf
        %2303 = vmax.xlane.f32.xlu0 %v2302
        %v2304 = vpop.xlane.xlu0 %2303
        %v2305 = vsel %vm2292, %v2288, -inf
        %2306 = vmax.xlane.f32.xlu0 %v2305
        %v2307 = vpop.xlane.xlu0 %2306
        %v2308 = vsel %vm2292, %v2289, -inf
        %2309 = vmax.xlane.f32.xlu0 %v2308
        %v2310 = vpop.xlane.xlu0 %2309
        %v2311 = vsel %vm2292, %v2290, -inf
        %2312 = vmax.xlane.f32.xlu0 %v2311
        %v2313 = vpop.xlane.xlu0 %2312
        %v2314 = vsel %vm2292, %v2291, -inf
        %2315 = vmax.xlane.f32.xlu0 %v2314
        %v2316 = vpop.xlane.xlu0 %2315
        %v2317 = vsub.f32 %v2284, %v2295
        %v2318 = vsub.f32 %v2285, %v2298
        %v2319 = vsub.f32 %v2286, %v2301
        %v2320 = vsub.f32 %v2287, %v2304
        %v2321 = vsub.f32 %v2288, %v2307
        %v2322 = vsub.f32 %v2289, %v2310
        %v2323 = vsub.f32 %v2290, %v2313
        %v2324 = vsub.f32 %v2291, %v2316
        %v2325 = vmul.f32 %v2317, 1.442695
        %v2326 = vpow.pop %v2325
        %v2327 = vmul.f32 %v2318, 1.442695
        %v2328 = vpow.pop %v2327
        %v2329 = vmul.f32 %v2319, 1.442695
        %v2330 = vpow.pop %v2329
        %v2331 = vmul.f32 %v2320, 1.442695
        %v2332 = vpow.pop %v2331
        %v2333 = vmul.f32 %v2321, 1.442695
        %v2334 = vpow.pop %v2333
        %v2335 = vmul.f32 %v2322, 1.442695
        %v2336 = vpow.pop %v2335
        %v2337 = vmul.f32 %v2323, 1.442695
        %v2338 = vpow.pop %v2337
        %v2339 = vmul.f32 %v2324, 1.442695
        %v2340 = vpow.pop %v2339
        %v2341 = vsel %vm2292, %v2326, 0.0
        %2342 = vadd.xlane.f32.xlu0 %v2341
        %v2343 = vpop.xlane.xlu0 %2342
        %v2344 = vsel %vm2292, %v2328, 0.0
        %2345 = vadd.xlane.f32.xlu0 %v2344
        %v2346 = vpop.xlane.xlu0 %2345
        %v2347 = vsel %vm2292, %v2330, 0.0
        %2348 = vadd.xlane.f32.xlu0 %v2347
        %v2349 = vpop.xlane.xlu0 %2348
        %v2350 = vsel %vm2292, %v2332, 0.0
        %2351 = vadd.xlane.f32.xlu0 %v2350
        %v2352 = vpop.xlane.xlu0 %2351
        %v2353 = vsel %vm2292, %v2334, 0.0
        %2354 = vadd.xlane.f32.xlu0 %v2353
        %v2355 = vpop.xlane.xlu0 %2354
        %v2356 = vsel %vm2292, %v2336, 0.0
        %2357 = vadd.xlane.f32.xlu0 %v2356
        %v2358 = vpop.xlane.xlu0 %2357
        %v2359 = vsel %vm2292, %v2338, 0.0
        %2360 = vadd.xlane.f32.xlu0 %v2359
        %v2361 = vpop.xlane.xlu0 %2360
        %v2362 = vsel %vm2292, %v2340, 0.0
        %2363 = vadd.xlane.f32.xlu0 %v2362
        %v2364 = vpop.xlane.xlu0 %2363
        %v2365 = vrcp.pop %v2343
        %v2366 = vrcp.pop %v2346
        %v2367 = vrcp.pop %v2349
        %v2368 = vrcp.pop %v2352
        %v2369 = vrcp.pop %v2355
        %v2370 = vrcp.pop %v2358
        %v2371 = vrcp.pop %v2361
        %v2372 = vrcp.pop %v2364
        %v2373 = vmul.f32 %v2326, %v2365
        %v2374 = vmul.f32 %v2328, %v2366
        %v2375 = vmul.f32 %v2330, %v2367
        %v2376 = vmul.f32 %v2332, %v2368
        %v2377 = vmul.f32 %v2334, %v2369
        %v2378 = vmul.f32 %v2336, %v2370
        %v2379 = vmul.f32 %v2338, %v2371
        %v2380 = vmul.f32 %v2340, %v2372
        %v2381 = vpack.c.bf16 %v2373, %v2373
        %v2382 = vpack.c.bf16 %v2374, %v2374
        %v2383 = vpack.c.bf16 %v2375, %v2375
        %v2384 = vpack.c.bf16 %v2376, %v2376
        %v2385 = vpack.c.bf16 %v2377, %v2377
        %v2386 = vpack.c.bf16 %v2378, %v2378
        %v2387 = vpack.c.bf16 %v2379, %v2379
        %v2388 = vpack.c.bf16 %v2380, %v2380
        %v2390 = vsel %vm2292, %v2381, 0
        %vm2392 = vcmask 1043456
        %v2394 = vsel %vm2392, %v1907, 0
        %2396 = vmatprep.subr.bf16.mxu0 0
        %2397 = vmatpush1.bf16.msra.mxu0 %v2394
        %2398 = vmatprep.subr.bf16.mxu0 0
        %2399 = vmatpush1.bf16.msra.mxu0 0
        %2400 = vmatprep.subr.bf16.mxu0 0
        %2401 = vmatpush1.bf16.msra.mxu0 0
        %2402 = vmatprep.subr.bf16.mxu0 0
        %2403 = vmatpush1.bf16.msra.mxu0 0
        %2404 = vmatprep.subr.bf16.mxu0 0
        %2405 = vmatpush1.bf16.msra.mxu0 0
        %2406 = vmatprep.subr.bf16.mxu0 0
        %2407 = vmatpush1.bf16.msra.mxu0 0
        %2408 = vmatprep.subr.bf16.mxu0 0
        %2409 = vmatpush1.bf16.msra.mxu0 0
        %2410 = vmatprep.subr.bf16.mxu0 0
        %2411 = vmatpush1.bf16.msra.mxu0 0
        %2412 = vmatprep.subr.bf16.mxu0 0
        %2413 = vmatpush1.bf16.msra.mxu0 0
        %2414 = vmatprep.subr.bf16.mxu0 0
        %2415 = vmatpush1.bf16.msra.mxu0 0
        %2416 = vmatprep.subr.bf16.mxu0 0
        %2417 = vmatpush1.bf16.msra.mxu0 0
        %2418 = vmatprep.subr.bf16.mxu0 0
        %2419 = vmatpush1.bf16.msra.mxu0 0
        %2420 = vmatprep.subr.bf16.mxu0 0
        %2421 = vmatpush1.bf16.msra.mxu0 0
        %2422 = vmatprep.subr.bf16.mxu0 0
        %2423 = vmatpush1.bf16.msra.mxu0 0
        %2424 = vmatprep.subr.bf16.mxu0 0
        %2425 = vmatpush1.bf16.msra.mxu0 0
        %2426 = vmatprep.subr.bf16.mxu0 0
        %2427 = vmatpush1.bf16.msra.mxu0 0
        %2428 = vmatprep.mubr.bf16.mxu0 0
        %2429 = vmatmul.mubr.bf16.gmra.mrb[0].mxu0 %v2390
        %v2430 = vpop.f32.mrb[0].mxu0
        %v2431 = vadd.f32 0.0, %v2430
        %v2432 = vpop.f32.mrb[0].mxu0
        %v2433 = vpop.f32.mrb[0].mxu0
        %v2434 = vpop.f32.mrb[0].mxu0
        %2435 = vdwg.mxu0
        %v2437 = vsel %vm2292, %v2382, 0
        %v2440 = vsel %vm2392, %v1908, 0
        %2442 = vmatprep.subr.bf16.mxu0 0
        %2443 = vmatpush1.bf16.msra.mxu0 %v2440
        %2444 = vmatprep.subr.bf16.mxu0 0
        %2445 = vmatpush1.bf16.msra.mxu0 0
        %2446 = vmatprep.subr.bf16.mxu0 0
        %2447 = vmatpush1.bf16.msra.mxu0 0
        %2448 = vmatprep.subr.bf16.mxu0 0
        %2449 = vmatpush1.bf16.msra.mxu0 0
        %2450 = vmatprep.subr.bf16.mxu0 0
        %2451 = vmatpush1.bf16.msra.mxu0 0
        %2452 = vmatprep.subr.bf16.mxu0 0
        %2453 = vmatpush1.bf16.msra.mxu0 0
        %2454 = vmatprep.subr.bf16.mxu0 0
        %2455 = vmatpush1.bf16.msra.mxu0 0
        %2456 = vmatprep.subr.bf16.mxu0 0
        %2457 = vmatpush1.bf16.msra.mxu0 0
        %2458 = vmatprep.subr.bf16.mxu0 0
        %2459 = vmatpush1.bf16.msra.mxu0 0
        %2460 = vmatprep.subr.bf16.mxu0 0
        %2461 = vmatpush1.bf16.msra.mxu0 0
        %2462 = vmatprep.subr.bf16.mxu0 0
        %2463 = vmatpush1.bf16.msra.mxu0 0
        %2464 = vmatprep.subr.bf16.mxu0 0
        %2465 = vmatpush1.bf16.msra.mxu0 0
        %2466 = vmatprep.subr.bf16.mxu0 0
        %2467 = vmatpush1.bf16.msra.mxu0 0
        %2468 = vmatprep.subr.bf16.mxu0 0
        %2469 = vmatpush1.bf16.msra.mxu0 0
        %2470 = vmatprep.subr.bf16.mxu0 0
        %2471 = vmatpush1.bf16.msra.mxu0 0
        %2472 = vmatprep.subr.bf16.mxu0 0
        %2473 = vmatpush1.bf16.msra.mxu0 0
        %2474 = vmatprep.mubr.bf16.mxu0 0
        %2475 = vmatmul.mubr.bf16.gmra.mrb[0].mxu0 %v2437
        %v2476 = vpop.f32.mrb[0].mxu0
        %v2477 = vadd.f32 0.0, %v2476
        %v2478 = vpop.f32.mrb[0].mxu0
        %v2479 = vpop.f32.mrb[0].mxu0
        %v2480 = vpop.f32.mrb[0].mxu0
        %2481 = vdwg.mxu0
        %v2483 = vsel %vm2292, %v2383, 0
        %v2486 = vsel %vm2392, %v1909, 0
        %2488 = vmatprep.subr.bf16.mxu0 0
        %2489 = vmatpush1.bf16.msra.mxu0 %v2486
        %2490 = vmatprep.subr.bf16.mxu0 0
        %2491 = vmatpush1.bf16.msra.mxu0 0
        %2492 = vmatprep.subr.bf16.mxu0 0
        %2493 = vmatpush1.bf16.msra.mxu0 0
        %2494 = vmatprep.subr.bf16.mxu0 0
        %2495 = vmatpush1.bf16.msra.mxu0 0
        %2496 = vmatprep.subr.bf16.mxu0 0
        %2497 = vmatpush1.bf16.msra.mxu0 0
        %2498 = vmatprep.subr.bf16.mxu0 0
        %2499 = vmatpush1.bf16.msra.mxu0 0
        %2500 = vmatprep.subr.bf16.mxu0 0
        %2501 = vmatpush1.bf16.msra.mxu0 0
        %2502 = vmatprep.subr.bf16.mxu0 0
        %2503 = vmatpush1.bf16.msra.mxu0 0
        %2504 = vmatprep.subr.bf16.mxu0 0
        %2505 = vmatpush1.bf16.msra.mxu0 0
        %2506 = vmatprep.subr.bf16.mxu0 0
        %2507 = vmatpush1.bf16.msra.mxu0 0
        %2508 = vmatprep.subr.bf16.mxu0 0
        %2509 = vmatpush1.bf16.msra.mxu0 0
        %2510 = vmatprep.subr.bf16.mxu0 0
        %2511 = vmatpush1.bf16.msra.mxu0 0
        %2512 = vmatprep.subr.bf16.mxu0 0
        %2513 = vmatpush1.bf16.msra.mxu0 0
        %2514 = vmatprep.subr.bf16.mxu0 0
        %2515 = vmatpush1.bf16.msra.mxu0 0
        %2516 = vmatprep.subr.bf16.mxu0 0
        %2517 = vmatpush1.bf16.msra.mxu0 0
        %2518 = vmatprep.subr.bf16.mxu0 0
        %2519 = vmatpush1.bf16.msra.mxu0 0
        %2520 = vmatprep.mubr.bf16.mxu0 0
        %2521 = vmatmul.mubr.bf16.gmra.mrb[0].mxu0 %v2483
        %v2522 = vpop.f32.mrb[0].mxu0
        %v2523 = vadd.f32 0.0, %v2522
        %v2524 = vpop.f32.mrb[0].mxu0
        %v2525 = vpop.f32.mrb[0].mxu0
        %v2526 = vpop.f32.mrb[0].mxu0
        %2527 = vdwg.mxu0
        %v2529 = vsel %vm2292, %v2384, 0
        %v2532 = vsel %vm2392, %v1910, 0
        %2534 = vmatprep.subr.bf16.mxu0 0
        %2535 = vmatpush1.bf16.msra.mxu0 %v2532
        %2536 = vmatprep.subr.bf16.mxu0 0
        %2537 = vmatpush1.bf16.msra.mxu0 0
        %2538 = vmatprep.subr.bf16.mxu0 0
        %2539 = vmatpush1.bf16.msra.mxu0 0
        %2540 = vmatprep.subr.bf16.mxu0 0
        %2541 = vmatpush1.bf16.msra.mxu0 0
        %2542 = vmatprep.subr.bf16.mxu0 0
        %2543 = vmatpush1.bf16.msra.mxu0 0
        %2544 = vmatprep.subr.bf16.mxu0 0
        %2545 = vmatpush1.bf16.msra.mxu0 0
        %2546 = vmatprep.subr.bf16.mxu0 0
        %2547 = vmatpush1.bf16.msra.mxu0 0
        %2548 = vmatprep.subr.bf16.mxu0 0
        %2549 = vmatpush1.bf16.msra.mxu0 0
        %2550 = vmatprep.subr.bf16.mxu0 0
        %2551 = vmatpush1.bf16.msra.mxu0 0
        %2552 = vmatprep.subr.bf16.mxu0 0
        %2553 = vmatpush1.bf16.msra.mxu0 0
        %2554 = vmatprep.subr.bf16.mxu0 0
        %2555 = vmatpush1.bf16.msra.mxu0 0
        %2556 = vmatprep.subr.bf16.mxu0 0
        %2557 = vmatpush1.bf16.msra.mxu0 0
        %2558 = vmatprep.subr.bf16.mxu0 0
        %2559 = vmatpush1.bf16.msra.mxu0 0
        %2560 = vmatprep.subr.bf16.mxu0 0
        %2561 = vmatpush1.bf16.msra.mxu0 0
        %2562 = vmatprep.subr.bf16.mxu0 0
        %2563 = vmatpush1.bf16.msra.mxu0 0
        %2564 = vmatprep.subr.bf16.mxu0 0
        %2565 = vmatpush1.bf16.msra.mxu0 0
        %2566 = vmatprep.mubr.bf16.mxu0 0
        %2567 = vmatmul.mubr.bf16.gmra.mrb[0].mxu0 %v2529
        %v2568 = vpop.f32.mrb[0].mxu0
        %v2569 = vadd.f32 0.0, %v2568
        %v2570 = vpop.f32.mrb[0].mxu0
        %v2571 = vpop.f32.mrb[0].mxu0
        %v2572 = vpop.f32.mrb[0].mxu0
        %2573 = vdwg.mxu0
        %v2575 = vsel %vm2292, %v2385, 0
        %v2578 = vsel %vm2392, %v1911, 0
        %2580 = vmatprep.subr.bf16.mxu0 0
        %2581 = vmatpush1.bf16.msra.mxu0 %v2578
        %2582 = vmatprep.subr.bf16.mxu0 0
        %2583 = vmatpush1.bf16.msra.mxu0 0
        %2584 = vmatprep.subr.bf16.mxu0 0
        %2585 = vmatpush1.bf16.msra.mxu0 0
        %2586 = vmatprep.subr.bf16.mxu0 0
        %2587 = vmatpush1.bf16.msra.mxu0 0
        %2588 = vmatprep.subr.bf16.mxu0 0
        %2589 = vmatpush1.bf16.msra.mxu0 0
        %2590 = vmatprep.subr.bf16.mxu0 0
        %2591 = vmatpush1.bf16.msra.mxu0 0
        %2592 = vmatprep.subr.bf16.mxu0 0
        %2593 = vmatpush1.bf16.msra.mxu0 0
        %2594 = vmatprep.subr.bf16.mxu0 0
        %2595 = vmatpush1.bf16.msra.mxu0 0
        %2596 = vmatprep.subr.bf16.mxu0 0
        %2597 = vmatpush1.bf16.msra.mxu0 0
        %2598 = vmatprep.subr.bf16.mxu0 0
        %2599 = vmatpush1.bf16.msra.mxu0 0
        %2600 = vmatprep.subr.bf16.mxu0 0
        %2601 = vmatpush1.bf16.msra.mxu0 0
        %2602 = vmatprep.subr.bf16.mxu0 0
        %2603 = vmatpush1.bf16.msra.mxu0 0
        %2604 = vmatprep.subr.bf16.mxu0 0
        %2605 = vmatpush1.bf16.msra.mxu0 0
        %2606 = vmatprep.subr.bf16.mxu0 0
        %2607 = vmatpush1.bf16.msra.mxu0 0
        %2608 = vmatprep.subr.bf16.mxu0 0
        %2609 = vmatpush1.bf16.msra.mxu0 0
        %2610 = vmatprep.subr.bf16.mxu0 0
        %2611 = vmatpush1.bf16.msra.mxu0 0
        %2612 = vmatprep.mubr.bf16.mxu0 0
        %2613 = vmatmul.mubr.bf16.gmra.mrb[0].mxu0 %v2575
        %v2614 = vpop.f32.mrb[0].mxu0
        %v2615 = vadd.f32 0.0, %v2614
        %v2616 = vpop.f32.mrb[0].mxu0
        %v2617 = vpop.f32.mrb[0].mxu0
        %v2618 = vpop.f32.mrb[0].mxu0
        %2619 = vdwg.mxu0
        %v2621 = vsel %vm2292, %v2386, 0
        %v2624 = vsel %vm2392, %v1912, 0
        %2626 = vmatprep.subr.bf16.mxu0 0
        %2627 = vmatpush1.bf16.msra.mxu0 %v2624
        %2628 = vmatprep.subr.bf16.mxu0 0
        %2629 = vmatpush1.bf16.msra.mxu0 0
        %2630 = vmatprep.subr.bf16.mxu0 0
        %2631 = vmatpush1.bf16.msra.mxu0 0
        %2632 = vmatprep.subr.bf16.mxu0 0
        %2633 = vmatpush1.bf16.msra.mxu0 0
        %2634 = vmatprep.subr.bf16.mxu0 0
        %2635 = vmatpush1.bf16.msra.mxu0 0
        %2636 = vmatprep.subr.bf16.mxu0 0
        %2637 = vmatpush1.bf16.msra.mxu0 0
        %2638 = vmatprep.subr.bf16.mxu0 0
        %2639 = vmatpush1.bf16.msra.mxu0 0
        %2640 = vmatprep.subr.bf16.mxu0 0
        %2641 = vmatpush1.bf16.msra.mxu0 0
        %2642 = vmatprep.subr.bf16.mxu0 0
        %2643 = vmatpush1.bf16.msra.mxu0 0
        %2644 = vmatprep.subr.bf16.mxu0 0
        %2645 = vmatpush1.bf16.msra.mxu0 0
        %2646 = vmatprep.subr.bf16.mxu0 0
        %2647 = vmatpush1.bf16.msra.mxu0 0
        %2648 = vmatprep.subr.bf16.mxu0 0
        %2649 = vmatpush1.bf16.msra.mxu0 0
        %2650 = vmatprep.subr.bf16.mxu0 0
        %2651 = vmatpush1.bf16.msra.mxu0 0
        %2652 = vmatprep.subr.bf16.mxu0 0
        %2653 = vmatpush1.bf16.msra.mxu0 0
        %2654 = vmatprep.subr.bf16.mxu0 0
        %2655 = vmatpush1.bf16.msra.mxu0 0
        %2656 = vmatprep.subr.bf16.mxu0 0
        %2657 = vmatpush1.bf16.msra.mxu0 0
        %2658 = vmatprep.mubr.bf16.mxu0 0
        %2659 = vmatmul.mubr.bf16.gmra.mrb[0].mxu0 %v2621
        %v2660 = vpop.f32.mrb[0].mxu0
        %v2661 = vadd.f32 0.0, %v2660
        %v2662 = vpop.f32.mrb[0].mxu0
        %v2663 = vpop.f32.mrb[0].mxu0
        %v2664 = vpop.f32.mrb[0].mxu0
        %2665 = vdwg.mxu0
        %v2667 = vsel %vm2292, %v2387, 0
        %v2670 = vsel %vm2392, %v1913, 0
        %2672 = vmatprep.subr.bf16.mxu0 0
        %2673 = vmatpush1.bf16.msra.mxu0 %v2670
        %2674 = vmatprep.subr.bf16.mxu0 0
        %2675 = vmatpush1.bf16.msra.mxu0 0
        %2676 = vmatprep.subr.bf16.mxu0 0
        %2677 = vmatpush1.bf16.msra.mxu0 0
        %2678 = vmatprep.subr.bf16.mxu0 0
        %2679 = vmatpush1.bf16.msra.mxu0 0
        %2680 = vmatprep.subr.bf16.mxu0 0
        %2681 = vmatpush1.bf16.msra.mxu0 0
        %2682 = vmatprep.subr.bf16.mxu0 0
        %2683 = vmatpush1.bf16.msra.mxu0 0
        %2684 = vmatprep.subr.bf16.mxu0 0
        %2685 = vmatpush1.bf16.msra.mxu0 0
        %2686 = vmatprep.subr.bf16.mxu0 0
        %2687 = vmatpush1.bf16.msra.mxu0 0
        %2688 = vmatprep.subr.bf16.mxu0 0
        %2689 = vmatpush1.bf16.msra.mxu0 0
        %2690 = vmatprep.subr.bf16.mxu0 0
        %2691 = vmatpush1.bf16.msra.mxu0 0
        %2692 = vmatprep.subr.bf16.mxu0 0
        %2693 = vmatpush1.bf16.msra.mxu0 0
        %2694 = vmatprep.subr.bf16.mxu0 0
        %2695 = vmatpush1.bf16.msra.mxu0 0
        %2696 = vmatprep.subr.bf16.mxu0 0
        %2697 = vmatpush1.bf16.msra.mxu0 0
        %2698 = vmatprep.subr.bf16.mxu0 0
        %2699 = vmatpush1.bf16.msra.mxu0 0
        %2700 = vmatprep.subr.bf16.mxu0 0
        %2701 = vmatpush1.bf16.msra.mxu0 0
        %2702 = vmatprep.subr.bf16.mxu0 0
        %2703 = vmatpush1.bf16.msra.mxu0 0
        %2704 = vmatprep.mubr.bf16.mxu0 0
        %2705 = vmatmul.mubr.bf16.gmra.mrb[0].mxu0 %v2667
        %v2706 = vpop.f32.mrb[0].mxu0
        %v2707 = vadd.f32 0.0, %v2706
        %v2708 = vpop.f32.mrb[0].mxu0
        %v2709 = vpop.f32.mrb[0].mxu0
        %v2710 = vpop.f32.mrb[0].mxu0
        %2711 = vdwg.mxu0
        %v2713 = vsel %vm2292, %v2388, 0
        %v2716 = vsel %vm2392, %v1914, 0
        %2718 = vmatprep.subr.bf16.mxu0 0
        %2719 = vmatpush1.bf16.msra.mxu0 %v2716
        %2720 = vmatprep.subr.bf16.mxu0 0
        %2721 = vmatpush1.bf16.msra.mxu0 0
        %2722 = vmatprep.subr.bf16.mxu0 0
        %2723 = vmatpush1.bf16.msra.mxu0 0
        %2724 = vmatprep.subr.bf16.mxu0 0
        %2725 = vmatpush1.bf16.msra.mxu0 0
        %2726 = vmatprep.subr.bf16.mxu0 0
        %2727 = vmatpush1.bf16.msra.mxu0 0
        %2728 = vmatprep.subr.bf16.mxu0 0
        %2729 = vmatpush1.bf16.msra.mxu0 0
        %2730 = vmatprep.subr.bf16.mxu0 0
        %2731 = vmatpush1.bf16.msra.mxu0 0
        %2732 = vmatprep.subr.bf16.mxu0 0
        %2733 = vmatpush1.bf16.msra.mxu0 0
        %2734 = vmatprep.subr.bf16.mxu0 0
        %2735 = vmatpush1.bf16.msra.mxu0 0
        %2736 = vmatprep.subr.bf16.mxu0 0
        %2737 = vmatpush1.bf16.msra.mxu0 0
        %2738 = vmatprep.subr.bf16.mxu0 0
        %2739 = vmatpush1.bf16.msra.mxu0 0
        %2740 = vmatprep.subr.bf16.mxu0 0
        %2741 = vmatpush1.bf16.msra.mxu0 0
        %2742 = vmatprep.subr.bf16.mxu0 0
        %2743 = vmatpush1.bf16.msra.mxu0 0
        %2744 = vmatprep.subr.bf16.mxu0 0
        %2745 = vmatpush1.bf16.msra.mxu0 0
        %2746 = vmatprep.subr.bf16.mxu0 0
        %2747 = vmatpush1.bf16.msra.mxu0 0
        %2748 = vmatprep.subr.bf16.mxu0 0
        %2749 = vmatpush1.bf16.msra.mxu0 0
        %2750 = vmatprep.mubr.bf16.mxu0 0
        %2751 = vmatmul.mubr.bf16.gmra.mrb[0].mxu0 %v2713
        %v2752 = vpop.f32.mrb[0].mxu0
        %v2753 = vadd.f32 0.0, %v2752
        %v2754 = vpop.f32.mrb[0].mxu0
        %v2755 = vpop.f32.mrb[0].mxu0
        %v2756 = vpop.f32.mrb[0].mxu0
        %2757 = vdwg.mxu0
        %2758 = vxpose.xlu0.b32.start [1/16] %v2431, 128
        %2759 = vxpose.xlu0.b32.cont [2/16] %v2477, 128
        %2760 = vxpose.xlu0.b32.cont [3/16] 0.0, 128
        %2761 = vxpose.xlu0.b32.cont [4/16] 0.0, 128
        %2762 = vxpose.xlu0.b32.cont [5/16] 0.0, 128
        %2763 = vxpose.xlu0.b32.cont [6/16] 0.0, 128
        %2764 = vxpose.xlu0.b32.cont [7/16] 0.0, 128
        %2765 = vxpose.xlu0.b32.cont [8/16] 0.0, 128
        %2766 = vxpose.xlu0.b32.cont [9/16] 0.0, 128
        %2767 = vxpose.xlu0.b32.cont [10/16] 0.0, 128
        %2768 = vxpose.xlu0.b32.cont [11/16] 0.0, 128
        %2769 = vxpose.xlu0.b32.cont [12/16] 0.0, 128
        %2770 = vxpose.xlu0.b32.cont [13/16] 0.0, 128
        %2771 = vxpose.xlu0.b32.cont [14/16] 0.0, 128
        %2772 = vxpose.xlu0.b32.cont [15/16] 0.0, 128
        %2773 = vxpose.xlu0.b32.end [16/16] 0.0, 128
        %v2774 = vpop.trf.xlu0
        %v2775 = vpop.trf.xlu0
        %v2776 = vpop.trf.xlu0
        %v2777 = vpop.trf.xlu0
        %v2778 = vpop.trf.xlu0
        %v2779 = vpop.trf.xlu0
        %v2780 = vpop.trf.xlu0
        %v2781 = vpop.trf.xlu0
        %v2782 = vpop.trf.xlu0
        %v2783 = vpop.trf.xlu0
        %v2784 = vpop.trf.xlu0
        %v2785 = vpop.trf.xlu0
        %v2786 = vpop.trf.xlu0
        %v2787 = vpop.trf.xlu0
        %v2788 = vpop.trf.xlu0
        %v2789 = vpop.trf.xlu0
        %2790 = vxpose.xlu0.b32.start [1/16] %v2523, 128
        %2791 = vxpose.xlu0.b32.cont [2/16] %v2569, 128
        %2792 = vxpose.xlu0.b32.cont [3/16] 0.0, 128
        %2793 = vxpose.xlu0.b32.cont [4/16] 0.0, 128
        %2794 = vxpose.xlu0.b32.cont [5/16] 0.0, 128
        %2795 = vxpose.xlu0.b32.cont [6/16] 0.0, 128
        %2796 = vxpose.xlu0.b32.cont [7/16] 0.0, 128
        %2797 = vxpose.xlu0.b32.cont [8/16] 0.0, 128
        %2798 = vxpose.xlu0.b32.cont [9/16] 0.0, 128
        %2799 = vxpose.xlu0.b32.cont [10/16] 0.0, 128
        %2800 = vxpose.xlu0.b32.cont [11/16] 0.0, 128
        %2801 = vxpose.xlu0.b32.cont [12/16] 0.0, 128
        %2802 = vxpose.xlu0.b32.cont [13/16] 0.0, 128
        %2803 = vxpose.xlu0.b32.cont [14/16] 0.0, 128
        %2804 = vxpose.xlu0.b32.cont [15/16] 0.0, 128
        %2805 = vxpose.xlu0.b32.end [16/16] 0.0, 128
        %v2806 = vpop.trf.xlu0
        %v2807 = vpop.trf.xlu0
        %v2808 = vpop.trf.xlu0
        %v2809 = vpop.trf.xlu0
        %v2810 = vpop.trf.xlu0
        %v2811 = vpop.trf.xlu0
        %v2812 = vpop.trf.xlu0
        %v2813 = vpop.trf.xlu0
        %v2814 = vpop.trf.xlu0
        %v2815 = vpop.trf.xlu0
        %v2816 = vpop.trf.xlu0
        %v2817 = vpop.trf.xlu0
        %v2818 = vpop.trf.xlu0
        %v2819 = vpop.trf.xlu0
        %v2820 = vpop.trf.xlu0
        %v2821 = vpop.trf.xlu0
        %2822 = vxpose.xlu0.b32.start [1/16] %v2615, 128
        %2823 = vxpose.xlu0.b32.cont [2/16] %v2661, 128
        %2824 = vxpose.xlu0.b32.cont [3/16] 0.0, 128
        %2825 = vxpose.xlu0.b32.cont [4/16] 0.0, 128
        %2826 = vxpose.xlu0.b32.cont [5/16] 0.0, 128
        %2827 = vxpose.xlu0.b32.cont [6/16] 0.0, 128
        %2828 = vxpose.xlu0.b32.cont [7/16] 0.0, 128
        %2829 = vxpose.xlu0.b32.cont [8/16] 0.0, 128
        %2830 = vxpose.xlu0.b32.cont [9/16] 0.0, 128
        %2831 = vxpose.xlu0.b32.cont [10/16] 0.0, 128
        %2832 = vxpose.xlu0.b32.cont [11/16] 0.0, 128
        %2833 = vxpose.xlu0.b32.cont [12/16] 0.0, 128
        %2834 = vxpose.xlu0.b32.cont [13/16] 0.0, 128
        %2835 = vxpose.xlu0.b32.cont [14/16] 0.0, 128
        %2836 = vxpose.xlu0.b32.cont [15/16] 0.0, 128
        %2837 = vxpose.xlu0.b32.end [16/16] 0.0, 128
        %v2838 = vpop.trf.xlu0
        %v2839 = vpop.trf.xlu0
        %v2840 = vpop.trf.xlu0
        %v2841 = vpop.trf.xlu0
        %v2842 = vpop.trf.xlu0
        %v2843 = vpop.trf.xlu0
        %v2844 = vpop.trf.xlu0
        %v2845 = vpop.trf.xlu0
        %v2846 = vpop.trf.xlu0
        %v2847 = vpop.trf.xlu0
        %v2848 = vpop.trf.xlu0
        %v2849 = vpop.trf.xlu0
        %v2850 = vpop.trf.xlu0
        %v2851 = vpop.trf.xlu0
        %v2852 = vpop.trf.xlu0
        %v2853 = vpop.trf.xlu0
        %2854 = vxpose.xlu0.b32.start [1/16] %v2707, 128
        %2855 = vxpose.xlu0.b32.cont [2/16] %v2753, 128
        %2856 = vxpose.xlu0.b32.cont [3/16] 0.0, 128
        %2857 = vxpose.xlu0.b32.cont [4/16] 0.0, 128
        %2858 = vxpose.xlu0.b32.cont [5/16] 0.0, 128
        %2859 = vxpose.xlu0.b32.cont [6/16] 0.0, 128
        %2860 = vxpose.xlu0.b32.cont [7/16] 0.0, 128
        %2861 = vxpose.xlu0.b32.cont [8/16] 0.0, 128
        %2862 = vxpose.xlu0.b32.cont [9/16] 0.0, 128
        %2863 = vxpose.xlu0.b32.cont [10/16] 0.0, 128
        %2864 = vxpose.xlu0.b32.cont [11/16] 0.0, 128
        %2865 = vxpose.xlu0.b32.cont [12/16] 0.0, 128
        %2866 = vxpose.xlu0.b32.cont [13/16] 0.0, 128
        %2867 = vxpose.xlu0.b32.cont [14/16] 0.0, 128
        %2868 = vxpose.xlu0.b32.cont [15/16] 0.0, 128
        %2869 = vxpose.xlu0.b32.end [16/16] 0.0, 128
        %v2870 = vpop.trf.xlu0
        %v2871 = vpop.trf.xlu0
        %v2872 = vpop.trf.xlu0
        %v2873 = vpop.trf.xlu0
        %v2874 = vpop.trf.xlu0
        %v2875 = vpop.trf.xlu0
        %v2876 = vpop.trf.xlu0
        %v2877 = vpop.trf.xlu0
        %v2878 = vpop.trf.xlu0
        %v2879 = vpop.trf.xlu0
        %v2880 = vpop.trf.xlu0
        %v2881 = vpop.trf.xlu0
        %v2882 = vpop.trf.xlu0
        %v2883 = vpop.trf.xlu0
        %v2884 = vpop.trf.xlu0
        %v2885 = vpop.trf.xlu0
        %v2886 = vld [vmem:[%s851] sm:$0xf]
        %v2887 = vld [vmem:[%s851 + $0x4] sm:$0xf]
        %v2888 = vld [vmem:[%s851 + $0x8] sm:$0xf]
        %v2889 = vld [vmem:[%s851 + $0xc] sm:$0xf]
        %v2890 = vld [vmem:[%s851 + $0x10] sm:$0xf]
        %v2891 = vld [vmem:[%s851 + $0x14] sm:$0xf]
        %v2892 = vld [vmem:[%s851 + $0x18] sm:$0xf]
        %v2893 = vld [vmem:[%s851 + $0x1c] sm:$0xf]
        %v2894 = vld [vmem:[%s851 + $0x20] sm:$0xf]
        %v2895 = vld [vmem:[%s851 + $0x24] sm:$0xf]
        %v2896 = vld [vmem:[%s851 + $0x28] sm:$0xf]
        %v2897 = vld [vmem:[%s851 + $0x2c] sm:$0xf]
        %v2898 = vld [vmem:[%s851 + $0x30] sm:$0xf]
        %v2899 = vld [vmem:[%s851 + $0x34] sm:$0xf]
        %v2900 = vld [vmem:[%s851 + $0x38] sm:$0xf]
        %v2901 = vld [vmem:[%s851 + $0x3c] sm:$0xf]
        %v2902 = vpack.c.bf16 %v2775, %v2774
        %v2903 = vpack.c.bf16 %v2777, %v2776
        %v2904 = vpack.c.bf16 %v2807, %v2806
        %v2905 = vpack.c.bf16 %v2809, %v2808
        %v2906 = vpack.c.bf16 %v2839, %v2838
        %v2907 = vpack.c.bf16 %v2841, %v2840
        %v2908 = vpack.c.bf16 %v2871, %v2870
        %v2909 = vpack.c.bf16 %v2873, %v2872
        %v2910 = vld [vmem:[%s856] sm:$0xff]
        %v2911 = vld [vmem:[%s856 + $0x8] sm:$0xff]
        %v2912 = vld [vmem:[%s856 + $0x10] sm:$0xff]
        %v2913 = vld [vmem:[%s856 + $0x18] sm:$0xff]
        %v2914 = vld [vmem:[%s856 + $0x20] sm:$0xff]
        %v2915 = vld [vmem:[%s856 + $0x28] sm:$0xff]
        %v2916 = vld [vmem:[%s856 + $0x30] sm:$0xff]
        %v2917 = vld [vmem:[%s856 + $0x38] sm:$0xff]
        %v2918 = vld [vmem:[%s856 + $0x40] sm:$0xff]
        %v2919 = vld [vmem:[%s856 + $0x48] sm:$0xff]
        %v2920 = vld [vmem:[%s856 + $0x50] sm:$0xff]
        %v2921 = vld [vmem:[%s856 + $0x58] sm:$0xff]
        %v2922 = vld [vmem:[%s856 + $0x60] sm:$0xff]
        %v2923 = vld [vmem:[%s856 + $0x68] sm:$0xff]
        %v2924 = vld [vmem:[%s856 + $0x70] sm:$0xff]
        %v2925 = vld [vmem:[%s856 + $0x78] sm:$0xff]
        %2927 = vset.pattern.permute.xlu0 0
        %2928 = vperm.xlu0 %2927, %v2910
        %v2929 = vpop.permute.xlu0 %2928
        %2932 = vset.pattern.permute.xlu0 0
        %2933 = vperm.xlu0 %2932, %v2911
        %v2934 = vpop.permute.xlu0 %2933
        %2937 = vset.pattern.permute.xlu0 0
        %2938 = vperm.xlu0 %2937, %v2912
        %v2939 = vpop.permute.xlu0 %2938
        %2942 = vset.pattern.permute.xlu0 0
        %2943 = vperm.xlu0 %2942, %v2913
        %v2944 = vpop.permute.xlu0 %2943
        %2947 = vset.pattern.permute.xlu0 0
        %2948 = vperm.xlu0 %2947, %v2914
        %v2949 = vpop.permute.xlu0 %2948
        %2952 = vset.pattern.permute.xlu0 0
        %2953 = vperm.xlu0 %2952, %v2915
        %v2954 = vpop.permute.xlu0 %2953
        %2957 = vset.pattern.permute.xlu0 0
        %2958 = vperm.xlu0 %2957, %v2916
        %v2959 = vpop.permute.xlu0 %2958
        %2962 = vset.pattern.permute.xlu0 0
        %2963 = vperm.xlu0 %2962, %v2917
        %v2964 = vpop.permute.xlu0 %2963
        %2967 = vset.pattern.permute.xlu0 0
        %2968 = vperm.xlu0 %2967, %v2918
        %v2969 = vpop.permute.xlu0 %2968
        %2972 = vset.pattern.permute.xlu0 0
        %2973 = vperm.xlu0 %2972, %v2919
        %v2974 = vpop.permute.xlu0 %2973
        %2977 = vset.pattern.permute.xlu0 0
        %2978 = vperm.xlu0 %2977, %v2920
        %v2979 = vpop.permute.xlu0 %2978
        %2982 = vset.pattern.permute.xlu0 0
        %2983 = vperm.xlu0 %2982, %v2921
        %v2984 = vpop.permute.xlu0 %2983
        %2987 = vset.pattern.permute.xlu0 0
        %2988 = vperm.xlu0 %2987, %v2922
        %v2989 = vpop.permute.xlu0 %2988
        %2992 = vset.pattern.permute.xlu0 0
        %2993 = vperm.xlu0 %2992, %v2923
        %v2994 = vpop.permute.xlu0 %2993
        %2997 = vset.pattern.permute.xlu0 0
        %2998 = vperm.xlu0 %2997, %v2924
        %v2999 = vpop.permute.xlu0 %2998
        %3002 = vset.pattern.permute.xlu0 0
        %3003 = vperm.xlu0 %3002, %v2925
        %v3004 = vpop.permute.xlu0 %3003
        %v3022 = vunpack.c.l.b16 %v2886
        %v3023 = vunpack.c.l.b16 %v2887
        %v3024 = vunpack.c.l.b16 %v2888
        %v3025 = vunpack.c.l.b16 %v2889
        %v3026 = vunpack.c.l.b16 %v2890
        %v3027 = vunpack.c.l.b16 %v2891
        %v3028 = vunpack.c.l.b16 %v2892
        %v3029 = vunpack.c.l.b16 %v2893
        %v3030 = vunpack.c.l.b16 %v2894
        %v3031 = vunpack.c.l.b16 %v2895
        %v3032 = vunpack.c.l.b16 %v2896
        %v3033 = vunpack.c.l.b16 %v2897
        %v3034 = vunpack.c.l.b16 %v2898
        %v3035 = vunpack.c.l.b16 %v2899
        %v3036 = vunpack.c.l.b16 %v2900
        %v3037 = vunpack.c.l.b16 %v2901
        %v3038 = vpack.c.b16 %v3023, %v3022
        %v3039 = vpack.c.b16 %v3025, %v3024
        %v3040 = vpack.c.b16 %v3027, %v3026
        %v3041 = vpack.c.b16 %v3029, %v3028
        %v3042 = vpack.c.b16 %v3031, %v3030
        %v3043 = vpack.c.b16 %v3033, %v3032
        %v3044 = vpack.c.b16 %v3035, %v3034
        %v3045 = vpack.c.b16 %v3037, %v3036
        %3054 = vmatprep.subr.bf16.mxu0 0
        %3055 = vmatpush1.bf16.msra.mxu0 %v2902
        %3056 = vmatprep.subr.bf16.mxu0 0
        %3057 = vmatpush1.bf16.msra.mxu0 %v2903
        %3058 = vmatprep.subr.bf16.mxu0 0
        %3059 = vmatpush1.bf16.msra.mxu0 %v2904
        %3060 = vmatprep.subr.bf16.mxu0 0
        %3061 = vmatpush1.bf16.msra.mxu0 %v2905
        %3062 = vmatprep.subr.bf16.mxu0 0
        %3063 = vmatpush1.bf16.msra.mxu0 %v2906
        %3064 = vmatprep.subr.bf16.mxu0 0
        %3065 = vmatpush1.bf16.msra.mxu0 %v2907
        %3066 = vmatprep.subr.bf16.mxu0 0
        %3067 = vmatpush1.bf16.msra.mxu0 %v2908
        %3068 = vmatprep.subr.bf16.mxu0 0
        %3069 = vmatpush1.bf16.msra.mxu0 %v2909
        %3070 = vmatprep.subr.bf16.mxu0 0
        %3071 = vmatpush1.bf16.msra.mxu0 0
        %3072 = vmatprep.subr.bf16.mxu0 0
        %3073 = vmatpush1.bf16.msra.mxu0 0
        %3074 = vmatprep.subr.bf16.mxu0 0
        %3075 = vmatpush1.bf16.msra.mxu0 0
        %3076 = vmatprep.subr.bf16.mxu0 0
        %3077 = vmatpush1.bf16.msra.mxu0 0
        %3078 = vmatprep.subr.bf16.mxu0 0
        %3079 = vmatpush1.bf16.msra.mxu0 0
        %3080 = vmatprep.subr.bf16.mxu0 0
        %3081 = vmatpush1.bf16.msra.mxu0 0
        %3082 = vmatprep.subr.bf16.mxu0 0
        %3083 = vmatpush1.bf16.msra.mxu0 0
        %3084 = vmatprep.subr.bf16.mxu0 0
        %3085 = vmatpush1.bf16.msra.mxu0 0
        %3086 = vmatprep.mubr.bf16.mxu0 0
        %3087 = vmatmul.mubr.bf16.gmra.mrb[0].mxu0 %v3038
        %v3088 = vpop.f32.mrb[0].mxu0
        %v3089 = vadd.f32 %v2929, %v3088
        %v3090 = vpop.f32.mrb[0].mxu0
        %v3091 = vpop.f32.mrb[0].mxu0
        %v3092 = vadd.f32 %v2934, %v3091
        %v3093 = vpop.f32.mrb[0].mxu0
        %3094 = vmatprep.mubr.bf16.mxu0 0
        %3095 = vmatmul.mubr.bf16.gmra.mrb[0].mxu0 %v3039
        %v3096 = vpop.f32.mrb[0].mxu0
        %v3097 = vadd.f32 %v2939, %v3096
        %v3098 = vpop.f32.mrb[0].mxu0
        %v3099 = vpop.f32.mrb[0].mxu0
        %v3100 = vadd.f32 %v2944, %v3099
        %v3101 = vpop.f32.mrb[0].mxu0
        %3102 = vmatprep.mubr.bf16.mxu0 0
        %3103 = vmatmul.mubr.bf16.gmra.mrb[0].mxu0 %v3040
        %v3104 = vpop.f32.mrb[0].mxu0
        %v3105 = vadd.f32 %v2949, %v3104
        %v3106 = vpop.f32.mrb[0].mxu0
        %v3107 = vpop.f32.mrb[0].mxu0
        %v3108 = vadd.f32 %v2954, %v3107
        %v3109 = vpop.f32.mrb[0].mxu0
        %3110 = vmatprep.mubr.bf16.mxu0 0
        %3111 = vmatmul.mubr.bf16.gmra.mrb[0].mxu0 %v3041
        %v3112 = vpop.f32.mrb[0].mxu0
        %v3113 = vadd.f32 %v2959, %v3112
        %v3114 = vpop.f32.mrb[0].mxu0
        %v3115 = vpop.f32.mrb[0].mxu0
        %v3116 = vadd.f32 %v2964, %v3115
        %v3117 = vpop.f32.mrb[0].mxu0
        %3118 = vmatprep.mubr.bf16.mxu0 0
        %3119 = vmatmul.mubr.bf16.gmra.mrb[0].mxu0 %v3042
        %v3120 = vpop.f32.mrb[0].mxu0
        %v3121 = vadd.f32 %v2969, %v3120
        %v3122 = vpop.f32.mrb[0].mxu0
        %v3123 = vpop.f32.mrb[0].mxu0
        %v3124 = vadd.f32 %v2974, %v3123
        %v3125 = vpop.f32.mrb[0].mxu0
        %3126 = vmatprep.mubr.bf16.mxu0 0
        %3127 = vmatmul.mubr.bf16.gmra.mrb[0].mxu0 %v3043
        %v3128 = vpop.f32.mrb[0].mxu0
        %v3129 = vadd.f32 %v2979, %v3128
        %v3130 = vpop.f32.mrb[0].mxu0
        %v3131 = vpop.f32.mrb[0].mxu0
        %v3132 = vadd.f32 %v2984, %v3131
        %v3133 = vpop.f32.mrb[0].mxu0
        %3134 = vmatprep.mubr.bf16.mxu0 0
        %3135 = vmatmul.mubr.bf16.gmra.mrb[0].mxu0 %v3044
        %v3136 = vpop.f32.mrb[0].mxu0
        %v3137 = vadd.f32 %v2989, %v3136
        %v3138 = vpop.f32.mrb[0].mxu0
        %v3139 = vpop.f32.mrb[0].mxu0
        %v3140 = vadd.f32 %v2994, %v3139
        %v3141 = vpop.f32.mrb[0].mxu0
        %3142 = vmatprep.mubr.bf16.mxu0 0
        %3143 = vmatmul.mubr.bf16.gmra.mrb[0].mxu0 %v3045
        %v3144 = vpop.f32.mrb[0].mxu0
        %v3145 = vadd.f32 %v2999, %v3144
        %v3146 = vpop.f32.mrb[0].mxu0
        %v3147 = vpop.f32.mrb[0].mxu0
        %v3148 = vadd.f32 %v3004, %v3147
        %v3149 = vpop.f32.mrb[0].mxu0
        %3150 = vdwg.mxu0
        %3151 = vxpose.xlu0.b32.start [1/16] %v3089, 128
        %3152 = vxpose.xlu0.b32.cont [2/16] %v3092, 128
        %3153 = vxpose.xlu0.b32.cont [3/16] %v3097, 128
        %3154 = vxpose.xlu0.b32.cont [4/16] %v3100, 128
        %3155 = vxpose.xlu0.b32.cont [5/16] %v3105, 128
        %3156 = vxpose.xlu0.b32.cont [6/16] %v3108, 128
        %3157 = vxpose.xlu0.b32.cont [7/16] %v3113, 128
        %3158 = vxpose.xlu0.b32.cont [8/16] %v3116, 128
        %3159 = vxpose.xlu0.b32.cont [9/16] %v3121, 128
        %3160 = vxpose.xlu0.b32.cont [10/16] %v3124, 128
        %3161 = vxpose.xlu0.b32.cont [11/16] %v3129, 128
        %3162 = vxpose.xlu0.b32.cont [12/16] %v3132, 128
        %3163 = vxpose.xlu0.b32.cont [13/16] %v3137, 128
        %3164 = vxpose.xlu0.b32.cont [14/16] %v3140, 128
        %3165 = vxpose.xlu0.b32.cont [15/16] %v3145, 128
        %3166 = vxpose.xlu0.b32.end [16/16] %v3148, 128
        %v3167 = vpop.trf.xlu0
        %v3168 = vpop.trf.xlu0
        %v3169 = vpop.trf.xlu0
        %v3170 = vpop.trf.xlu0
        %v3171 = vpop.trf.xlu0
        %v3172 = vpop.trf.xlu0
        %v3173 = vpop.trf.xlu0
        %v3174 = vpop.trf.xlu0
        %v3175 = vpop.trf.xlu0
        %v3176 = vpop.trf.xlu0
        %v3177 = vpop.trf.xlu0
        %v3178 = vpop.trf.xlu0
        %v3179 = vpop.trf.xlu0
        %v3180 = vpop.trf.xlu0
        %v3181 = vpop.trf.xlu0
        %v3182 = vpop.trf.xlu0
        %v3183 = vadd.f32 %v931, %v3167
        %v3184 = vadd.f32 %v932, %v3168
        %v3185 = vld [vmem:[%s859] sm:$0x1]
        %v3186 = vld [vmem:[%s862] sm:$0x1]
        %3187 = vadd.xlane.f32.xlu0 %v3183
        %v3188 = vpop.xlane.xlu0 %3187
        %3189 = vadd.xlane.f32.xlu0 %v3184
        %v3190 = vpop.xlane.xlu0 %3189
        %v3191 = vrcp.pop 128.0
        %v3192 = vmul.f32 %v3188, %v3191
        %v3193 = vmul.f32 %v3190, %v3191
        %v3194 = vsub.f32 %v3183, %v3192
        %v3195 = vsub.f32 %v3184, %v3193
        %v3196 = vmul.f32 %v3194, %v3194
        %v3197 = vmul.f32 %v3195, %v3195
        %3198 = vadd.xlane.f32.xlu0 %v3196
        %v3199 = vpop.xlane.xlu0 %3198
        %3200 = vadd.xlane.f32.xlu0 %v3197
        %v3201 = vpop.xlane.xlu0 %3200
        %v3202 = vmul.f32 %v3199, %v3191
        %v3203 = vmul.f32 %v3201, %v3191
        %v3204 = vadd.f32 %v3202, 1e-05
        %v3205 = vadd.f32 %v3203, 1e-05
        %v3206 = vrsqrt.pop %v3204
        %v3207 = vrsqrt.pop %v3205
        %v3208 = vmul.f32 %v3194, %v3206
        %v3209 = vmul.f32 %v3195, %v3207
        %v3211 = vlaneseq
        %v3212 = vshrl.u32 %v3211, 7
        %v3213 = vsub.s32 0, %v3212
        %v3214 = vrot.slane %v3185, %v3213
        %v3216 = vmul.f32 %v3208, %v3214
        %v3217 = vmul.f32 %v3209, %v3214
        %v3219 = vlaneseq
        %v3220 = vshrl.u32 %v3219, 7
        %v3221 = vsub.s32 0, %v3220
        %v3222 = vrot.slane %v3186, %v3221
        %v3224 = vadd.f32 %v3216, %v3222
        %v3225 = vadd.f32 %v3217, %v3222
        %v3226 = vld [vmem:[%s867] sm:$0xf]
        %v3227 = vld [vmem:[%s867 + $0x4] sm:$0xf]
        %v3228 = vld [vmem:[%s867 + $0x8] sm:$0xf]
        %v3229 = vld [vmem:[%s867 + $0xc] sm:$0xf]
        %v3230 = vld [vmem:[%s867 + $0x10] sm:$0xf]
        %v3231 = vld [vmem:[%s867 + $0x14] sm:$0xf]
        %v3232 = vld [vmem:[%s867 + $0x18] sm:$0xf]
        %v3233 = vld [vmem:[%s867 + $0x1c] sm:$0xf]
        %v3234 = vld [vmem:[%s867 + $0x20] sm:$0xf]
        %v3235 = vld [vmem:[%s867 + $0x24] sm:$0xf]
        %v3236 = vld [vmem:[%s867 + $0x28] sm:$0xf]
        %v3237 = vld [vmem:[%s867 + $0x2c] sm:$0xf]
        %v3238 = vld [vmem:[%s867 + $0x30] sm:$0xf]
        %v3239 = vld [vmem:[%s867 + $0x34] sm:$0xf]
        %v3240 = vld [vmem:[%s867 + $0x38] sm:$0xf]
        %v3241 = vld [vmem:[%s867 + $0x3c] sm:$0xf]
        %v3242 = vld [vmem:[%s867 + $0x40] sm:$0xf]
        %v3243 = vld [vmem:[%s867 + $0x44] sm:$0xf]
        %v3244 = vld [vmem:[%s867 + $0x48] sm:$0xf]
        %v3245 = vld [vmem:[%s867 + $0x4c] sm:$0xf]
        %v3246 = vld [vmem:[%s867 + $0x50] sm:$0xf]
        %v3247 = vld [vmem:[%s867 + $0x54] sm:$0xf]
        %v3248 = vld [vmem:[%s867 + $0x58] sm:$0xf]
        %v3249 = vld [vmem:[%s867 + $0x5c] sm:$0xf]
        %v3250 = vld [vmem:[%s867 + $0x60] sm:$0xf]
        %v3251 = vld [vmem:[%s867 + $0x64] sm:$0xf]
        %v3252 = vld [vmem:[%s867 + $0x68] sm:$0xf]
        %v3253 = vld [vmem:[%s867 + $0x6c] sm:$0xf]
        %v3254 = vld [vmem:[%s867 + $0x70] sm:$0xf]
        %v3255 = vld [vmem:[%s867 + $0x74] sm:$0xf]
        %v3256 = vld [vmem:[%s867 + $0x78] sm:$0xf]
        %v3257 = vld [vmem:[%s867 + $0x7c] sm:$0xf]
        %v3258 = vpack.c.bf16 %v3225, %v3224
        %v3259 = vld [vmem:[%s871] sm:$0x3]
        %v3261 = vlaneseq
        %v3262 = vshrl.u32 %v3261, 7
        %v3263 = vsub.s32 0, %v3262
        %v3264 = vrot.slane %v3259, %v3263
        %v3265 = vlaneseq
        %v3266 = vshrl.u32 %v3265, 7
        %v3267 = vsub.s32 1, %v3266
        %v3268 = vrot.slane %v3259, %v3267
        %v3303 = vunpack.c.l.b16 %v3226
        %v3304 = vunpack.c.l.b16 %v3227
        %v3305 = vunpack.c.l.b16 %v3228
        %v3306 = vunpack.c.l.b16 %v3229
        %v3307 = vunpack.c.l.b16 %v3230
        %v3308 = vunpack.c.l.b16 %v3231
        %v3309 = vunpack.c.l.b16 %v3232
        %v3310 = vunpack.c.l.b16 %v3233
        %v3311 = vunpack.c.l.b16 %v3234
        %v3312 = vunpack.c.l.b16 %v3235
        %v3313 = vunpack.c.l.b16 %v3236
        %v3314 = vunpack.c.l.b16 %v3237
        %v3315 = vunpack.c.l.b16 %v3238
        %v3316 = vunpack.c.l.b16 %v3239
        %v3317 = vunpack.c.l.b16 %v3240
        %v3318 = vunpack.c.l.b16 %v3241
        %v3319 = vunpack.c.l.b16 %v3242
        %v3320 = vunpack.c.l.b16 %v3243
        %v3321 = vunpack.c.l.b16 %v3244
        %v3322 = vunpack.c.l.b16 %v3245
        %v3323 = vunpack.c.l.b16 %v3246
        %v3324 = vunpack.c.l.b16 %v3247
        %v3325 = vunpack.c.l.b16 %v3248
        %v3326 = vunpack.c.l.b16 %v3249
        %v3327 = vunpack.c.l.b16 %v3250
        %v3328 = vunpack.c.l.b16 %v3251
        %v3329 = vunpack.c.l.b16 %v3252
        %v3330 = vunpack.c.l.b16 %v3253
        %v3331 = vunpack.c.l.b16 %v3254
        %v3332 = vunpack.c.l.b16 %v3255
        %v3333 = vunpack.c.l.b16 %v3256
        %v3334 = vunpack.c.l.b16 %v3257
        %v3335 = vpack.c.b16 %v3304, %v3303
        %v3336 = vpack.c.b16 %v3306, %v3305
        %v3337 = vpack.c.b16 %v3308, %v3307
        %v3338 = vpack.c.b16 %v3310, %v3309
        %v3339 = vpack.c.b16 %v3312, %v3311
        %v3340 = vpack.c.b16 %v3314, %v3313
        %v3341 = vpack.c.b16 %v3316, %v3315
        %v3342 = vpack.c.b16 %v3318, %v3317
        %v3343 = vpack.c.b16 %v3320, %v3319
        %v3344 = vpack.c.b16 %v3322, %v3321
        %v3345 = vpack.c.b16 %v3324, %v3323
        %v3346 = vpack.c.b16 %v3326, %v3325
        %v3347 = vpack.c.b16 %v3328, %v3327
        %v3348 = vpack.c.b16 %v3330, %v3329
        %v3349 = vpack.c.b16 %v3332, %v3331
        %v3350 = vpack.c.b16 %v3334, %v3333
        %3367 = vmatprep.subr.bf16.mxu0 0
        %3368 = vmatpush1.bf16.xpose.msra.mxu0 %v3335
        %3369 = vmatprep.subr.bf16.mxu0 0
        %3370 = vmatpush1.bf16.xpose.msra.mxu0 %v3336
        %3371 = vmatprep.subr.bf16.mxu0 0
        %3372 = vmatpush1.bf16.xpose.msra.mxu0 %v3337
        %3373 = vmatprep.subr.bf16.mxu0 0
        %3374 = vmatpush1.bf16.xpose.msra.mxu0 %v3338
        %3375 = vmatprep.subr.bf16.mxu0 0
        %3376 = vmatpush1.bf16.xpose.msra.mxu0 %v3339
        %3377 = vmatprep.subr.bf16.mxu0 0
        %3378 = vmatpush1.bf16.xpose.msra.mxu0 %v3340
        %3379 = vmatprep.subr.bf16.mxu0 0
        %3380 = vmatpush1.bf16.xpose.msra.mxu0 %v3341
        %3381 = vmatprep.subr.bf16.mxu0 0
        %3382 = vmatpush1.bf16.xpose.msra.mxu0 %v3342
        %3383 = vmatprep.subr.bf16.mxu0 0
        %3384 = vmatpush1.bf16.xpose.msra.mxu0 %v3343
        %3385 = vmatprep.subr.bf16.mxu0 0
        %3386 = vmatpush1.bf16.xpose.msra.mxu0 %v3344
        %3387 = vmatprep.subr.bf16.mxu0 0
        %3388 = vmatpush1.bf16.xpose.msra.mxu0 %v3345
        %3389 = vmatprep.subr.bf16.mxu0 0
        %3390 = vmatpush1.bf16.xpose.msra.mxu0 %v3346
        %3391 = vmatprep.subr.bf16.mxu0 0
        %3392 = vmatpush1.bf16.xpose.msra.mxu0 %v3347
        %3393 = vmatprep.subr.bf16.mxu0 0
        %3394 = vmatpush1.bf16.xpose.msra.mxu0 %v3348
        %3395 = vmatprep.subr.bf16.mxu0 0
        %3396 = vmatpush1.bf16.xpose.msra.mxu0 %v3349
        %3397 = vmatprep.subr.bf16.mxu0 0
        %3398 = vmatpush1.bf16.xpose.msra.mxu0 %v3350
        %3399 = vmatprep.mubr.bf16.mxu0 0
        %3400 = vmatmul.mubr.bf16.gmra.mrb[0].mxu0 %v3258
        %v3401 = vpop.f32.mrb[0].mxu0
        %v3402 = vadd.f32 %v3264, %v3401
        %v3403 = vpop.f32.mrb[0].mxu0
        %v3404 = vadd.f32 %v3268, %v3403
        %v3405 = vpop.f32.mrb[0].mxu0
        %v3406 = vadd.f32 %v3264, %v3405
        %v3407 = vpop.f32.mrb[0].mxu0
        %v3408 = vadd.f32 %v3268, %v3407
        %3409 = vdwg.mxu0
        %v3410 = vmax.f32 %v3402, 0.0
        %v3411 = vmax.f32 %v3404, 0.0
        %v3412 = vmax.f32 %v3406, 0.0
        %v3413 = vmax.f32 %v3408, 0.0
        %v3414 = vld [vmem:[%s876] sm:$0xff]
        %v3415 = vld [vmem:[%s876 + $0x8] sm:$0xff]
        %v3416 = vld [vmem:[%s876 + $0x10] sm:$0xff]
        %v3417 = vld [vmem:[%s876 + $0x18] sm:$0xff]
        %v3418 = vld [vmem:[%s876 + $0x20] sm:$0xff]
        %v3419 = vld [vmem:[%s876 + $0x28] sm:$0xff]
        %v3420 = vld [vmem:[%s876 + $0x30] sm:$0xff]
        %v3421 = vld [vmem:[%s876 + $0x38] sm:$0xff]
        %v3422 = vld [vmem:[%s876 + $0x40] sm:$0xff]
        %v3423 = vld [vmem:[%s876 + $0x48] sm:$0xff]
        %v3424 = vld [vmem:[%s876 + $0x50] sm:$0xff]
        %v3425 = vld [vmem:[%s876 + $0x58] sm:$0xff]
        %v3426 = vld [vmem:[%s876 + $0x60] sm:$0xff]
        %v3427 = vld [vmem:[%s876 + $0x68] sm:$0xff]
        %v3428 = vld [vmem:[%s876 + $0x70] sm:$0xff]
        %v3429 = vld [vmem:[%s876 + $0x78] sm:$0xff]
        %v3430 = vpack.c.bf16 %v3412, %v3410
        %v3431 = vpack.c.bf16 %v3413, %v3411
        %v3432 = vld [vmem:[%s879] sm:$0x1]
        %v3434 = vlaneseq
        %v3435 = vshrl.u32 %v3434, 7
        %v3436 = vsub.s32 0, %v3435
        %v3437 = vrot.slane %v3432, %v3436
        %v3455 = vunpack.c.l.b16 %v3414
        %v3456 = vunpack.c.h.b16 %v3414
        %v3457 = vunpack.c.l.b16 %v3415
        %v3458 = vunpack.c.h.b16 %v3415
        %v3459 = vunpack.c.l.b16 %v3416
        %v3460 = vunpack.c.h.b16 %v3416
        %v3461 = vunpack.c.l.b16 %v3417
        %v3462 = vunpack.c.h.b16 %v3417
        %v3463 = vunpack.c.l.b16 %v3418
        %v3464 = vunpack.c.h.b16 %v3418
        %v3465 = vunpack.c.l.b16 %v3419
        %v3466 = vunpack.c.h.b16 %v3419
        %v3467 = vunpack.c.l.b16 %v3420
        %v3468 = vunpack.c.h.b16 %v3420
        %v3469 = vunpack.c.l.b16 %v3421
        %v3470 = vunpack.c.h.b16 %v3421
        %v3471 = vunpack.c.l.b16 %v3422
        %v3472 = vunpack.c.h.b16 %v3422
        %v3473 = vunpack.c.l.b16 %v3423
        %v3474 = vunpack.c.h.b16 %v3423
        %v3475 = vunpack.c.l.b16 %v3424
        %v3476 = vunpack.c.h.b16 %v3424
        %v3477 = vunpack.c.l.b16 %v3425
        %v3478 = vunpack.c.h.b16 %v3425
        %v3479 = vunpack.c.l.b16 %v3426
        %v3480 = vunpack.c.h.b16 %v3426
        %v3481 = vunpack.c.l.b16 %v3427
        %v3482 = vunpack.c.h.b16 %v3427
        %v3483 = vunpack.c.l.b16 %v3428
        %v3484 = vunpack.c.h.b16 %v3428
        %v3485 = vunpack.c.l.b16 %v3429
        %v3486 = vunpack.c.h.b16 %v3429
        %v3487 = vpack.c.b16 %v3457, %v3455
        %v3488 = vpack.c.b16 %v3458, %v3456
        %v3489 = vpack.c.b16 %v3461, %v3459
        %v3490 = vpack.c.b16 %v3462, %v3460
        %v3491 = vpack.c.b16 %v3465, %v3463
        %v3492 = vpack.c.b16 %v3466, %v3464
        %v3493 = vpack.c.b16 %v3469, %v3467
        %v3494 = vpack.c.b16 %v3470, %v3468
        %v3495 = vpack.c.b16 %v3473, %v3471
        %v3496 = vpack.c.b16 %v3474, %v3472
        %v3497 = vpack.c.b16 %v3477, %v3475
        %v3498 = vpack.c.b16 %v3478, %v3476
        %v3499 = vpack.c.b16 %v3481, %v3479
        %v3500 = vpack.c.b16 %v3482, %v3480
        %v3501 = vpack.c.b16 %v3485, %v3483
        %v3502 = vpack.c.b16 %v3486, %v3484
        %3519 = vmatprep.subr.bf16.mxu0 %v3488
        %3520 = vmatpush1.bf16.xpose.msra.mxu0 %v3487
        %3521 = vmatprep.subr.bf16.mxu0 %v3490
        %3522 = vmatpush1.bf16.xpose.msra.mxu0 %v3489
        %3523 = vmatprep.subr.bf16.mxu0 %v3492
        %3524 = vmatpush1.bf16.xpose.msra.mxu0 %v3491
        %3525 = vmatprep.subr.bf16.mxu0 %v3494
        %3526 = vmatpush1.bf16.xpose.msra.mxu0 %v3493
        %3527 = vmatprep.subr.bf16.mxu0 %v3496
        %3528 = vmatpush1.bf16.xpose.msra.mxu0 %v3495
        %3529 = vmatprep.subr.bf16.mxu0 %v3498
        %3530 = vmatpush1.bf16.xpose.msra.mxu0 %v3497
        %3531 = vmatprep.subr.bf16.mxu0 %v3500
        %3532 = vmatpush1.bf16.xpose.msra.mxu0 %v3499
        %3533 = vmatprep.subr.bf16.mxu0 %v3502
        %3534 = vmatpush1.bf16.xpose.msra.mxu0 %v3501
        %3535 = vmatprep.subr.bf16.mxu0 0
        %3536 = vmatpush1.bf16.xpose.msra.mxu0 0
        %3537 = vmatprep.subr.bf16.mxu0 0
        %3538 = vmatpush1.bf16.xpose.msra.mxu0 0
        %3539 = vmatprep.subr.bf16.mxu0 0
        %3540 = vmatpush1.bf16.xpose.msra.mxu0 0
        %3541 = vmatprep.subr.bf16.mxu0 0
        %3542 = vmatpush1.bf16.xpose.msra.mxu0 0
        %3543 = vmatprep.subr.bf16.mxu0 0
        %3544 = vmatpush1.bf16.xpose.msra.mxu0 0
        %3545 = vmatprep.subr.bf16.mxu0 0
        %3546 = vmatpush1.bf16.xpose.msra.mxu0 0
        %3547 = vmatprep.subr.bf16.mxu0 0
        %3548 = vmatpush1.bf16.xpose.msra.mxu0 0
        %3549 = vmatprep.subr.bf16.mxu0 0
        %3550 = vmatpush1.bf16.xpose.msra.mxu0 0
        %3551 = vmatprep.mubr.bf16.mxu0 %v3431
        %3552 = vmatmul.mubr.bf16.gmra.mrb[0].mxu0 %v3430
        %v3553 = vpop.f32.mrb[0].mxu0
        %v3554 = vadd.f32 %v3437, %v3553
        %v3555 = vpop.f32.mrb[0].mxu0
        %v3556 = vpop.f32.mrb[0].mxu0
        %v3557 = vadd.f32 %v3437, %v3556
        %v3558 = vpop.f32.mrb[0].mxu0
        %3559 = vdwg.mxu0
        %v3560 = vadd.f32 %v3224, %v3554
        %v3561 = vadd.f32 %v3225, %v3557
        %v3562 = vld [vmem:[%s882] sm:$0x1]
        %v3563 = vld [vmem:[%s885] sm:$0x1]
        %3564 = vadd.xlane.f32.xlu0 %v3560
        %v3565 = vpop.xlane.xlu0 %3564
        %3566 = vadd.xlane.f32.xlu0 %v3561
        %v3567 = vpop.xlane.xlu0 %3566
        %v3568 = vmul.f32 %v3565, %v3191
        %v3569 = vmul.f32 %v3567, %v3191
        %v3570 = vsub.f32 %v3560, %v3568
        %v3571 = vsub.f32 %v3561, %v3569
        %v3572 = vmul.f32 %v3570, %v3570
        %v3573 = vmul.f32 %v3571, %v3571
        %3574 = vadd.xlane.f32.xlu0 %v3572
        %v3575 = vpop.xlane.xlu0 %3574
        %3576 = vadd.xlane.f32.xlu0 %v3573
        %v3577 = vpop.xlane.xlu0 %3576
        %v3578 = vmul.f32 %v3575, %v3191
        %v3579 = vmul.f32 %v3577, %v3191
        %v3580 = vadd.f32 %v3578, 1e-05
        %v3581 = vadd.f32 %v3579, 1e-05
        %v3582 = vrsqrt.pop %v3580
        %v3583 = vrsqrt.pop %v3581
        %v3584 = vmul.f32 %v3570, %v3582
        %v3585 = vmul.f32 %v3571, %v3583
        %v3587 = vlaneseq
        %v3588 = vshrl.u32 %v3587, 7
        %v3589 = vsub.s32 0, %v3588
        %v3590 = vrot.slane %v3562, %v3589
        %v3592 = vmul.f32 %v3584, %v3590
        %v3593 = vmul.f32 %v3585, %v3590
        %v3595 = vlaneseq
        %v3596 = vshrl.u32 %v3595, 7
        %v3597 = vsub.s32 0, %v3596
        %v3598 = vrot.slane %v3563, %v3597
        %v3600 = vadd.f32 %v3592, %v3598
        %v3601 = vadd.f32 %v3593, %v3598
        %3602 = vst [vmem:[#allocation2] sm:$0xff] %v3600
        %3603 = vst [vmem:[#allocation2 + $0x8] sm:$0xff] %v3601
        %p3604 = scmp.eq.s32.totalorder %s37, 3
        // Predicated region
        $region117: #{spectral_temporal_forward.3} parent=111 // pred_check
          %p3605 = pneg %p3604
        $region118: #{spectral_temporal_forward.3} parent=111 // pred_check_branch
          %3607 = sbr.rel (%p3605) target = $region120
        $region119: #{spectral_temporal_forward.3} parent=111 // pred_region
          %v3608 = vld [vmem:[%s15] sm:$0x1]
          %v3610 = vlaneseq
          %v3611 = vshrl.u32 %v3610, 7
          %v3612 = vsub.s32 0, %v3611
          %v3613 = vrot.slane %v3608, %v3612
          %v3615 = vmul.f32 %v3600, %v3613
          %v3616 = vmul.f32 %v3601, %v3613
          %3617 = vadd.xlane.f32.xlu0 %v3615
          %v3618 = vpop.xlane.xlu0 %3617
          %3619 = vadd.xlane.f32.xlu0 %v3616
          %v3620 = vpop.xlane.xlu0 %3619
          %v3621 = vld [vmem:[#allocation3] sm:$0x1]
          %v3623 = vlaneseq
          %v3624 = vshrl.u32 %v3623, 7
          %v3625 = vsub.s32 0, %v3624
          %v3626 = vrot.slane %v3621, %v3625
          %3627 = vset.pattern.permute.xlu0 0
          %3628 = vperm.xlu0 %3627, %v3626
          %v3629 = vpop.permute.xlu0 %3628
          %v3631 = vadd.f32 %v3618, %v3629
          %v3632 = vadd.f32 %v3620, %v3629
          %v3635 = vlaneseq
          %v3636 = vand.u32 %v3635, 127
          %v3637 = vlaneseq
          %v3638 = vshrl.u32 %v3637, 7
          %v3639 = vsub.s32 %v3636, %v3638
          %v3640 = vrot.slane %v3631, %v3639
          %v3641 = vlaneseq
          %v3642 = vshrl.u32 %v3641, 7
          %v3643 = vsub.s32 %v3636, %v3642
          %v3644 = vrot.slane %v3632, %v3643
          %vm3645 = vcmask 1041409
          %v3646 = vsel %vm3645, %v3644, %v3640
          %vm3648 = vcmask 58368
          %v3649 = vsel %vm3648, %v3646, -inf
          %3650 = vmax.xlane.f32.xlu0 %v3649
          %v3651 = vpop.xlane.xlu0 %3650
          %v3653 = vlaneseq
          %v3654 = vshrl.u32 %v3653, 7
          %v3655 = vsub.s32 0, %v3654
          %v3656 = vrot.slane %v3651, %v3655
          %v3657 = vlaneseq
          %v3658 = vshrl.u32 %v3657, 7
          %v3659 = vsub.s32 1, %v3658
          %v3660 = vrot.slane %v3651, %v3659
          %v3663 = vsub.f32 %v3631, %v3656
          %v3664 = vsub.f32 %v3632, %v3660
          %v3665 = vmul.f32 %v3663, 1.442695
          %v3666 = vpow.pop %v3665
          %v3667 = vmul.f32 %v3664, 1.442695
          %v3668 = vpow.pop %v3667
          %3671 = vset.pattern.permute.xlu0 0
          %3672 = vperm.xlu0 %3671, %v3666
          %v3673 = vpop.permute.xlu0 %3672
          %3674 = vset.pattern.permute.xlu0 0
          %3675 = vperm.xlu0 %3674, %v3668
          %v3676 = vpop.permute.xlu0 %3675
          %v3677 = vlaneseq
          %v3678 = vshrl.u32 %v3677, 7
          %v3679 = vsub.s32 %v3636, %v3678
          %v3680 = vrot.slane %v3673, %v3679
          %v3681 = vlaneseq
          %v3682 = vshrl.u32 %v3681, 7
          %v3683 = vsub.s32 %v3636, %v3682
          %v3684 = vrot.slane %v3676, %v3683
          %v3685 = vsel %vm3645, %v3684, %v3680
          %v3687 = vsel %vm3648, %v3685, 0.0
          %3688 = vadd.xlane.f32.xlu0 %v3687
          %v3689 = vpop.xlane.xlu0 %3688
          %v3691 = vlaneseq
          %v3692 = vshrl.u32 %v3691, 7
          %v3693 = vsub.s32 0, %v3692
          %v3694 = vrot.slane %v3689, %v3693
          %v3695 = vlaneseq
          %v3696 = vshrl.u32 %v3695, 7
          %v3697 = vsub.s32 1, %v3696
          %v3698 = vrot.slane %v3689, %v3697
          %v3701 = vrcp.pop %v3694
          %v3702 = vmul.f32 %v3666, %v3701
          %v3703 = vrcp.pop %v3698
          %v3704 = vmul.f32 %v3668, %v3703
          %3706 = vset.pattern.permute.xlu0 0
          %3707 = vperm.xlu0 %3706, %v3702
          %v3708 = vpop.permute.xlu0 %3707
          %3711 = vset.pattern.permute.xlu0 0
          %3712 = vperm.xlu0 %3711, %v3704
          %v3713 = vpop.permute.xlu0 %3712
          %v3715 = vmul.f32 %v3708, %v3600
          %v3716 = vmul.f32 %v3713, %v3601
          %v3717 = vrot.slane %v3715, 4
          %v3718 = vadd.f32 %v3715, %v3717
          %v3719 = vrot.slane %v3718, 2
          %v3720 = vadd.f32 %v3718, %v3719
          %v3721 = vrot.slane %v3720, 1
          %v3722 = vadd.f32 %v3720, %v3721
          %v3723 = vrot.slane %v3716, 4
          %v3724 = vadd.f32 %v3716, %v3723
          %v3725 = vrot.slane %v3724, 2
          %v3726 = vadd.f32 %v3724, %v3725
          %v3727 = vrot.slane %v3726, 1
          %v3728 = vadd.f32 %v3726, %v3727
          %v3729 = vld [vmem:[%s17] sm:$0xf]
          %v3730 = vld [vmem:[%s17 + $0x4] sm:$0xf]
          %v3731 = vld [vmem:[%s17 + $0x8] sm:$0xf]
          %v3732 = vld [vmem:[%s17 + $0xc] sm:$0xf]
          %v3733 = vld [vmem:[%s17 + $0x10] sm:$0xf]
          %v3734 = vld [vmem:[%s17 + $0x14] sm:$0xf]
          %v3735 = vld [vmem:[%s17 + $0x18] sm:$0xf]
          %v3736 = vld [vmem:[%s17 + $0x1c] sm:$0xf]
          %v3737 = vld [vmem:[%s17 + $0x20] sm:$0xf]
          %v3738 = vld [vmem:[%s17 + $0x24] sm:$0xf]
          %v3739 = vld [vmem:[%s17 + $0x28] sm:$0xf]
          %v3740 = vld [vmem:[%s17 + $0x2c] sm:$0xf]
          %v3741 = vld [vmem:[%s17 + $0x30] sm:$0xf]
          %v3742 = vld [vmem:[%s17 + $0x34] sm:$0xf]
          %v3743 = vld [vmem:[%s17 + $0x38] sm:$0xf]
          %v3744 = vld [vmem:[%s17 + $0x3c] sm:$0xf]
          %v3745 = vpack.c.bf16 %v3722, %v3722
          %v3746 = vpack.c.bf16 %v3728, %v3728
          %v3747 = vld [vmem:[%s18] sm:$0x1]
          %v3749 = vlaneseq
          %v3750 = vshrl.u32 %v3749, 7
          %v3751 = vsub.s32 0, %v3750
          %v3752 = vrot.slane %v3747, %v3751
          %v3756 = vunpack.c.l.b16 %v3745
          %v3757 = vunpack.c.l.b16 %v3746
          %v3758 = vsel %vm3645, %v3757, %v3756
          %v3759 = vpack.c.b16 %v3758, %v3758
          %v3777 = vunpack.c.l.b16 %v3729
          %v3778 = vunpack.c.l.b16 %v3730
          %v3779 = vunpack.c.l.b16 %v3731
          %v3780 = vunpack.c.l.b16 %v3732
          %v3781 = vunpack.c.l.b16 %v3733
          %v3782 = vunpack.c.l.b16 %v3734
          %v3783 = vunpack.c.l.b16 %v3735
          %v3784 = vunpack.c.l.b16 %v3736
          %v3785 = vunpack.c.l.b16 %v3737
          %v3786 = vunpack.c.l.b16 %v3738
          %v3787 = vunpack.c.l.b16 %v3739
          %v3788 = vunpack.c.l.b16 %v3740
          %v3789 = vunpack.c.l.b16 %v3741
          %v3790 = vunpack.c.l.b16 %v3742
          %v3791 = vunpack.c.l.b16 %v3743
          %v3792 = vunpack.c.l.b16 %v3744
          %v3793 = vpack.c.b16 %v3778, %v3777
          %v3794 = vpack.c.b16 %v3780, %v3779
          %v3795 = vpack.c.b16 %v3782, %v3781
          %v3796 = vpack.c.b16 %v3784, %v3783
          %v3797 = vpack.c.b16 %v3786, %v3785
          %v3798 = vpack.c.b16 %v3788, %v3787
          %v3799 = vpack.c.b16 %v3790, %v3789
          %v3800 = vpack.c.b16 %v3792, %v3791
          %3809 = vmatprep.subr.bf16.mxu0 0
          %3810 = vmatpush1.bf16.xpose.msra.mxu0 %v3793
          %3811 = vmatprep.subr.bf16.mxu0 0
          %3812 = vmatpush1.bf16.xpose.msra.mxu0 %v3794
          %3813 = vmatprep.subr.bf16.mxu0 0
          %3814 = vmatpush1.bf16.xpose.msra.mxu0 %v3795
          %3815 = vmatprep.subr.bf16.mxu0 0
          %3816 = vmatpush1.bf16.xpose.msra.mxu0 %v3796
          %3817 = vmatprep.subr.bf16.mxu0 0
          %3818 = vmatpush1.bf16.xpose.msra.mxu0 %v3797
          %3819 = vmatprep.subr.bf16.mxu0 0
          %3820 = vmatpush1.bf16.xpose.msra.mxu0 %v3798
          %3821 = vmatprep.subr.bf16.mxu0 0
          %3822 = vmatpush1.bf16.xpose.msra.mxu0 %v3799
          %3823 = vmatprep.subr.bf16.mxu0 0
          %3824 = vmatpush1.bf16.xpose.msra.mxu0 %v3800
          %3825 = vmatprep.subr.bf16.mxu0 0
          %3826 = vmatpush1.bf16.xpose.msra.mxu0 0
          %3827 = vmatprep.subr.bf16.mxu0 0
          %3828 = vmatpush1.bf16.xpose.msra.mxu0 0
          %3829 = vmatprep.subr.bf16.mxu0 0
          %3830 = vmatpush1.bf16.xpose.msra.mxu0 0
          %3831 = vmatprep.subr.bf16.mxu0 0
          %3832 = vmatpush1.bf16.xpose.msra.mxu0 0
          %3833 = vmatprep.subr.bf16.mxu0 0
          %3834 = vmatpush1.bf16.xpose.msra.mxu0 0
          %3835 = vmatprep.subr.bf16.mxu0 0
          %3836 = vmatpush1.bf16.xpose.msra.mxu0 0
          %3837 = vmatprep.subr.bf16.mxu0 0
          %3838 = vmatpush1.bf16.xpose.msra.mxu0 0
          %3839 = vmatprep.subr.bf16.mxu0 0
          %3840 = vmatpush1.bf16.xpose.msra.mxu0 0
          %3841 = vmatprep.mubr.bf16.mxu0 0
          %3842 = vmatmul.mubr.bf16.gmra.mrb[0].mxu0 %v3759
          %v3843 = vpop.f32.mrb[0].mxu0
          %v3844 = vadd.f32 %v3752, %v3843
          %v3845 = vpop.f32.mrb[0].mxu0
          %v3846 = vpop.f32.mrb[0].mxu0
          %v3847 = vpop.f32.mrb[0].mxu0
          %3848 = vdwg.mxu0
          %v3849 = vld [vmem:[%s19] sm:$0x3]
          %v3850 = vld [vmem:[%s20] sm:$0xf]
          %v3851 = vld [vmem:[%s20 + $0x4] sm:$0xf]
          %v3852 = vld [vmem:[%s20 + $0x8] sm:$0xf]
          %v3853 = vld [vmem:[%s20 + $0xc] sm:$0xf]
          %v3854 = vld [vmem:[%s20 + $0x10] sm:$0xf]
          %v3855 = vld [vmem:[%s20 + $0x14] sm:$0xf]
          %v3856 = vld [vmem:[%s20 + $0x18] sm:$0xf]
          %v3857 = vld [vmem:[%s20 + $0x1c] sm:$0xf]
          %v3858 = vld [vmem:[%s20 + $0x20] sm:$0xf]
          %v3859 = vld [vmem:[%s20 + $0x24] sm:$0xf]
          %v3860 = vld [vmem:[%s20 + $0x28] sm:$0xf]
          %v3861 = vld [vmem:[%s20 + $0x2c] sm:$0xf]
          %v3862 = vld [vmem:[%s20 + $0x30] sm:$0xf]
          %v3863 = vld [vmem:[%s20 + $0x34] sm:$0xf]
          %v3864 = vld [vmem:[%s20 + $0x38] sm:$0xf]
          %v3865 = vld [vmem:[%s20 + $0x3c] sm:$0xf]
          %v3866 = vpack.c.bf16 %v3849, %v3849
          %v3867 = vld [vmem:[%s21] sm:$0xf]
          %v3868 = vld [vmem:[%s21 + $0x4] sm:$0xf]
          %v3869 = vld [vmem:[%s21 + $0x8] sm:$0xf]
          %v3870 = vld [vmem:[%s21 + $0xc] sm:$0xf]
          %v3871 = vld [vmem:[%s21 + $0x10] sm:$0xf]
          %v3872 = vld [vmem:[%s21 + $0x14] sm:$0xf]
          %v3873 = vld [vmem:[%s21 + $0x18] sm:$0xf]
          %v3874 = vld [vmem:[%s21 + $0x1c] sm:$0xf]
          %v3875 = vld [vmem:[%s21 + $0x20] sm:$0xf]
          %v3876 = vld [vmem:[%s21 + $0x24] sm:$0xf]
          %v3877 = vld [vmem:[%s21 + $0x28] sm:$0xf]
          %v3878 = vld [vmem:[%s21 + $0x2c] sm:$0xf]
          %v3879 = vld [vmem:[%s21 + $0x30] sm:$0xf]
          %v3880 = vld [vmem:[%s21 + $0x34] sm:$0xf]
          %v3881 = vld [vmem:[%s21 + $0x38] sm:$0xf]
          %v3882 = vld [vmem:[%s21 + $0x3c] sm:$0xf]
          %v3883 = vpack.c.bf16 %v3844, %v3844
          %v3900 = vunpack.c.l.b16 %v3867
          %v3901 = vunpack.c.l.b16 %v3868
          %v3902 = vunpack.c.l.b16 %v3869
          %v3903 = vunpack.c.l.b16 %v3870
          %v3904 = vunpack.c.l.b16 %v3871
          %v3905 = vunpack.c.l.b16 %v3872
          %v3906 = vunpack.c.l.b16 %v3873
          %v3907 = vunpack.c.l.b16 %v3874
          %v3908 = vunpack.c.l.b16 %v3875
          %v3909 = vunpack.c.l.b16 %v3876
          %v3910 = vunpack.c.l.b16 %v3877
          %v3911 = vunpack.c.l.b16 %v3878
          %v3912 = vunpack.c.l.b16 %v3879
          %v3913 = vunpack.c.l.b16 %v3880
          %v3914 = vunpack.c.l.b16 %v3881
          %v3915 = vunpack.c.l.b16 %v3882
          %v3916 = vpack.c.b16 %v3901, %v3900
          %v3917 = vpack.c.b16 %v3903, %v3902
          %v3918 = vpack.c.b16 %v3905, %v3904
          %v3919 = vpack.c.b16 %v3907, %v3906
          %v3920 = vpack.c.b16 %v3909, %v3908
          %v3921 = vpack.c.b16 %v3911, %v3910
          %v3922 = vpack.c.b16 %v3913, %v3912
          %v3923 = vpack.c.b16 %v3915, %v3914
          %3932 = vmatprep.subr.bf16.mxu0 0
          %3933 = vmatpush1.bf16.xpose.msra.mxu0 %v3916
          %3934 = vmatprep.subr.bf16.mxu0 0
          %3935 = vmatpush1.bf16.xpose.msra.mxu0 %v3917
          %3936 = vmatprep.subr.bf16.mxu0 0
          %3937 = vmatpush1.bf16.xpose.msra.mxu0 %v3918
          %3938 = vmatprep.subr.bf16.mxu0 0
          %3939 = vmatpush1.bf16.xpose.msra.mxu0 %v3919
          %3940 = vmatprep.subr.bf16.mxu0 0
          %3941 = vmatpush1.bf16.xpose.msra.mxu0 %v3920
          %3942 = vmatprep.subr.bf16.mxu0 0
          %3943 = vmatpush1.bf16.xpose.msra.mxu0 %v3921
          %3944 = vmatprep.subr.bf16.mxu0 0
          %3945 = vmatpush1.bf16.xpose.msra.mxu0 %v3922
          %3946 = vmatprep.subr.bf16.mxu0 0
          %3947 = vmatpush1.bf16.xpose.msra.mxu0 %v3923
          %3948 = vmatprep.subr.bf16.mxu0 0
          %3949 = vmatpush1.bf16.xpose.msra.mxu0 0
          %3950 = vmatprep.subr.bf16.mxu0 0
          %3951 = vmatpush1.bf16.xpose.msra.mxu0 0
          %3952 = vmatprep.subr.bf16.mxu0 0
          %3953 = vmatpush1.bf16.xpose.msra.mxu0 0
          %3954 = vmatprep.subr.bf16.mxu0 0
          %3955 = vmatpush1.bf16.xpose.msra.mxu0 0
          %3956 = vmatprep.subr.bf16.mxu0 0
          %3957 = vmatpush1.bf16.xpose.msra.mxu0 0
          %3958 = vmatprep.subr.bf16.mxu0 0
          %3959 = vmatpush1.bf16.xpose.msra.mxu0 0
          %3960 = vmatprep.subr.bf16.mxu0 0
          %3961 = vmatpush1.bf16.xpose.msra.mxu0 0
          %3962 = vmatprep.subr.bf16.mxu0 0
          %3963 = vmatpush1.bf16.xpose.msra.mxu0 0
          %3964 = vmatprep.mubr.bf16.mxu0 0
          %3965 = vmatmul.mubr.bf16.gmra.mrb[0].mxu0 %v3883
          %v3966 = vpop.f32.mrb[0].mxu0
          %v3967 = vadd.f32 0.0, %v3966
          %v3968 = vpop.f32.mrb[0].mxu0
          %v3969 = vpop.f32.mrb[0].mxu0
          %v3970 = vpop.f32.mrb[0].mxu0
          %3971 = vdwg.mxu0
          %v3988 = vunpack.c.l.b16 %v3850
          %v3989 = vunpack.c.l.b16 %v3851
          %v3990 = vunpack.c.l.b16 %v3852
          %v3991 = vunpack.c.l.b16 %v3853
          %v3992 = vunpack.c.l.b16 %v3854
          %v3993 = vunpack.c.l.b16 %v3855
          %v3994 = vunpack.c.l.b16 %v3856
          %v3995 = vunpack.c.l.b16 %v3857
          %v3996 = vunpack.c.l.b16 %v3858
          %v3997 = vunpack.c.l.b16 %v3859
          %v3998 = vunpack.c.l.b16 %v3860
          %v3999 = vunpack.c.l.b16 %v3861
          %v4000 = vunpack.c.l.b16 %v3862
          %v4001 = vunpack.c.l.b16 %v3863
          %v4002 = vunpack.c.l.b16 %v3864
          %v4003 = vunpack.c.l.b16 %v3865
          %v4004 = vpack.c.b16 %v3989, %v3988
          %v4005 = vpack.c.b16 %v3991, %v3990
          %v4006 = vpack.c.b16 %v3993, %v3992
          %v4007 = vpack.c.b16 %v3995, %v3994
          %v4008 = vpack.c.b16 %v3997, %v3996
          %v4009 = vpack.c.b16 %v3999, %v3998
          %v4010 = vpack.c.b16 %v4001, %v4000
          %v4011 = vpack.c.b16 %v4003, %v4002
          %4020 = vmatprep.subr.bf16.mxu0 0
          %4021 = vmatpush1.bf16.xpose.msra.mxu0 %v4004
          %4022 = vmatprep.subr.bf16.mxu0 0
          %4023 = vmatpush1.bf16.xpose.msra.mxu0 %v4005
          %4024 = vmatprep.subr.bf16.mxu0 0
          %4025 = vmatpush1.bf16.xpose.msra.mxu0 %v4006
          %4026 = vmatprep.subr.bf16.mxu0 0
          %4027 = vmatpush1.bf16.xpose.msra.mxu0 %v4007
          %4028 = vmatprep.subr.bf16.mxu0 0
          %4029 = vmatpush1.bf16.xpose.msra.mxu0 %v4008
          %4030 = vmatprep.subr.bf16.mxu0 0
          %4031 = vmatpush1.bf16.xpose.msra.mxu0 %v4009
          %4032 = vmatprep.subr.bf16.mxu0 0
          %4033 = vmatpush1.bf16.xpose.msra.mxu0 %v4010
          %4034 = vmatprep.subr.bf16.mxu0 0
          %4035 = vmatpush1.bf16.xpose.msra.mxu0 %v4011
          %4036 = vmatprep.subr.bf16.mxu0 0
          %4037 = vmatpush1.bf16.xpose.msra.mxu0 0
          %4038 = vmatprep.subr.bf16.mxu0 0
          %4039 = vmatpush1.bf16.xpose.msra.mxu0 0
          %4040 = vmatprep.subr.bf16.mxu0 0
          %4041 = vmatpush1.bf16.xpose.msra.mxu0 0
          %4042 = vmatprep.subr.bf16.mxu0 0
          %4043 = vmatpush1.bf16.xpose.msra.mxu0 0
          %4044 = vmatprep.subr.bf16.mxu0 0
          %4045 = vmatpush1.bf16.xpose.msra.mxu0 0
          %4046 = vmatprep.subr.bf16.mxu0 0
          %4047 = vmatpush1.bf16.xpose.msra.mxu0 0
          %4048 = vmatprep.subr.bf16.mxu0 0
          %4049 = vmatpush1.bf16.xpose.msra.mxu0 0
          %4050 = vmatprep.subr.bf16.mxu0 0
          %4051 = vmatpush1.bf16.xpose.msra.mxu0 0
          %4052 = vmatprep.mubr.bf16.mxu0 0
          %4053 = vmatmul.mubr.bf16.gmra.mrb[0].mxu0 %v3866
          %v4054 = vpop.f32.mrb[0].mxu0
          %v4055 = vadd.f32 %v3967, %v4054
          %v4056 = vpop.f32.mrb[0].mxu0
          %v4057 = vpop.f32.mrb[0].mxu0
          %v4058 = vpop.f32.mrb[0].mxu0
          %4059 = vdwg.mxu0
          %v4060 = vld [vmem:[%s22] sm:$0x1]
          %v4062 = vlaneseq
          %v4063 = vshrl.u32 %v4062, 7
          %v4064 = vsub.s32 0, %v4063
          %v4065 = vrot.slane %v4060, %v4064
          %v4067 = vadd.f32 %v4055, %v4065
          %4068 = vst [vmem:[#allocation4] sm:$0x3] %v4067
        $region120: #{spectral_temporal_forward.3} parent=111 // pred_fallthru
          _
        // Predicated region
        $region121: #{spectral_temporal_forward.3} parent=111 // pred_check
          %p4069 = pneg %p593
        $region122: #{spectral_temporal_forward.3} parent=111 // pred_check_branch
          %4071 = sbr.rel (%p4069) target = $region124
        $region123: #{spectral_temporal_forward.3} parent=111 // pred_region
          %s4073 = ssub.s32 32, 32
          %4074 = vsyncadd [#allocation5], %s4073
          %s4076 = sshll.u32 [#allocation4], 4
          %s4077 = int_to_ptr.vmem [resolvable:$true] %s4076
          %4079 = dma.vmem_to_hbm [thread:$0]  %s4077, 32, %s23, [#allocation5]
        $region124: #{spectral_temporal_forward.3} parent=111 // pred_fallthru
          _
        // Predicated region
        $region125: #{spectral_temporal_forward.3} parent=111 // pred_check
          %p4080 = pneg %p593
        $region126: #{spectral_temporal_forward.3} parent=111 // pred_check_branch
          %4082 = sbr.rel (%p4080) target = $region128
        $region127: #{spectral_temporal_forward.3} parent=111 // pred_region
          %4083 = dma.done [#allocation5], 32
        $region128: #{spectral_temporal_forward.3} parent=111 // pred_fallthru
          _
      $region112: #{spectral_temporal_forward.3} parent=5 // pred_fallthru
        _
      %p4084 = scmp.le.s32.totalorder 2, %s32
      // Predicated region
      $region129: #{spectral_temporal_forward.3} parent=5 // pred_check
        %p4085 = pneg %p4084
      $region130: #{spectral_temporal_forward.3} parent=5 // pred_check_branch
        %4087 = sbr.rel (%p4085) target = $region132
      $region131: #{spectral_temporal_forward.3} parent=5 // pred_region
        %s4088 = ssub.s32 %s32, 2
      $region132: #{spectral_temporal_forward.3} parent=5 // pred_fallthru
        _
    $region6: #{spectral_temporal_forward.3} parent=1 // loop_footer
      %s36 = sadd.s32 1, %s32
    $region7: #{spectral_temporal_forward.3} parent=1 // loop_footer_branch
      %31 = sbr.rel target = $region3
    $region8: #{spectral_temporal_forward.3} parent=1 // loop_exit
      _
    %4089 = vsyncpa [#allocation5], 1
    %s4090 = scalar_lea.sflag [#allocation5], 1
    %4091 = vsyncpa %s4090, 1

// kernel: spectral_temporal_forward.2
$region0: #{spectral_temporal_forward.2}
  #allocation0 [shape = 'u32[]', space=smem, size = 0x4, offset = 0x4, fixed_abs, tag = 'smem constant byte address 0x4 - core index']
  #allocation1 [shape = 'u32[144,128]{1,0:T(1,128)}', space=vmem, size = 0x12000, scoped, tag = 'internal scratch']
  #allocation2 [shape = 'f32[16,128]{1,0:T(8,128)}', space=vmem, size = 0x2000, scoped, tag = 'scratch operand']
  #allocation3 [shape = 'f32[1,1]{1,0:T(1,128)S(1)}', space=vmem, size = 0x200, scoped, tag = 'scoped memory for spectral_temporal_forward.2']
  %s0 = inlined_call_operand.vmem [shape: f32[2,8,4], index: 0, kind: input, shape index: {}]
  %s1 = inlined_call_operand.vmem [shape: f32[4,128], index: 1, kind: input, shape index: {}]
  %s2 = inlined_call_operand.vmem [shape: f32[8,128], index: 2, kind: input, shape index: {}]
  %s3 = inlined_call_operand.vmem [shape: bf16[2,384,128], index: 3, kind: input, shape index: {}]
  %s4 = inlined_call_operand.vmem [shape: f32[2,384,1], index: 4, kind: input, shape index: {}]
  %s5 = inlined_call_operand.vmem [shape: bf16[2,128,128], index: 5, kind: input, shape index: {}]
  %s6 = inlined_call_operand.vmem [shape: f32[2,128,1], index: 6, kind: input, shape index: {}]
  %s7 = inlined_call_operand.vmem [shape: f32[2,1,128], index: 7, kind: input, shape index: {}]
  %s8 = inlined_call_operand.vmem [shape: f32[2,1,128], index: 8, kind: input, shape index: {}]
  %s9 = inlined_call_operand.vmem [shape: bf16[2,512,128], index: 9, kind: input, shape index: {}]
  %s10 = inlined_call_operand.vmem [shape: f32[2,1,512], index: 10, kind: input, shape index: {}]
  %s11 = inlined_call_operand.vmem [shape: bf16[2,128,512], index: 11, kind: input, shape index: {}]
  %s12 = inlined_call_operand.vmem [shape: f32[2,1,128], index: 12, kind: input, shape index: {}]
  %s13 = inlined_call_operand.vmem [shape: f32[2,1,128], index: 13, kind: input, shape index: {}]
  %s14 = inlined_call_operand.vmem [shape: f32[2,1,128], index: 14, kind: input, shape index: {}]
  %s15 = inlined_call_operand.vmem [shape: f32[1,128], index: 15, kind: input, shape index: {}]
  %s16 = inlined_call_operand.<no memory space> [shape: f32[1,1], index: 16, kind: input, shape index: {}]
  %s17 = inlined_call_operand.vmem [shape: bf16[128,128], index: 17, kind: input, shape index: {}]
  %s18 = inlined_call_operand.vmem [shape: f32[1,128], index: 18, kind: input, shape index: {}]
  %s19 = inlined_call_operand.vmem [shape: f32[2,128], index: 19, kind: output, shape index: {}]
  %s20 = sld [smem:[#allocation0]]
  $region117: #{spectral_temporal_forward.2} parent=0
    _
  %s22 = ssub.s32 1, %s20
  %s23 = scalar_select 0, %s22, %s20
  %v24 = vstv %s16
  %25 = vst [vmem:[#allocation3] sm:$0x1] %v24
  loop: start=0, step=1, limit=4
  $region2: #{spectral_temporal_forward.2} parent=0 // loop_pre_header
    _
  $region3: #{spectral_temporal_forward.2} parent=0 // loop_header
    %s27 = sphi 0, %s31
    %p28 = scmp.ge.s32.totalorder %s27, 4
    %s35 = sphi 0, %s35
    %s37 = sphi 0, %s35
    %s38 = sphi 0, %s37
    %s52 = sphi 0, %s38
    %s56 = sphi 0, %s56
    %s58 = sphi 0, %s56
    %s59 = sphi 0, %s58
    %s73 = sphi 0, %s59
    %s77 = sphi 0, %s77
    %s79 = sphi 0, %s77
    %s80 = sphi 0, %s79
    %s94 = sphi 0, %s80
    %s100 = sphi 0, %s102
    %s103 = sphi 0, %s100
    %s104 = sphi 0, %s103
    %s120 = sphi 0, %s104
    %s126 = sphi 0, %s128
    %s129 = sphi 0, %s126
    %s130 = sphi 0, %s129
    %s146 = sphi 0, %s130
    %s152 = sphi 0, %s154
    %s155 = sphi 0, %s152
    %s156 = sphi 0, %s155
    %s172 = sphi 0, %s156
    %s178 = sphi 0, %s180
    %s181 = sphi 0, %s178
    %s182 = sphi 0, %s181
    %s198 = sphi 0, %s182
    %s204 = sphi 0, %s206
    %s207 = sphi 0, %s204
    %s208 = sphi 0, %s207
    %s224 = sphi 0, %s208
    %s230 = sphi 0, %s232
    %s233 = sphi 0, %s230
    %s234 = sphi 0, %s233
    %s250 = sphi 0, %s234
    %s256 = sphi 0, %s258
    %s259 = sphi 0, %s256
    %s260 = sphi 0, %s259
    %s276 = sphi 0, %s260
    %s282 = sphi 0, %s284
    %s285 = sphi 0, %s282
    %s286 = sphi 0, %s285
    %s302 = sphi 0, %s286
    %s308 = sphi 0, %s310
    %s311 = sphi 0, %s308
    %s312 = sphi 0, %s311
    %s328 = sphi 0, %s312
    %s334 = sphi 0, %s336
    %s337 = sphi 0, %s334
    %s338 = sphi 0, %s337
    %s354 = sphi 0, %s338
    %s360 = sphi 0, %s362
    %s363 = sphi 0, %s360
    %s364 = sphi 0, %s363
    %s380 = sphi 0, %s364
    %s386 = sphi 0, %s388
    %s389 = sphi 0, %s386
    %s390 = sphi 0, %s389
    %s406 = sphi 0, %s390
    %s410 = sphi 0, %s410
    %s412 = sphi 0, %s410
    %s413 = sphi 0, %s412
    %s427 = sphi 0, %s413
    %s431 = sphi 0, %s431
    %s433 = sphi 0, %s431
    %s434 = sphi 0, %s433
    %s448 = sphi 0, %s434
    %s452 = sphi 0, %s452
    %s454 = sphi 0, %s452
    %s455 = sphi 0, %s454
    %s469 = sphi 0, %s455
    %s473 = sphi 0, %s473
    %s475 = sphi 0, %s473
    %s476 = sphi 0, %s475
    %s490 = sphi 0, %s476
    %s494 = sphi 0, %s494
    %s496 = sphi 0, %s494
    %s497 = sphi 0, %s496
    %s511 = sphi 0, %s497
  $region4: #{spectral_temporal_forward.2} parent=0 // loop_header_branch
    %30 = sbr.rel (%p28) target = $region8
  $region5: #{spectral_temporal_forward.2} parent=0 // loop_body
    %s32 = ssub.s32 %s27, 1
    %s33 = ssub.s32 %s27, 2
    %s34 = sadd.s32 %s27, 1
    %s36 = sadd.s32 %s35, 1
    %p39 = scmp.eq.s32.totalorder %s27, 1
    %p40 = scmp.ne.s32.totalorder %s35, %s37
    %p41 = scmp.eq.s32.totalorder %s27, 0
    %p42 = por %p40, %p41
    %p43 = scmp.ne.s32.totalorder %s35, %s37
    %p44 = scmp.eq.s32.totalorder %s32, 1
    %p45 = por %p43, %p44
    %p46 = scmp.ne.s32.totalorder %s37, %s38
    %p47 = scmp.eq.s32.totalorder %s32, 0
    %p48 = por %p46, %p47
    %p49 = scmp.ne.s32.totalorder %s37, %s38
    %p50 = scmp.eq.s32.totalorder %s33, 1
    %p51 = por %p49, %p50
    %p53 = scmp.ne.s32.totalorder %s38, %s52
    %p54 = scmp.eq.s32.totalorder %s33, 0
    %p55 = por %p53, %p54
    %s57 = sadd.s32 %s56, 1
    %p60 = scmp.eq.s32.totalorder %s27, 1
    %p61 = scmp.ne.s32.totalorder %s56, %s58
    %p62 = scmp.eq.s32.totalorder %s27, 0
    %p63 = por %p61, %p62
    %p64 = scmp.ne.s32.totalorder %s56, %s58
    %p65 = scmp.eq.s32.totalorder %s32, 1
    %p66 = por %p64, %p65
    %p67 = scmp.ne.s32.totalorder %s58, %s59
    %p68 = scmp.eq.s32.totalorder %s32, 0
    %p69 = por %p67, %p68
    %p70 = scmp.ne.s32.totalorder %s58, %s59
    %p71 = scmp.eq.s32.totalorder %s33, 1
    %p72 = por %p70, %p71
    %p74 = scmp.ne.s32.totalorder %s59, %s73
    %p75 = scmp.eq.s32.totalorder %s33, 0
    %p76 = por %p74, %p75
    %s78 = sadd.s32 %s77, 1
    %p81 = scmp.eq.s32.totalorder %s27, 1
    %p82 = scmp.ne.s32.totalorder %s77, %s79
    %p83 = scmp.eq.s32.totalorder %s27, 0
    %p84 = por %p82, %p83
    %p85 = scmp.ne.s32.totalorder %s77, %s79
    %p86 = scmp.eq.s32.totalorder %s32, 1
    %p87 = por %p85, %p86
    %p88 = scmp.ne.s32.totalorder %s79, %s80
    %p89 = scmp.eq.s32.totalorder %s32, 0
    %p90 = por %p88, %p89
    %p91 = scmp.ne.s32.totalorder %s79, %s80
    %p92 = scmp.eq.s32.totalorder %s33, 1
    %p93 = por %p91, %p92
    %p95 = scmp.ne.s32.totalorder %s80, %s94
    %p96 = scmp.eq.s32.totalorder %s33, 0
    %p97 = por %p95, %p96
    %s98 = ssub.s32 %s27, %s34
    %p99 = scmp.eq.s32.totalorder %s98, 0
    %s101 = sadd.s32 %s100, 1
    %s102 = scalar_select %p99, %s100, %s101
    %p105 = pneg %p99
    %p106 = scmp.eq.s32.totalorder %s27, 1
    %p107 = por %p105, %p106
    %p108 = scmp.ne.s32.totalorder %s100, %s103
    %p109 = scmp.eq.s32.totalorder %s27, 0
    %p110 = por %p108, %p109
    %p111 = scmp.ne.s32.totalorder %s100, %s103
    %p112 = scmp.eq.s32.totalorder %s32, 1
    %p113 = por %p111, %p112
    %p114 = scmp.ne.s32.totalorder %s103, %s104
    %p115 = scmp.eq.s32.totalorder %s32, 0
    %p116 = por %p114, %p115
    %p117 = scmp.ne.s32.totalorder %s103, %s104
    %p118 = scmp.eq.s32.totalorder %s33, 1
    %p119 = por %p117, %p118
    %p121 = scmp.ne.s32.totalorder %s104, %s120
    %p122 = scmp.eq.s32.totalorder %s33, 0
    %p123 = por %p121, %p122
    %s124 = ssub.s32 %s27, %s34
    %p125 = scmp.eq.s32.totalorder %s124, 0
    %s127 = sadd.s32 %s126, 1
    %s128 = scalar_select %p125, %s126, %s127
    %p131 = pneg %p125
    %p132 = scmp.eq.s32.totalorder %s27, 1
    %p133 = por %p131, %p132
    %p134 = scmp.ne.s32.totalorder %s126, %s129
    %p135 = scmp.eq.s32.totalorder %s27, 0
    %p136 = por %p134, %p135
    %p137 = scmp.ne.s32.totalorder %s126, %s129
    %p138 = scmp.eq.s32.totalorder %s32, 1
    %p139 = por %p137, %p138
    %p140 = scmp.ne.s32.totalorder %s129, %s130
    %p141 = scmp.eq.s32.totalorder %s32, 0
    %p142 = por %p140, %p141
    %p143 = scmp.ne.s32.totalorder %s129, %s130
    %p144 = scmp.eq.s32.totalorder %s33, 1
    %p145 = por %p143, %p144
    %p147 = scmp.ne.s32.totalorder %s130, %s146
    %p148 = scmp.eq.s32.totalorder %s33, 0
    %p149 = por %p147, %p148
    %s150 = ssub.s32 %s27, %s34
    %p151 = scmp.eq.s32.totalorder %s150, 0
    %s153 = sadd.s32 %s152, 1
    %s154 = scalar_select %p151, %s152, %s153
    %p157 = pneg %p151
    %p158 = scmp.eq.s32.totalorder %s27, 1
    %p159 = por %p157, %p158
    %p160 = scmp.ne.s32.totalorder %s152, %s155
    %p161 = scmp.eq.s32.totalorder %s27, 0
    %p162 = por %p160, %p161
    %p163 = scmp.ne.s32.totalorder %s152, %s155
    %p164 = scmp.eq.s32.totalorder %s32, 1
    %p165 = por %p163, %p164
    %p166 = scmp.ne.s32.totalorder %s155, %s156
    %p167 = scmp.eq.s32.totalorder %s32, 0
    %p168 = por %p166, %p167
    %p169 = scmp.ne.s32.totalorder %s155, %s156
    %p170 = scmp.eq.s32.totalorder %s33, 1
    %p171 = por %p169, %p170
    %p173 = scmp.ne.s32.totalorder %s156, %s172
    %p174 = scmp.eq.s32.totalorder %s33, 0
    %p175 = por %p173, %p174
    %s176 = ssub.s32 %s27, %s34
    %p177 = scmp.eq.s32.totalorder %s176, 0
    %s179 = sadd.s32 %s178, 1
    %s180 = scalar_select %p177, %s178, %s179
    %p183 = pneg %p177
    %p184 = scmp.eq.s32.totalorder %s27, 1
    %p185 = por %p183, %p184
    %p186 = scmp.ne.s32.totalorder %s178, %s181
    %p187 = scmp.eq.s32.totalorder %s27, 0
    %p188 = por %p186, %p187
    %p189 = scmp.ne.s32.totalorder %s178, %s181
    %p190 = scmp.eq.s32.totalorder %s32, 1
    %p191 = por %p189, %p190
    %p192 = scmp.ne.s32.totalorder %s181, %s182
    %p193 = scmp.eq.s32.totalorder %s32, 0
    %p194 = por %p192, %p193
    %p195 = scmp.ne.s32.totalorder %s181, %s182
    %p196 = scmp.eq.s32.totalorder %s33, 1
    %p197 = por %p195, %p196
    %p199 = scmp.ne.s32.totalorder %s182, %s198
    %p200 = scmp.eq.s32.totalorder %s33, 0
    %p201 = por %p199, %p200
    %s202 = ssub.s32 %s27, %s34
    %p203 = scmp.eq.s32.totalorder %s202, 0
    %s205 = sadd.s32 %s204, 1
    %s206 = scalar_select %p203, %s204, %s205
    %p209 = pneg %p203
    %p210 = scmp.eq.s32.totalorder %s27, 1
    %p211 = por %p209, %p210
    %p212 = scmp.ne.s32.totalorder %s204, %s207
    %p213 = scmp.eq.s32.totalorder %s27, 0
    %p214 = por %p212, %p213
    %p215 = scmp.ne.s32.totalorder %s204, %s207
    %p216 = scmp.eq.s32.totalorder %s32, 1
    %p217 = por %p215, %p216
    %p218 = scmp.ne.s32.totalorder %s207, %s208
    %p219 = scmp.eq.s32.totalorder %s32, 0
    %p220 = por %p218, %p219
    %p221 = scmp.ne.s32.totalorder %s207, %s208
    %p222 = scmp.eq.s32.totalorder %s33, 1
    %p223 = por %p221, %p222
    %p225 = scmp.ne.s32.totalorder %s208, %s224
    %p226 = scmp.eq.s32.totalorder %s33, 0
    %p227 = por %p225, %p226
    %s228 = ssub.s32 %s27, %s34
    %p229 = scmp.eq.s32.totalorder %s228, 0
    %s231 = sadd.s32 %s230, 1
    %s232 = scalar_select %p229, %s230, %s231
    %p235 = pneg %p229
    %p236 = scmp.eq.s32.totalorder %s27, 1
    %p237 = por %p235, %p236
    %p238 = scmp.ne.s32.totalorder %s230, %s233
    %p239 = scmp.eq.s32.totalorder %s27, 0
    %p240 = por %p238, %p239
    %p241 = scmp.ne.s32.totalorder %s230, %s233
    %p242 = scmp.eq.s32.totalorder %s32, 1
    %p243 = por %p241, %p242
    %p244 = scmp.ne.s32.totalorder %s233, %s234
    %p245 = scmp.eq.s32.totalorder %s32, 0
    %p246 = por %p244, %p245
    %p247 = scmp.ne.s32.totalorder %s233, %s234
    %p248 = scmp.eq.s32.totalorder %s33, 1
    %p249 = por %p247, %p248
    %p251 = scmp.ne.s32.totalorder %s234, %s250
    %p252 = scmp.eq.s32.totalorder %s33, 0
    %p253 = por %p251, %p252
    %s254 = ssub.s32 %s27, %s34
    %p255 = scmp.eq.s32.totalorder %s254, 0
    %s257 = sadd.s32 %s256, 1
    %s258 = scalar_select %p255, %s256, %s257
    %p261 = pneg %p255
    %p262 = scmp.eq.s32.totalorder %s27, 1
    %p263 = por %p261, %p262
    %p264 = scmp.ne.s32.totalorder %s256, %s259
    %p265 = scmp.eq.s32.totalorder %s27, 0
    %p266 = por %p264, %p265
    %p267 = scmp.ne.s32.totalorder %s256, %s259
    %p268 = scmp.eq.s32.totalorder %s32, 1
    %p269 = por %p267, %p268
    %p270 = scmp.ne.s32.totalorder %s259, %s260
    %p271 = scmp.eq.s32.totalorder %s32, 0
    %p272 = por %p270, %p271
    %p273 = scmp.ne.s32.totalorder %s259, %s260
    %p274 = scmp.eq.s32.totalorder %s33, 1
    %p275 = por %p273, %p274
    %p277 = scmp.ne.s32.totalorder %s260, %s276
    %p278 = scmp.eq.s32.totalorder %s33, 0
    %p279 = por %p277, %p278
    %s280 = ssub.s32 %s27, %s34
    %p281 = scmp.eq.s32.totalorder %s280, 0
    %s283 = sadd.s32 %s282, 1
    %s284 = scalar_select %p281, %s282, %s283
    %p287 = pneg %p281
    %p288 = scmp.eq.s32.totalorder %s27, 1
    %p289 = por %p287, %p288
    %p290 = scmp.ne.s32.totalorder %s282, %s285
    %p291 = scmp.eq.s32.totalorder %s27, 0
    %p292 = por %p290, %p291
    %p293 = scmp.ne.s32.totalorder %s282, %s285
    %p294 = scmp.eq.s32.totalorder %s32, 1
    %p295 = por %p293, %p294
    %p296 = scmp.ne.s32.totalorder %s285, %s286
    %p297 = scmp.eq.s32.totalorder %s32, 0
    %p298 = por %p296, %p297
    %p299 = scmp.ne.s32.totalorder %s285, %s286
    %p300 = scmp.eq.s32.totalorder %s33, 1
    %p301 = por %p299, %p300
    %p303 = scmp.ne.s32.totalorder %s286, %s302
    %p304 = scmp.eq.s32.totalorder %s33, 0
    %p305 = por %p303, %p304
    %s306 = ssub.s32 %s27, %s34
    %p307 = scmp.eq.s32.totalorder %s306, 0
    %s309 = sadd.s32 %s308, 1
    %s310 = scalar_select %p307, %s308, %s309
    %p313 = pneg %p307
    %p314 = scmp.eq.s32.totalorder %s27, 1
    %p315 = por %p313, %p314
    %p316 = scmp.ne.s32.totalorder %s308, %s311
    %p317 = scmp.eq.s32.totalorder %s27, 0
    %p318 = por %p316, %p317
    %p319 = scmp.ne.s32.totalorder %s308, %s311
    %p320 = scmp.eq.s32.totalorder %s32, 1
    %p321 = por %p319, %p320
    %p322 = scmp.ne.s32.totalorder %s311, %s312
    %p323 = scmp.eq.s32.totalorder %s32, 0
    %p324 = por %p322, %p323
    %p325 = scmp.ne.s32.totalorder %s311, %s312
    %p326 = scmp.eq.s32.totalorder %s33, 1
    %p327 = por %p325, %p326
    %p329 = scmp.ne.s32.totalorder %s312, %s328
    %p330 = scmp.eq.s32.totalorder %s33, 0
    %p331 = por %p329, %p330
    %s332 = ssub.s32 %s27, %s34
    %p333 = scmp.eq.s32.totalorder %s332, 0
    %s335 = sadd.s32 %s334, 1
    %s336 = scalar_select %p333, %s334, %s335
    %p339 = pneg %p333
    %p340 = scmp.eq.s32.totalorder %s27, 1
    %p341 = por %p339, %p340
    %p342 = scmp.ne.s32.totalorder %s334, %s337
    %p343 = scmp.eq.s32.totalorder %s27, 0
    %p344 = por %p342, %p343
    %p345 = scmp.ne.s32.totalorder %s334, %s337
    %p346 = scmp.eq.s32.totalorder %s32, 1
    %p347 = por %p345, %p346
    %p348 = scmp.ne.s32.totalorder %s337, %s338
    %p349 = scmp.eq.s32.totalorder %s32, 0
    %p350 = por %p348, %p349
    %p351 = scmp.ne.s32.totalorder %s337, %s338
    %p352 = scmp.eq.s32.totalorder %s33, 1
    %p353 = por %p351, %p352
    %p355 = scmp.ne.s32.totalorder %s338, %s354
    %p356 = scmp.eq.s32.totalorder %s33, 0
    %p357 = por %p355, %p356
    %s358 = ssub.s32 %s27, %s34
    %p359 = scmp.eq.s32.totalorder %s358, 0
    %s361 = sadd.s32 %s360, 1
    %s362 = scalar_select %p359, %s360, %s361
    %p365 = pneg %p359
    %p366 = scmp.eq.s32.totalorder %s27, 1
    %p367 = por %p365, %p366
    %p368 = scmp.ne.s32.totalorder %s360, %s363
    %p369 = scmp.eq.s32.totalorder %s27, 0
    %p370 = por %p368, %p369
    %p371 = scmp.ne.s32.totalorder %s360, %s363
    %p372 = scmp.eq.s32.totalorder %s32, 1
    %p373 = por %p371, %p372
    %p374 = scmp.ne.s32.totalorder %s363, %s364
    %p375 = scmp.eq.s32.totalorder %s32, 0
    %p376 = por %p374, %p375
    %p377 = scmp.ne.s32.totalorder %s363, %s364
    %p378 = scmp.eq.s32.totalorder %s33, 1
    %p379 = por %p377, %p378
    %p381 = scmp.ne.s32.totalorder %s364, %s380
    %p382 = scmp.eq.s32.totalorder %s33, 0
    %p383 = por %p381, %p382
    %s384 = ssub.s32 %s27, %s34
    %p385 = scmp.eq.s32.totalorder %s384, 0
    %s387 = sadd.s32 %s386, 1
    %s388 = scalar_select %p385, %s386, %s387
    %p391 = pneg %p385
    %p392 = scmp.eq.s32.totalorder %s27, 1
    %p393 = por %p391, %p392
    %p394 = scmp.ne.s32.totalorder %s386, %s389
    %p395 = scmp.eq.s32.totalorder %s27, 0
    %p396 = por %p394, %p395
    %p397 = scmp.ne.s32.totalorder %s386, %s389
    %p398 = scmp.eq.s32.totalorder %s32, 1
    %p399 = por %p397, %p398
    %p400 = scmp.ne.s32.totalorder %s389, %s390
    %p401 = scmp.eq.s32.totalorder %s32, 0
    %p402 = por %p400, %p401
    %p403 = scmp.ne.s32.totalorder %s389, %s390
    %p404 = scmp.eq.s32.totalorder %s33, 1
    %p405 = por %p403, %p404
    %p407 = scmp.ne.s32.totalorder %s390, %s406
    %p408 = scmp.eq.s32.totalorder %s33, 0
    %p409 = por %p407, %p408
    %s411 = sadd.s32 %s410, 1
    %p414 = scmp.eq.s32.totalorder %s27, 1
    %p415 = scmp.ne.s32.totalorder %s410, %s412
    %p416 = scmp.eq.s32.totalorder %s27, 0
    %p417 = por %p415, %p416
    %p418 = scmp.ne.s32.totalorder %s410, %s412
    %p419 = scmp.eq.s32.totalorder %s32, 1
    %p420 = por %p418, %p419
    %p421 = scmp.ne.s32.totalorder %s412, %s413
    %p422 = scmp.eq.s32.totalorder %s32, 0
    %p423 = por %p421, %p422
    %p424 = scmp.ne.s32.totalorder %s412, %s413
    %p425 = scmp.eq.s32.totalorder %s33, 1
    %p426 = por %p424, %p425
    %p428 = scmp.ne.s32.totalorder %s413, %s427
    %p429 = scmp.eq.s32.totalorder %s33, 0
    %p430 = por %p428, %p429
    %s432 = sadd.s32 %s431, 1
    %p435 = scmp.eq.s32.totalorder %s27, 1
    %p436 = scmp.ne.s32.totalorder %s431, %s433
    %p437 = scmp.eq.s32.totalorder %s27, 0
    %p438 = por %p436, %p437
    %p439 = scmp.ne.s32.totalorder %s431, %s433
    %p440 = scmp.eq.s32.totalorder %s32, 1
    %p441 = por %p439, %p440
    %p442 = scmp.ne.s32.totalorder %s433, %s434
    %p443 = scmp.eq.s32.totalorder %s32, 0
    %p444 = por %p442, %p443
    %p445 = scmp.ne.s32.totalorder %s433, %s434
    %p446 = scmp.eq.s32.totalorder %s33, 1
    %p447 = por %p445, %p446
    %p449 = scmp.ne.s32.totalorder %s434, %s448
    %p450 = scmp.eq.s32.totalorder %s33, 0
    %p451 = por %p449, %p450
    %s453 = sadd.s32 %s452, 1
    %p456 = scmp.eq.s32.totalorder %s27, 1
    %p457 = scmp.ne.s32.totalorder %s452, %s454
    %p458 = scmp.eq.s32.totalorder %s27, 0
    %p459 = por %p457, %p458
    %p460 = scmp.ne.s32.totalorder %s452, %s454
    %p461 = scmp.eq.s32.totalorder %s32, 1
    %p462 = por %p460, %p461
    %p463 = scmp.ne.s32.totalorder %s454, %s455
    %p464 = scmp.eq.s32.totalorder %s32, 0
    %p465 = por %p463, %p464
    %p466 = scmp.ne.s32.totalorder %s454, %s455
    %p467 = scmp.eq.s32.totalorder %s33, 1
    %p468 = por %p466, %p467
    %p470 = scmp.ne.s32.totalorder %s455, %s469
    %p471 = scmp.eq.s32.totalorder %s33, 0
    %p472 = por %p470, %p471
    %s474 = sadd.s32 %s473, 1
    %p477 = scmp.eq.s32.totalorder %s27, 1
    %p478 = scmp.ne.s32.totalorder %s473, %s475
    %p479 = scmp.eq.s32.totalorder %s27, 0
    %p480 = por %p478, %p479
    %p481 = scmp.ne.s32.totalorder %s473, %s475
    %p482 = scmp.eq.s32.totalorder %s32, 1
    %p483 = por %p481, %p482
    %p484 = scmp.ne.s32.totalorder %s475, %s476
    %p485 = scmp.eq.s32.totalorder %s32, 0
    %p486 = por %p484, %p485
    %p487 = scmp.ne.s32.totalorder %s475, %s476
    %p488 = scmp.eq.s32.totalorder %s33, 1
    %p489 = por %p487, %p488
    %p491 = scmp.ne.s32.totalorder %s476, %s490
    %p492 = scmp.eq.s32.totalorder %s33, 0
    %p493 = por %p491, %p492
    %s495 = sadd.s32 %s494, 1
    %p498 = scmp.eq.s32.totalorder %s27, 1
    %p499 = scmp.ne.s32.totalorder %s494, %s496
    %p500 = scmp.eq.s32.totalorder %s27, 0
    %p501 = por %p499, %p500
    %p502 = scmp.ne.s32.totalorder %s494, %s496
    %p503 = scmp.eq.s32.totalorder %s32, 1
    %p504 = por %p502, %p503
    %p505 = scmp.ne.s32.totalorder %s496, %s497
    %p506 = scmp.eq.s32.totalorder %s32, 0
    %p507 = por %p505, %p506
    %p508 = scmp.ne.s32.totalorder %s496, %s497
    %p509 = scmp.eq.s32.totalorder %s33, 1
    %p510 = por %p508, %p509
    %p512 = scmp.ne.s32.totalorder %s497, %s511
    %p513 = scmp.eq.s32.totalorder %s33, 0
    %p514 = por %p512, %p513
    %p515 = scmp.le.s32.totalorder 1, %s27
    %p516 = scmp.lt.s32.totalorder %s27, 3
    %p517 = pnand %p515, %p516
    %p518 = pneg %p517
    // Predicated region
    $region9: #{spectral_temporal_forward.2} parent=5 // pred_check
      _
    $region10: #{spectral_temporal_forward.2} parent=5 // pred_check_branch
      %520 = sbr.rel (%p517) target = $region12
    $region11: #{spectral_temporal_forward.2} parent=5 // pred_region
      %s521 = ssub.s32 %s27, 1
      // Predicated region
      $region13: #{spectral_temporal_forward.2} parent=11 // pred_check
        %p522 = pneg %p48
      $region14: #{spectral_temporal_forward.2} parent=11 // pred_check_branch
        %524 = sbr.rel (%p522) target = $region16
      $region15: #{spectral_temporal_forward.2} parent=11 // pred_region
        _
      $region16: #{spectral_temporal_forward.2} parent=11 // pred_fallthru
        _
      // Predicated region
      $region17: #{spectral_temporal_forward.2} parent=11 // pred_check
        %p525 = pneg %p69
      $region18: #{spectral_temporal_forward.2} parent=11 // pred_check_branch
        %527 = sbr.rel (%p525) target = $region20
      $region19: #{spectral_temporal_forward.2} parent=11 // pred_region
        _
      $region20: #{spectral_temporal_forward.2} parent=11 // pred_fallthru
        _
      // Predicated region
      $region21: #{spectral_temporal_forward.2} parent=11 // pred_check
        %p528 = pneg %p90
      $region22: #{spectral_temporal_forward.2} parent=11 // pred_check_branch
        %530 = sbr.rel (%p528) target = $region24
      $region23: #{spectral_temporal_forward.2} parent=11 // pred_region
        _
      $region24: #{spectral_temporal_forward.2} parent=11 // pred_fallthru
        _
      // Predicated region
      $region25: #{spectral_temporal_forward.2} parent=11 // pred_check
        %p531 = pneg %p423
      $region26: #{spectral_temporal_forward.2} parent=11 // pred_check_branch
        %533 = sbr.rel (%p531) target = $region28
      $region27: #{spectral_temporal_forward.2} parent=11 // pred_region
        _
      $region28: #{spectral_temporal_forward.2} parent=11 // pred_fallthru
        _
      // Predicated region
      $region29: #{spectral_temporal_forward.2} parent=11 // pred_check
        %p534 = pneg %p444
      $region30: #{spectral_temporal_forward.2} parent=11 // pred_check_branch
        %536 = sbr.rel (%p534) target = $region32
      $region31: #{spectral_temporal_forward.2} parent=11 // pred_region
        _
      $region32: #{spectral_temporal_forward.2} parent=11 // pred_fallthru
        _
      // Predicated region
      $region33: #{spectral_temporal_forward.2} parent=11 // pred_check
        %p537 = pneg %p465
      $region34: #{spectral_temporal_forward.2} parent=11 // pred_check_branch
        %539 = sbr.rel (%p537) target = $region36
      $region35: #{spectral_temporal_forward.2} parent=11 // pred_region
        _
      $region36: #{spectral_temporal_forward.2} parent=11 // pred_fallthru
        _
      // Predicated region
      $region37: #{spectral_temporal_forward.2} parent=11 // pred_check
        %p540 = pneg %p486
      $region38: #{spectral_temporal_forward.2} parent=11 // pred_check_branch
        %542 = sbr.rel (%p540) target = $region40
      $region39: #{spectral_temporal_forward.2} parent=11 // pred_region
        _
      $region40: #{spectral_temporal_forward.2} parent=11 // pred_fallthru
        _
    $region12: #{spectral_temporal_forward.2} parent=5 // pred_fallthru
      _
    %p543 = scmp.lt.s32.totalorder %s27, 2
    // Predicated region
    $region41: #{spectral_temporal_forward.2} parent=5 // pred_check
      %p544 = pneg %p543
    $region42: #{spectral_temporal_forward.2} parent=5 // pred_check_branch
      %546 = sbr.rel (%p544) target = $region44
    $region43: #{spectral_temporal_forward.2} parent=5 // pred_region
      // Predicated region
      $region45: #{spectral_temporal_forward.2} parent=43 // pred_check
        %p547 = pneg %p110
      $region46: #{spectral_temporal_forward.2} parent=43 // pred_check_branch
        %549 = sbr.rel (%p547) target = $region48
      $region47: #{spectral_temporal_forward.2} parent=43 // pred_region
        %p550 = scmp.lt.s32.totalorder %s27, 1
        %s551 = scalar_select %p550, %s27, 1
        %s552 = smul.addr %s551, 48
        %s553 = smul.addr %s552, 4
        %s554 = scalar_lea.vmem %s3, %s553
      $region48: #{spectral_temporal_forward.2} parent=43 // pred_fallthru
        _
      // Predicated region
      $region49: #{spectral_temporal_forward.2} parent=43 // pred_check
        %p555 = pneg %p136
      $region50: #{spectral_temporal_forward.2} parent=43 // pred_check_branch
        %557 = sbr.rel (%p555) target = $region52
      $region51: #{spectral_temporal_forward.2} parent=43 // pred_region
        %p558 = scmp.lt.s32.totalorder %s27, 1
        %s559 = scalar_select %p558, %s27, 1
        %s560 = smul.addr %s559, 48
        %s561 = smul.addr %s560, 8
        %s562 = scalar_lea.vmem %s4, %s561
      $region52: #{spectral_temporal_forward.2} parent=43 // pred_fallthru
        _
      // Predicated region
      $region53: #{spectral_temporal_forward.2} parent=43 // pred_check
        %p563 = pneg %p162
      $region54: #{spectral_temporal_forward.2} parent=43 // pred_check_branch
        %565 = sbr.rel (%p563) target = $region56
      $region55: #{spectral_temporal_forward.2} parent=43 // pred_region
        %p566 = scmp.lt.s32.totalorder %s27, 1
        %s567 = scalar_select %p566, %s27, 1
        %s568 = smul.addr %s567, 16
        %s569 = smul.addr %s568, 4
        %s570 = scalar_lea.vmem %s5, %s569
      $region56: #{spectral_temporal_forward.2} parent=43 // pred_fallthru
        _
      // Predicated region
      $region57: #{spectral_temporal_forward.2} parent=43 // pred_check
        %p571 = pneg %p188
      $region58: #{spectral_temporal_forward.2} parent=43 // pred_check_branch
        %573 = sbr.rel (%p571) target = $region60
      $region59: #{spectral_temporal_forward.2} parent=43 // pred_region
        %p574 = scmp.lt.s32.totalorder %s27, 1
        %s575 = scalar_select %p574, %s27, 1
        %s576 = smul.addr %s575, 16
        %s577 = smul.addr %s576, 8
        %s578 = scalar_lea.vmem %s6, %s577
      $region60: #{spectral_temporal_forward.2} parent=43 // pred_fallthru
        _
      // Predicated region
      $region61: #{spectral_temporal_forward.2} parent=43 // pred_check
        %p579 = pneg %p214
      $region62: #{spectral_temporal_forward.2} parent=43 // pred_check_branch
        %581 = sbr.rel (%p579) target = $region64
      $region63: #{spectral_temporal_forward.2} parent=43 // pred_region
        %p582 = scmp.lt.s32.totalorder %s27, 1
        %s583 = scalar_select %p582, %s27, 1
        %s584 = scalar_lea.vmem %s7, %s583
      $region64: #{spectral_temporal_forward.2} parent=43 // pred_fallthru
        _
      // Predicated region
      $region65: #{spectral_temporal_forward.2} parent=43 // pred_check
        %p585 = pneg %p240
      $region66: #{spectral_temporal_forward.2} parent=43 // pred_check_branch
        %587 = sbr.rel (%p585) target = $region68
      $region67: #{spectral_temporal_forward.2} parent=43 // pred_region
        %p588 = scmp.lt.s32.totalorder %s27, 1
        %s589 = scalar_select %p588, %s27, 1
        %s590 = scalar_lea.vmem %s8, %s589
      $region68: #{spectral_temporal_forward.2} parent=43 // pred_fallthru
        _
      // Predicated region
      $region69: #{spectral_temporal_forward.2} parent=43 // pred_check
        %p591 = pneg %p266
      $region70: #{spectral_temporal_forward.2} parent=43 // pred_check_branch
        %593 = sbr.rel (%p591) target = $region72
      $region71: #{spectral_temporal_forward.2} parent=43 // pred_region
        %p594 = scmp.lt.s32.totalorder %s27, 1
        %s595 = scalar_select %p594, %s27, 1
        %s596 = smul.addr %s595, 64
        %s597 = smul.addr %s596, 4
        %s598 = scalar_lea.vmem %s9, %s597
      $region72: #{spectral_temporal_forward.2} parent=43 // pred_fallthru
        _
      // Predicated region
      $region73: #{spectral_temporal_forward.2} parent=43 // pred_check
        %p599 = pneg %p292
      $region74: #{spectral_temporal_forward.2} parent=43 // pred_check_branch
        %601 = sbr.rel (%p599) target = $region76
      $region75: #{spectral_temporal_forward.2} parent=43 // pred_region
        %p602 = scmp.lt.s32.totalorder %s27, 1
        %s603 = scalar_select %p602, %s27, 1
        %s604 = smul.addr %s603, 4
        %s605 = scalar_lea.vmem %s10, %s604
      $region76: #{spectral_temporal_forward.2} parent=43 // pred_fallthru
        _
      // Predicated region
      $region77: #{spectral_temporal_forward.2} parent=43 // pred_check
        %p606 = pneg %p318
      $region78: #{spectral_temporal_forward.2} parent=43 // pred_check_branch
        %608 = sbr.rel (%p606) target = $region80
      $region79: #{spectral_temporal_forward.2} parent=43 // pred_region
        %p609 = scmp.lt.s32.totalorder %s27, 1
        %s610 = scalar_select %p609, %s27, 1
        %s611 = smul.addr %s610, 64
        %s612 = smul.addr %s611, 4
        %s613 = scalar_lea.vmem %s11, %s612
      $region80: #{spectral_temporal_forward.2} parent=43 // pred_fallthru
        _
      // Predicated region
      $region81: #{spectral_temporal_forward.2} parent=43 // pred_check
        %p614 = pneg %p344
      $region82: #{spectral_temporal_forward.2} parent=43 // pred_check_branch
        %616 = sbr.rel (%p614) target = $region84
      $region83: #{spectral_temporal_forward.2} parent=43 // pred_region
        %p617 = scmp.lt.s32.totalorder %s27, 1
        %s618 = scalar_select %p617, %s27, 1
        %s619 = scalar_lea.vmem %s12, %s618
      $region84: #{spectral_temporal_forward.2} parent=43 // pred_fallthru
        _
      // Predicated region
      $region85: #{spectral_temporal_forward.2} parent=43 // pred_check
        %p620 = pneg %p370
      $region86: #{spectral_temporal_forward.2} parent=43 // pred_check_branch
        %622 = sbr.rel (%p620) target = $region88
      $region87: #{spectral_temporal_forward.2} parent=43 // pred_region
        %p623 = scmp.lt.s32.totalorder %s27, 1
        %s624 = scalar_select %p623, %s27, 1
        %s625 = scalar_lea.vmem %s13, %s624
      $region88: #{spectral_temporal_forward.2} parent=43 // pred_fallthru
        _
      // Predicated region
      $region89: #{spectral_temporal_forward.2} parent=43 // pred_check
        %p626 = pneg %p396
      $region90: #{spectral_temporal_forward.2} parent=43 // pred_check_branch
        %628 = sbr.rel (%p626) target = $region92
      $region91: #{spectral_temporal_forward.2} parent=43 // pred_region
        %p629 = scmp.lt.s32.totalorder %s27, 1
        %s630 = scalar_select %p629, %s27, 1
        %s631 = scalar_lea.vmem %s14, %s630
      $region92: #{spectral_temporal_forward.2} parent=43 // pred_fallthru
        _
    $region44: #{spectral_temporal_forward.2} parent=5 // pred_fallthru
      _
    %p632 = scmp.le.s32.totalorder 1, %s27
    %p633 = scmp.lt.s32.totalorder %s27, 3
    %p634 = pnand %p632, %p633
    %p635 = pneg %p634
    // Predicated region
    $region93: #{spectral_temporal_forward.2} parent=5 // pred_check
      _
    $region94: #{spectral_temporal_forward.2} parent=5 // pred_check_branch
      %637 = sbr.rel (%p634) target = $region96
    $region95: #{spectral_temporal_forward.2} parent=5 // pred_region
      %s638 = ssub.s32 %s27, 1
      %p639 = pneg %p48
      %p640 = pneg %p45
      %p641 = pneg %p69
      %p642 = pneg %p66
      %p643 = pneg %p90
      %p644 = pneg %p87
      %p645 = scmp.lt.s32.totalorder %s32, 1
      %s646 = scalar_select %p645, %s32, 1
      %s647 = smul.addr %s646, 48
      %s648 = smul.addr %s647, 4
      %s649 = scalar_lea.vmem %s3, %s648
      %p650 = pneg %p116
      %p651 = pneg %p113
      %p652 = scmp.lt.s32.totalorder %s32, 1
      %s653 = scalar_select %p652, %s32, 1
      %s654 = smul.addr %s653, 48
      %s655 = smul.addr %s654, 8
      %s656 = scalar_lea.vmem %s4, %s655
      %p657 = pneg %p142
      %p658 = pneg %p139
      %p659 = scmp.lt.s32.totalorder %s32, 1
      %s660 = scalar_select %p659, %s32, 1
      %s661 = smul.addr %s660, 16
      %s662 = smul.addr %s661, 4
      %s663 = scalar_lea.vmem %s5, %s662
      %p664 = pneg %p168
      %p665 = pneg %p165
      %p666 = scmp.lt.s32.totalorder %s32, 1
      %s667 = scalar_select %p666, %s32, 1
      %s668 = smul.addr %s667, 16
      %s669 = smul.addr %s668, 8
      %s670 = scalar_lea.vmem %s6, %s669
      %p671 = pneg %p194
      %p672 = pneg %p191
      %p673 = scmp.lt.s32.totalorder %s32, 1
      %s674 = scalar_select %p673, %s32, 1
      %s675 = scalar_lea.vmem %s7, %s674
      %p676 = pneg %p220
      %p677 = pneg %p217
      %p678 = scmp.lt.s32.totalorder %s32, 1
      %s679 = scalar_select %p678, %s32, 1
      %s680 = scalar_lea.vmem %s8, %s679
      %p681 = pneg %p246
      %p682 = pneg %p243
      %p683 = scmp.lt.s32.totalorder %s32, 1
      %s684 = scalar_select %p683, %s32, 1
      %s685 = smul.addr %s684, 64
      %s686 = smul.addr %s685, 4
      %s687 = scalar_lea.vmem %s9, %s686
      %p688 = pneg %p272
      %p689 = pneg %p269
      %p690 = scmp.lt.s32.totalorder %s32, 1
      %s691 = scalar_select %p690, %s32, 1
      %s692 = smul.addr %s691, 4
      %s693 = scalar_lea.vmem %s10, %s692
      %p694 = pneg %p298
      %p695 = pneg %p295
      %p696 = scmp.lt.s32.totalorder %s32, 1
      %s697 = scalar_select %p696, %s32, 1
      %s698 = smul.addr %s697, 64
      %s699 = smul.addr %s698, 4
      %s700 = scalar_lea.vmem %s11, %s699
      %p701 = pneg %p324
      %p702 = pneg %p321
      %p703 = scmp.lt.s32.totalorder %s32, 1
      %s704 = scalar_select %p703, %s32, 1
      %s705 = scalar_lea.vmem %s12, %s704
      %p706 = pneg %p350
      %p707 = pneg %p347
      %p708 = scmp.lt.s32.totalorder %s32, 1
      %s709 = scalar_select %p708, %s32, 1
      %s710 = scalar_lea.vmem %s13, %s709
      %p711 = pneg %p376
      %p712 = pneg %p373
      %p713 = scmp.lt.s32.totalorder %s32, 1
      %s714 = scalar_select %p713, %s32, 1
      %s715 = scalar_lea.vmem %s14, %s714
      %p716 = pneg %p402
      %p717 = pneg %p399
      %p718 = pneg %p423
      %p719 = pneg %p420
      %p720 = pneg %p444
      %p721 = pneg %p441
      %p722 = pneg %p465
      %p723 = pneg %p462
      %p724 = pneg %p486
      %p725 = pneg %p483
      %p726 = pneg %p507
      %p727 = pneg %p504
      %p728 = scmp.lt.s32.totalorder %s32, 1
      %s729 = scalar_select %p728, %s32, 1
      %s730 = smul.addr %s729, 48
      %s731 = smul.addr %s730, 4
      %s732 = scalar_lea.vmem %s3, %s731
      %p733 = scmp.lt.s32.totalorder %s32, 1
      %s734 = scalar_select %p733, %s32, 1
      %s735 = smul.addr %s734, 48
      %s736 = smul.addr %s735, 8
      %s737 = scalar_lea.vmem %s4, %s736
      %p738 = scmp.lt.s32.totalorder %s32, 1
      %s739 = scalar_select %p738, %s32, 1
      %s740 = smul.addr %s739, 16
      %s741 = smul.addr %s740, 4
      %s742 = scalar_lea.vmem %s5, %s741
      %p743 = scmp.lt.s32.totalorder %s32, 1
      %s744 = scalar_select %p743, %s32, 1
      %s745 = smul.addr %s744, 16
      %s746 = smul.addr %s745, 8
      %s747 = scalar_lea.vmem %s6, %s746
      %p748 = scmp.lt.s32.totalorder %s32, 1
      %s749 = scalar_select %p748, %s32, 1
      %s750 = scalar_lea.vmem %s7, %s749
      %p751 = scmp.lt.s32.totalorder %s32, 1
      %s752 = scalar_select %p751, %s32, 1
      %s753 = scalar_lea.vmem %s8, %s752
      %p754 = scmp.lt.s32.totalorder %s32, 1
      %s755 = scalar_select %p754, %s32, 1
      %s756 = smul.addr %s755, 64
      %s757 = smul.addr %s756, 4
      %s758 = scalar_lea.vmem %s9, %s757
      %p759 = scmp.lt.s32.totalorder %s32, 1
      %s760 = scalar_select %p759, %s32, 1
      %s761 = smul.addr %s760, 4
      %s762 = scalar_lea.vmem %s10, %s761
      %p763 = scmp.lt.s32.totalorder %s32, 1
      %s764 = scalar_select %p763, %s32, 1
      %s765 = smul.addr %s764, 64
      %s766 = smul.addr %s765, 4
      %s767 = scalar_lea.vmem %s11, %s766
      %p768 = scmp.lt.s32.totalorder %s32, 1
      %s769 = scalar_select %p768, %s32, 1
      %s770 = scalar_lea.vmem %s12, %s769
      %p771 = scmp.lt.s32.totalorder %s32, 1
      %s772 = scalar_select %p771, %s32, 1
      %s773 = scalar_lea.vmem %s13, %s772
      %p774 = scmp.lt.s32.totalorder %s32, 1
      %s775 = scalar_select %p774, %s32, 1
      %s776 = scalar_lea.vmem %s14, %s775
      %p778 = scmp.eq.s32.totalorder %s32, 0
      // Predicated region
      $region97: #{spectral_temporal_forward.2} parent=95 // pred_check
        %p779 = pneg %p778
      $region98: #{spectral_temporal_forward.2} parent=95 // pred_check_branch
        %781 = sbr.rel (%p779) target = $region100
      $region99: #{spectral_temporal_forward.2} parent=95 // pred_region
        %v782 = vld [vmem:[%s0] sm:$0xff]
        %v783 = vld [vmem:[%s0 + $0x8] sm:$0xff]
        %v784 = vld [vmem:[%s1] sm:$0xf]
        %v785 = vld [vmem:[%s2] sm:$0xff]
        %787 = vset.pattern.permute.xlu0 0
        %788 = vperm.xlu0 %787, %v782
        %v789 = vpop.permute.xlu0 %788
        %792 = vset.pattern.permute.xlu0 0
        %793 = vperm.xlu0 %792, %v783
        %v794 = vpop.permute.xlu0 %793
        %v796 = vlaneseq
        %v797 = vshrl.u32 %v796, 7
        %v798 = vsub.s32 0, %v797
        %v799 = vrot.slane %v784, %v798
        %v800 = vmul.f32 %v789, %v799
        %v801 = vmul.f32 %v794, %v799
        %v802 = vadd.f32 %v785, %v800
        %v803 = vadd.f32 %v785, %v801
        %804 = vset.pattern.permute.xlu0 1
        %805 = vperm.xlu0 %804, %v782
        %v806 = vpop.permute.xlu0 %805
        %808 = vset.pattern.permute.xlu0 1
        %809 = vperm.xlu0 %808, %v783
        %v810 = vpop.permute.xlu0 %809
        %v812 = vlaneseq
        %v813 = vshrl.u32 %v812, 7
        %v814 = vsub.s32 1, %v813
        %v815 = vrot.slane %v784, %v814
        %v816 = vmul.f32 %v806, %v815
        %v817 = vmul.f32 %v810, %v815
        %v818 = vadd.f32 %v802, %v816
        %v819 = vadd.f32 %v803, %v817
        %820 = vset.pattern.permute.xlu0 2
        %821 = vperm.xlu0 %820, %v782
        %v822 = vpop.permute.xlu0 %821
        %824 = vset.pattern.permute.xlu0 2
        %825 = vperm.xlu0 %824, %v783
        %v826 = vpop.permute.xlu0 %825
        %v828 = vlaneseq
        %v829 = vshrl.u32 %v828, 7
        %v830 = vsub.s32 2, %v829
        %v831 = vrot.slane %v784, %v830
        %v832 = vmul.f32 %v822, %v831
        %v833 = vmul.f32 %v826, %v831
        %v834 = vadd.f32 %v818, %v832
        %v835 = vadd.f32 %v819, %v833
        %836 = vset.pattern.permute.xlu0 3
        %837 = vperm.xlu0 %836, %v782
        %v838 = vpop.permute.xlu0 %837
        %840 = vset.pattern.permute.xlu0 3
        %841 = vperm.xlu0 %840, %v783
        %v842 = vpop.permute.xlu0 %841
        %v844 = vlaneseq
        %v845 = vshrl.u32 %v844, 7
        %v846 = vsub.s32 3, %v845
        %v847 = vrot.slane %v784, %v846
        %v848 = vmul.f32 %v838, %v847
        %v849 = vmul.f32 %v842, %v847
        %v850 = vadd.f32 %v834, %v848
        %v851 = vadd.f32 %v835, %v849
        %852 = vst [vmem:[#allocation2] sm:$0xff] %v850
        %853 = vst [vmem:[#allocation2 + $0x8] sm:$0xff] %v851
      $region100: #{spectral_temporal_forward.2} parent=95 // pred_fallthru
        _
      %v854 = vld [vmem:[#allocation2] sm:$0xff]
      %v855 = vld [vmem:[#allocation2 + $0x8] sm:$0xff]
      %v856 = vpack.c.bf16 %v855, %v854
      %v857 = vld [vmem:[%s732] sm:$0xf]
      %v858 = vld [vmem:[%s732 + $0x4] sm:$0xf]
      %v859 = vld [vmem:[%s732 + $0x8] sm:$0xf]
      %v860 = vld [vmem:[%s732 + $0xc] sm:$0xf]
      %v861 = vld [vmem:[%s732 + $0x10] sm:$0xf]
      %v862 = vld [vmem:[%s732 + $0x14] sm:$0xf]
      %v863 = vld [vmem:[%s732 + $0x18] sm:$0xf]
      %v864 = vld [vmem:[%s732 + $0x1c] sm:$0xf]
      %v865 = vld [vmem:[%s732 + $0x20] sm:$0xf]
      %v866 = vld [vmem:[%s732 + $0x24] sm:$0xf]
      %v867 = vld [vmem:[%s732 + $0x28] sm:$0xf]
      %v868 = vld [vmem:[%s732 + $0x2c] sm:$0xf]
      %v869 = vld [vmem:[%s732 + $0x30] sm:$0xf]
      %v870 = vld [vmem:[%s732 + $0x34] sm:$0xf]
      %v871 = vld [vmem:[%s732 + $0x38] sm:$0xf]
      %v872 = vld [vmem:[%s732 + $0x3c] sm:$0xf]
      %v873 = vld [vmem:[%s732 + $0x40] sm:$0xf]
      %v874 = vld [vmem:[%s732 + $0x44] sm:$0xf]
      %v875 = vld [vmem:[%s732 + $0x48] sm:$0xf]
      %v876 = vld [vmem:[%s732 + $0x4c] sm:$0xf]
      %v877 = vld [vmem:[%s732 + $0x50] sm:$0xf]
      %v878 = vld [vmem:[%s732 + $0x54] sm:$0xf]
      %v879 = vld [vmem:[%s732 + $0x58] sm:$0xf]
      %v880 = vld [vmem:[%s732 + $0x5c] sm:$0xf]
      %v881 = vld [vmem:[%s732 + $0x60] sm:$0xf]
      %v882 = vld [vmem:[%s732 + $0x64] sm:$0xf]
      %v883 = vld [vmem:[%s732 + $0x68] sm:$0xf]
      %v884 = vld [vmem:[%s732 + $0x6c] sm:$0xf]
      %v885 = vld [vmem:[%s732 + $0x70] sm:$0xf]
      %v886 = vld [vmem:[%s732 + $0x74] sm:$0xf]
      %v887 = vld [vmem:[%s732 + $0x78] sm:$0xf]
      %v888 = vld [vmem:[%s732 + $0x7c] sm:$0xf]
      %v889 = vld [vmem:[%s732 + $0x80] sm:$0xf]
      %v890 = vld [vmem:[%s732 + $0x84] sm:$0xf]
      %v891 = vld [vmem:[%s732 + $0x88] sm:$0xf]
      %v892 = vld [vmem:[%s732 + $0x8c] sm:$0xf]
      %v893 = vld [vmem:[%s732 + $0x90] sm:$0xf]
      %v894 = vld [vmem:[%s732 + $0x94] sm:$0xf]
      %v895 = vld [vmem:[%s732 + $0x98] sm:$0xf]
      %v896 = vld [vmem:[%s732 + $0x9c] sm:$0xf]
      %v897 = vld [vmem:[%s732 + $0xa0] sm:$0xf]
      %v898 = vld [vmem:[%s732 + $0xa4] sm:$0xf]
      %v899 = vld [vmem:[%s732 + $0xa8] sm:$0xf]
      %v900 = vld [vmem:[%s732 + $0xac] sm:$0xf]
      %v901 = vld [vmem:[%s732 + $0xb0] sm:$0xf]
      %v902 = vld [vmem:[%s732 + $0xb4] sm:$0xf]
      %v903 = vld [vmem:[%s732 + $0xb8] sm:$0xf]
      %v904 = vld [vmem:[%s732 + $0xbc] sm:$0xf]
      %v905 = vld [vmem:[%s737] sm:$0xff]
      %v906 = vld [vmem:[%s737 + $0x8] sm:$0xff]
      %v907 = vld [vmem:[%s737 + $0x10] sm:$0xff]
      %v908 = vld [vmem:[%s737 + $0x18] sm:$0xff]
      %v909 = vld [vmem:[%s737 + $0x20] sm:$0xff]
      %v910 = vld [vmem:[%s737 + $0x28] sm:$0xff]
      %v911 = vld [vmem:[%s737 + $0x30] sm:$0xff]
      %v912 = vld [vmem:[%s737 + $0x38] sm:$0xff]
      %v913 = vld [vmem:[%s737 + $0x40] sm:$0xff]
      %v914 = vld [vmem:[%s737 + $0x48] sm:$0xff]
      %v915 = vld [vmem:[%s737 + $0x50] sm:$0xff]
      %v916 = vld [vmem:[%s737 + $0x58] sm:$0xff]
      %v917 = vld [vmem:[%s737 + $0x60] sm:$0xff]
      %v918 = vld [vmem:[%s737 + $0x68] sm:$0xff]
      %v919 = vld [vmem:[%s737 + $0x70] sm:$0xff]
      %v920 = vld [vmem:[%s737 + $0x78] sm:$0xff]
      %v921 = vld [vmem:[%s737 + $0x80] sm:$0xff]
      %v922 = vld [vmem:[%s737 + $0x88] sm:$0xff]
      %v923 = vld [vmem:[%s737 + $0x90] sm:$0xff]
      %v924 = vld [vmem:[%s737 + $0x98] sm:$0xff]
      %v925 = vld [vmem:[%s737 + $0xa0] sm:$0xff]
      %v926 = vld [vmem:[%s737 + $0xa8] sm:$0xff]
      %v927 = vld [vmem:[%s737 + $0xb0] sm:$0xff]
      %v928 = vld [vmem:[%s737 + $0xb8] sm:$0xff]
      %v929 = vld [vmem:[%s737 + $0xc0] sm:$0xff]
      %v930 = vld [vmem:[%s737 + $0xc8] sm:$0xff]
      %v931 = vld [vmem:[%s737 + $0xd0] sm:$0xff]
      %v932 = vld [vmem:[%s737 + $0xd8] sm:$0xff]
      %v933 = vld [vmem:[%s737 + $0xe0] sm:$0xff]
      %v934 = vld [vmem:[%s737 + $0xe8] sm:$0xff]
      %v935 = vld [vmem:[%s737 + $0xf0] sm:$0xff]
      %v936 = vld [vmem:[%s737 + $0xf8] sm:$0xff]
      %v937 = vld [vmem:[%s737 + $0x100] sm:$0xff]
      %v938 = vld [vmem:[%s737 + $0x108] sm:$0xff]
      %v939 = vld [vmem:[%s737 + $0x110] sm:$0xff]
      %v940 = vld [vmem:[%s737 + $0x118] sm:$0xff]
      %v941 = vld [vmem:[%s737 + $0x120] sm:$0xff]
      %v942 = vld [vmem:[%s737 + $0x128] sm:$0xff]
      %v943 = vld [vmem:[%s737 + $0x130] sm:$0xff]
      %v944 = vld [vmem:[%s737 + $0x138] sm:$0xff]
      %v945 = vld [vmem:[%s737 + $0x140] sm:$0xff]
      %v946 = vld [vmem:[%s737 + $0x148] sm:$0xff]
      %v947 = vld [vmem:[%s737 + $0x150] sm:$0xff]
      %v948 = vld [vmem:[%s737 + $0x158] sm:$0xff]
      %v949 = vld [vmem:[%s737 + $0x160] sm:$0xff]
      %v950 = vld [vmem:[%s737 + $0x168] sm:$0xff]
      %v951 = vld [vmem:[%s737 + $0x170] sm:$0xff]
      %v952 = vld [vmem:[%s737 + $0x178] sm:$0xff]
      %954 = vset.pattern.permute.xlu0 0
      %955 = vperm.xlu0 %954, %v905
      %v956 = vpop.permute.xlu0 %955
      %959 = vset.pattern.permute.xlu0 0
      %960 = vperm.xlu0 %959, %v906
      %v961 = vpop.permute.xlu0 %960
      %964 = vset.pattern.permute.xlu0 0
      %965 = vperm.xlu0 %964, %v907
      %v966 = vpop.permute.xlu0 %965
      %969 = vset.pattern.permute.xlu0 0
      %970 = vperm.xlu0 %969, %v908
      %v971 = vpop.permute.xlu0 %970
      %974 = vset.pattern.permute.xlu0 0
      %975 = vperm.xlu0 %974, %v909
      %v976 = vpop.permute.xlu0 %975
      %979 = vset.pattern.permute.xlu0 0
      %980 = vperm.xlu0 %979, %v910
      %v981 = vpop.permute.xlu0 %980
      %984 = vset.pattern.permute.xlu0 0
      %985 = vperm.xlu0 %984, %v911
      %v986 = vpop.permute.xlu0 %985
      %989 = vset.pattern.permute.xlu0 0
      %990 = vperm.xlu0 %989, %v912
      %v991 = vpop.permute.xlu0 %990
      %994 = vset.pattern.permute.xlu0 0
      %995 = vperm.xlu0 %994, %v913
      %v996 = vpop.permute.xlu0 %995
      %999 = vset.pattern.permute.xlu0 0
      %1000 = vperm.xlu0 %999, %v914
      %v1001 = vpop.permute.xlu0 %1000
      %1004 = vset.pattern.permute.xlu0 0
      %1005 = vperm.xlu0 %1004, %v915
      %v1006 = vpop.permute.xlu0 %1005
      %1009 = vset.pattern.permute.xlu0 0
      %1010 = vperm.xlu0 %1009, %v916
      %v1011 = vpop.permute.xlu0 %1010
      %1014 = vset.pattern.permute.xlu0 0
      %1015 = vperm.xlu0 %1014, %v917
      %v1016 = vpop.permute.xlu0 %1015
      %1019 = vset.pattern.permute.xlu0 0
      %1020 = vperm.xlu0 %1019, %v918
      %v1021 = vpop.permute.xlu0 %1020
      %1024 = vset.pattern.permute.xlu0 0
      %1025 = vperm.xlu0 %1024, %v919
      %v1026 = vpop.permute.xlu0 %1025
      %1029 = vset.pattern.permute.xlu0 0
      %1030 = vperm.xlu0 %1029, %v920
      %v1031 = vpop.permute.xlu0 %1030
      %1034 = vset.pattern.permute.xlu0 0
      %1035 = vperm.xlu0 %1034, %v921
      %v1036 = vpop.permute.xlu0 %1035
      %1039 = vset.pattern.permute.xlu0 0
      %1040 = vperm.xlu0 %1039, %v922
      %v1041 = vpop.permute.xlu0 %1040
      %1044 = vset.pattern.permute.xlu0 0
      %1045 = vperm.xlu0 %1044, %v923
      %v1046 = vpop.permute.xlu0 %1045
      %1049 = vset.pattern.permute.xlu0 0
      %1050 = vperm.xlu0 %1049, %v924
      %v1051 = vpop.permute.xlu0 %1050
      %1054 = vset.pattern.permute.xlu0 0
      %1055 = vperm.xlu0 %1054, %v925
      %v1056 = vpop.permute.xlu0 %1055
      %1059 = vset.pattern.permute.xlu0 0
      %1060 = vperm.xlu0 %1059, %v926
      %v1061 = vpop.permute.xlu0 %1060
      %1064 = vset.pattern.permute.xlu0 0
      %1065 = vperm.xlu0 %1064, %v927
      %v1066 = vpop.permute.xlu0 %1065
      %1069 = vset.pattern.permute.xlu0 0
      %1070 = vperm.xlu0 %1069, %v928
      %v1071 = vpop.permute.xlu0 %1070
      %1074 = vset.pattern.permute.xlu0 0
      %1075 = vperm.xlu0 %1074, %v929
      %v1076 = vpop.permute.xlu0 %1075
      %1079 = vset.pattern.permute.xlu0 0
      %1080 = vperm.xlu0 %1079, %v930
      %v1081 = vpop.permute.xlu0 %1080
      %1084 = vset.pattern.permute.xlu0 0
      %1085 = vperm.xlu0 %1084, %v931
      %v1086 = vpop.permute.xlu0 %1085
      %1089 = vset.pattern.permute.xlu0 0
      %1090 = vperm.xlu0 %1089, %v932
      %v1091 = vpop.permute.xlu0 %1090
      %1094 = vset.pattern.permute.xlu0 0
      %1095 = vperm.xlu0 %1094, %v933
      %v1096 = vpop.permute.xlu0 %1095
      %1099 = vset.pattern.permute.xlu0 0
      %1100 = vperm.xlu0 %1099, %v934
      %v1101 = vpop.permute.xlu0 %1100
      %1104 = vset.pattern.permute.xlu0 0
      %1105 = vperm.xlu0 %1104, %v935
      %v1106 = vpop.permute.xlu0 %1105
      %1109 = vset.pattern.permute.xlu0 0
      %1110 = vperm.xlu0 %1109, %v936
      %v1111 = vpop.permute.xlu0 %1110
      %1114 = vset.pattern.permute.xlu0 0
      %1115 = vperm.xlu0 %1114, %v937
      %v1116 = vpop.permute.xlu0 %1115
      %1119 = vset.pattern.permute.xlu0 0
      %1120 = vperm.xlu0 %1119, %v938
      %v1121 = vpop.permute.xlu0 %1120
      %1124 = vset.pattern.permute.xlu0 0
      %1125 = vperm.xlu0 %1124, %v939
      %v1126 = vpop.permute.xlu0 %1125
      %1129 = vset.pattern.permute.xlu0 0
      %1130 = vperm.xlu0 %1129, %v940
      %v1131 = vpop.permute.xlu0 %1130
      %1134 = vset.pattern.permute.xlu0 0
      %1135 = vperm.xlu0 %1134, %v941
      %v1136 = vpop.permute.xlu0 %1135
      %1139 = vset.pattern.permute.xlu0 0
      %1140 = vperm.xlu0 %1139, %v942
      %v1141 = vpop.permute.xlu0 %1140
      %1144 = vset.pattern.permute.xlu0 0
      %1145 = vperm.xlu0 %1144, %v943
      %v1146 = vpop.permute.xlu0 %1145
      %1149 = vset.pattern.permute.xlu0 0
      %1150 = vperm.xlu0 %1149, %v944
      %v1151 = vpop.permute.xlu0 %1150
      %1154 = vset.pattern.permute.xlu0 0
      %1155 = vperm.xlu0 %1154, %v945
      %v1156 = vpop.permute.xlu0 %1155
      %1159 = vset.pattern.permute.xlu0 0
      %1160 = vperm.xlu0 %1159, %v946
      %v1161 = vpop.permute.xlu0 %1160
      %1164 = vset.pattern.permute.xlu0 0
      %1165 = vperm.xlu0 %1164, %v947
      %v1166 = vpop.permute.xlu0 %1165
      %1169 = vset.pattern.permute.xlu0 0
      %1170 = vperm.xlu0 %1169, %v948
      %v1171 = vpop.permute.xlu0 %1170
      %1174 = vset.pattern.permute.xlu0 0
      %1175 = vperm.xlu0 %1174, %v949
      %v1176 = vpop.permute.xlu0 %1175
      %1179 = vset.pattern.permute.xlu0 0
      %1180 = vperm.xlu0 %1179, %v950
      %v1181 = vpop.permute.xlu0 %1180
      %1184 = vset.pattern.permute.xlu0 0
      %1185 = vperm.xlu0 %1184, %v951
      %v1186 = vpop.permute.xlu0 %1185
      %1189 = vset.pattern.permute.xlu0 0
      %1190 = vperm.xlu0 %1189, %v952
      %v1191 = vpop.permute.xlu0 %1190
      %v1241 = vunpack.c.l.b16 %v857
      %v1242 = vunpack.c.l.b16 %v858
      %v1243 = vunpack.c.l.b16 %v859
      %v1244 = vunpack.c.l.b16 %v860
      %v1245 = vunpack.c.l.b16 %v861
      %v1246 = vunpack.c.l.b16 %v862
      %v1247 = vunpack.c.l.b16 %v863
      %v1248 = vunpack.c.l.b16 %v864
      %v1249 = vunpack.c.l.b16 %v865
      %v1250 = vunpack.c.l.b16 %v866
      %v1251 = vunpack.c.l.b16 %v867
      %v1252 = vunpack.c.l.b16 %v868
      %v1253 = vunpack.c.l.b16 %v869
      %v1254 = vunpack.c.l.b16 %v870
      %v1255 = vunpack.c.l.b16 %v871
      %v1256 = vunpack.c.l.b16 %v872
      %v1257 = vunpack.c.l.b16 %v873
      %v1258 = vunpack.c.l.b16 %v874
      %v1259 = vunpack.c.l.b16 %v875
      %v1260 = vunpack.c.l.b16 %v876
      %v1261 = vunpack.c.l.b16 %v877
      %v1262 = vunpack.c.l.b16 %v878
      %v1263 = vunpack.c.l.b16 %v879
      %v1264 = vunpack.c.l.b16 %v880
      %v1265 = vunpack.c.l.b16 %v881
      %v1266 = vunpack.c.l.b16 %v882
      %v1267 = vunpack.c.l.b16 %v883
      %v1268 = vunpack.c.l.b16 %v884
      %v1269 = vunpack.c.l.b16 %v885
      %v1270 = vunpack.c.l.b16 %v886
      %v1271 = vunpack.c.l.b16 %v887
      %v1272 = vunpack.c.l.b16 %v888
      %v1273 = vunpack.c.l.b16 %v889
      %v1274 = vunpack.c.l.b16 %v890
      %v1275 = vunpack.c.l.b16 %v891
      %v1276 = vunpack.c.l.b16 %v892
      %v1277 = vunpack.c.l.b16 %v893
      %v1278 = vunpack.c.l.b16 %v894
      %v1279 = vunpack.c.l.b16 %v895
      %v1280 = vunpack.c.l.b16 %v896
      %v1281 = vunpack.c.l.b16 %v897
      %v1282 = vunpack.c.l.b16 %v898
      %v1283 = vunpack.c.l.b16 %v899
      %v1284 = vunpack.c.l.b16 %v900
      %v1285 = vunpack.c.l.b16 %v901
      %v1286 = vunpack.c.l.b16 %v902
      %v1287 = vunpack.c.l.b16 %v903
      %v1288 = vunpack.c.l.b16 %v904
      %v1289 = vpack.c.b16 %v1242, %v1241
      %v1290 = vpack.c.b16 %v1244, %v1243
      %v1291 = vpack.c.b16 %v1246, %v1245
      %v1292 = vpack.c.b16 %v1248, %v1247
      %v1293 = vpack.c.b16 %v1250, %v1249
      %v1294 = vpack.c.b16 %v1252, %v1251
      %v1295 = vpack.c.b16 %v1254, %v1253
      %v1296 = vpack.c.b16 %v1256, %v1255
      %v1297 = vpack.c.b16 %v1258, %v1257
      %v1298 = vpack.c.b16 %v1260, %v1259
      %v1299 = vpack.c.b16 %v1262, %v1261
      %v1300 = vpack.c.b16 %v1264, %v1263
      %v1301 = vpack.c.b16 %v1266, %v1265
      %v1302 = vpack.c.b16 %v1268, %v1267
      %v1303 = vpack.c.b16 %v1270, %v1269
      %v1304 = vpack.c.b16 %v1272, %v1271
      %v1305 = vpack.c.b16 %v1274, %v1273
      %v1306 = vpack.c.b16 %v1276, %v1275
      %v1307 = vpack.c.b16 %v1278, %v1277
      %v1308 = vpack.c.b16 %v1280, %v1279
      %v1309 = vpack.c.b16 %v1282, %v1281
      %v1310 = vpack.c.b16 %v1284, %v1283
      %v1311 = vpack.c.b16 %v1286, %v1285
      %v1312 = vpack.c.b16 %v1288, %v1287
      %1337 = vmatprep.subr.bf16.mxu0 0
      %1338 = vmatpush1.bf16.xpose.msra.mxu0 %v856
      %1339 = vmatprep.subr.bf16.mxu0 0
      %1340 = vmatpush1.bf16.xpose.msra.mxu0 0
      %1341 = vmatprep.subr.bf16.mxu0 0
      %1342 = vmatpush1.bf16.xpose.msra.mxu0 0
      %1343 = vmatprep.subr.bf16.mxu0 0
      %1344 = vmatpush1.bf16.xpose.msra.mxu0 0
      %1345 = vmatprep.subr.bf16.mxu0 0
      %1346 = vmatpush1.bf16.xpose.msra.mxu0 0
      %1347 = vmatprep.subr.bf16.mxu0 0
      %1348 = vmatpush1.bf16.xpose.msra.mxu0 0
      %1349 = vmatprep.subr.bf16.mxu0 0
      %1350 = vmatpush1.bf16.xpose.msra.mxu0 0
      %1351 = vmatprep.subr.bf16.mxu0 0
      %1352 = vmatpush1.bf16.xpose.msra.mxu0 0
      %1353 = vmatprep.subr.bf16.mxu0 0
      %1354 = vmatpush1.bf16.xpose.msra.mxu0 0
      %1355 = vmatprep.subr.bf16.mxu0 0
      %1356 = vmatpush1.bf16.xpose.msra.mxu0 0
      %1357 = vmatprep.subr.bf16.mxu0 0
      %1358 = vmatpush1.bf16.xpose.msra.mxu0 0
      %1359 = vmatprep.subr.bf16.mxu0 0
      %1360 = vmatpush1.bf16.xpose.msra.mxu0 0
      %1361 = vmatprep.subr.bf16.mxu0 0
      %1362 = vmatpush1.bf16.xpose.msra.mxu0 0
      %1363 = vmatprep.subr.bf16.mxu0 0
      %1364 = vmatpush1.bf16.xpose.msra.mxu0 0
      %1365 = vmatprep.subr.bf16.mxu0 0
      %1366 = vmatpush1.bf16.xpose.msra.mxu0 0
      %1367 = vmatprep.subr.bf16.mxu0 0
      %1368 = vmatpush1.bf16.xpose.msra.mxu0 0
      %1369 = vmatprep.mubr.bf16.mxu0 0
      %1370 = vmatmul.mubr.bf16.gmra.mrb[0].mxu0 %v1289
      %v1371 = vpop.f32.mrb[0].mxu0
      %v1372 = vadd.f32 %v956, %v1371
      %v1373 = vpop.f32.mrb[0].mxu0
      %v1374 = vpop.f32.mrb[0].mxu0
      %v1375 = vadd.f32 %v961, %v1374
      %v1376 = vpop.f32.mrb[0].mxu0
      %1377 = vmatprep.mubr.bf16.mxu0 0
      %1378 = vmatmul.mubr.bf16.gmra.mrb[0].mxu0 %v1290
      %v1379 = vpop.f32.mrb[0].mxu0
      %v1380 = vadd.f32 %v966, %v1379
      %v1381 = vpop.f32.mrb[0].mxu0
      %v1382 = vpop.f32.mrb[0].mxu0
      %v1383 = vadd.f32 %v971, %v1382
      %v1384 = vpop.f32.mrb[0].mxu0
      %1385 = vmatprep.mubr.bf16.mxu0 0
      %1386 = vmatmul.mubr.bf16.gmra.mrb[0].mxu0 %v1291
      %v1387 = vpop.f32.mrb[0].mxu0
      %v1388 = vadd.f32 %v976, %v1387
      %v1389 = vpop.f32.mrb[0].mxu0
      %v1390 = vpop.f32.mrb[0].mxu0
      %v1391 = vadd.f32 %v981, %v1390
      %v1392 = vpop.f32.mrb[0].mxu0
      %1393 = vmatprep.mubr.bf16.mxu0 0
      %1394 = vmatmul.mubr.bf16.gmra.mrb[0].mxu0 %v1292
      %v1395 = vpop.f32.mrb[0].mxu0
      %v1396 = vadd.f32 %v986, %v1395
      %v1397 = vpop.f32.mrb[0].mxu0
      %v1398 = vpop.f32.mrb[0].mxu0
      %v1399 = vadd.f32 %v991, %v1398
      %v1400 = vpop.f32.mrb[0].mxu0
      %1401 = vmatprep.mubr.bf16.mxu0 0
      %1402 = vmatmul.mubr.bf16.gmra.mrb[0].mxu0 %v1293
      %v1403 = vpop.f32.mrb[0].mxu0
      %v1404 = vadd.f32 %v996, %v1403
      %v1405 = vpop.f32.mrb[0].mxu0
      %v1406 = vpop.f32.mrb[0].mxu0
      %v1407 = vadd.f32 %v1001, %v1406
      %v1408 = vpop.f32.mrb[0].mxu0
      %1409 = vmatprep.mubr.bf16.mxu0 0
      %1410 = vmatmul.mubr.bf16.gmra.mrb[0].mxu0 %v1294
      %v1411 = vpop.f32.mrb[0].mxu0
      %v1412 = vadd.f32 %v1006, %v1411
      %v1413 = vpop.f32.mrb[0].mxu0
      %v1414 = vpop.f32.mrb[0].mxu0
      %v1415 = vadd.f32 %v1011, %v1414
      %v1416 = vpop.f32.mrb[0].mxu0
      %1417 = vmatprep.mubr.bf16.mxu0 0
      %1418 = vmatmul.mubr.bf16.gmra.mrb[0].mxu0 %v1295
      %v1419 = vpop.f32.mrb[0].mxu0
      %v1420 = vadd.f32 %v1016, %v1419
      %v1421 = vpop.f32.mrb[0].mxu0
      %v1422 = vpop.f32.mrb[0].mxu0
      %v1423 = vadd.f32 %v1021, %v1422
      %v1424 = vpop.f32.mrb[0].mxu0
      %1425 = vmatprep.mubr.bf16.mxu0 0
      %1426 = vmatmul.mubr.bf16.gmra.mrb[0].mxu0 %v1296
      %v1427 = vpop.f32.mrb[0].mxu0
      %v1428 = vadd.f32 %v1026, %v1427
      %v1429 = vpop.f32.mrb[0].mxu0
      %v1430 = vpop.f32.mrb[0].mxu0
      %v1431 = vadd.f32 %v1031, %v1430
      %v1432 = vpop.f32.mrb[0].mxu0
      %1433 = vmatprep.mubr.bf16.mxu0 0
      %1434 = vmatmul.mubr.bf16.gmra.mrb[0].mxu0 %v1297
      %v1435 = vpop.f32.mrb[0].mxu0
      %v1436 = vadd.f32 %v1036, %v1435
      %v1437 = vpop.f32.mrb[0].mxu0
      %v1438 = vpop.f32.mrb[0].mxu0
      %v1439 = vadd.f32 %v1041, %v1438
      %v1440 = vpop.f32.mrb[0].mxu0
      %1441 = vmatprep.mubr.bf16.mxu0 0
      %1442 = vmatmul.mubr.bf16.gmra.mrb[0].mxu0 %v1298
      %v1443 = vpop.f32.mrb[0].mxu0
      %v1444 = vadd.f32 %v1046, %v1443
      %v1445 = vpop.f32.mrb[0].mxu0
      %v1446 = vpop.f32.mrb[0].mxu0
      %v1447 = vadd.f32 %v1051, %v1446
      %v1448 = vpop.f32.mrb[0].mxu0
      %1449 = vmatprep.mubr.bf16.mxu0 0
      %1450 = vmatmul.mubr.bf16.gmra.mrb[0].mxu0 %v1299
      %v1451 = vpop.f32.mrb[0].mxu0
      %v1452 = vadd.f32 %v1056, %v1451
      %v1453 = vpop.f32.mrb[0].mxu0
      %v1454 = vpop.f32.mrb[0].mxu0
      %v1455 = vadd.f32 %v1061, %v1454
      %v1456 = vpop.f32.mrb[0].mxu0
      %1457 = vmatprep.mubr.bf16.mxu0 0
      %1458 = vmatmul.mubr.bf16.gmra.mrb[0].mxu0 %v1300
      %v1459 = vpop.f32.mrb[0].mxu0
      %v1460 = vadd.f32 %v1066, %v1459
      %v1461 = vpop.f32.mrb[0].mxu0
      %v1462 = vpop.f32.mrb[0].mxu0
      %v1463 = vadd.f32 %v1071, %v1462
      %v1464 = vpop.f32.mrb[0].mxu0
      %1465 = vmatprep.mubr.bf16.mxu0 0
      %1466 = vmatmul.mubr.bf16.gmra.mrb[0].mxu0 %v1301
      %v1467 = vpop.f32.mrb[0].mxu0
      %v1468 = vadd.f32 %v1076, %v1467
      %v1469 = vpop.f32.mrb[0].mxu0
      %v1470 = vpop.f32.mrb[0].mxu0
      %v1471 = vadd.f32 %v1081, %v1470
      %v1472 = vpop.f32.mrb[0].mxu0
      %1473 = vmatprep.mubr.bf16.mxu0 0
      %1474 = vmatmul.mubr.bf16.gmra.mrb[0].mxu0 %v1302
      %v1475 = vpop.f32.mrb[0].mxu0
      %v1476 = vadd.f32 %v1086, %v1475
      %v1477 = vpop.f32.mrb[0].mxu0
      %v1478 = vpop.f32.mrb[0].mxu0
      %v1479 = vadd.f32 %v1091, %v1478
      %v1480 = vpop.f32.mrb[0].mxu0
      %1481 = vmatprep.mubr.bf16.mxu0 0
      %1482 = vmatmul.mubr.bf16.gmra.mrb[0].mxu0 %v1303
      %v1483 = vpop.f32.mrb[0].mxu0
      %v1484 = vadd.f32 %v1096, %v1483
      %v1485 = vpop.f32.mrb[0].mxu0
      %v1486 = vpop.f32.mrb[0].mxu0
      %v1487 = vadd.f32 %v1101, %v1486
      %v1488 = vpop.f32.mrb[0].mxu0
      %1489 = vmatprep.mubr.bf16.mxu0 0
      %1490 = vmatmul.mubr.bf16.gmra.mrb[0].mxu0 %v1304
      %v1491 = vpop.f32.mrb[0].mxu0
      %v1492 = vadd.f32 %v1106, %v1491
      %v1493 = vpop.f32.mrb[0].mxu0
      %v1494 = vpop.f32.mrb[0].mxu0
      %v1495 = vadd.f32 %v1111, %v1494
      %v1496 = vpop.f32.mrb[0].mxu0
      %1497 = vmatprep.mubr.bf16.mxu0 0
      %1498 = vmatmul.mubr.bf16.gmra.mrb[0].mxu0 %v1305
      %v1499 = vpop.f32.mrb[0].mxu0
      %v1500 = vadd.f32 %v1116, %v1499
      %v1501 = vpop.f32.mrb[0].mxu0
      %v1502 = vpop.f32.mrb[0].mxu0
      %v1503 = vadd.f32 %v1121, %v1502
      %v1504 = vpop.f32.mrb[0].mxu0
      %1505 = vmatprep.mubr.bf16.mxu0 0
      %1506 = vmatmul.mubr.bf16.gmra.mrb[0].mxu0 %v1306
      %v1507 = vpop.f32.mrb[0].mxu0
      %v1508 = vadd.f32 %v1126, %v1507
      %v1509 = vpop.f32.mrb[0].mxu0
      %v1510 = vpop.f32.mrb[0].mxu0
      %v1511 = vadd.f32 %v1131, %v1510
      %v1512 = vpop.f32.mrb[0].mxu0
      %1513 = vmatprep.mubr.bf16.mxu0 0
      %1514 = vmatmul.mubr.bf16.gmra.mrb[0].mxu0 %v1307
      %v1515 = vpop.f32.mrb[0].mxu0
      %v1516 = vadd.f32 %v1136, %v1515
      %v1517 = vpop.f32.mrb[0].mxu0
      %v1518 = vpop.f32.mrb[0].mxu0
      %v1519 = vadd.f32 %v1141, %v1518
      %v1520 = vpop.f32.mrb[0].mxu0
      %1521 = vmatprep.mubr.bf16.mxu0 0
      %1522 = vmatmul.mubr.bf16.gmra.mrb[0].mxu0 %v1308
      %v1523 = vpop.f32.mrb[0].mxu0
      %v1524 = vadd.f32 %v1146, %v1523
      %v1525 = vpop.f32.mrb[0].mxu0
      %v1526 = vpop.f32.mrb[0].mxu0
      %v1527 = vadd.f32 %v1151, %v1526
      %v1528 = vpop.f32.mrb[0].mxu0
      %1529 = vmatprep.mubr.bf16.mxu0 0
      %1530 = vmatmul.mubr.bf16.gmra.mrb[0].mxu0 %v1309
      %v1531 = vpop.f32.mrb[0].mxu0
      %v1532 = vadd.f32 %v1156, %v1531
      %v1533 = vpop.f32.mrb[0].mxu0
      %v1534 = vpop.f32.mrb[0].mxu0
      %v1535 = vadd.f32 %v1161, %v1534
      %v1536 = vpop.f32.mrb[0].mxu0
      %1537 = vmatprep.mubr.bf16.mxu0 0
      %1538 = vmatmul.mubr.bf16.gmra.mrb[0].mxu0 %v1310
      %v1539 = vpop.f32.mrb[0].mxu0
      %v1540 = vadd.f32 %v1166, %v1539
      %v1541 = vpop.f32.mrb[0].mxu0
      %v1542 = vpop.f32.mrb[0].mxu0
      %v1543 = vadd.f32 %v1171, %v1542
      %v1544 = vpop.f32.mrb[0].mxu0
      %1545 = vmatprep.mubr.bf16.mxu0 0
      %1546 = vmatmul.mubr.bf16.gmra.mrb[0].mxu0 %v1311
      %v1547 = vpop.f32.mrb[0].mxu0
      %v1548 = vadd.f32 %v1176, %v1547
      %v1549 = vpop.f32.mrb[0].mxu0
      %v1550 = vpop.f32.mrb[0].mxu0
      %v1551 = vadd.f32 %v1181, %v1550
      %v1552 = vpop.f32.mrb[0].mxu0
      %1553 = vmatprep.mubr.bf16.mxu0 0
      %1554 = vmatmul.mubr.bf16.gmra.mrb[0].mxu0 %v1312
      %v1555 = vpop.f32.mrb[0].mxu0
      %v1556 = vadd.f32 %v1186, %v1555
      %v1557 = vpop.f32.mrb[0].mxu0
      %v1558 = vpop.f32.mrb[0].mxu0
      %v1559 = vadd.f32 %v1191, %v1558
      %v1560 = vpop.f32.mrb[0].mxu0
      %1561 = vdwg.mxu0
      %v1562 = vpack.c.bf16 %v1375, %v1372
      %v1563 = vpack.c.bf16 %v1383, %v1380
      %v1564 = vpack.c.bf16 %v1391, %v1388
      %v1565 = vpack.c.bf16 %v1399, %v1396
      %v1566 = vpack.c.bf16 %v1407, %v1404
      %v1567 = vpack.c.bf16 %v1415, %v1412
      %v1568 = vpack.c.bf16 %v1423, %v1420
      %v1569 = vpack.c.bf16 %v1431, %v1428
      %v1570 = vpack.c.bf16 %v1439, %v1436
      %v1571 = vpack.c.bf16 %v1447, %v1444
      %v1572 = vpack.c.bf16 %v1455, %v1452
      %v1573 = vpack.c.bf16 %v1463, %v1460
      %v1574 = vpack.c.bf16 %v1471, %v1468
      %v1575 = vpack.c.bf16 %v1479, %v1476
      %v1576 = vpack.c.bf16 %v1487, %v1484
      %v1577 = vpack.c.bf16 %v1495, %v1492
      %v1578 = vpack.c.bf16 %v1503, %v1500
      %v1579 = vpack.c.bf16 %v1511, %v1508
      %v1580 = vpack.c.bf16 %v1519, %v1516
      %v1581 = vpack.c.bf16 %v1527, %v1524
      %v1582 = vpack.c.bf16 %v1535, %v1532
      %v1583 = vpack.c.bf16 %v1543, %v1540
      %v1584 = vpack.c.bf16 %v1551, %v1548
      %v1585 = vpack.c.bf16 %v1559, %v1556
      %1586 = vxpose.xlu0.c.b16.start [1/8] %v1562, 128
      %1587 = vxpose.xlu0.c.b16.cont [2/8] 0, 128
      %1588 = vxpose.xlu0.c.b16.cont [3/8] 0, 128
      %1589 = vxpose.xlu0.c.b16.cont [4/8] 0, 128
      %1590 = vxpose.xlu0.c.b16.cont [5/8] 0, 128
      %1591 = vxpose.xlu0.c.b16.cont [6/8] 0, 128
      %1592 = vxpose.xlu0.c.b16.cont [7/8] 0, 128
      %1593 = vxpose.xlu0.c.b16.end [8/8] 0, 128
      %v1594 = vpop.trf.xlu0
      %v1595 = vpop.trf.xlu0
      %v1596 = vpop.trf.xlu0
      %v1597 = vpop.trf.xlu0
      %v1598 = vpop.trf.xlu0
      %v1599 = vpop.trf.xlu0
      %v1600 = vpop.trf.xlu0
      %v1601 = vpop.trf.xlu0
      %1602 = vxpose.xlu0.c.b16.start [1/8] %v1563, 128
      %1603 = vxpose.xlu0.c.b16.cont [2/8] 0, 128
      %1604 = vxpose.xlu0.c.b16.cont [3/8] 0, 128
      %1605 = vxpose.xlu0.c.b16.cont [4/8] 0, 128
      %1606 = vxpose.xlu0.c.b16.cont [5/8] 0, 128
      %1607 = vxpose.xlu0.c.b16.cont [6/8] 0, 128
      %1608 = vxpose.xlu0.c.b16.cont [7/8] 0, 128
      %1609 = vxpose.xlu0.c.b16.end [8/8] 0, 128
      %v1610 = vpop.trf.xlu0
      %v1611 = vpop.trf.xlu0
      %v1612 = vpop.trf.xlu0
      %v1613 = vpop.trf.xlu0
      %v1614 = vpop.trf.xlu0
      %v1615 = vpop.trf.xlu0
      %v1616 = vpop.trf.xlu0
      %v1617 = vpop.trf.xlu0
      %1618 = vxpose.xlu0.c.b16.start [1/8] %v1564, 128
      %1619 = vxpose.xlu0.c.b16.cont [2/8] 0, 128
      %1620 = vxpose.xlu0.c.b16.cont [3/8] 0, 128
      %1621 = vxpose.xlu0.c.b16.cont [4/8] 0, 128
      %1622 = vxpose.xlu0.c.b16.cont [5/8] 0, 128
      %1623 = vxpose.xlu0.c.b16.cont [6/8] 0, 128
      %1624 = vxpose.xlu0.c.b16.cont [7/8] 0, 128
      %1625 = vxpose.xlu0.c.b16.end [8/8] 0, 128
      %v1626 = vpop.trf.xlu0
      %v1627 = vpop.trf.xlu0
      %v1628 = vpop.trf.xlu0
      %v1629 = vpop.trf.xlu0
      %v1630 = vpop.trf.xlu0
      %v1631 = vpop.trf.xlu0
      %v1632 = vpop.trf.xlu0
      %v1633 = vpop.trf.xlu0
      %1634 = vxpose.xlu0.c.b16.start [1/8] %v1565, 128
      %1635 = vxpose.xlu0.c.b16.cont [2/8] 0, 128
      %1636 = vxpose.xlu0.c.b16.cont [3/8] 0, 128
      %1637 = vxpose.xlu0.c.b16.cont [4/8] 0, 128
      %1638 = vxpose.xlu0.c.b16.cont [5/8] 0, 128
      %1639 = vxpose.xlu0.c.b16.cont [6/8] 0, 128
      %1640 = vxpose.xlu0.c.b16.cont [7/8] 0, 128
      %1641 = vxpose.xlu0.c.b16.end [8/8] 0, 128
      %v1642 = vpop.trf.xlu0
      %v1643 = vpop.trf.xlu0
      %v1644 = vpop.trf.xlu0
      %v1645 = vpop.trf.xlu0
      %v1646 = vpop.trf.xlu0
      %v1647 = vpop.trf.xlu0
      %v1648 = vpop.trf.xlu0
      %v1649 = vpop.trf.xlu0
      %1650 = vxpose.xlu0.c.b16.start [1/8] %v1566, 128
      %1651 = vxpose.xlu0.c.b16.cont [2/8] 0, 128
      %1652 = vxpose.xlu0.c.b16.cont [3/8] 0, 128
      %1653 = vxpose.xlu0.c.b16.cont [4/8] 0, 128
      %1654 = vxpose.xlu0.c.b16.cont [5/8] 0, 128
      %1655 = vxpose.xlu0.c.b16.cont [6/8] 0, 128
      %1656 = vxpose.xlu0.c.b16.cont [7/8] 0, 128
      %1657 = vxpose.xlu0.c.b16.end [8/8] 0, 128
      %v1658 = vpop.trf.xlu0
      %v1659 = vpop.trf.xlu0
      %v1660 = vpop.trf.xlu0
      %v1661 = vpop.trf.xlu0
      %v1662 = vpop.trf.xlu0
      %v1663 = vpop.trf.xlu0
      %v1664 = vpop.trf.xlu0
      %v1665 = vpop.trf.xlu0
      %1666 = vxpose.xlu0.c.b16.start [1/8] %v1567, 128
      %1667 = vxpose.xlu0.c.b16.cont [2/8] 0, 128
      %1668 = vxpose.xlu0.c.b16.cont [3/8] 0, 128
      %1669 = vxpose.xlu0.c.b16.cont [4/8] 0, 128
      %1670 = vxpose.xlu0.c.b16.cont [5/8] 0, 128
      %1671 = vxpose.xlu0.c.b16.cont [6/8] 0, 128
      %1672 = vxpose.xlu0.c.b16.cont [7/8] 0, 128
      %1673 = vxpose.xlu0.c.b16.end [8/8] 0, 128
      %v1674 = vpop.trf.xlu0
      %v1675 = vpop.trf.xlu0
      %v1676 = vpop.trf.xlu0
      %v1677 = vpop.trf.xlu0
      %v1678 = vpop.trf.xlu0
      %v1679 = vpop.trf.xlu0
      %v1680 = vpop.trf.xlu0
      %v1681 = vpop.trf.xlu0
      %1682 = vxpose.xlu0.c.b16.start [1/8] %v1568, 128
      %1683 = vxpose.xlu0.c.b16.cont [2/8] 0, 128
      %1684 = vxpose.xlu0.c.b16.cont [3/8] 0, 128
      %1685 = vxpose.xlu0.c.b16.cont [4/8] 0, 128
      %1686 = vxpose.xlu0.c.b16.cont [5/8] 0, 128
      %1687 = vxpose.xlu0.c.b16.cont [6/8] 0, 128
      %1688 = vxpose.xlu0.c.b16.cont [7/8] 0, 128
      %1689 = vxpose.xlu0.c.b16.end [8/8] 0, 128
      %v1690 = vpop.trf.xlu0
      %v1691 = vpop.trf.xlu0
      %v1692 = vpop.trf.xlu0
      %v1693 = vpop.trf.xlu0
      %v1694 = vpop.trf.xlu0
      %v1695 = vpop.trf.xlu0
      %v1696 = vpop.trf.xlu0
      %v1697 = vpop.trf.xlu0
      %1698 = vxpose.xlu0.c.b16.start [1/8] %v1569, 128
      %1699 = vxpose.xlu0.c.b16.cont [2/8] 0, 128
      %1700 = vxpose.xlu0.c.b16.cont [3/8] 0, 128
      %1701 = vxpose.xlu0.c.b16.cont [4/8] 0, 128
      %1702 = vxpose.xlu0.c.b16.cont [5/8] 0, 128
      %1703 = vxpose.xlu0.c.b16.cont [6/8] 0, 128
      %1704 = vxpose.xlu0.c.b16.cont [7/8] 0, 128
      %1705 = vxpose.xlu0.c.b16.end [8/8] 0, 128
      %v1706 = vpop.trf.xlu0
      %v1707 = vpop.trf.xlu0
      %v1708 = vpop.trf.xlu0
      %v1709 = vpop.trf.xlu0
      %v1710 = vpop.trf.xlu0
      %v1711 = vpop.trf.xlu0
      %v1712 = vpop.trf.xlu0
      %v1713 = vpop.trf.xlu0
      %v1722 = vunpack.c.l.b16 %v1594
      %v1723 = vunpack.c.h.b16 %v1594
      %v1724 = vunpack.c.l.b16 %v1610
      %v1725 = vunpack.c.h.b16 %v1610
      %v1726 = vunpack.c.l.b16 %v1626
      %v1727 = vunpack.c.h.b16 %v1626
      %v1728 = vunpack.c.l.b16 %v1642
      %v1729 = vunpack.c.h.b16 %v1642
      %v1730 = vunpack.c.l.b16 %v1658
      %v1731 = vunpack.c.h.b16 %v1658
      %v1732 = vunpack.c.l.b16 %v1674
      %v1733 = vunpack.c.h.b16 %v1674
      %v1734 = vunpack.c.l.b16 %v1690
      %v1735 = vunpack.c.h.b16 %v1690
      %v1736 = vunpack.c.l.b16 %v1706
      %v1737 = vunpack.c.h.b16 %v1706
      %v1738 = vpack.c.b16 %v1722, %v1722
      %v1739 = vpack.c.b16 %v1723, %v1723
      %v1740 = vpack.c.b16 %v1724, %v1724
      %v1741 = vpack.c.b16 %v1725, %v1725
      %v1742 = vpack.c.b16 %v1726, %v1726
      %v1743 = vpack.c.b16 %v1727, %v1727
      %v1744 = vpack.c.b16 %v1728, %v1728
      %v1745 = vpack.c.b16 %v1729, %v1729
      %v1746 = vpack.c.b16 %v1730, %v1730
      %v1747 = vpack.c.b16 %v1731, %v1731
      %v1748 = vpack.c.b16 %v1732, %v1732
      %v1749 = vpack.c.b16 %v1733, %v1733
      %v1750 = vpack.c.b16 %v1734, %v1734
      %v1751 = vpack.c.b16 %v1735, %v1735
      %v1752 = vpack.c.b16 %v1736, %v1736
      %v1753 = vpack.c.b16 %v1737, %v1737
      %1754 = vxpose.xlu0.c.b16.start [1/8] %v1570, 128
      %1755 = vxpose.xlu0.c.b16.cont [2/8] 0, 128
      %1756 = vxpose.xlu0.c.b16.cont [3/8] 0, 128
      %1757 = vxpose.xlu0.c.b16.cont [4/8] 0, 128
      %1758 = vxpose.xlu0.c.b16.cont [5/8] 0, 128
      %1759 = vxpose.xlu0.c.b16.cont [6/8] 0, 128
      %1760 = vxpose.xlu0.c.b16.cont [7/8] 0, 128
      %1761 = vxpose.xlu0.c.b16.end [8/8] 0, 128
      %v1762 = vpop.trf.xlu0
      %v1763 = vpop.trf.xlu0
      %v1764 = vpop.trf.xlu0
      %v1765 = vpop.trf.xlu0
      %v1766 = vpop.trf.xlu0
      %v1767 = vpop.trf.xlu0
      %v1768 = vpop.trf.xlu0
      %v1769 = vpop.trf.xlu0
      %1770 = vxpose.xlu0.c.b16.start [1/8] %v1571, 128
      %1771 = vxpose.xlu0.c.b16.cont [2/8] 0, 128
      %1772 = vxpose.xlu0.c.b16.cont [3/8] 0, 128
      %1773 = vxpose.xlu0.c.b16.cont [4/8] 0, 128
      %1774 = vxpose.xlu0.c.b16.cont [5/8] 0, 128
      %1775 = vxpose.xlu0.c.b16.cont [6/8] 0, 128
      %1776 = vxpose.xlu0.c.b16.cont [7/8] 0, 128
      %1777 = vxpose.xlu0.c.b16.end [8/8] 0, 128
      %v1778 = vpop.trf.xlu0
      %v1779 = vpop.trf.xlu0
      %v1780 = vpop.trf.xlu0
      %v1781 = vpop.trf.xlu0
      %v1782 = vpop.trf.xlu0
      %v1783 = vpop.trf.xlu0
      %v1784 = vpop.trf.xlu0
      %v1785 = vpop.trf.xlu0
      %1786 = vxpose.xlu0.c.b16.start [1/8] %v1572, 128
      %1787 = vxpose.xlu0.c.b16.cont [2/8] 0, 128
      %1788 = vxpose.xlu0.c.b16.cont [3/8] 0, 128
      %1789 = vxpose.xlu0.c.b16.cont [4/8] 0, 128
      %1790 = vxpose.xlu0.c.b16.cont [5/8] 0, 128
      %1791 = vxpose.xlu0.c.b16.cont [6/8] 0, 128
      %1792 = vxpose.xlu0.c.b16.cont [7/8] 0, 128
      %1793 = vxpose.xlu0.c.b16.end [8/8] 0, 128
      %v1794 = vpop.trf.xlu0
      %v1795 = vpop.trf.xlu0
      %v1796 = vpop.trf.xlu0
      %v1797 = vpop.trf.xlu0
      %v1798 = vpop.trf.xlu0
      %v1799 = vpop.trf.xlu0
      %v1800 = vpop.trf.xlu0
      %v1801 = vpop.trf.xlu0
      %1802 = vxpose.xlu0.c.b16.start [1/8] %v1573, 128
      %1803 = vxpose.xlu0.c.b16.cont [2/8] 0, 128
      %1804 = vxpose.xlu0.c.b16.cont [3/8] 0, 128
      %1805 = vxpose.xlu0.c.b16.cont [4/8] 0, 128
      %1806 = vxpose.xlu0.c.b16.cont [5/8] 0, 128
      %1807 = vxpose.xlu0.c.b16.cont [6/8] 0, 128
      %1808 = vxpose.xlu0.c.b16.cont [7/8] 0, 128
      %1809 = vxpose.xlu0.c.b16.end [8/8] 0, 128
      %v1810 = vpop.trf.xlu0
      %v1811 = vpop.trf.xlu0
      %v1812 = vpop.trf.xlu0
      %v1813 = vpop.trf.xlu0
      %v1814 = vpop.trf.xlu0
      %v1815 = vpop.trf.xlu0
      %v1816 = vpop.trf.xlu0
      %v1817 = vpop.trf.xlu0
      %1818 = vxpose.xlu0.c.b16.start [1/8] %v1574, 128
      %1819 = vxpose.xlu0.c.b16.cont [2/8] 0, 128
      %1820 = vxpose.xlu0.c.b16.cont [3/8] 0, 128
      %1821 = vxpose.xlu0.c.b16.cont [4/8] 0, 128
      %1822 = vxpose.xlu0.c.b16.cont [5/8] 0, 128
      %1823 = vxpose.xlu0.c.b16.cont [6/8] 0, 128
      %1824 = vxpose.xlu0.c.b16.cont [7/8] 0, 128
      %1825 = vxpose.xlu0.c.b16.end [8/8] 0, 128
      %v1826 = vpop.trf.xlu0
      %v1827 = vpop.trf.xlu0
      %v1828 = vpop.trf.xlu0
      %v1829 = vpop.trf.xlu0
      %v1830 = vpop.trf.xlu0
      %v1831 = vpop.trf.xlu0
      %v1832 = vpop.trf.xlu0
      %v1833 = vpop.trf.xlu0
      %1834 = vxpose.xlu0.c.b16.start [1/8] %v1575, 128
      %1835 = vxpose.xlu0.c.b16.cont [2/8] 0, 128
      %1836 = vxpose.xlu0.c.b16.cont [3/8] 0, 128
      %1837 = vxpose.xlu0.c.b16.cont [4/8] 0, 128
      %1838 = vxpose.xlu0.c.b16.cont [5/8] 0, 128
      %1839 = vxpose.xlu0.c.b16.cont [6/8] 0, 128
      %1840 = vxpose.xlu0.c.b16.cont [7/8] 0, 128
      %1841 = vxpose.xlu0.c.b16.end [8/8] 0, 128
      %v1842 = vpop.trf.xlu0
      %v1843 = vpop.trf.xlu0
      %v1844 = vpop.trf.xlu0
      %v1845 = vpop.trf.xlu0
      %v1846 = vpop.trf.xlu0
      %v1847 = vpop.trf.xlu0
      %v1848 = vpop.trf.xlu0
      %v1849 = vpop.trf.xlu0
      %1850 = vxpose.xlu0.c.b16.start [1/8] %v1576, 128
      %1851 = vxpose.xlu0.c.b16.cont [2/8] 0, 128
      %1852 = vxpose.xlu0.c.b16.cont [3/8] 0, 128
      %1853 = vxpose.xlu0.c.b16.cont [4/8] 0, 128
      %1854 = vxpose.xlu0.c.b16.cont [5/8] 0, 128
      %1855 = vxpose.xlu0.c.b16.cont [6/8] 0, 128
      %1856 = vxpose.xlu0.c.b16.cont [7/8] 0, 128
      %1857 = vxpose.xlu0.c.b16.end [8/8] 0, 128
      %v1858 = vpop.trf.xlu0
      %v1859 = vpop.trf.xlu0
      %v1860 = vpop.trf.xlu0
      %v1861 = vpop.trf.xlu0
      %v1862 = vpop.trf.xlu0
      %v1863 = vpop.trf.xlu0
      %v1864 = vpop.trf.xlu0
      %v1865 = vpop.trf.xlu0
      %1866 = vxpose.xlu0.c.b16.start [1/8] %v1577, 128
      %1867 = vxpose.xlu0.c.b16.cont [2/8] 0, 128
      %1868 = vxpose.xlu0.c.b16.cont [3/8] 0, 128
      %1869 = vxpose.xlu0.c.b16.cont [4/8] 0, 128
      %1870 = vxpose.xlu0.c.b16.cont [5/8] 0, 128
      %1871 = vxpose.xlu0.c.b16.cont [6/8] 0, 128
      %1872 = vxpose.xlu0.c.b16.cont [7/8] 0, 128
      %1873 = vxpose.xlu0.c.b16.end [8/8] 0, 128
      %v1874 = vpop.trf.xlu0
      %v1875 = vpop.trf.xlu0
      %v1876 = vpop.trf.xlu0
      %v1877 = vpop.trf.xlu0
      %v1878 = vpop.trf.xlu0
      %v1879 = vpop.trf.xlu0
      %v1880 = vpop.trf.xlu0
      %v1881 = vpop.trf.xlu0
      %v1890 = vunpack.c.l.b16 %v1762
      %v1891 = vunpack.c.h.b16 %v1762
      %v1892 = vunpack.c.l.b16 %v1778
      %v1893 = vunpack.c.h.b16 %v1778
      %v1894 = vunpack.c.l.b16 %v1794
      %v1895 = vunpack.c.h.b16 %v1794
      %v1896 = vunpack.c.l.b16 %v1810
      %v1897 = vunpack.c.h.b16 %v1810
      %v1898 = vunpack.c.l.b16 %v1826
      %v1899 = vunpack.c.h.b16 %v1826
      %v1900 = vunpack.c.l.b16 %v1842
      %v1901 = vunpack.c.h.b16 %v1842
      %v1902 = vunpack.c.l.b16 %v1858
      %v1903 = vunpack.c.h.b16 %v1858
      %v1904 = vunpack.c.l.b16 %v1874
      %v1905 = vunpack.c.h.b16 %v1874
      %v1906 = vpack.c.b16 %v1890, %v1890
      %v1907 = vpack.c.b16 %v1891, %v1891
      %v1908 = vpack.c.b16 %v1892, %v1892
      %v1909 = vpack.c.b16 %v1893, %v1893
      %v1910 = vpack.c.b16 %v1894, %v1894
      %v1911 = vpack.c.b16 %v1895, %v1895
      %v1912 = vpack.c.b16 %v1896, %v1896
      %v1913 = vpack.c.b16 %v1897, %v1897
      %v1914 = vpack.c.b16 %v1898, %v1898
      %v1915 = vpack.c.b16 %v1899, %v1899
      %v1916 = vpack.c.b16 %v1900, %v1900
      %v1917 = vpack.c.b16 %v1901, %v1901
      %v1918 = vpack.c.b16 %v1902, %v1902
      %v1919 = vpack.c.b16 %v1903, %v1903
      %v1920 = vpack.c.b16 %v1904, %v1904
      %v1921 = vpack.c.b16 %v1905, %v1905
      %1922 = vxpose.xlu0.c.b16.start [1/8] %v1578, 128
      %1923 = vxpose.xlu0.c.b16.cont [2/8] 0, 128
      %1924 = vxpose.xlu0.c.b16.cont [3/8] 0, 128
      %1925 = vxpose.xlu0.c.b16.cont [4/8] 0, 128
      %1926 = vxpose.xlu0.c.b16.cont [5/8] 0, 128
      %1927 = vxpose.xlu0.c.b16.cont [6/8] 0, 128
      %1928 = vxpose.xlu0.c.b16.cont [7/8] 0, 128
      %1929 = vxpose.xlu0.c.b16.end [8/8] 0, 128
      %v1930 = vpop.trf.xlu0
      %v1931 = vpop.trf.xlu0
      %v1932 = vpop.trf.xlu0
      %v1933 = vpop.trf.xlu0
      %v1934 = vpop.trf.xlu0
      %v1935 = vpop.trf.xlu0
      %v1936 = vpop.trf.xlu0
      %v1937 = vpop.trf.xlu0
      %1938 = vxpose.xlu0.c.b16.start [1/8] %v1579, 128
      %1939 = vxpose.xlu0.c.b16.cont [2/8] 0, 128
      %1940 = vxpose.xlu0.c.b16.cont [3/8] 0, 128
      %1941 = vxpose.xlu0.c.b16.cont [4/8] 0, 128
      %1942 = vxpose.xlu0.c.b16.cont [5/8] 0, 128
      %1943 = vxpose.xlu0.c.b16.cont [6/8] 0, 128
      %1944 = vxpose.xlu0.c.b16.cont [7/8] 0, 128
      %1945 = vxpose.xlu0.c.b16.end [8/8] 0, 128
      %v1946 = vpop.trf.xlu0
      %v1947 = vpop.trf.xlu0
      %v1948 = vpop.trf.xlu0
      %v1949 = vpop.trf.xlu0
      %v1950 = vpop.trf.xlu0
      %v1951 = vpop.trf.xlu0
      %v1952 = vpop.trf.xlu0
      %v1953 = vpop.trf.xlu0
      %1954 = vxpose.xlu0.c.b16.start [1/8] %v1580, 128
      %1955 = vxpose.xlu0.c.b16.cont [2/8] 0, 128
      %1956 = vxpose.xlu0.c.b16.cont [3/8] 0, 128
      %1957 = vxpose.xlu0.c.b16.cont [4/8] 0, 128
      %1958 = vxpose.xlu0.c.b16.cont [5/8] 0, 128
      %1959 = vxpose.xlu0.c.b16.cont [6/8] 0, 128
      %1960 = vxpose.xlu0.c.b16.cont [7/8] 0, 128
      %1961 = vxpose.xlu0.c.b16.end [8/8] 0, 128
      %v1962 = vpop.trf.xlu0
      %v1963 = vpop.trf.xlu0
      %v1964 = vpop.trf.xlu0
      %v1965 = vpop.trf.xlu0
      %v1966 = vpop.trf.xlu0
      %v1967 = vpop.trf.xlu0
      %v1968 = vpop.trf.xlu0
      %v1969 = vpop.trf.xlu0
      %1970 = vxpose.xlu0.c.b16.start [1/8] %v1581, 128
      %1971 = vxpose.xlu0.c.b16.cont [2/8] 0, 128
      %1972 = vxpose.xlu0.c.b16.cont [3/8] 0, 128
      %1973 = vxpose.xlu0.c.b16.cont [4/8] 0, 128
      %1974 = vxpose.xlu0.c.b16.cont [5/8] 0, 128
      %1975 = vxpose.xlu0.c.b16.cont [6/8] 0, 128
      %1976 = vxpose.xlu0.c.b16.cont [7/8] 0, 128
      %1977 = vxpose.xlu0.c.b16.end [8/8] 0, 128
      %v1978 = vpop.trf.xlu0
      %v1979 = vpop.trf.xlu0
      %v1980 = vpop.trf.xlu0
      %v1981 = vpop.trf.xlu0
      %v1982 = vpop.trf.xlu0
      %v1983 = vpop.trf.xlu0
      %v1984 = vpop.trf.xlu0
      %v1985 = vpop.trf.xlu0
      %1986 = vxpose.xlu0.c.b16.start [1/8] %v1582, 128
      %1987 = vxpose.xlu0.c.b16.cont [2/8] 0, 128
      %1988 = vxpose.xlu0.c.b16.cont [3/8] 0, 128
      %1989 = vxpose.xlu0.c.b16.cont [4/8] 0, 128
      %1990 = vxpose.xlu0.c.b16.cont [5/8] 0, 128
      %1991 = vxpose.xlu0.c.b16.cont [6/8] 0, 128
      %1992 = vxpose.xlu0.c.b16.cont [7/8] 0, 128
      %1993 = vxpose.xlu0.c.b16.end [8/8] 0, 128
      %v1994 = vpop.trf.xlu0
      %v1995 = vpop.trf.xlu0
      %v1996 = vpop.trf.xlu0
      %v1997 = vpop.trf.xlu0
      %v1998 = vpop.trf.xlu0
      %v1999 = vpop.trf.xlu0
      %v2000 = vpop.trf.xlu0
      %v2001 = vpop.trf.xlu0
      %2002 = vxpose.xlu0.c.b16.start [1/8] %v1583, 128
      %2003 = vxpose.xlu0.c.b16.cont [2/8] 0, 128
      %2004 = vxpose.xlu0.c.b16.cont [3/8] 0, 128
      %2005 = vxpose.xlu0.c.b16.cont [4/8] 0, 128
      %2006 = vxpose.xlu0.c.b16.cont [5/8] 0, 128
      %2007 = vxpose.xlu0.c.b16.cont [6/8] 0, 128
      %2008 = vxpose.xlu0.c.b16.cont [7/8] 0, 128
      %2009 = vxpose.xlu0.c.b16.end [8/8] 0, 128
      %v2010 = vpop.trf.xlu0
      %v2011 = vpop.trf.xlu0
      %v2012 = vpop.trf.xlu0
      %v2013 = vpop.trf.xlu0
      %v2014 = vpop.trf.xlu0
      %v2015 = vpop.trf.xlu0
      %v2016 = vpop.trf.xlu0
      %v2017 = vpop.trf.xlu0
      %2018 = vxpose.xlu0.c.b16.start [1/8] %v1584, 128
      %2019 = vxpose.xlu0.c.b16.cont [2/8] 0, 128
      %2020 = vxpose.xlu0.c.b16.cont [3/8] 0, 128
      %2021 = vxpose.xlu0.c.b16.cont [4/8] 0, 128
      %2022 = vxpose.xlu0.c.b16.cont [5/8] 0, 128
      %2023 = vxpose.xlu0.c.b16.cont [6/8] 0, 128
      %2024 = vxpose.xlu0.c.b16.cont [7/8] 0, 128
      %2025 = vxpose.xlu0.c.b16.end [8/8] 0, 128
      %v2026 = vpop.trf.xlu0
      %v2027 = vpop.trf.xlu0
      %v2028 = vpop.trf.xlu0
      %v2029 = vpop.trf.xlu0
      %v2030 = vpop.trf.xlu0
      %v2031 = vpop.trf.xlu0
      %v2032 = vpop.trf.xlu0
      %v2033 = vpop.trf.xlu0
      %2034 = vxpose.xlu0.c.b16.start [1/8] %v1585, 128
      %2035 = vxpose.xlu0.c.b16.cont [2/8] 0, 128
      %2036 = vxpose.xlu0.c.b16.cont [3/8] 0, 128
      %2037 = vxpose.xlu0.c.b16.cont [4/8] 0, 128
      %2038 = vxpose.xlu0.c.b16.cont [5/8] 0, 128
      %2039 = vxpose.xlu0.c.b16.cont [6/8] 0, 128
      %2040 = vxpose.xlu0.c.b16.cont [7/8] 0, 128
      %2041 = vxpose.xlu0.c.b16.end [8/8] 0, 128
      %v2042 = vpop.trf.xlu0
      %v2043 = vpop.trf.xlu0
      %v2044 = vpop.trf.xlu0
      %v2045 = vpop.trf.xlu0
      %v2046 = vpop.trf.xlu0
      %v2047 = vpop.trf.xlu0
      %v2048 = vpop.trf.xlu0
      %v2049 = vpop.trf.xlu0
      %v2058 = vunpack.c.l.b16 %v1930
      %v2059 = vunpack.c.h.b16 %v1930
      %v2060 = vunpack.c.l.b16 %v1946
      %v2061 = vunpack.c.h.b16 %v1946
      %v2062 = vunpack.c.l.b16 %v1962
      %v2063 = vunpack.c.h.b16 %v1962
      %v2064 = vunpack.c.l.b16 %v1978
      %v2065 = vunpack.c.h.b16 %v1978
      %v2066 = vunpack.c.l.b16 %v1994
      %v2067 = vunpack.c.h.b16 %v1994
      %v2068 = vunpack.c.l.b16 %v2010
      %v2069 = vunpack.c.h.b16 %v2010
      %v2070 = vunpack.c.l.b16 %v2026
      %v2071 = vunpack.c.h.b16 %v2026
      %v2072 = vunpack.c.l.b16 %v2042
      %v2073 = vunpack.c.h.b16 %v2042
      %v2074 = vpack.c.b16 %v2058, %v2058
      %v2075 = vpack.c.b16 %v2059, %v2059
      %v2076 = vpack.c.b16 %v2060, %v2060
      %v2077 = vpack.c.b16 %v2061, %v2061
      %v2078 = vpack.c.b16 %v2062, %v2062
      %v2079 = vpack.c.b16 %v2063, %v2063
      %v2080 = vpack.c.b16 %v2064, %v2064
      %v2081 = vpack.c.b16 %v2065, %v2065
      %v2082 = vpack.c.b16 %v2066, %v2066
      %v2083 = vpack.c.b16 %v2067, %v2067
      %v2084 = vpack.c.b16 %v2068, %v2068
      %v2085 = vpack.c.b16 %v2069, %v2069
      %v2086 = vpack.c.b16 %v2070, %v2070
      %v2087 = vpack.c.b16 %v2071, %v2071
      %v2088 = vpack.c.b16 %v2072, %v2072
      %v2089 = vpack.c.b16 %v2073, %v2073
      %vm2090 = vcmask 130048
      %v2092 = vsel %vm2090, %v1738, 0
      %v2095 = vsel %vm2090, %v1906, 0
      %2097 = vmatprep.subr.bf16.mxu0 0
      %2098 = vmatpush1.bf16.xpose.msra.mxu0 %v2095
      %2099 = vmatprep.subr.bf16.mxu0 0
      %2100 = vmatpush1.bf16.xpose.msra.mxu0 0
      %2101 = vmatprep.subr.bf16.mxu0 0
      %2102 = vmatpush1.bf16.xpose.msra.mxu0 0
      %2103 = vmatprep.subr.bf16.mxu0 0
      %2104 = vmatpush1.bf16.xpose.msra.mxu0 0
      %2105 = vmatprep.subr.bf16.mxu0 0
      %2106 = vmatpush1.bf16.xpose.msra.mxu0 0
      %2107 = vmatprep.subr.bf16.mxu0 0
      %2108 = vmatpush1.bf16.xpose.msra.mxu0 0
      %2109 = vmatprep.subr.bf16.mxu0 0
      %2110 = vmatpush1.bf16.xpose.msra.mxu0 0
      %2111 = vmatprep.subr.bf16.mxu0 0
      %2112 = vmatpush1.bf16.xpose.msra.mxu0 0
      %2113 = vmatprep.subr.bf16.mxu0 0
      %2114 = vmatpush1.bf16.xpose.msra.mxu0 0
      %2115 = vmatprep.subr.bf16.mxu0 0
      %2116 = vmatpush1.bf16.xpose.msra.mxu0 0
      %2117 = vmatprep.subr.bf16.mxu0 0
      %2118 = vmatpush1.bf16.xpose.msra.mxu0 0
      %2119 = vmatprep.subr.bf16.mxu0 0
      %2120 = vmatpush1.bf16.xpose.msra.mxu0 0
      %2121 = vmatprep.subr.bf16.mxu0 0
      %2122 = vmatpush1.bf16.xpose.msra.mxu0 0
      %2123 = vmatprep.subr.bf16.mxu0 0
      %2124 = vmatpush1.bf16.xpose.msra.mxu0 0
      %2125 = vmatprep.subr.bf16.mxu0 0
      %2126 = vmatpush1.bf16.xpose.msra.mxu0 0
      %2127 = vmatprep.subr.bf16.mxu0 0
      %2128 = vmatpush1.bf16.xpose.msra.mxu0 0
      %2129 = vmatprep.mubr.bf16.mxu0 0
      %2130 = vmatmul.mubr.bf16.gmra.mrb[0].mxu0 %v2092
      %v2131 = vpop.f32.mrb[0].mxu0
      %v2132 = vadd.f32 0.0, %v2131
      %v2133 = vpop.f32.mrb[0].mxu0
      %v2134 = vpop.f32.mrb[0].mxu0
      %v2135 = vpop.f32.mrb[0].mxu0
      %2136 = vdwg.mxu0
      %v2138 = vsel %vm2090, %v1739, 0
      %v2141 = vsel %vm2090, %v1907, 0
      %2143 = vmatprep.subr.bf16.mxu0 0
      %2144 = vmatpush1.bf16.xpose.msra.mxu0 %v2141
      %2145 = vmatprep.subr.bf16.mxu0 0
      %2146 = vmatpush1.bf16.xpose.msra.mxu0 0
      %2147 = vmatprep.subr.bf16.mxu0 0
      %2148 = vmatpush1.bf16.xpose.msra.mxu0 0
      %2149 = vmatprep.subr.bf16.mxu0 0
      %2150 = vmatpush1.bf16.xpose.msra.mxu0 0
      %2151 = vmatprep.subr.bf16.mxu0 0
      %2152 = vmatpush1.bf16.xpose.msra.mxu0 0
      %2153 = vmatprep.subr.bf16.mxu0 0
      %2154 = vmatpush1.bf16.xpose.msra.mxu0 0
      %2155 = vmatprep.subr.bf16.mxu0 0
      %2156 = vmatpush1.bf16.xpose.msra.mxu0 0
      %2157 = vmatprep.subr.bf16.mxu0 0
      %2158 = vmatpush1.bf16.xpose.msra.mxu0 0
      %2159 = vmatprep.subr.bf16.mxu0 0
      %2160 = vmatpush1.bf16.xpose.msra.mxu0 0
      %2161 = vmatprep.subr.bf16.mxu0 0
      %2162 = vmatpush1.bf16.xpose.msra.mxu0 0
      %2163 = vmatprep.subr.bf16.mxu0 0
      %2164 = vmatpush1.bf16.xpose.msra.mxu0 0
      %2165 = vmatprep.subr.bf16.mxu0 0
      %2166 = vmatpush1.bf16.xpose.msra.mxu0 0
      %2167 = vmatprep.subr.bf16.mxu0 0
      %2168 = vmatpush1.bf16.xpose.msra.mxu0 0
      %2169 = vmatprep.subr.bf16.mxu0 0
      %2170 = vmatpush1.bf16.xpose.msra.mxu0 0
      %2171 = vmatprep.subr.bf16.mxu0 0
      %2172 = vmatpush1.bf16.xpose.msra.mxu0 0
      %2173 = vmatprep.subr.bf16.mxu0 0
      %2174 = vmatpush1.bf16.xpose.msra.mxu0 0
      %2175 = vmatprep.mubr.bf16.mxu0 0
      %2176 = vmatmul.mubr.bf16.gmra.mrb[0].mxu0 %v2138
      %v2177 = vpop.f32.mrb[0].mxu0
      %v2178 = vadd.f32 0.0, %v2177
      %v2179 = vpop.f32.mrb[0].mxu0
      %v2180 = vpop.f32.mrb[0].mxu0
      %v2181 = vpop.f32.mrb[0].mxu0
      %2182 = vdwg.mxu0
      %v2184 = vsel %vm2090, %v1740, 0
      %v2187 = vsel %vm2090, %v1908, 0
      %2189 = vmatprep.subr.bf16.mxu0 0
      %2190 = vmatpush1.bf16.xpose.msra.mxu0 %v2187
      %2191 = vmatprep.subr.bf16.mxu0 0
      %2192 = vmatpush1.bf16.xpose.msra.mxu0 0
      %2193 = vmatprep.subr.bf16.mxu0 0
      %2194 = vmatpush1.bf16.xpose.msra.mxu0 0
      %2195 = vmatprep.subr.bf16.mxu0 0
      %2196 = vmatpush1.bf16.xpose.msra.mxu0 0
      %2197 = vmatprep.subr.bf16.mxu0 0
      %2198 = vmatpush1.bf16.xpose.msra.mxu0 0
      %2199 = vmatprep.subr.bf16.mxu0 0
      %2200 = vmatpush1.bf16.xpose.msra.mxu0 0
      %2201 = vmatprep.subr.bf16.mxu0 0
      %2202 = vmatpush1.bf16.xpose.msra.mxu0 0
      %2203 = vmatprep.subr.bf16.mxu0 0
      %2204 = vmatpush1.bf16.xpose.msra.mxu0 0
      %2205 = vmatprep.subr.bf16.mxu0 0
      %2206 = vmatpush1.bf16.xpose.msra.mxu0 0
      %2207 = vmatprep.subr.bf16.mxu0 0
      %2208 = vmatpush1.bf16.xpose.msra.mxu0 0
      %2209 = vmatprep.subr.bf16.mxu0 0
      %2210 = vmatpush1.bf16.xpose.msra.mxu0 0
      %2211 = vmatprep.subr.bf16.mxu0 0
      %2212 = vmatpush1.bf16.xpose.msra.mxu0 0
      %2213 = vmatprep.subr.bf16.mxu0 0
      %2214 = vmatpush1.bf16.xpose.msra.mxu0 0
      %2215 = vmatprep.subr.bf16.mxu0 0
      %2216 = vmatpush1.bf16.xpose.msra.mxu0 0
      %2217 = vmatprep.subr.bf16.mxu0 0
      %2218 = vmatpush1.bf16.xpose.msra.mxu0 0
      %2219 = vmatprep.subr.bf16.mxu0 0
      %2220 = vmatpush1.bf16.xpose.msra.mxu0 0
      %2221 = vmatprep.mubr.bf16.mxu0 0
      %2222 = vmatmul.mubr.bf16.gmra.mrb[0].mxu0 %v2184
      %v2223 = vpop.f32.mrb[0].mxu0
      %v2224 = vadd.f32 0.0, %v2223
      %v2225 = vpop.f32.mrb[0].mxu0
      %v2226 = vpop.f32.mrb[0].mxu0
      %v2227 = vpop.f32.mrb[0].mxu0
      %2228 = vdwg.mxu0
      %v2230 = vsel %vm2090, %v1741, 0
      %v2233 = vsel %vm2090, %v1909, 0
      %2235 = vmatprep.subr.bf16.mxu0 0
      %2236 = vmatpush1.bf16.xpose.msra.mxu0 %v2233
      %2237 = vmatprep.subr.bf16.mxu0 0
      %2238 = vmatpush1.bf16.xpose.msra.mxu0 0
      %2239 = vmatprep.subr.bf16.mxu0 0
      %2240 = vmatpush1.bf16.xpose.msra.mxu0 0
      %2241 = vmatprep.subr.bf16.mxu0 0
      %2242 = vmatpush1.bf16.xpose.msra.mxu0 0
      %2243 = vmatprep.subr.bf16.mxu0 0
      %2244 = vmatpush1.bf16.xpose.msra.mxu0 0
      %2245 = vmatprep.subr.bf16.mxu0 0
      %2246 = vmatpush1.bf16.xpose.msra.mxu0 0
      %2247 = vmatprep.subr.bf16.mxu0 0
      %2248 = vmatpush1.bf16.xpose.msra.mxu0 0
      %2249 = vmatprep.subr.bf16.mxu0 0
      %2250 = vmatpush1.bf16.xpose.msra.mxu0 0
      %2251 = vmatprep.subr.bf16.mxu0 0
      %2252 = vmatpush1.bf16.xpose.msra.mxu0 0
      %2253 = vmatprep.subr.bf16.mxu0 0
      %2254 = vmatpush1.bf16.xpose.msra.mxu0 0
      %2255 = vmatprep.subr.bf16.mxu0 0
      %2256 = vmatpush1.bf16.xpose.msra.mxu0 0
      %2257 = vmatprep.subr.bf16.mxu0 0
      %2258 = vmatpush1.bf16.xpose.msra.mxu0 0
      %2259 = vmatprep.subr.bf16.mxu0 0
      %2260 = vmatpush1.bf16.xpose.msra.mxu0 0
      %2261 = vmatprep.subr.bf16.mxu0 0
      %2262 = vmatpush1.bf16.xpose.msra.mxu0 0
      %2263 = vmatprep.subr.bf16.mxu0 0
      %2264 = vmatpush1.bf16.xpose.msra.mxu0 0
      %2265 = vmatprep.subr.bf16.mxu0 0
      %2266 = vmatpush1.bf16.xpose.msra.mxu0 0
      %2267 = vmatprep.mubr.bf16.mxu0 0
      %2268 = vmatmul.mubr.bf16.gmra.mrb[0].mxu0 %v2230
      %v2269 = vpop.f32.mrb[0].mxu0
      %v2270 = vadd.f32 0.0, %v2269
      %v2271 = vpop.f32.mrb[0].mxu0
      %v2272 = vpop.f32.mrb[0].mxu0
      %v2273 = vpop.f32.mrb[0].mxu0
      %2274 = vdwg.mxu0
      %v2276 = vsel %vm2090, %v1742, 0
      %v2279 = vsel %vm2090, %v1910, 0
      %2281 = vmatprep.subr.bf16.mxu0 0
      %2282 = vmatpush1.bf16.xpose.msra.mxu0 %v2279
      %2283 = vmatprep.subr.bf16.mxu0 0
      %2284 = vmatpush1.bf16.xpose.msra.mxu0 0
      %2285 = vmatprep.subr.bf16.mxu0 0
      %2286 = vmatpush1.bf16.xpose.msra.mxu0 0
      %2287 = vmatprep.subr.bf16.mxu0 0
      %2288 = vmatpush1.bf16.xpose.msra.mxu0 0
      %2289 = vmatprep.subr.bf16.mxu0 0
      %2290 = vmatpush1.bf16.xpose.msra.mxu0 0
      %2291 = vmatprep.subr.bf16.mxu0 0
      %2292 = vmatpush1.bf16.xpose.msra.mxu0 0
      %2293 = vmatprep.subr.bf16.mxu0 0
      %2294 = vmatpush1.bf16.xpose.msra.mxu0 0
      %2295 = vmatprep.subr.bf16.mxu0 0
      %2296 = vmatpush1.bf16.xpose.msra.mxu0 0
      %2297 = vmatprep.subr.bf16.mxu0 0
      %2298 = vmatpush1.bf16.xpose.msra.mxu0 0
      %2299 = vmatprep.subr.bf16.mxu0 0
      %2300 = vmatpush1.bf16.xpose.msra.mxu0 0
      %2301 = vmatprep.subr.bf16.mxu0 0
      %2302 = vmatpush1.bf16.xpose.msra.mxu0 0
      %2303 = vmatprep.subr.bf16.mxu0 0
      %2304 = vmatpush1.bf16.xpose.msra.mxu0 0
      %2305 = vmatprep.subr.bf16.mxu0 0
      %2306 = vmatpush1.bf16.xpose.msra.mxu0 0
      %2307 = vmatprep.subr.bf16.mxu0 0
      %2308 = vmatpush1.bf16.xpose.msra.mxu0 0
      %2309 = vmatprep.subr.bf16.mxu0 0
      %2310 = vmatpush1.bf16.xpose.msra.mxu0 0
      %2311 = vmatprep.subr.bf16.mxu0 0
      %2312 = vmatpush1.bf16.xpose.msra.mxu0 0
      %2313 = vmatprep.mubr.bf16.mxu0 0
      %2314 = vmatmul.mubr.bf16.gmra.mrb[0].mxu0 %v2276
      %v2315 = vpop.f32.mrb[0].mxu0
      %v2316 = vadd.f32 0.0, %v2315
      %v2317 = vpop.f32.mrb[0].mxu0
      %v2318 = vpop.f32.mrb[0].mxu0
      %v2319 = vpop.f32.mrb[0].mxu0
      %2320 = vdwg.mxu0
      %v2322 = vsel %vm2090, %v1743, 0
      %v2325 = vsel %vm2090, %v1911, 0
      %2327 = vmatprep.subr.bf16.mxu0 0
      %2328 = vmatpush1.bf16.xpose.msra.mxu0 %v2325
      %2329 = vmatprep.subr.bf16.mxu0 0
      %2330 = vmatpush1.bf16.xpose.msra.mxu0 0
      %2331 = vmatprep.subr.bf16.mxu0 0
      %2332 = vmatpush1.bf16.xpose.msra.mxu0 0
      %2333 = vmatprep.subr.bf16.mxu0 0
      %2334 = vmatpush1.bf16.xpose.msra.mxu0 0
      %2335 = vmatprep.subr.bf16.mxu0 0
      %2336 = vmatpush1.bf16.xpose.msra.mxu0 0
      %2337 = vmatprep.subr.bf16.mxu0 0
      %2338 = vmatpush1.bf16.xpose.msra.mxu0 0
      %2339 = vmatprep.subr.bf16.mxu0 0
      %2340 = vmatpush1.bf16.xpose.msra.mxu0 0
      %2341 = vmatprep.subr.bf16.mxu0 0
      %2342 = vmatpush1.bf16.xpose.msra.mxu0 0
      %2343 = vmatprep.subr.bf16.mxu0 0
      %2344 = vmatpush1.bf16.xpose.msra.mxu0 0
      %2345 = vmatprep.subr.bf16.mxu0 0
      %2346 = vmatpush1.bf16.xpose.msra.mxu0 0
      %2347 = vmatprep.subr.bf16.mxu0 0
      %2348 = vmatpush1.bf16.xpose.msra.mxu0 0
      %2349 = vmatprep.subr.bf16.mxu0 0
      %2350 = vmatpush1.bf16.xpose.msra.mxu0 0
      %2351 = vmatprep.subr.bf16.mxu0 0
      %2352 = vmatpush1.bf16.xpose.msra.mxu0 0
      %2353 = vmatprep.subr.bf16.mxu0 0
      %2354 = vmatpush1.bf16.xpose.msra.mxu0 0
      %2355 = vmatprep.subr.bf16.mxu0 0
      %2356 = vmatpush1.bf16.xpose.msra.mxu0 0
      %2357 = vmatprep.subr.bf16.mxu0 0
      %2358 = vmatpush1.bf16.xpose.msra.mxu0 0
      %2359 = vmatprep.mubr.bf16.mxu0 0
      %2360 = vmatmul.mubr.bf16.gmra.mrb[0].mxu0 %v2322
      %v2361 = vpop.f32.mrb[0].mxu0
      %v2362 = vadd.f32 0.0, %v2361
      %v2363 = vpop.f32.mrb[0].mxu0
      %v2364 = vpop.f32.mrb[0].mxu0
      %v2365 = vpop.f32.mrb[0].mxu0
      %2366 = vdwg.mxu0
      %v2368 = vsel %vm2090, %v1744, 0
      %v2371 = vsel %vm2090, %v1912, 0
      %2373 = vmatprep.subr.bf16.mxu0 0
      %2374 = vmatpush1.bf16.xpose.msra.mxu0 %v2371
      %2375 = vmatprep.subr.bf16.mxu0 0
      %2376 = vmatpush1.bf16.xpose.msra.mxu0 0
      %2377 = vmatprep.subr.bf16.mxu0 0
      %2378 = vmatpush1.bf16.xpose.msra.mxu0 0
      %2379 = vmatprep.subr.bf16.mxu0 0
      %2380 = vmatpush1.bf16.xpose.msra.mxu0 0
      %2381 = vmatprep.subr.bf16.mxu0 0
      %2382 = vmatpush1.bf16.xpose.msra.mxu0 0
      %2383 = vmatprep.subr.bf16.mxu0 0
      %2384 = vmatpush1.bf16.xpose.msra.mxu0 0
      %2385 = vmatprep.subr.bf16.mxu0 0
      %2386 = vmatpush1.bf16.xpose.msra.mxu0 0
      %2387 = vmatprep.subr.bf16.mxu0 0
      %2388 = vmatpush1.bf16.xpose.msra.mxu0 0
      %2389 = vmatprep.subr.bf16.mxu0 0
      %2390 = vmatpush1.bf16.xpose.msra.mxu0 0
      %2391 = vmatprep.subr.bf16.mxu0 0
      %2392 = vmatpush1.bf16.xpose.msra.mxu0 0
      %2393 = vmatprep.subr.bf16.mxu0 0
      %2394 = vmatpush1.bf16.xpose.msra.mxu0 0
      %2395 = vmatprep.subr.bf16.mxu0 0
      %2396 = vmatpush1.bf16.xpose.msra.mxu0 0
      %2397 = vmatprep.subr.bf16.mxu0 0
      %2398 = vmatpush1.bf16.xpose.msra.mxu0 0
      %2399 = vmatprep.subr.bf16.mxu0 0
      %2400 = vmatpush1.bf16.xpose.msra.mxu0 0
      %2401 = vmatprep.subr.bf16.mxu0 0
      %2402 = vmatpush1.bf16.xpose.msra.mxu0 0
      %2403 = vmatprep.subr.bf16.mxu0 0
      %2404 = vmatpush1.bf16.xpose.msra.mxu0 0
      %2405 = vmatprep.mubr.bf16.mxu0 0
      %2406 = vmatmul.mubr.bf16.gmra.mrb[0].mxu0 %v2368
      %v2407 = vpop.f32.mrb[0].mxu0
      %v2408 = vadd.f32 0.0, %v2407
      %v2409 = vpop.f32.mrb[0].mxu0
      %v2410 = vpop.f32.mrb[0].mxu0
      %v2411 = vpop.f32.mrb[0].mxu0
      %2412 = vdwg.mxu0
      %v2414 = vsel %vm2090, %v1745, 0
      %v2417 = vsel %vm2090, %v1913, 0
      %2419 = vmatprep.subr.bf16.mxu0 0
      %2420 = vmatpush1.bf16.xpose.msra.mxu0 %v2417
      %2421 = vmatprep.subr.bf16.mxu0 0
      %2422 = vmatpush1.bf16.xpose.msra.mxu0 0
      %2423 = vmatprep.subr.bf16.mxu0 0
      %2424 = vmatpush1.bf16.xpose.msra.mxu0 0
      %2425 = vmatprep.subr.bf16.mxu0 0
      %2426 = vmatpush1.bf16.xpose.msra.mxu0 0
      %2427 = vmatprep.subr.bf16.mxu0 0
      %2428 = vmatpush1.bf16.xpose.msra.mxu0 0
      %2429 = vmatprep.subr.bf16.mxu0 0
      %2430 = vmatpush1.bf16.xpose.msra.mxu0 0
      %2431 = vmatprep.subr.bf16.mxu0 0
      %2432 = vmatpush1.bf16.xpose.msra.mxu0 0
      %2433 = vmatprep.subr.bf16.mxu0 0
      %2434 = vmatpush1.bf16.xpose.msra.mxu0 0
      %2435 = vmatprep.subr.bf16.mxu0 0
      %2436 = vmatpush1.bf16.xpose.msra.mxu0 0
      %2437 = vmatprep.subr.bf16.mxu0 0
      %2438 = vmatpush1.bf16.xpose.msra.mxu0 0
      %2439 = vmatprep.subr.bf16.mxu0 0
      %2440 = vmatpush1.bf16.xpose.msra.mxu0 0
      %2441 = vmatprep.subr.bf16.mxu0 0
      %2442 = vmatpush1.bf16.xpose.msra.mxu0 0
      %2443 = vmatprep.subr.bf16.mxu0 0
      %2444 = vmatpush1.bf16.xpose.msra.mxu0 0
      %2445 = vmatprep.subr.bf16.mxu0 0
      %2446 = vmatpush1.bf16.xpose.msra.mxu0 0
      %2447 = vmatprep.subr.bf16.mxu0 0
      %2448 = vmatpush1.bf16.xpose.msra.mxu0 0
      %2449 = vmatprep.subr.bf16.mxu0 0
      %2450 = vmatpush1.bf16.xpose.msra.mxu0 0
      %2451 = vmatprep.mubr.bf16.mxu0 0
      %2452 = vmatmul.mubr.bf16.gmra.mrb[0].mxu0 %v2414
      %v2453 = vpop.f32.mrb[0].mxu0
      %v2454 = vadd.f32 0.0, %v2453
      %v2455 = vpop.f32.mrb[0].mxu0
      %v2456 = vpop.f32.mrb[0].mxu0
      %v2457 = vpop.f32.mrb[0].mxu0
      %2458 = vdwg.mxu0
      %v2460 = vsel %vm2090, %v1746, 0
      %v2463 = vsel %vm2090, %v1914, 0
      %2465 = vmatprep.subr.bf16.mxu0 0
      %2466 = vmatpush1.bf16.xpose.msra.mxu0 %v2463
      %2467 = vmatprep.subr.bf16.mxu0 0
      %2468 = vmatpush1.bf16.xpose.msra.mxu0 0
      %2469 = vmatprep.subr.bf16.mxu0 0
      %2470 = vmatpush1.bf16.xpose.msra.mxu0 0
      %2471 = vmatprep.subr.bf16.mxu0 0
      %2472 = vmatpush1.bf16.xpose.msra.mxu0 0
      %2473 = vmatprep.subr.bf16.mxu0 0
      %2474 = vmatpush1.bf16.xpose.msra.mxu0 0
      %2475 = vmatprep.subr.bf16.mxu0 0
      %2476 = vmatpush1.bf16.xpose.msra.mxu0 0
      %2477 = vmatprep.subr.bf16.mxu0 0
      %2478 = vmatpush1.bf16.xpose.msra.mxu0 0
      %2479 = vmatprep.subr.bf16.mxu0 0
      %2480 = vmatpush1.bf16.xpose.msra.mxu0 0
      %2481 = vmatprep.subr.bf16.mxu0 0
      %2482 = vmatpush1.bf16.xpose.msra.mxu0 0
      %2483 = vmatprep.subr.bf16.mxu0 0
      %2484 = vmatpush1.bf16.xpose.msra.mxu0 0
      %2485 = vmatprep.subr.bf16.mxu0 0
      %2486 = vmatpush1.bf16.xpose.msra.mxu0 0
      %2487 = vmatprep.subr.bf16.mxu0 0
      %2488 = vmatpush1.bf16.xpose.msra.mxu0 0
      %2489 = vmatprep.subr.bf16.mxu0 0
      %2490 = vmatpush1.bf16.xpose.msra.mxu0 0
      %2491 = vmatprep.subr.bf16.mxu0 0
      %2492 = vmatpush1.bf16.xpose.msra.mxu0 0
      %2493 = vmatprep.subr.bf16.mxu0 0
      %2494 = vmatpush1.bf16.xpose.msra.mxu0 0
      %2495 = vmatprep.subr.bf16.mxu0 0
      %2496 = vmatpush1.bf16.xpose.msra.mxu0 0
      %2497 = vmatprep.mubr.bf16.mxu0 0
      %2498 = vmatmul.mubr.bf16.gmra.mrb[0].mxu0 %v2460
      %v2499 = vpop.f32.mrb[0].mxu0
      %v2500 = vadd.f32 0.0, %v2499
      %v2501 = vpop.f32.mrb[0].mxu0
      %v2502 = vpop.f32.mrb[0].mxu0
      %v2503 = vpop.f32.mrb[0].mxu0
      %2504 = vdwg.mxu0
      %v2506 = vsel %vm2090, %v1747, 0
      %v2509 = vsel %vm2090, %v1915, 0
      %2511 = vmatprep.subr.bf16.mxu0 0
      %2512 = vmatpush1.bf16.xpose.msra.mxu0 %v2509
      %2513 = vmatprep.subr.bf16.mxu0 0
      %2514 = vmatpush1.bf16.xpose.msra.mxu0 0
      %2515 = vmatprep.subr.bf16.mxu0 0
      %2516 = vmatpush1.bf16.xpose.msra.mxu0 0
      %2517 = vmatprep.subr.bf16.mxu0 0
      %2518 = vmatpush1.bf16.xpose.msra.mxu0 0
      %2519 = vmatprep.subr.bf16.mxu0 0
      %2520 = vmatpush1.bf16.xpose.msra.mxu0 0
      %2521 = vmatprep.subr.bf16.mxu0 0
      %2522 = vmatpush1.bf16.xpose.msra.mxu0 0
      %2523 = vmatprep.subr.bf16.mxu0 0
      %2524 = vmatpush1.bf16.xpose.msra.mxu0 0
      %2525 = vmatprep.subr.bf16.mxu0 0
      %2526 = vmatpush1.bf16.xpose.msra.mxu0 0
      %2527 = vmatprep.subr.bf16.mxu0 0
      %2528 = vmatpush1.bf16.xpose.msra.mxu0 0
      %2529 = vmatprep.subr.bf16.mxu0 0
      %2530 = vmatpush1.bf16.xpose.msra.mxu0 0
      %2531 = vmatprep.subr.bf16.mxu0 0
      %2532 = vmatpush1.bf16.xpose.msra.mxu0 0
      %2533 = vmatprep.subr.bf16.mxu0 0
      %2534 = vmatpush1.bf16.xpose.msra.mxu0 0
      %2535 = vmatprep.subr.bf16.mxu0 0
      %2536 = vmatpush1.bf16.xpose.msra.mxu0 0
      %2537 = vmatprep.subr.bf16.mxu0 0
      %2538 = vmatpush1.bf16.xpose.msra.mxu0 0
      %2539 = vmatprep.subr.bf16.mxu0 0
      %2540 = vmatpush1.bf16.xpose.msra.mxu0 0
      %2541 = vmatprep.subr.bf16.mxu0 0
      %2542 = vmatpush1.bf16.xpose.msra.mxu0 0
      %2543 = vmatprep.mubr.bf16.mxu0 0
      %2544 = vmatmul.mubr.bf16.gmra.mrb[0].mxu0 %v2506
      %v2545 = vpop.f32.mrb[0].mxu0
      %v2546 = vadd.f32 0.0, %v2545
      %v2547 = vpop.f32.mrb[0].mxu0
      %v2548 = vpop.f32.mrb[0].mxu0
      %v2549 = vpop.f32.mrb[0].mxu0
      %2550 = vdwg.mxu0
      %v2552 = vsel %vm2090, %v1748, 0
      %v2555 = vsel %vm2090, %v1916, 0
      %2557 = vmatprep.subr.bf16.mxu0 0
      %2558 = vmatpush1.bf16.xpose.msra.mxu0 %v2555
      %2559 = vmatprep.subr.bf16.mxu0 0
      %2560 = vmatpush1.bf16.xpose.msra.mxu0 0
      %2561 = vmatprep.subr.bf16.mxu0 0
      %2562 = vmatpush1.bf16.xpose.msra.mxu0 0
      %2563 = vmatprep.subr.bf16.mxu0 0
      %2564 = vmatpush1.bf16.xpose.msra.mxu0 0
      %2565 = vmatprep.subr.bf16.mxu0 0
      %2566 = vmatpush1.bf16.xpose.msra.mxu0 0
      %2567 = vmatprep.subr.bf16.mxu0 0
      %2568 = vmatpush1.bf16.xpose.msra.mxu0 0
      %2569 = vmatprep.subr.bf16.mxu0 0
      %2570 = vmatpush1.bf16.xpose.msra.mxu0 0
      %2571 = vmatprep.subr.bf16.mxu0 0
      %2572 = vmatpush1.bf16.xpose.msra.mxu0 0
      %2573 = vmatprep.subr.bf16.mxu0 0
      %2574 = vmatpush1.bf16.xpose.msra.mxu0 0
      %2575 = vmatprep.subr.bf16.mxu0 0
      %2576 = vmatpush1.bf16.xpose.msra.mxu0 0
      %2577 = vmatprep.subr.bf16.mxu0 0
      %2578 = vmatpush1.bf16.xpose.msra.mxu0 0
      %2579 = vmatprep.subr.bf16.mxu0 0
      %2580 = vmatpush1.bf16.xpose.msra.mxu0 0
      %2581 = vmatprep.subr.bf16.mxu0 0
      %2582 = vmatpush1.bf16.xpose.msra.mxu0 0
      %2583 = vmatprep.subr.bf16.mxu0 0
      %2584 = vmatpush1.bf16.xpose.msra.mxu0 0
      %2585 = vmatprep.subr.bf16.mxu0 0
      %2586 = vmatpush1.bf16.xpose.msra.mxu0 0
      %2587 = vmatprep.subr.bf16.mxu0 0
      %2588 = vmatpush1.bf16.xpose.msra.mxu0 0
      %2589 = vmatprep.mubr.bf16.mxu0 0
      %2590 = vmatmul.mubr.bf16.gmra.mrb[0].mxu0 %v2552
      %v2591 = vpop.f32.mrb[0].mxu0
      %v2592 = vadd.f32 0.0, %v2591
      %v2593 = vpop.f32.mrb[0].mxu0
      %v2594 = vpop.f32.mrb[0].mxu0
      %v2595 = vpop.f32.mrb[0].mxu0
      %2596 = vdwg.mxu0
      %v2598 = vsel %vm2090, %v1749, 0
      %v2601 = vsel %vm2090, %v1917, 0
      %2603 = vmatprep.subr.bf16.mxu0 0
      %2604 = vmatpush1.bf16.xpose.msra.mxu0 %v2601
      %2605 = vmatprep.subr.bf16.mxu0 0
      %2606 = vmatpush1.bf16.xpose.msra.mxu0 0
      %2607 = vmatprep.subr.bf16.mxu0 0
      %2608 = vmatpush1.bf16.xpose.msra.mxu0 0
      %2609 = vmatprep.subr.bf16.mxu0 0
      %2610 = vmatpush1.bf16.xpose.msra.mxu0 0
      %2611 = vmatprep.subr.bf16.mxu0 0
      %2612 = vmatpush1.bf16.xpose.msra.mxu0 0
      %2613 = vmatprep.subr.bf16.mxu0 0
      %2614 = vmatpush1.bf16.xpose.msra.mxu0 0
      %2615 = vmatprep.subr.bf16.mxu0 0
      %2616 = vmatpush1.bf16.xpose.msra.mxu0 0
      %2617 = vmatprep.subr.bf16.mxu0 0
      %2618 = vmatpush1.bf16.xpose.msra.mxu0 0
      %2619 = vmatprep.subr.bf16.mxu0 0
      %2620 = vmatpush1.bf16.xpose.msra.mxu0 0
      %2621 = vmatprep.subr.bf16.mxu0 0
      %2622 = vmatpush1.bf16.xpose.msra.mxu0 0
      %2623 = vmatprep.subr.bf16.mxu0 0
      %2624 = vmatpush1.bf16.xpose.msra.mxu0 0
      %2625 = vmatprep.subr.bf16.mxu0 0
      %2626 = vmatpush1.bf16.xpose.msra.mxu0 0
      %2627 = vmatprep.subr.bf16.mxu0 0
      %2628 = vmatpush1.bf16.xpose.msra.mxu0 0
      %2629 = vmatprep.subr.bf16.mxu0 0
      %2630 = vmatpush1.bf16.xpose.msra.mxu0 0
      %2631 = vmatprep.subr.bf16.mxu0 0
      %2632 = vmatpush1.bf16.xpose.msra.mxu0 0
      %2633 = vmatprep.subr.bf16.mxu0 0
      %2634 = vmatpush1.bf16.xpose.msra.mxu0 0
      %2635 = vmatprep.mubr.bf16.mxu0 0
      %2636 = vmatmul.mubr.bf16.gmra.mrb[0].mxu0 %v2598
      %v2637 = vpop.f32.mrb[0].mxu0
      %v2638 = vadd.f32 0.0, %v2637
      %v2639 = vpop.f32.mrb[0].mxu0
      %v2640 = vpop.f32.mrb[0].mxu0
      %v2641 = vpop.f32.mrb[0].mxu0
      %2642 = vdwg.mxu0
      %v2644 = vsel %vm2090, %v1750, 0
      %v2647 = vsel %vm2090, %v1918, 0
      %2649 = vmatprep.subr.bf16.mxu0 0
      %2650 = vmatpush1.bf16.xpose.msra.mxu0 %v2647
      %2651 = vmatprep.subr.bf16.mxu0 0
      %2652 = vmatpush1.bf16.xpose.msra.mxu0 0
      %2653 = vmatprep.subr.bf16.mxu0 0
      %2654 = vmatpush1.bf16.xpose.msra.mxu0 0
      %2655 = vmatprep.subr.bf16.mxu0 0
      %2656 = vmatpush1.bf16.xpose.msra.mxu0 0
      %2657 = vmatprep.subr.bf16.mxu0 0
      %2658 = vmatpush1.bf16.xpose.msra.mxu0 0
      %2659 = vmatprep.subr.bf16.mxu0 0
      %2660 = vmatpush1.bf16.xpose.msra.mxu0 0
      %2661 = vmatprep.subr.bf16.mxu0 0
      %2662 = vmatpush1.bf16.xpose.msra.mxu0 0
      %2663 = vmatprep.subr.bf16.mxu0 0
      %2664 = vmatpush1.bf16.xpose.msra.mxu0 0
      %2665 = vmatprep.subr.bf16.mxu0 0
      %2666 = vmatpush1.bf16.xpose.msra.mxu0 0
      %2667 = vmatprep.subr.bf16.mxu0 0
      %2668 = vmatpush1.bf16.xpose.msra.mxu0 0
      %2669 = vmatprep.subr.bf16.mxu0 0
      %2670 = vmatpush1.bf16.xpose.msra.mxu0 0
      %2671 = vmatprep.subr.bf16.mxu0 0
      %2672 = vmatpush1.bf16.xpose.msra.mxu0 0
      %2673 = vmatprep.subr.bf16.mxu0 0
      %2674 = vmatpush1.bf16.xpose.msra.mxu0 0
      %2675 = vmatprep.subr.bf16.mxu0 0
      %2676 = vmatpush1.bf16.xpose.msra.mxu0 0
      %2677 = vmatprep.subr.bf16.mxu0 0
      %2678 = vmatpush1.bf16.xpose.msra.mxu0 0
      %2679 = vmatprep.subr.bf16.mxu0 0
      %2680 = vmatpush1.bf16.xpose.msra.mxu0 0
      %2681 = vmatprep.mubr.bf16.mxu0 0
      %2682 = vmatmul.mubr.bf16.gmra.mrb[0].mxu0 %v2644
      %v2683 = vpop.f32.mrb[0].mxu0
      %v2684 = vadd.f32 0.0, %v2683
      %v2685 = vpop.f32.mrb[0].mxu0
      %v2686 = vpop.f32.mrb[0].mxu0
      %v2687 = vpop.f32.mrb[0].mxu0
      %2688 = vdwg.mxu0
      %v2690 = vsel %vm2090, %v1751, 0
      %v2693 = vsel %vm2090, %v1919, 0
      %2695 = vmatprep.subr.bf16.mxu0 0
      %2696 = vmatpush1.bf16.xpose.msra.mxu0 %v2693
      %2697 = vmatprep.subr.bf16.mxu0 0
      %2698 = vmatpush1.bf16.xpose.msra.mxu0 0
      %2699 = vmatprep.subr.bf16.mxu0 0
      %2700 = vmatpush1.bf16.xpose.msra.mxu0 0
      %2701 = vmatprep.subr.bf16.mxu0 0
      %2702 = vmatpush1.bf16.xpose.msra.mxu0 0
      %2703 = vmatprep.subr.bf16.mxu0 0
      %2704 = vmatpush1.bf16.xpose.msra.mxu0 0
      %2705 = vmatprep.subr.bf16.mxu0 0
      %2706 = vmatpush1.bf16.xpose.msra.mxu0 0
      %2707 = vmatprep.subr.bf16.mxu0 0
      %2708 = vmatpush1.bf16.xpose.msra.mxu0 0
      %2709 = vmatprep.subr.bf16.mxu0 0
      %2710 = vmatpush1.bf16.xpose.msra.mxu0 0
      %2711 = vmatprep.subr.bf16.mxu0 0
      %2712 = vmatpush1.bf16.xpose.msra.mxu0 0
      %2713 = vmatprep.subr.bf16.mxu0 0
      %2714 = vmatpush1.bf16.xpose.msra.mxu0 0
      %2715 = vmatprep.subr.bf16.mxu0 0
      %2716 = vmatpush1.bf16.xpose.msra.mxu0 0
      %2717 = vmatprep.subr.bf16.mxu0 0
      %2718 = vmatpush1.bf16.xpose.msra.mxu0 0
      %2719 = vmatprep.subr.bf16.mxu0 0
      %2720 = vmatpush1.bf16.xpose.msra.mxu0 0
      %2721 = vmatprep.subr.bf16.mxu0 0
      %2722 = vmatpush1.bf16.xpose.msra.mxu0 0
      %2723 = vmatprep.subr.bf16.mxu0 0
      %2724 = vmatpush1.bf16.xpose.msra.mxu0 0
      %2725 = vmatprep.subr.bf16.mxu0 0
      %2726 = vmatpush1.bf16.xpose.msra.mxu0 0
      %2727 = vmatprep.mubr.bf16.mxu0 0
      %2728 = vmatmul.mubr.bf16.gmra.mrb[0].mxu0 %v2690
      %v2729 = vpop.f32.mrb[0].mxu0
      %v2730 = vadd.f32 0.0, %v2729
      %v2731 = vpop.f32.mrb[0].mxu0
      %v2732 = vpop.f32.mrb[0].mxu0
      %v2733 = vpop.f32.mrb[0].mxu0
      %2734 = vdwg.mxu0
      %v2736 = vsel %vm2090, %v1752, 0
      %v2739 = vsel %vm2090, %v1920, 0
      %2741 = vmatprep.subr.bf16.mxu0 0
      %2742 = vmatpush1.bf16.xpose.msra.mxu0 %v2739
      %2743 = vmatprep.subr.bf16.mxu0 0
      %2744 = vmatpush1.bf16.xpose.msra.mxu0 0
      %2745 = vmatprep.subr.bf16.mxu0 0
      %2746 = vmatpush1.bf16.xpose.msra.mxu0 0
      %2747 = vmatprep.subr.bf16.mxu0 0
      %2748 = vmatpush1.bf16.xpose.msra.mxu0 0
      %2749 = vmatprep.subr.bf16.mxu0 0
      %2750 = vmatpush1.bf16.xpose.msra.mxu0 0
      %2751 = vmatprep.subr.bf16.mxu0 0
      %2752 = vmatpush1.bf16.xpose.msra.mxu0 0
      %2753 = vmatprep.subr.bf16.mxu0 0
      %2754 = vmatpush1.bf16.xpose.msra.mxu0 0
      %2755 = vmatprep.subr.bf16.mxu0 0
      %2756 = vmatpush1.bf16.xpose.msra.mxu0 0
      %2757 = vmatprep.subr.bf16.mxu0 0
      %2758 = vmatpush1.bf16.xpose.msra.mxu0 0
      %2759 = vmatprep.subr.bf16.mxu0 0
      %2760 = vmatpush1.bf16.xpose.msra.mxu0 0
      %2761 = vmatprep.subr.bf16.mxu0 0
      %2762 = vmatpush1.bf16.xpose.msra.mxu0 0
      %2763 = vmatprep.subr.bf16.mxu0 0
      %2764 = vmatpush1.bf16.xpose.msra.mxu0 0
      %2765 = vmatprep.subr.bf16.mxu0 0
      %2766 = vmatpush1.bf16.xpose.msra.mxu0 0
      %2767 = vmatprep.subr.bf16.mxu0 0
      %2768 = vmatpush1.bf16.xpose.msra.mxu0 0
      %2769 = vmatprep.subr.bf16.mxu0 0
      %2770 = vmatpush1.bf16.xpose.msra.mxu0 0
      %2771 = vmatprep.subr.bf16.mxu0 0
      %2772 = vmatpush1.bf16.xpose.msra.mxu0 0
      %2773 = vmatprep.mubr.bf16.mxu0 0
      %2774 = vmatmul.mubr.bf16.gmra.mrb[0].mxu0 %v2736
      %v2775 = vpop.f32.mrb[0].mxu0
      %v2776 = vadd.f32 0.0, %v2775
      %v2777 = vpop.f32.mrb[0].mxu0
      %v2778 = vpop.f32.mrb[0].mxu0
      %v2779 = vpop.f32.mrb[0].mxu0
      %2780 = vdwg.mxu0
      %v2782 = vsel %vm2090, %v1753, 0
      %v2785 = vsel %vm2090, %v1921, 0
      %2787 = vmatprep.subr.bf16.mxu0 0
      %2788 = vmatpush1.bf16.xpose.msra.mxu0 %v2785
      %2789 = vmatprep.subr.bf16.mxu0 0
      %2790 = vmatpush1.bf16.xpose.msra.mxu0 0
      %2791 = vmatprep.subr.bf16.mxu0 0
      %2792 = vmatpush1.bf16.xpose.msra.mxu0 0
      %2793 = vmatprep.subr.bf16.mxu0 0
      %2794 = vmatpush1.bf16.xpose.msra.mxu0 0
      %2795 = vmatprep.subr.bf16.mxu0 0
      %2796 = vmatpush1.bf16.xpose.msra.mxu0 0
      %2797 = vmatprep.subr.bf16.mxu0 0
      %2798 = vmatpush1.bf16.xpose.msra.mxu0 0
      %2799 = vmatprep.subr.bf16.mxu0 0
      %2800 = vmatpush1.bf16.xpose.msra.mxu0 0
      %2801 = vmatprep.subr.bf16.mxu0 0
      %2802 = vmatpush1.bf16.xpose.msra.mxu0 0
      %2803 = vmatprep.subr.bf16.mxu0 0
      %2804 = vmatpush1.bf16.xpose.msra.mxu0 0
      %2805 = vmatprep.subr.bf16.mxu0 0
      %2806 = vmatpush1.bf16.xpose.msra.mxu0 0
      %2807 = vmatprep.subr.bf16.mxu0 0
      %2808 = vmatpush1.bf16.xpose.msra.mxu0 0
      %2809 = vmatprep.subr.bf16.mxu0 0
      %2810 = vmatpush1.bf16.xpose.msra.mxu0 0
      %2811 = vmatprep.subr.bf16.mxu0 0
      %2812 = vmatpush1.bf16.xpose.msra.mxu0 0
      %2813 = vmatprep.subr.bf16.mxu0 0
      %2814 = vmatpush1.bf16.xpose.msra.mxu0 0
      %2815 = vmatprep.subr.bf16.mxu0 0
      %2816 = vmatpush1.bf16.xpose.msra.mxu0 0
      %2817 = vmatprep.subr.bf16.mxu0 0
      %2818 = vmatpush1.bf16.xpose.msra.mxu0 0
      %2819 = vmatprep.mubr.bf16.mxu0 0
      %2820 = vmatmul.mubr.bf16.gmra.mrb[0].mxu0 %v2782
      %v2821 = vpop.f32.mrb[0].mxu0
      %v2822 = vadd.f32 0.0, %v2821
      %v2823 = vpop.f32.mrb[0].mxu0
      %v2824 = vpop.f32.mrb[0].mxu0
      %v2825 = vpop.f32.mrb[0].mxu0
      %2826 = vdwg.mxu0
      %v2827 = vmul.f32 %v2132, 0.25
      %v2828 = vmul.f32 %v2178, 0.25
      %v2829 = vmul.f32 %v2224, 0.25
      %v2830 = vmul.f32 %v2270, 0.25
      %v2831 = vmul.f32 %v2316, 0.25
      %v2832 = vmul.f32 %v2362, 0.25
      %v2833 = vmul.f32 %v2408, 0.25
      %v2834 = vmul.f32 %v2454, 0.25
      %v2835 = vmul.f32 %v2500, 0.25
      %v2836 = vmul.f32 %v2546, 0.25
      %v2837 = vmul.f32 %v2592, 0.25
      %v2838 = vmul.f32 %v2638, 0.25
      %v2839 = vmul.f32 %v2684, 0.25
      %v2840 = vmul.f32 %v2730, 0.25
      %v2841 = vmul.f32 %v2776, 0.25
      %v2842 = vmul.f32 %v2822, 0.25
      %vm2843 = vcmask 64512
      %v2844 = vsel %vm2843, %v2827, -inf
      %2845 = vmax.xlane.f32.xlu0 %v2844
      %v2846 = vpop.xlane.xlu0 %2845
      %v2847 = vsel %vm2843, %v2828, -inf
      %2848 = vmax.xlane.f32.xlu0 %v2847
      %v2849 = vpop.xlane.xlu0 %2848
      %v2850 = vsel %vm2843, %v2829, -inf
      %2851 = vmax.xlane.f32.xlu0 %v2850
      %v2852 = vpop.xlane.xlu0 %2851
      %v2853 = vsel %vm2843, %v2830, -inf
      %2854 = vmax.xlane.f32.xlu0 %v2853
      %v2855 = vpop.xlane.xlu0 %2854
      %v2856 = vsel %vm2843, %v2831, -inf
      %2857 = vmax.xlane.f32.xlu0 %v2856
      %v2858 = vpop.xlane.xlu0 %2857
      %v2859 = vsel %vm2843, %v2832, -inf
      %2860 = vmax.xlane.f32.xlu0 %v2859
      %v2861 = vpop.xlane.xlu0 %2860
      %v2862 = vsel %vm2843, %v2833, -inf
      %2863 = vmax.xlane.f32.xlu0 %v2862
      %v2864 = vpop.xlane.xlu0 %2863
      %v2865 = vsel %vm2843, %v2834, -inf
      %2866 = vmax.xlane.f32.xlu0 %v2865
      %v2867 = vpop.xlane.xlu0 %2866
      %v2868 = vsel %vm2843, %v2835, -inf
      %2869 = vmax.xlane.f32.xlu0 %v2868
      %v2870 = vpop.xlane.xlu0 %2869
      %v2871 = vsel %vm2843, %v2836, -inf
      %2872 = vmax.xlane.f32.xlu0 %v2871
      %v2873 = vpop.xlane.xlu0 %2872
      %v2874 = vsel %vm2843, %v2837, -inf
      %2875 = vmax.xlane.f32.xlu0 %v2874
      %v2876 = vpop.xlane.xlu0 %2875
      %v2877 = vsel %vm2843, %v2838, -inf
      %2878 = vmax.xlane.f32.xlu0 %v2877
      %v2879 = vpop.xlane.xlu0 %2878
      %v2880 = vsel %vm2843, %v2839, -inf
      %2881 = vmax.xlane.f32.xlu0 %v2880
      %v2882 = vpop.xlane.xlu0 %2881
      %v2883 = vsel %vm2843, %v2840, -inf
      %2884 = vmax.xlane.f32.xlu0 %v2883
      %v2885 = vpop.xlane.xlu0 %2884
      %v2886 = vsel %vm2843, %v2841, -inf
      %2887 = vmax.xlane.f32.xlu0 %v2886
      %v2888 = vpop.xlane.xlu0 %2887
      %v2889 = vsel %vm2843, %v2842, -inf
      %2890 = vmax.xlane.f32.xlu0 %v2889
      %v2891 = vpop.xlane.xlu0 %2890
      %v2892 = vsub.f32 %v2827, %v2846
      %v2893 = vsub.f32 %v2828, %v2849
      %v2894 = vsub.f32 %v2829, %v2852
      %v2895 = vsub.f32 %v2830, %v2855
      %v2896 = vsub.f32 %v2831, %v2858
      %v2897 = vsub.f32 %v2832, %v2861
      %v2898 = vsub.f32 %v2833, %v2864
      %v2899 = vsub.f32 %v2834, %v2867
      %v2900 = vsub.f32 %v2835, %v2870
      %v2901 = vsub.f32 %v2836, %v2873
      %v2902 = vsub.f32 %v2837, %v2876
      %v2903 = vsub.f32 %v2838, %v2879
      %v2904 = vsub.f32 %v2839, %v2882
      %v2905 = vsub.f32 %v2840, %v2885
      %v2906 = vsub.f32 %v2841, %v2888
      %v2907 = vsub.f32 %v2842, %v2891
      %v2908 = vmul.f32 %v2892, 1.442695
      %v2909 = vpow.pop %v2908
      %v2910 = vmul.f32 %v2893, 1.442695
      %v2911 = vpow.pop %v2910
      %v2912 = vmul.f32 %v2894, 1.442695
      %v2913 = vpow.pop %v2912
      %v2914 = vmul.f32 %v2895, 1.442695
      %v2915 = vpow.pop %v2914
      %v2916 = vmul.f32 %v2896, 1.442695
      %v2917 = vpow.pop %v2916
      %v2918 = vmul.f32 %v2897, 1.442695
      %v2919 = vpow.pop %v2918
      %v2920 = vmul.f32 %v2898, 1.442695
      %v2921 = vpow.pop %v2920
      %v2922 = vmul.f32 %v2899, 1.442695
      %v2923 = vpow.pop %v2922
      %v2924 = vmul.f32 %v2900, 1.442695
      %v2925 = vpow.pop %v2924
      %v2926 = vmul.f32 %v2901, 1.442695
      %v2927 = vpow.pop %v2926
      %v2928 = vmul.f32 %v2902, 1.442695
      %v2929 = vpow.pop %v2928
      %v2930 = vmul.f32 %v2903, 1.442695
      %v2931 = vpow.pop %v2930
      %v2932 = vmul.f32 %v2904, 1.442695
      %v2933 = vpow.pop %v2932
      %v2934 = vmul.f32 %v2905, 1.442695
      %v2935 = vpow.pop %v2934
      %v2936 = vmul.f32 %v2906, 1.442695
      %v2937 = vpow.pop %v2936
      %v2938 = vmul.f32 %v2907, 1.442695
      %v2939 = vpow.pop %v2938
      %v2940 = vsel %vm2843, %v2909, 0.0
      %2941 = vadd.xlane.f32.xlu0 %v2940
      %v2942 = vpop.xlane.xlu0 %2941
      %v2943 = vsel %vm2843, %v2911, 0.0
      %2944 = vadd.xlane.f32.xlu0 %v2943
      %v2945 = vpop.xlane.xlu0 %2944
      %v2946 = vsel %vm2843, %v2913, 0.0
      %2947 = vadd.xlane.f32.xlu0 %v2946
      %v2948 = vpop.xlane.xlu0 %2947
      %v2949 = vsel %vm2843, %v2915, 0.0
      %2950 = vadd.xlane.f32.xlu0 %v2949
      %v2951 = vpop.xlane.xlu0 %2950
      %v2952 = vsel %vm2843, %v2917, 0.0
      %2953 = vadd.xlane.f32.xlu0 %v2952
      %v2954 = vpop.xlane.xlu0 %2953
      %v2955 = vsel %vm2843, %v2919, 0.0
      %2956 = vadd.xlane.f32.xlu0 %v2955
      %v2957 = vpop.xlane.xlu0 %2956
      %v2958 = vsel %vm2843, %v2921, 0.0
      %2959 = vadd.xlane.f32.xlu0 %v2958
      %v2960 = vpop.xlane.xlu0 %2959
      %v2961 = vsel %vm2843, %v2923, 0.0
      %2962 = vadd.xlane.f32.xlu0 %v2961
      %v2963 = vpop.xlane.xlu0 %2962
      %v2964 = vsel %vm2843, %v2925, 0.0
      %2965 = vadd.xlane.f32.xlu0 %v2964
      %v2966 = vpop.xlane.xlu0 %2965
      %v2967 = vsel %vm2843, %v2927, 0.0
      %2968 = vadd.xlane.f32.xlu0 %v2967
      %v2969 = vpop.xlane.xlu0 %2968
      %v2970 = vsel %vm2843, %v2929, 0.0
      %2971 = vadd.xlane.f32.xlu0 %v2970
      %v2972 = vpop.xlane.xlu0 %2971
      %v2973 = vsel %vm2843, %v2931, 0.0
      %2974 = vadd.xlane.f32.xlu0 %v2973
      %v2975 = vpop.xlane.xlu0 %2974
      %v2976 = vsel %vm2843, %v2933, 0.0
      %2977 = vadd.xlane.f32.xlu0 %v2976
      %v2978 = vpop.xlane.xlu0 %2977
      %v2979 = vsel %vm2843, %v2935, 0.0
      %2980 = vadd.xlane.f32.xlu0 %v2979
      %v2981 = vpop.xlane.xlu0 %2980
      %v2982 = vsel %vm2843, %v2937, 0.0
      %2983 = vadd.xlane.f32.xlu0 %v2982
      %v2984 = vpop.xlane.xlu0 %2983
      %v2985 = vsel %vm2843, %v2939, 0.0
      %2986 = vadd.xlane.f32.xlu0 %v2985
      %v2987 = vpop.xlane.xlu0 %2986
      %v2988 = vrcp.pop %v2942
      %v2989 = vrcp.pop %v2945
      %v2990 = vrcp.pop %v2948
      %v2991 = vrcp.pop %v2951
      %v2992 = vrcp.pop %v2954
      %v2993 = vrcp.pop %v2957
      %v2994 = vrcp.pop %v2960
      %v2995 = vrcp.pop %v2963
      %v2996 = vrcp.pop %v2966
      %v2997 = vrcp.pop %v2969
      %v2998 = vrcp.pop %v2972
      %v2999 = vrcp.pop %v2975
      %v3000 = vrcp.pop %v2978
      %v3001 = vrcp.pop %v2981
      %v3002 = vrcp.pop %v2984
      %v3003 = vrcp.pop %v2987
      %v3004 = vmul.f32 %v2909, %v2988
      %v3005 = vmul.f32 %v2911, %v2989
      %v3006 = vmul.f32 %v2913, %v2990
      %v3007 = vmul.f32 %v2915, %v2991
      %v3008 = vmul.f32 %v2917, %v2992
      %v3009 = vmul.f32 %v2919, %v2993
      %v3010 = vmul.f32 %v2921, %v2994
      %v3011 = vmul.f32 %v2923, %v2995
      %v3012 = vmul.f32 %v2925, %v2996
      %v3013 = vmul.f32 %v2927, %v2997
      %v3014 = vmul.f32 %v2929, %v2998
      %v3015 = vmul.f32 %v2931, %v2999
      %v3016 = vmul.f32 %v2933, %v3000
      %v3017 = vmul.f32 %v2935, %v3001
      %v3018 = vmul.f32 %v2937, %v3002
      %v3019 = vmul.f32 %v2939, %v3003
      %v3020 = vpack.c.bf16 %v3004, %v3004
      %v3021 = vpack.c.bf16 %v3005, %v3005
      %v3022 = vpack.c.bf16 %v3006, %v3006
      %v3023 = vpack.c.bf16 %v3007, %v3007
      %v3024 = vpack.c.bf16 %v3008, %v3008
      %v3025 = vpack.c.bf16 %v3009, %v3009
      %v3026 = vpack.c.bf16 %v3010, %v3010
      %v3027 = vpack.c.bf16 %v3011, %v3011
      %v3028 = vpack.c.bf16 %v3012, %v3012
      %v3029 = vpack.c.bf16 %v3013, %v3013
      %v3030 = vpack.c.bf16 %v3014, %v3014
      %v3031 = vpack.c.bf16 %v3015, %v3015
      %v3032 = vpack.c.bf16 %v3016, %v3016
      %v3033 = vpack.c.bf16 %v3017, %v3017
      %v3034 = vpack.c.bf16 %v3018, %v3018
      %v3035 = vpack.c.bf16 %v3019, %v3019
      %v3037 = vsel %vm2843, %v3020, 0
      %vm3039 = vcmask 1043456
      %v3041 = vsel %vm3039, %v2074, 0
      %3043 = vmatprep.subr.bf16.mxu0 0
      %3044 = vmatpush1.bf16.msra.mxu0 %v3041
      %3045 = vmatprep.subr.bf16.mxu0 0
      %3046 = vmatpush1.bf16.msra.mxu0 0
      %3047 = vmatprep.subr.bf16.mxu0 0
      %3048 = vmatpush1.bf16.msra.mxu0 0
      %3049 = vmatprep.subr.bf16.mxu0 0
      %3050 = vmatpush1.bf16.msra.mxu0 0
      %3051 = vmatprep.subr.bf16.mxu0 0
      %3052 = vmatpush1.bf16.msra.mxu0 0
      %3053 = vmatprep.subr.bf16.mxu0 0
      %3054 = vmatpush1.bf16.msra.mxu0 0
      %3055 = vmatprep.subr.bf16.mxu0 0
      %3056 = vmatpush1.bf16.msra.mxu0 0
      %3057 = vmatprep.subr.bf16.mxu0 0
      %3058 = vmatpush1.bf16.msra.mxu0 0
      %3059 = vmatprep.subr.bf16.mxu0 0
      %3060 = vmatpush1.bf16.msra.mxu0 0
      %3061 = vmatprep.subr.bf16.mxu0 0
      %3062 = vmatpush1.bf16.msra.mxu0 0
      %3063 = vmatprep.subr.bf16.mxu0 0
      %3064 = vmatpush1.bf16.msra.mxu0 0
      %3065 = vmatprep.subr.bf16.mxu0 0
      %3066 = vmatpush1.bf16.msra.mxu0 0
      %3067 = vmatprep.subr.bf16.mxu0 0
      %3068 = vmatpush1.bf16.msra.mxu0 0
      %3069 = vmatprep.subr.bf16.mxu0 0
      %3070 = vmatpush1.bf16.msra.mxu0 0
      %3071 = vmatprep.subr.bf16.mxu0 0
      %3072 = vmatpush1.bf16.msra.mxu0 0
      %3073 = vmatprep.subr.bf16.mxu0 0
      %3074 = vmatpush1.bf16.msra.mxu0 0
      %3075 = vmatprep.mubr.bf16.mxu0 0
      %3076 = vmatmul.mubr.bf16.gmra.mrb[0].mxu0 %v3037
      %v3077 = vpop.f32.mrb[0].mxu0
      %v3078 = vadd.f32 0.0, %v3077
      %v3079 = vpop.f32.mrb[0].mxu0
      %v3080 = vpop.f32.mrb[0].mxu0
      %v3081 = vpop.f32.mrb[0].mxu0
      %3082 = vdwg.mxu0
      %v3084 = vsel %vm2843, %v3021, 0
      %v3087 = vsel %vm3039, %v2075, 0
      %3089 = vmatprep.subr.bf16.mxu0 0
      %3090 = vmatpush1.bf16.msra.mxu0 %v3087
      %3091 = vmatprep.subr.bf16.mxu0 0
      %3092 = vmatpush1.bf16.msra.mxu0 0
      %3093 = vmatprep.subr.bf16.mxu0 0
      %3094 = vmatpush1.bf16.msra.mxu0 0
      %3095 = vmatprep.subr.bf16.mxu0 0
      %3096 = vmatpush1.bf16.msra.mxu0 0
      %3097 = vmatprep.subr.bf16.mxu0 0
      %3098 = vmatpush1.bf16.msra.mxu0 0
      %3099 = vmatprep.subr.bf16.mxu0 0
      %3100 = vmatpush1.bf16.msra.mxu0 0
      %3101 = vmatprep.subr.bf16.mxu0 0
      %3102 = vmatpush1.bf16.msra.mxu0 0
      %3103 = vmatprep.subr.bf16.mxu0 0
      %3104 = vmatpush1.bf16.msra.mxu0 0
      %3105 = vmatprep.subr.bf16.mxu0 0
      %3106 = vmatpush1.bf16.msra.mxu0 0
      %3107 = vmatprep.subr.bf16.mxu0 0
      %3108 = vmatpush1.bf16.msra.mxu0 0
      %3109 = vmatprep.subr.bf16.mxu0 0
      %3110 = vmatpush1.bf16.msra.mxu0 0
      %3111 = vmatprep.subr.bf16.mxu0 0
      %3112 = vmatpush1.bf16.msra.mxu0 0
      %3113 = vmatprep.subr.bf16.mxu0 0
      %3114 = vmatpush1.bf16.msra.mxu0 0
      %3115 = vmatprep.subr.bf16.mxu0 0
      %3116 = vmatpush1.bf16.msra.mxu0 0
      %3117 = vmatprep.subr.bf16.mxu0 0
      %3118 = vmatpush1.bf16.msra.mxu0 0
      %3119 = vmatprep.subr.bf16.mxu0 0
      %3120 = vmatpush1.bf16.msra.mxu0 0
      %3121 = vmatprep.mubr.bf16.mxu0 0
      %3122 = vmatmul.mubr.bf16.gmra.mrb[0].mxu0 %v3084
      %v3123 = vpop.f32.mrb[0].mxu0
      %v3124 = vadd.f32 0.0, %v3123
      %v3125 = vpop.f32.mrb[0].mxu0
      %v3126 = vpop.f32.mrb[0].mxu0
      %v3127 = vpop.f32.mrb[0].mxu0
      %3128 = vdwg.mxu0
      %v3130 = vsel %vm2843, %v3022, 0
      %v3133 = vsel %vm3039, %v2076, 0
      %3135 = vmatprep.subr.bf16.mxu0 0
      %3136 = vmatpush1.bf16.msra.mxu0 %v3133
      %3137 = vmatprep.subr.bf16.mxu0 0
      %3138 = vmatpush1.bf16.msra.mxu0 0
      %3139 = vmatprep.subr.bf16.mxu0 0
      %3140 = vmatpush1.bf16.msra.mxu0 0
      %3141 = vmatprep.subr.bf16.mxu0 0
      %3142 = vmatpush1.bf16.msra.mxu0 0
      %3143 = vmatprep.subr.bf16.mxu0 0
      %3144 = vmatpush1.bf16.msra.mxu0 0
      %3145 = vmatprep.subr.bf16.mxu0 0
      %3146 = vmatpush1.bf16.msra.mxu0 0
      %3147 = vmatprep.subr.bf16.mxu0 0
      %3148 = vmatpush1.bf16.msra.mxu0 0
      %3149 = vmatprep.subr.bf16.mxu0 0
      %3150 = vmatpush1.bf16.msra.mxu0 0
      %3151 = vmatprep.subr.bf16.mxu0 0
      %3152 = vmatpush1.bf16.msra.mxu0 0
      %3153 = vmatprep.subr.bf16.mxu0 0
      %3154 = vmatpush1.bf16.msra.mxu0 0
      %3155 = vmatprep.subr.bf16.mxu0 0
      %3156 = vmatpush1.bf16.msra.mxu0 0
      %3157 = vmatprep.subr.bf16.mxu0 0
      %3158 = vmatpush1.bf16.msra.mxu0 0
      %3159 = vmatprep.subr.bf16.mxu0 0
      %3160 = vmatpush1.bf16.msra.mxu0 0
      %3161 = vmatprep.subr.bf16.mxu0 0
      %3162 = vmatpush1.bf16.msra.mxu0 0
      %3163 = vmatprep.subr.bf16.mxu0 0
      %3164 = vmatpush1.bf16.msra.mxu0 0
      %3165 = vmatprep.subr.bf16.mxu0 0
      %3166 = vmatpush1.bf16.msra.mxu0 0
      %3167 = vmatprep.mubr.bf16.mxu0 0
      %3168 = vmatmul.mubr.bf16.gmra.mrb[0].mxu0 %v3130
      %v3169 = vpop.f32.mrb[0].mxu0
      %v3170 = vadd.f32 0.0, %v3169
      %v3171 = vpop.f32.mrb[0].mxu0
      %v3172 = vpop.f32.mrb[0].mxu0
      %v3173 = vpop.f32.mrb[0].mxu0
      %3174 = vdwg.mxu0
      %v3176 = vsel %vm2843, %v3023, 0
      %v3179 = vsel %vm3039, %v2077, 0
      %3181 = vmatprep.subr.bf16.mxu0 0
      %3182 = vmatpush1.bf16.msra.mxu0 %v3179
      %3183 = vmatprep.subr.bf16.mxu0 0
      %3184 = vmatpush1.bf16.msra.mxu0 0
      %3185 = vmatprep.subr.bf16.mxu0 0
      %3186 = vmatpush1.bf16.msra.mxu0 0
      %3187 = vmatprep.subr.bf16.mxu0 0
      %3188 = vmatpush1.bf16.msra.mxu0 0
      %3189 = vmatprep.subr.bf16.mxu0 0
      %3190 = vmatpush1.bf16.msra.mxu0 0
      %3191 = vmatprep.subr.bf16.mxu0 0
      %3192 = vmatpush1.bf16.msra.mxu0 0
      %3193 = vmatprep.subr.bf16.mxu0 0
      %3194 = vmatpush1.bf16.msra.mxu0 0
      %3195 = vmatprep.subr.bf16.mxu0 0
      %3196 = vmatpush1.bf16.msra.mxu0 0
      %3197 = vmatprep.subr.bf16.mxu0 0
      %3198 = vmatpush1.bf16.msra.mxu0 0
      %3199 = vmatprep.subr.bf16.mxu0 0
      %3200 = vmatpush1.bf16.msra.mxu0 0
      %3201 = vmatprep.subr.bf16.mxu0 0
      %3202 = vmatpush1.bf16.msra.mxu0 0
      %3203 = vmatprep.subr.bf16.mxu0 0
      %3204 = vmatpush1.bf16.msra.mxu0 0
      %3205 = vmatprep.subr.bf16.mxu0 0
      %3206 = vmatpush1.bf16.msra.mxu0 0
      %3207 = vmatprep.subr.bf16.mxu0 0
      %3208 = vmatpush1.bf16.msra.mxu0 0
      %3209 = vmatprep.subr.bf16.mxu0 0
      %3210 = vmatpush1.bf16.msra.mxu0 0
      %3211 = vmatprep.subr.bf16.mxu0 0
      %3212 = vmatpush1.bf16.msra.mxu0 0
      %3213 = vmatprep.mubr.bf16.mxu0 0
      %3214 = vmatmul.mubr.bf16.gmra.mrb[0].mxu0 %v3176
      %v3215 = vpop.f32.mrb[0].mxu0
      %v3216 = vadd.f32 0.0, %v3215
      %v3217 = vpop.f32.mrb[0].mxu0
      %v3218 = vpop.f32.mrb[0].mxu0
      %v3219 = vpop.f32.mrb[0].mxu0
      %3220 = vdwg.mxu0
      %v3222 = vsel %vm2843, %v3024, 0
      %v3225 = vsel %vm3039, %v2078, 0
      %3227 = vmatprep.subr.bf16.mxu0 0
      %3228 = vmatpush1.bf16.msra.mxu0 %v3225
      %3229 = vmatprep.subr.bf16.mxu0 0
      %3230 = vmatpush1.bf16.msra.mxu0 0
      %3231 = vmatprep.subr.bf16.mxu0 0
      %3232 = vmatpush1.bf16.msra.mxu0 0
      %3233 = vmatprep.subr.bf16.mxu0 0
      %3234 = vmatpush1.bf16.msra.mxu0 0
      %3235 = vmatprep.subr.bf16.mxu0 0
      %3236 = vmatpush1.bf16.msra.mxu0 0
      %3237 = vmatprep.subr.bf16.mxu0 0
      %3238 = vmatpush1.bf16.msra.mxu0 0
      %3239 = vmatprep.subr.bf16.mxu0 0
      %3240 = vmatpush1.bf16.msra.mxu0 0
      %3241 = vmatprep.subr.bf16.mxu0 0
      %3242 = vmatpush1.bf16.msra.mxu0 0
      %3243 = vmatprep.subr.bf16.mxu0 0
      %3244 = vmatpush1.bf16.msra.mxu0 0
      %3245 = vmatprep.subr.bf16.mxu0 0
      %3246 = vmatpush1.bf16.msra.mxu0 0
      %3247 = vmatprep.subr.bf16.mxu0 0
      %3248 = vmatpush1.bf16.msra.mxu0 0
      %3249 = vmatprep.subr.bf16.mxu0 0
      %3250 = vmatpush1.bf16.msra.mxu0 0
      %3251 = vmatprep.subr.bf16.mxu0 0
      %3252 = vmatpush1.bf16.msra.mxu0 0
      %3253 = vmatprep.subr.bf16.mxu0 0
      %3254 = vmatpush1.bf16.msra.mxu0 0
      %3255 = vmatprep.subr.bf16.mxu0 0
      %3256 = vmatpush1.bf16.msra.mxu0 0
      %3257 = vmatprep.subr.bf16.mxu0 0
      %3258 = vmatpush1.bf16.msra.mxu0 0
      %3259 = vmatprep.mubr.bf16.mxu0 0
      %3260 = vmatmul.mubr.bf16.gmra.mrb[0].mxu0 %v3222
      %v3261 = vpop.f32.mrb[0].mxu0
      %v3262 = vadd.f32 0.0, %v3261
      %v3263 = vpop.f32.mrb[0].mxu0
      %v3264 = vpop.f32.mrb[0].mxu0
      %v3265 = vpop.f32.mrb[0].mxu0
      %3266 = vdwg.mxu0
      %v3268 = vsel %vm2843, %v3025, 0
      %v3271 = vsel %vm3039, %v2079, 0
      %3273 = vmatprep.subr.bf16.mxu0 0
      %3274 = vmatpush1.bf16.msra.mxu0 %v3271
      %3275 = vmatprep.subr.bf16.mxu0 0
      %3276 = vmatpush1.bf16.msra.mxu0 0
      %3277 = vmatprep.subr.bf16.mxu0 0
      %3278 = vmatpush1.bf16.msra.mxu0 0
      %3279 = vmatprep.subr.bf16.mxu0 0
      %3280 = vmatpush1.bf16.msra.mxu0 0
      %3281 = vmatprep.subr.bf16.mxu0 0
      %3282 = vmatpush1.bf16.msra.mxu0 0
      %3283 = vmatprep.subr.bf16.mxu0 0
      %3284 = vmatpush1.bf16.msra.mxu0 0
      %3285 = vmatprep.subr.bf16.mxu0 0
      %3286 = vmatpush1.bf16.msra.mxu0 0
      %3287 = vmatprep.subr.bf16.mxu0 0
      %3288 = vmatpush1.bf16.msra.mxu0 0
      %3289 = vmatprep.subr.bf16.mxu0 0
      %3290 = vmatpush1.bf16.msra.mxu0 0
      %3291 = vmatprep.subr.bf16.mxu0 0
      %3292 = vmatpush1.bf16.msra.mxu0 0
      %3293 = vmatprep.subr.bf16.mxu0 0
      %3294 = vmatpush1.bf16.msra.mxu0 0
      %3295 = vmatprep.subr.bf16.mxu0 0
      %3296 = vmatpush1.bf16.msra.mxu0 0
      %3297 = vmatprep.subr.bf16.mxu0 0
      %3298 = vmatpush1.bf16.msra.mxu0 0
      %3299 = vmatprep.subr.bf16.mxu0 0
      %3300 = vmatpush1.bf16.msra.mxu0 0
      %3301 = vmatprep.subr.bf16.mxu0 0
      %3302 = vmatpush1.bf16.msra.mxu0 0
      %3303 = vmatprep.subr.bf16.mxu0 0
      %3304 = vmatpush1.bf16.msra.mxu0 0
      %3305 = vmatprep.mubr.bf16.mxu0 0
      %3306 = vmatmul.mubr.bf16.gmra.mrb[0].mxu0 %v3268
      %v3307 = vpop.f32.mrb[0].mxu0
      %v3308 = vadd.f32 0.0, %v3307
      %v3309 = vpop.f32.mrb[0].mxu0
      %v3310 = vpop.f32.mrb[0].mxu0
      %v3311 = vpop.f32.mrb[0].mxu0
      %3312 = vdwg.mxu0
      %v3314 = vsel %vm2843, %v3026, 0
      %v3317 = vsel %vm3039, %v2080, 0
      %3319 = vmatprep.subr.bf16.mxu0 0
      %3320 = vmatpush1.bf16.msra.mxu0 %v3317
      %3321 = vmatprep.subr.bf16.mxu0 0
      %3322 = vmatpush1.bf16.msra.mxu0 0
      %3323 = vmatprep.subr.bf16.mxu0 0
      %3324 = vmatpush1.bf16.msra.mxu0 0
      %3325 = vmatprep.subr.bf16.mxu0 0
      %3326 = vmatpush1.bf16.msra.mxu0 0
      %3327 = vmatprep.subr.bf16.mxu0 0
      %3328 = vmatpush1.bf16.msra.mxu0 0
      %3329 = vmatprep.subr.bf16.mxu0 0
      %3330 = vmatpush1.bf16.msra.mxu0 0
      %3331 = vmatprep.subr.bf16.mxu0 0
      %3332 = vmatpush1.bf16.msra.mxu0 0
      %3333 = vmatprep.subr.bf16.mxu0 0
      %3334 = vmatpush1.bf16.msra.mxu0 0
      %3335 = vmatprep.subr.bf16.mxu0 0
      %3336 = vmatpush1.bf16.msra.mxu0 0
      %3337 = vmatprep.subr.bf16.mxu0 0
      %3338 = vmatpush1.bf16.msra.mxu0 0
      %3339 = vmatprep.subr.bf16.mxu0 0
      %3340 = vmatpush1.bf16.msra.mxu0 0
      %3341 = vmatprep.subr.bf16.mxu0 0
      %3342 = vmatpush1.bf16.msra.mxu0 0
      %3343 = vmatprep.subr.bf16.mxu0 0
      %3344 = vmatpush1.bf16.msra.mxu0 0
      %3345 = vmatprep.subr.bf16.mxu0 0
      %3346 = vmatpush1.bf16.msra.mxu0 0
      %3347 = vmatprep.subr.bf16.mxu0 0
      %3348 = vmatpush1.bf16.msra.mxu0 0
      %3349 = vmatprep.subr.bf16.mxu0 0
      %3350 = vmatpush1.bf16.msra.mxu0 0
      %3351 = vmatprep.mubr.bf16.mxu0 0
      %3352 = vmatmul.mubr.bf16.gmra.mrb[0].mxu0 %v3314
      %v3353 = vpop.f32.mrb[0].mxu0
      %v3354 = vadd.f32 0.0, %v3353
      %v3355 = vpop.f32.mrb[0].mxu0
      %v3356 = vpop.f32.mrb[0].mxu0
      %v3357 = vpop.f32.mrb[0].mxu0
      %3358 = vdwg.mxu0
      %v3360 = vsel %vm2843, %v3027, 0
      %v3363 = vsel %vm3039, %v2081, 0
      %3365 = vmatprep.subr.bf16.mxu0 0
      %3366 = vmatpush1.bf16.msra.mxu0 %v3363
      %3367 = vmatprep.subr.bf16.mxu0 0
      %3368 = vmatpush1.bf16.msra.mxu0 0
      %3369 = vmatprep.subr.bf16.mxu0 0
      %3370 = vmatpush1.bf16.msra.mxu0 0
      %3371 = vmatprep.subr.bf16.mxu0 0
      %3372 = vmatpush1.bf16.msra.mxu0 0
      %3373 = vmatprep.subr.bf16.mxu0 0
      %3374 = vmatpush1.bf16.msra.mxu0 0
      %3375 = vmatprep.subr.bf16.mxu0 0
      %3376 = vmatpush1.bf16.msra.mxu0 0
      %3377 = vmatprep.subr.bf16.mxu0 0
      %3378 = vmatpush1.bf16.msra.mxu0 0
      %3379 = vmatprep.subr.bf16.mxu0 0
      %3380 = vmatpush1.bf16.msra.mxu0 0
      %3381 = vmatprep.subr.bf16.mxu0 0
      %3382 = vmatpush1.bf16.msra.mxu0 0
      %3383 = vmatprep.subr.bf16.mxu0 0
      %3384 = vmatpush1.bf16.msra.mxu0 0
      %3385 = vmatprep.subr.bf16.mxu0 0
      %3386 = vmatpush1.bf16.msra.mxu0 0
      %3387 = vmatprep.subr.bf16.mxu0 0
      %3388 = vmatpush1.bf16.msra.mxu0 0
      %3389 = vmatprep.subr.bf16.mxu0 0
      %3390 = vmatpush1.bf16.msra.mxu0 0
      %3391 = vmatprep.subr.bf16.mxu0 0
      %3392 = vmatpush1.bf16.msra.mxu0 0
      %3393 = vmatprep.subr.bf16.mxu0 0
      %3394 = vmatpush1.bf16.msra.mxu0 0
      %3395 = vmatprep.subr.bf16.mxu0 0
      %3396 = vmatpush1.bf16.msra.mxu0 0
      %3397 = vmatprep.mubr.bf16.mxu0 0
      %3398 = vmatmul.mubr.bf16.gmra.mrb[0].mxu0 %v3360
      %v3399 = vpop.f32.mrb[0].mxu0
      %v3400 = vadd.f32 0.0, %v3399
      %v3401 = vpop.f32.mrb[0].mxu0
      %v3402 = vpop.f32.mrb[0].mxu0
      %v3403 = vpop.f32.mrb[0].mxu0
      %3404 = vdwg.mxu0
      %v3406 = vsel %vm2843, %v3028, 0
      %v3409 = vsel %vm3039, %v2082, 0
      %3411 = vmatprep.subr.bf16.mxu0 0
      %3412 = vmatpush1.bf16.msra.mxu0 %v3409
      %3413 = vmatprep.subr.bf16.mxu0 0
      %3414 = vmatpush1.bf16.msra.mxu0 0
      %3415 = vmatprep.subr.bf16.mxu0 0
      %3416 = vmatpush1.bf16.msra.mxu0 0
      %3417 = vmatprep.subr.bf16.mxu0 0
      %3418 = vmatpush1.bf16.msra.mxu0 0
      %3419 = vmatprep.subr.bf16.mxu0 0
      %3420 = vmatpush1.bf16.msra.mxu0 0
      %3421 = vmatprep.subr.bf16.mxu0 0
      %3422 = vmatpush1.bf16.msra.mxu0 0
      %3423 = vmatprep.subr.bf16.mxu0 0
      %3424 = vmatpush1.bf16.msra.mxu0 0
      %3425 = vmatprep.subr.bf16.mxu0 0
      %3426 = vmatpush1.bf16.msra.mxu0 0
      %3427 = vmatprep.subr.bf16.mxu0 0
      %3428 = vmatpush1.bf16.msra.mxu0 0
      %3429 = vmatprep.subr.bf16.mxu0 0
      %3430 = vmatpush1.bf16.msra.mxu0 0
      %3431 = vmatprep.subr.bf16.mxu0 0
      %3432 = vmatpush1.bf16.msra.mxu0 0
      %3433 = vmatprep.subr.bf16.mxu0 0
      %3434 = vmatpush1.bf16.msra.mxu0 0
      %3435 = vmatprep.subr.bf16.mxu0 0
      %3436 = vmatpush1.bf16.msra.mxu0 0
      %3437 = vmatprep.subr.bf16.mxu0 0
      %3438 = vmatpush1.bf16.msra.mxu0 0
      %3439 = vmatprep.subr.bf16.mxu0 0
      %3440 = vmatpush1.bf16.msra.mxu0 0
      %3441 = vmatprep.subr.bf16.mxu0 0
      %3442 = vmatpush1.bf16.msra.mxu0 0
      %3443 = vmatprep.mubr.bf16.mxu0 0
      %3444 = vmatmul.mubr.bf16.gmra.mrb[0].mxu0 %v3406
      %v3445 = vpop.f32.mrb[0].mxu0
      %v3446 = vadd.f32 0.0, %v3445
      %v3447 = vpop.f32.mrb[0].mxu0
      %v3448 = vpop.f32.mrb[0].mxu0
      %v3449 = vpop.f32.mrb[0].mxu0
      %3450 = vdwg.mxu0
      %v3452 = vsel %vm2843, %v3029, 0
      %v3455 = vsel %vm3039, %v2083, 0
      %3457 = vmatprep.subr.bf16.mxu0 0
      %3458 = vmatpush1.bf16.msra.mxu0 %v3455
      %3459 = vmatprep.subr.bf16.mxu0 0
      %3460 = vmatpush1.bf16.msra.mxu0 0
      %3461 = vmatprep.subr.bf16.mxu0 0
      %3462 = vmatpush1.bf16.msra.mxu0 0
      %3463 = vmatprep.subr.bf16.mxu0 0
      %3464 = vmatpush1.bf16.msra.mxu0 0
      %3465 = vmatprep.subr.bf16.mxu0 0
      %3466 = vmatpush1.bf16.msra.mxu0 0
      %3467 = vmatprep.subr.bf16.mxu0 0
      %3468 = vmatpush1.bf16.msra.mxu0 0
      %3469 = vmatprep.subr.bf16.mxu0 0
      %3470 = vmatpush1.bf16.msra.mxu0 0
      %3471 = vmatprep.subr.bf16.mxu0 0
      %3472 = vmatpush1.bf16.msra.mxu0 0
      %3473 = vmatprep.subr.bf16.mxu0 0
      %3474 = vmatpush1.bf16.msra.mxu0 0
      %3475 = vmatprep.subr.bf16.mxu0 0
      %3476 = vmatpush1.bf16.msra.mxu0 0
      %3477 = vmatprep.subr.bf16.mxu0 0
      %3478 = vmatpush1.bf16.msra.mxu0 0
      %3479 = vmatprep.subr.bf16.mxu0 0
      %3480 = vmatpush1.bf16.msra.mxu0 0
      %3481 = vmatprep.subr.bf16.mxu0 0
      %3482 = vmatpush1.bf16.msra.mxu0 0
      %3483 = vmatprep.subr.bf16.mxu0 0
      %3484 = vmatpush1.bf16.msra.mxu0 0
      %3485 = vmatprep.subr.bf16.mxu0 0
      %3486 = vmatpush1.bf16.msra.mxu0 0
      %3487 = vmatprep.subr.bf16.mxu0 0
      %3488 = vmatpush1.bf16.msra.mxu0 0
      %3489 = vmatprep.mubr.bf16.mxu0 0
      %3490 = vmatmul.mubr.bf16.gmra.mrb[0].mxu0 %v3452
      %v3491 = vpop.f32.mrb[0].mxu0
      %v3492 = vadd.f32 0.0, %v3491
      %v3493 = vpop.f32.mrb[0].mxu0
      %v3494 = vpop.f32.mrb[0].mxu0
      %v3495 = vpop.f32.mrb[0].mxu0
      %3496 = vdwg.mxu0
      %v3498 = vsel %vm2843, %v3030, 0
      %v3501 = vsel %vm3039, %v2084, 0
      %3503 = vmatprep.subr.bf16.mxu0 0
      %3504 = vmatpush1.bf16.msra.mxu0 %v3501
      %3505 = vmatprep.subr.bf16.mxu0 0
      %3506 = vmatpush1.bf16.msra.mxu0 0
      %3507 = vmatprep.subr.bf16.mxu0 0
      %3508 = vmatpush1.bf16.msra.mxu0 0
      %3509 = vmatprep.subr.bf16.mxu0 0
      %3510 = vmatpush1.bf16.msra.mxu0 0
      %3511 = vmatprep.subr.bf16.mxu0 0
      %3512 = vmatpush1.bf16.msra.mxu0 0
      %3513 = vmatprep.subr.bf16.mxu0 0
      %3514 = vmatpush1.bf16.msra.mxu0 0
      %3515 = vmatprep.subr.bf16.mxu0 0
      %3516 = vmatpush1.bf16.msra.mxu0 0
      %3517 = vmatprep.subr.bf16.mxu0 0
      %3518 = vmatpush1.bf16.msra.mxu0 0
      %3519 = vmatprep.subr.bf16.mxu0 0
      %3520 = vmatpush1.bf16.msra.mxu0 0
      %3521 = vmatprep.subr.bf16.mxu0 0
      %3522 = vmatpush1.bf16.msra.mxu0 0
      %3523 = vmatprep.subr.bf16.mxu0 0
      %3524 = vmatpush1.bf16.msra.mxu0 0
      %3525 = vmatprep.subr.bf16.mxu0 0
      %3526 = vmatpush1.bf16.msra.mxu0 0
      %3527 = vmatprep.subr.bf16.mxu0 0
      %3528 = vmatpush1.bf16.msra.mxu0 0
      %3529 = vmatprep.subr.bf16.mxu0 0
      %3530 = vmatpush1.bf16.msra.mxu0 0
      %3531 = vmatprep.subr.bf16.mxu0 0
      %3532 = vmatpush1.bf16.msra.mxu0 0
      %3533 = vmatprep.subr.bf16.mxu0 0
      %3534 = vmatpush1.bf16.msra.mxu0 0
      %3535 = vmatprep.mubr.bf16.mxu0 0
      %3536 = vmatmul.mubr.bf16.gmra.mrb[0].mxu0 %v3498
      %v3537 = vpop.f32.mrb[0].mxu0
      %v3538 = vadd.f32 0.0, %v3537
      %v3539 = vpop.f32.mrb[0].mxu0
      %v3540 = vpop.f32.mrb[0].mxu0
      %v3541 = vpop.f32.mrb[0].mxu0
      %3542 = vdwg.mxu0
      %v3544 = vsel %vm2843, %v3031, 0
      %v3547 = vsel %vm3039, %v2085, 0
      %3549 = vmatprep.subr.bf16.mxu0 0
      %3550 = vmatpush1.bf16.msra.mxu0 %v3547
      %3551 = vmatprep.subr.bf16.mxu0 0
      %3552 = vmatpush1.bf16.msra.mxu0 0
      %3553 = vmatprep.subr.bf16.mxu0 0
      %3554 = vmatpush1.bf16.msra.mxu0 0
      %3555 = vmatprep.subr.bf16.mxu0 0
      %3556 = vmatpush1.bf16.msra.mxu0 0
      %3557 = vmatprep.subr.bf16.mxu0 0
      %3558 = vmatpush1.bf16.msra.mxu0 0
      %3559 = vmatprep.subr.bf16.mxu0 0
      %3560 = vmatpush1.bf16.msra.mxu0 0
      %3561 = vmatprep.subr.bf16.mxu0 0
      %3562 = vmatpush1.bf16.msra.mxu0 0
      %3563 = vmatprep.subr.bf16.mxu0 0
      %3564 = vmatpush1.bf16.msra.mxu0 0
      %3565 = vmatprep.subr.bf16.mxu0 0
      %3566 = vmatpush1.bf16.msra.mxu0 0
      %3567 = vmatprep.subr.bf16.mxu0 0
      %3568 = vmatpush1.bf16.msra.mxu0 0
      %3569 = vmatprep.subr.bf16.mxu0 0
      %3570 = vmatpush1.bf16.msra.mxu0 0
      %3571 = vmatprep.subr.bf16.mxu0 0
      %3572 = vmatpush1.bf16.msra.mxu0 0
      %3573 = vmatprep.subr.bf16.mxu0 0
      %3574 = vmatpush1.bf16.msra.mxu0 0
      %3575 = vmatprep.subr.bf16.mxu0 0
      %3576 = vmatpush1.bf16.msra.mxu0 0
      %3577 = vmatprep.subr.bf16.mxu0 0
      %3578 = vmatpush1.bf16.msra.mxu0 0
      %3579 = vmatprep.subr.bf16.mxu0 0
      %3580 = vmatpush1.bf16.msra.mxu0 0
      %3581 = vmatprep.mubr.bf16.mxu0 0
      %3582 = vmatmul.mubr.bf16.gmra.mrb[0].mxu0 %v3544
      %v3583 = vpop.f32.mrb[0].mxu0
      %v3584 = vadd.f32 0.0, %v3583
      %v3585 = vpop.f32.mrb[0].mxu0
      %v3586 = vpop.f32.mrb[0].mxu0
      %v3587 = vpop.f32.mrb[0].mxu0
      %3588 = vdwg.mxu0
      %v3590 = vsel %vm2843, %v3032, 0
      %v3593 = vsel %vm3039, %v2086, 0
      %3595 = vmatprep.subr.bf16.mxu0 0
      %3596 = vmatpush1.bf16.msra.mxu0 %v3593
      %3597 = vmatprep.subr.bf16.mxu0 0
      %3598 = vmatpush1.bf16.msra.mxu0 0
      %3599 = vmatprep.subr.bf16.mxu0 0
      %3600 = vmatpush1.bf16.msra.mxu0 0
      %3601 = vmatprep.subr.bf16.mxu0 0
      %3602 = vmatpush1.bf16.msra.mxu0 0
      %3603 = vmatprep.subr.bf16.mxu0 0
      %3604 = vmatpush1.bf16.msra.mxu0 0
      %3605 = vmatprep.subr.bf16.mxu0 0
      %3606 = vmatpush1.bf16.msra.mxu0 0
      %3607 = vmatprep.subr.bf16.mxu0 0
      %3608 = vmatpush1.bf16.msra.mxu0 0
      %3609 = vmatprep.subr.bf16.mxu0 0
      %3610 = vmatpush1.bf16.msra.mxu0 0
      %3611 = vmatprep.subr.bf16.mxu0 0
      %3612 = vmatpush1.bf16.msra.mxu0 0
      %3613 = vmatprep.subr.bf16.mxu0 0
      %3614 = vmatpush1.bf16.msra.mxu0 0
      %3615 = vmatprep.subr.bf16.mxu0 0
      %3616 = vmatpush1.bf16.msra.mxu0 0
      %3617 = vmatprep.subr.bf16.mxu0 0
      %3618 = vmatpush1.bf16.msra.mxu0 0
      %3619 = vmatprep.subr.bf16.mxu0 0
      %3620 = vmatpush1.bf16.msra.mxu0 0
      %3621 = vmatprep.subr.bf16.mxu0 0
      %3622 = vmatpush1.bf16.msra.mxu0 0
      %3623 = vmatprep.subr.bf16.mxu0 0
      %3624 = vmatpush1.bf16.msra.mxu0 0
      %3625 = vmatprep.subr.bf16.mxu0 0
      %3626 = vmatpush1.bf16.msra.mxu0 0
      %3627 = vmatprep.mubr.bf16.mxu0 0
      %3628 = vmatmul.mubr.bf16.gmra.mrb[0].mxu0 %v3590
      %v3629 = vpop.f32.mrb[0].mxu0
      %v3630 = vadd.f32 0.0, %v3629
      %v3631 = vpop.f32.mrb[0].mxu0
      %v3632 = vpop.f32.mrb[0].mxu0
      %v3633 = vpop.f32.mrb[0].mxu0
      %3634 = vdwg.mxu0
      %v3636 = vsel %vm2843, %v3033, 0
      %v3639 = vsel %vm3039, %v2087, 0
      %3641 = vmatprep.subr.bf16.mxu0 0
      %3642 = vmatpush1.bf16.msra.mxu0 %v3639
      %3643 = vmatprep.subr.bf16.mxu0 0
      %3644 = vmatpush1.bf16.msra.mxu0 0
      %3645 = vmatprep.subr.bf16.mxu0 0
      %3646 = vmatpush1.bf16.msra.mxu0 0
      %3647 = vmatprep.subr.bf16.mxu0 0
      %3648 = vmatpush1.bf16.msra.mxu0 0
      %3649 = vmatprep.subr.bf16.mxu0 0
      %3650 = vmatpush1.bf16.msra.mxu0 0
      %3651 = vmatprep.subr.bf16.mxu0 0
      %3652 = vmatpush1.bf16.msra.mxu0 0
      %3653 = vmatprep.subr.bf16.mxu0 0
      %3654 = vmatpush1.bf16.msra.mxu0 0
      %3655 = vmatprep.subr.bf16.mxu0 0
      %3656 = vmatpush1.bf16.msra.mxu0 0
      %3657 = vmatprep.subr.bf16.mxu0 0
      %3658 = vmatpush1.bf16.msra.mxu0 0
      %3659 = vmatprep.subr.bf16.mxu0 0
      %3660 = vmatpush1.bf16.msra.mxu0 0
      %3661 = vmatprep.subr.bf16.mxu0 0
      %3662 = vmatpush1.bf16.msra.mxu0 0
      %3663 = vmatprep.subr.bf16.mxu0 0
      %3664 = vmatpush1.bf16.msra.mxu0 0
      %3665 = vmatprep.subr.bf16.mxu0 0
      %3666 = vmatpush1.bf16.msra.mxu0 0
      %3667 = vmatprep.subr.bf16.mxu0 0
      %3668 = vmatpush1.bf16.msra.mxu0 0
      %3669 = vmatprep.subr.bf16.mxu0 0
      %3670 = vmatpush1.bf16.msra.mxu0 0
      %3671 = vmatprep.subr.bf16.mxu0 0
      %3672 = vmatpush1.bf16.msra.mxu0 0
      %3673 = vmatprep.mubr.bf16.mxu0 0
      %3674 = vmatmul.mubr.bf16.gmra.mrb[0].mxu0 %v3636
      %v3675 = vpop.f32.mrb[0].mxu0
      %v3676 = vadd.f32 0.0, %v3675
      %v3677 = vpop.f32.mrb[0].mxu0
      %v3678 = vpop.f32.mrb[0].mxu0
      %v3679 = vpop.f32.mrb[0].mxu0
      %3680 = vdwg.mxu0
      %v3682 = vsel %vm2843, %v3034, 0
      %v3685 = vsel %vm3039, %v2088, 0
      %3687 = vmatprep.subr.bf16.mxu0 0
      %3688 = vmatpush1.bf16.msra.mxu0 %v3685
      %3689 = vmatprep.subr.bf16.mxu0 0
      %3690 = vmatpush1.bf16.msra.mxu0 0
      %3691 = vmatprep.subr.bf16.mxu0 0
      %3692 = vmatpush1.bf16.msra.mxu0 0
      %3693 = vmatprep.subr.bf16.mxu0 0
      %3694 = vmatpush1.bf16.msra.mxu0 0
      %3695 = vmatprep.subr.bf16.mxu0 0
      %3696 = vmatpush1.bf16.msra.mxu0 0
      %3697 = vmatprep.subr.bf16.mxu0 0
      %3698 = vmatpush1.bf16.msra.mxu0 0
      %3699 = vmatprep.subr.bf16.mxu0 0
      %3700 = vmatpush1.bf16.msra.mxu0 0
      %3701 = vmatprep.subr.bf16.mxu0 0
      %3702 = vmatpush1.bf16.msra.mxu0 0
      %3703 = vmatprep.subr.bf16.mxu0 0
      %3704 = vmatpush1.bf16.msra.mxu0 0
      %3705 = vmatprep.subr.bf16.mxu0 0
      %3706 = vmatpush1.bf16.msra.mxu0 0
      %3707 = vmatprep.subr.bf16.mxu0 0
      %3708 = vmatpush1.bf16.msra.mxu0 0
      %3709 = vmatprep.subr.bf16.mxu0 0
      %3710 = vmatpush1.bf16.msra.mxu0 0
      %3711 = vmatprep.subr.bf16.mxu0 0
      %3712 = vmatpush1.bf16.msra.mxu0 0
      %3713 = vmatprep.subr.bf16.mxu0 0
      %3714 = vmatpush1.bf16.msra.mxu0 0
      %3715 = vmatprep.subr.bf16.mxu0 0
      %3716 = vmatpush1.bf16.msra.mxu0 0
      %3717 = vmatprep.subr.bf16.mxu0 0
      %3718 = vmatpush1.bf16.msra.mxu0 0
      %3719 = vmatprep.mubr.bf16.mxu0 0
      %3720 = vmatmul.mubr.bf16.gmra.mrb[0].mxu0 %v3682
      %v3721 = vpop.f32.mrb[0].mxu0
      %v3722 = vadd.f32 0.0, %v3721
      %v3723 = vpop.f32.mrb[0].mxu0
      %v3724 = vpop.f32.mrb[0].mxu0
      %v3725 = vpop.f32.mrb[0].mxu0
      %3726 = vdwg.mxu0
      %v3728 = vsel %vm2843, %v3035, 0
      %v3731 = vsel %vm3039, %v2089, 0
      %3733 = vmatprep.subr.bf16.mxu0 0
      %3734 = vmatpush1.bf16.msra.mxu0 %v3731
      %3735 = vmatprep.subr.bf16.mxu0 0
      %3736 = vmatpush1.bf16.msra.mxu0 0
      %3737 = vmatprep.subr.bf16.mxu0 0
      %3738 = vmatpush1.bf16.msra.mxu0 0
      %3739 = vmatprep.subr.bf16.mxu0 0
      %3740 = vmatpush1.bf16.msra.mxu0 0
      %3741 = vmatprep.subr.bf16.mxu0 0
      %3742 = vmatpush1.bf16.msra.mxu0 0
      %3743 = vmatprep.subr.bf16.mxu0 0
      %3744 = vmatpush1.bf16.msra.mxu0 0
      %3745 = vmatprep.subr.bf16.mxu0 0
      %3746 = vmatpush1.bf16.msra.mxu0 0
      %3747 = vmatprep.subr.bf16.mxu0 0
      %3748 = vmatpush1.bf16.msra.mxu0 0
      %3749 = vmatprep.subr.bf16.mxu0 0
      %3750 = vmatpush1.bf16.msra.mxu0 0
      %3751 = vmatprep.subr.bf16.mxu0 0
      %3752 = vmatpush1.bf16.msra.mxu0 0
      %3753 = vmatprep.subr.bf16.mxu0 0
      %3754 = vmatpush1.bf16.msra.mxu0 0
      %3755 = vmatprep.subr.bf16.mxu0 0
      %3756 = vmatpush1.bf16.msra.mxu0 0
      %3757 = vmatprep.subr.bf16.mxu0 0
      %3758 = vmatpush1.bf16.msra.mxu0 0
      %3759 = vmatprep.subr.bf16.mxu0 0
      %3760 = vmatpush1.bf16.msra.mxu0 0
      %3761 = vmatprep.subr.bf16.mxu0 0
      %3762 = vmatpush1.bf16.msra.mxu0 0
      %3763 = vmatprep.subr.bf16.mxu0 0
      %3764 = vmatpush1.bf16.msra.mxu0 0
      %3765 = vmatprep.mubr.bf16.mxu0 0
      %3766 = vmatmul.mubr.bf16.gmra.mrb[0].mxu0 %v3728
      %v3767 = vpop.f32.mrb[0].mxu0
      %v3768 = vadd.f32 0.0, %v3767
      %v3769 = vpop.f32.mrb[0].mxu0
      %v3770 = vpop.f32.mrb[0].mxu0
      %v3771 = vpop.f32.mrb[0].mxu0
      %3772 = vdwg.mxu0
      %3773 = vxpose.xlu0.b32.start [1/16] %v3078, 128
      %3774 = vxpose.xlu0.b32.cont [2/16] %v3124, 128
      %3775 = vxpose.xlu0.b32.cont [3/16] 0.0, 128
      %3776 = vxpose.xlu0.b32.cont [4/16] 0.0, 128
      %3777 = vxpose.xlu0.b32.cont [5/16] 0.0, 128
      %3778 = vxpose.xlu0.b32.cont [6/16] 0.0, 128
      %3779 = vxpose.xlu0.b32.cont [7/16] 0.0, 128
      %3780 = vxpose.xlu0.b32.cont [8/16] 0.0, 128
      %3781 = vxpose.xlu0.b32.cont [9/16] 0.0, 128
      %3782 = vxpose.xlu0.b32.cont [10/16] 0.0, 128
      %3783 = vxpose.xlu0.b32.cont [11/16] 0.0, 128
      %3784 = vxpose.xlu0.b32.cont [12/16] 0.0, 128
      %3785 = vxpose.xlu0.b32.cont [13/16] 0.0, 128
      %3786 = vxpose.xlu0.b32.cont [14/16] 0.0, 128
      %3787 = vxpose.xlu0.b32.cont [15/16] 0.0, 128
      %3788 = vxpose.xlu0.b32.end [16/16] 0.0, 128
      %v3789 = vpop.trf.xlu0
      %v3790 = vpop.trf.xlu0
      %v3791 = vpop.trf.xlu0
      %v3792 = vpop.trf.xlu0
      %v3793 = vpop.trf.xlu0
      %v3794 = vpop.trf.xlu0
      %v3795 = vpop.trf.xlu0
      %v3796 = vpop.trf.xlu0
      %v3797 = vpop.trf.xlu0
      %v3798 = vpop.trf.xlu0
      %v3799 = vpop.trf.xlu0
      %v3800 = vpop.trf.xlu0
      %v3801 = vpop.trf.xlu0
      %v3802 = vpop.trf.xlu0
      %v3803 = vpop.trf.xlu0
      %v3804 = vpop.trf.xlu0
      %3805 = vxpose.xlu0.b32.start [1/16] %v3170, 128
      %3806 = vxpose.xlu0.b32.cont [2/16] %v3216, 128
      %3807 = vxpose.xlu0.b32.cont [3/16] 0.0, 128
      %3808 = vxpose.xlu0.b32.cont [4/16] 0.0, 128
      %3809 = vxpose.xlu0.b32.cont [5/16] 0.0, 128
      %3810 = vxpose.xlu0.b32.cont [6/16] 0.0, 128
      %3811 = vxpose.xlu0.b32.cont [7/16] 0.0, 128
      %3812 = vxpose.xlu0.b32.cont [8/16] 0.0, 128
      %3813 = vxpose.xlu0.b32.cont [9/16] 0.0, 128
      %3814 = vxpose.xlu0.b32.cont [10/16] 0.0, 128
      %3815 = vxpose.xlu0.b32.cont [11/16] 0.0, 128
      %3816 = vxpose.xlu0.b32.cont [12/16] 0.0, 128
      %3817 = vxpose.xlu0.b32.cont [13/16] 0.0, 128
      %3818 = vxpose.xlu0.b32.cont [14/16] 0.0, 128
      %3819 = vxpose.xlu0.b32.cont [15/16] 0.0, 128
      %3820 = vxpose.xlu0.b32.end [16/16] 0.0, 128
      %v3821 = vpop.trf.xlu0
      %v3822 = vpop.trf.xlu0
      %v3823 = vpop.trf.xlu0
      %v3824 = vpop.trf.xlu0
      %v3825 = vpop.trf.xlu0
      %v3826 = vpop.trf.xlu0
      %v3827 = vpop.trf.xlu0
      %v3828 = vpop.trf.xlu0
      %v3829 = vpop.trf.xlu0
      %v3830 = vpop.trf.xlu0
      %v3831 = vpop.trf.xlu0
      %v3832 = vpop.trf.xlu0
      %v3833 = vpop.trf.xlu0
      %v3834 = vpop.trf.xlu0
      %v3835 = vpop.trf.xlu0
      %v3836 = vpop.trf.xlu0
      %3837 = vxpose.xlu0.b32.start [1/16] %v3262, 128
      %3838 = vxpose.xlu0.b32.cont [2/16] %v3308, 128
      %3839 = vxpose.xlu0.b32.cont [3/16] 0.0, 128
      %3840 = vxpose.xlu0.b32.cont [4/16] 0.0, 128
      %3841 = vxpose.xlu0.b32.cont [5/16] 0.0, 128
      %3842 = vxpose.xlu0.b32.cont [6/16] 0.0, 128
      %3843 = vxpose.xlu0.b32.cont [7/16] 0.0, 128
      %3844 = vxpose.xlu0.b32.cont [8/16] 0.0, 128
      %3845 = vxpose.xlu0.b32.cont [9/16] 0.0, 128
      %3846 = vxpose.xlu0.b32.cont [10/16] 0.0, 128
      %3847 = vxpose.xlu0.b32.cont [11/16] 0.0, 128
      %3848 = vxpose.xlu0.b32.cont [12/16] 0.0, 128
      %3849 = vxpose.xlu0.b32.cont [13/16] 0.0, 128
      %3850 = vxpose.xlu0.b32.cont [14/16] 0.0, 128
      %3851 = vxpose.xlu0.b32.cont [15/16] 0.0, 128
      %3852 = vxpose.xlu0.b32.end [16/16] 0.0, 128
      %v3853 = vpop.trf.xlu0
      %v3854 = vpop.trf.xlu0
      %v3855 = vpop.trf.xlu0
      %v3856 = vpop.trf.xlu0
      %v3857 = vpop.trf.xlu0
      %v3858 = vpop.trf.xlu0
      %v3859 = vpop.trf.xlu0
      %v3860 = vpop.trf.xlu0
      %v3861 = vpop.trf.xlu0
      %v3862 = vpop.trf.xlu0
      %v3863 = vpop.trf.xlu0
      %v3864 = vpop.trf.xlu0
      %v3865 = vpop.trf.xlu0
      %v3866 = vpop.trf.xlu0
      %v3867 = vpop.trf.xlu0
      %v3868 = vpop.trf.xlu0
      %3869 = vxpose.xlu0.b32.start [1/16] %v3354, 128
      %3870 = vxpose.xlu0.b32.cont [2/16] %v3400, 128
      %3871 = vxpose.xlu0.b32.cont [3/16] 0.0, 128
      %3872 = vxpose.xlu0.b32.cont [4/16] 0.0, 128
      %3873 = vxpose.xlu0.b32.cont [5/16] 0.0, 128
      %3874 = vxpose.xlu0.b32.cont [6/16] 0.0, 128
      %3875 = vxpose.xlu0.b32.cont [7/16] 0.0, 128
      %3876 = vxpose.xlu0.b32.cont [8/16] 0.0, 128
      %3877 = vxpose.xlu0.b32.cont [9/16] 0.0, 128
      %3878 = vxpose.xlu0.b32.cont [10/16] 0.0, 128
      %3879 = vxpose.xlu0.b32.cont [11/16] 0.0, 128
      %3880 = vxpose.xlu0.b32.cont [12/16] 0.0, 128
      %3881 = vxpose.xlu0.b32.cont [13/16] 0.0, 128
      %3882 = vxpose.xlu0.b32.cont [14/16] 0.0, 128
      %3883 = vxpose.xlu0.b32.cont [15/16] 0.0, 128
      %3884 = vxpose.xlu0.b32.end [16/16] 0.0, 128
      %v3885 = vpop.trf.xlu0
      %v3886 = vpop.trf.xlu0
      %v3887 = vpop.trf.xlu0
      %v3888 = vpop.trf.xlu0
      %v3889 = vpop.trf.xlu0
      %v3890 = vpop.trf.xlu0
      %v3891 = vpop.trf.xlu0
      %v3892 = vpop.trf.xlu0
      %v3893 = vpop.trf.xlu0
      %v3894 = vpop.trf.xlu0
      %v3895 = vpop.trf.xlu0
      %v3896 = vpop.trf.xlu0
      %v3897 = vpop.trf.xlu0
      %v3898 = vpop.trf.xlu0
      %v3899 = vpop.trf.xlu0
      %v3900 = vpop.trf.xlu0
      %3901 = vxpose.xlu0.b32.start [1/16] %v3446, 128
      %3902 = vxpose.xlu0.b32.cont [2/16] %v3492, 128
      %3903 = vxpose.xlu0.b32.cont [3/16] 0.0, 128
      %3904 = vxpose.xlu0.b32.cont [4/16] 0.0, 128
      %3905 = vxpose.xlu0.b32.cont [5/16] 0.0, 128
      %3906 = vxpose.xlu0.b32.cont [6/16] 0.0, 128
      %3907 = vxpose.xlu0.b32.cont [7/16] 0.0, 128
      %3908 = vxpose.xlu0.b32.cont [8/16] 0.0, 128
      %3909 = vxpose.xlu0.b32.cont [9/16] 0.0, 128
      %3910 = vxpose.xlu0.b32.cont [10/16] 0.0, 128
      %3911 = vxpose.xlu0.b32.cont [11/16] 0.0, 128
      %3912 = vxpose.xlu0.b32.cont [12/16] 0.0, 128
      %3913 = vxpose.xlu0.b32.cont [13/16] 0.0, 128
      %3914 = vxpose.xlu0.b32.cont [14/16] 0.0, 128
      %3915 = vxpose.xlu0.b32.cont [15/16] 0.0, 128
      %3916 = vxpose.xlu0.b32.end [16/16] 0.0, 128
      %v3917 = vpop.trf.xlu0
      %v3918 = vpop.trf.xlu0
      %v3919 = vpop.trf.xlu0
      %v3920 = vpop.trf.xlu0
      %v3921 = vpop.trf.xlu0
      %v3922 = vpop.trf.xlu0
      %v3923 = vpop.trf.xlu0
      %v3924 = vpop.trf.xlu0
      %v3925 = vpop.trf.xlu0
      %v3926 = vpop.trf.xlu0
      %v3927 = vpop.trf.xlu0
      %v3928 = vpop.trf.xlu0
      %v3929 = vpop.trf.xlu0
      %v3930 = vpop.trf.xlu0
      %v3931 = vpop.trf.xlu0
      %v3932 = vpop.trf.xlu0
      %3933 = vxpose.xlu0.b32.start [1/16] %v3538, 128
      %3934 = vxpose.xlu0.b32.cont [2/16] %v3584, 128
      %3935 = vxpose.xlu0.b32.cont [3/16] 0.0, 128
      %3936 = vxpose.xlu0.b32.cont [4/16] 0.0, 128
      %3937 = vxpose.xlu0.b32.cont [5/16] 0.0, 128
      %3938 = vxpose.xlu0.b32.cont [6/16] 0.0, 128
      %3939 = vxpose.xlu0.b32.cont [7/16] 0.0, 128
      %3940 = vxpose.xlu0.b32.cont [8/16] 0.0, 128
      %3941 = vxpose.xlu0.b32.cont [9/16] 0.0, 128
      %3942 = vxpose.xlu0.b32.cont [10/16] 0.0, 128
      %3943 = vxpose.xlu0.b32.cont [11/16] 0.0, 128
      %3944 = vxpose.xlu0.b32.cont [12/16] 0.0, 128
      %3945 = vxpose.xlu0.b32.cont [13/16] 0.0, 128
      %3946 = vxpose.xlu0.b32.cont [14/16] 0.0, 128
      %3947 = vxpose.xlu0.b32.cont [15/16] 0.0, 128
      %3948 = vxpose.xlu0.b32.end [16/16] 0.0, 128
      %v3949 = vpop.trf.xlu0
      %v3950 = vpop.trf.xlu0
      %v3951 = vpop.trf.xlu0
      %v3952 = vpop.trf.xlu0
      %v3953 = vpop.trf.xlu0
      %v3954 = vpop.trf.xlu0
      %v3955 = vpop.trf.xlu0
      %v3956 = vpop.trf.xlu0
      %v3957 = vpop.trf.xlu0
      %v3958 = vpop.trf.xlu0
      %v3959 = vpop.trf.xlu0
      %v3960 = vpop.trf.xlu0
      %v3961 = vpop.trf.xlu0
      %v3962 = vpop.trf.xlu0
      %v3963 = vpop.trf.xlu0
      %v3964 = vpop.trf.xlu0
      %3965 = vxpose.xlu0.b32.start [1/16] %v3630, 128
      %3966 = vxpose.xlu0.b32.cont [2/16] %v3676, 128
      %3967 = vxpose.xlu0.b32.cont [3/16] 0.0, 128
      %3968 = vxpose.xlu0.b32.cont [4/16] 0.0, 128
      %3969 = vxpose.xlu0.b32.cont [5/16] 0.0, 128
      %3970 = vxpose.xlu0.b32.cont [6/16] 0.0, 128
      %3971 = vxpose.xlu0.b32.cont [7/16] 0.0, 128
      %3972 = vxpose.xlu0.b32.cont [8/16] 0.0, 128
      %3973 = vxpose.xlu0.b32.cont [9/16] 0.0, 128
      %3974 = vxpose.xlu0.b32.cont [10/16] 0.0, 128
      %3975 = vxpose.xlu0.b32.cont [11/16] 0.0, 128
      %3976 = vxpose.xlu0.b32.cont [12/16] 0.0, 128
      %3977 = vxpose.xlu0.b32.cont [13/16] 0.0, 128
      %3978 = vxpose.xlu0.b32.cont [14/16] 0.0, 128
      %3979 = vxpose.xlu0.b32.cont [15/16] 0.0, 128
      %3980 = vxpose.xlu0.b32.end [16/16] 0.0, 128
      %v3981 = vpop.trf.xlu0
      %v3982 = vpop.trf.xlu0
      %v3983 = vpop.trf.xlu0
      %v3984 = vpop.trf.xlu0
      %v3985 = vpop.trf.xlu0
      %v3986 = vpop.trf.xlu0
      %v3987 = vpop.trf.xlu0
      %v3988 = vpop.trf.xlu0
      %v3989 = vpop.trf.xlu0
      %v3990 = vpop.trf.xlu0
      %v3991 = vpop.trf.xlu0
      %v3992 = vpop.trf.xlu0
      %v3993 = vpop.trf.xlu0
      %v3994 = vpop.trf.xlu0
      %v3995 = vpop.trf.xlu0
      %v3996 = vpop.trf.xlu0
      %3997 = vxpose.xlu0.b32.start [1/16] %v3722, 128
      %3998 = vxpose.xlu0.b32.cont [2/16] %v3768, 128
      %3999 = vxpose.xlu0.b32.cont [3/16] 0.0, 128
      %4000 = vxpose.xlu0.b32.cont [4/16] 0.0, 128
      %4001 = vxpose.xlu0.b32.cont [5/16] 0.0, 128
      %4002 = vxpose.xlu0.b32.cont [6/16] 0.0, 128
      %4003 = vxpose.xlu0.b32.cont [7/16] 0.0, 128
      %4004 = vxpose.xlu0.b32.cont [8/16] 0.0, 128
      %4005 = vxpose.xlu0.b32.cont [9/16] 0.0, 128
      %4006 = vxpose.xlu0.b32.cont [10/16] 0.0, 128
      %4007 = vxpose.xlu0.b32.cont [11/16] 0.0, 128
      %4008 = vxpose.xlu0.b32.cont [12/16] 0.0, 128
      %4009 = vxpose.xlu0.b32.cont [13/16] 0.0, 128
      %4010 = vxpose.xlu0.b32.cont [14/16] 0.0, 128
      %4011 = vxpose.xlu0.b32.cont [15/16] 0.0, 128
      %4012 = vxpose.xlu0.b32.end [16/16] 0.0, 128
      %v4013 = vpop.trf.xlu0
      %v4014 = vpop.trf.xlu0
      %v4015 = vpop.trf.xlu0
      %v4016 = vpop.trf.xlu0
      %v4017 = vpop.trf.xlu0
      %v4018 = vpop.trf.xlu0
      %v4019 = vpop.trf.xlu0
      %v4020 = vpop.trf.xlu0
      %v4021 = vpop.trf.xlu0
      %v4022 = vpop.trf.xlu0
      %v4023 = vpop.trf.xlu0
      %v4024 = vpop.trf.xlu0
      %v4025 = vpop.trf.xlu0
      %v4026 = vpop.trf.xlu0
      %v4027 = vpop.trf.xlu0
      %v4028 = vpop.trf.xlu0
      %v4029 = vld [vmem:[%s742] sm:$0xf]
      %v4030 = vld [vmem:[%s742 + $0x4] sm:$0xf]
      %v4031 = vld [vmem:[%s742 + $0x8] sm:$0xf]
      %v4032 = vld [vmem:[%s742 + $0xc] sm:$0xf]
      %v4033 = vld [vmem:[%s742 + $0x10] sm:$0xf]
      %v4034 = vld [vmem:[%s742 + $0x14] sm:$0xf]
      %v4035 = vld [vmem:[%s742 + $0x18] sm:$0xf]
      %v4036 = vld [vmem:[%s742 + $0x1c] sm:$0xf]
      %v4037 = vld [vmem:[%s742 + $0x20] sm:$0xf]
      %v4038 = vld [vmem:[%s742 + $0x24] sm:$0xf]
      %v4039 = vld [vmem:[%s742 + $0x28] sm:$0xf]
      %v4040 = vld [vmem:[%s742 + $0x2c] sm:$0xf]
      %v4041 = vld [vmem:[%s742 + $0x30] sm:$0xf]
      %v4042 = vld [vmem:[%s742 + $0x34] sm:$0xf]
      %v4043 = vld [vmem:[%s742 + $0x38] sm:$0xf]
      %v4044 = vld [vmem:[%s742 + $0x3c] sm:$0xf]
      %v4045 = vpack.c.bf16 %v3790, %v3789
      %v4046 = vpack.c.bf16 %v3822, %v3821
      %v4047 = vpack.c.bf16 %v3854, %v3853
      %v4048 = vpack.c.bf16 %v3886, %v3885
      %v4049 = vpack.c.bf16 %v3918, %v3917
      %v4050 = vpack.c.bf16 %v3950, %v3949
      %v4051 = vpack.c.bf16 %v3982, %v3981
      %v4052 = vpack.c.bf16 %v4014, %v4013
      %v4053 = vld [vmem:[%s747] sm:$0xff]
      %v4054 = vld [vmem:[%s747 + $0x8] sm:$0xff]
      %v4055 = vld [vmem:[%s747 + $0x10] sm:$0xff]
      %v4056 = vld [vmem:[%s747 + $0x18] sm:$0xff]
      %v4057 = vld [vmem:[%s747 + $0x20] sm:$0xff]
      %v4058 = vld [vmem:[%s747 + $0x28] sm:$0xff]
      %v4059 = vld [vmem:[%s747 + $0x30] sm:$0xff]
      %v4060 = vld [vmem:[%s747 + $0x38] sm:$0xff]
      %v4061 = vld [vmem:[%s747 + $0x40] sm:$0xff]
      %v4062 = vld [vmem:[%s747 + $0x48] sm:$0xff]
      %v4063 = vld [vmem:[%s747 + $0x50] sm:$0xff]
      %v4064 = vld [vmem:[%s747 + $0x58] sm:$0xff]
      %v4065 = vld [vmem:[%s747 + $0x60] sm:$0xff]
      %v4066 = vld [vmem:[%s747 + $0x68] sm:$0xff]
      %v4067 = vld [vmem:[%s747 + $0x70] sm:$0xff]
      %v4068 = vld [vmem:[%s747 + $0x78] sm:$0xff]
      %4070 = vset.pattern.permute.xlu0 0
      %4071 = vperm.xlu0 %4070, %v4053
      %v4072 = vpop.permute.xlu0 %4071
      %4075 = vset.pattern.permute.xlu0 0
      %4076 = vperm.xlu0 %4075, %v4054
      %v4077 = vpop.permute.xlu0 %4076
      %4080 = vset.pattern.permute.xlu0 0
      %4081 = vperm.xlu0 %4080, %v4055
      %v4082 = vpop.permute.xlu0 %4081
      %4085 = vset.pattern.permute.xlu0 0
      %4086 = vperm.xlu0 %4085, %v4056
      %v4087 = vpop.permute.xlu0 %4086
      %4090 = vset.pattern.permute.xlu0 0
      %4091 = vperm.xlu0 %4090, %v4057
      %v4092 = vpop.permute.xlu0 %4091
      %4095 = vset.pattern.permute.xlu0 0
      %4096 = vperm.xlu0 %4095, %v4058
      %v4097 = vpop.permute.xlu0 %4096
      %4100 = vset.pattern.permute.xlu0 0
      %4101 = vperm.xlu0 %4100, %v4059
      %v4102 = vpop.permute.xlu0 %4101
      %4105 = vset.pattern.permute.xlu0 0
      %4106 = vperm.xlu0 %4105, %v4060
      %v4107 = vpop.permute.xlu0 %4106
      %4110 = vset.pattern.permute.xlu0 0
      %4111 = vperm.xlu0 %4110, %v4061
      %v4112 = vpop.permute.xlu0 %4111
      %4115 = vset.pattern.permute.xlu0 0
      %4116 = vperm.xlu0 %4115, %v4062
      %v4117 = vpop.permute.xlu0 %4116
      %4120 = vset.pattern.permute.xlu0 0
      %4121 = vperm.xlu0 %4120, %v4063
      %v4122 = vpop.permute.xlu0 %4121
      %4125 = vset.pattern.permute.xlu0 0
      %4126 = vperm.xlu0 %4125, %v4064
      %v4127 = vpop.permute.xlu0 %4126
      %4130 = vset.pattern.permute.xlu0 0
      %4131 = vperm.xlu0 %4130, %v4065
      %v4132 = vpop.permute.xlu0 %4131
      %4135 = vset.pattern.permute.xlu0 0
      %4136 = vperm.xlu0 %4135, %v4066
      %v4137 = vpop.permute.xlu0 %4136
      %4140 = vset.pattern.permute.xlu0 0
      %4141 = vperm.xlu0 %4140, %v4067
      %v4142 = vpop.permute.xlu0 %4141
      %4145 = vset.pattern.permute.xlu0 0
      %4146 = vperm.xlu0 %4145, %v4068
      %v4147 = vpop.permute.xlu0 %4146
      %v4165 = vunpack.c.l.b16 %v4029
      %v4166 = vunpack.c.l.b16 %v4030
      %v4167 = vunpack.c.l.b16 %v4031
      %v4168 = vunpack.c.l.b16 %v4032
      %v4169 = vunpack.c.l.b16 %v4033
      %v4170 = vunpack.c.l.b16 %v4034
      %v4171 = vunpack.c.l.b16 %v4035
      %v4172 = vunpack.c.l.b16 %v4036
      %v4173 = vunpack.c.l.b16 %v4037
      %v4174 = vunpack.c.l.b16 %v4038
      %v4175 = vunpack.c.l.b16 %v4039
      %v4176 = vunpack.c.l.b16 %v4040
      %v4177 = vunpack.c.l.b16 %v4041
      %v4178 = vunpack.c.l.b16 %v4042
      %v4179 = vunpack.c.l.b16 %v4043
      %v4180 = vunpack.c.l.b16 %v4044
      %v4181 = vpack.c.b16 %v4166, %v4165
      %v4182 = vpack.c.b16 %v4168, %v4167
      %v4183 = vpack.c.b16 %v4170, %v4169
      %v4184 = vpack.c.b16 %v4172, %v4171
      %v4185 = vpack.c.b16 %v4174, %v4173
      %v4186 = vpack.c.b16 %v4176, %v4175
      %v4187 = vpack.c.b16 %v4178, %v4177
      %v4188 = vpack.c.b16 %v4180, %v4179
      %4197 = vmatprep.subr.bf16.mxu0 0
      %4198 = vmatpush1.bf16.msra.mxu0 %v4045
      %4199 = vmatprep.subr.bf16.mxu0 0
      %4200 = vmatpush1.bf16.msra.mxu0 %v4046
      %4201 = vmatprep.subr.bf16.mxu0 0
      %4202 = vmatpush1.bf16.msra.mxu0 %v4047
      %4203 = vmatprep.subr.bf16.mxu0 0
      %4204 = vmatpush1.bf16.msra.mxu0 %v4048
      %4205 = vmatprep.subr.bf16.mxu0 0
      %4206 = vmatpush1.bf16.msra.mxu0 %v4049
      %4207 = vmatprep.subr.bf16.mxu0 0
      %4208 = vmatpush1.bf16.msra.mxu0 %v4050
      %4209 = vmatprep.subr.bf16.mxu0 0
      %4210 = vmatpush1.bf16.msra.mxu0 %v4051
      %4211 = vmatprep.subr.bf16.mxu0 0
      %4212 = vmatpush1.bf16.msra.mxu0 %v4052
      %4213 = vmatprep.subr.bf16.mxu0 0
      %4214 = vmatpush1.bf16.msra.mxu0 0
      %4215 = vmatprep.subr.bf16.mxu0 0
      %4216 = vmatpush1.bf16.msra.mxu0 0
      %4217 = vmatprep.subr.bf16.mxu0 0
      %4218 = vmatpush1.bf16.msra.mxu0 0
      %4219 = vmatprep.subr.bf16.mxu0 0
      %4220 = vmatpush1.bf16.msra.mxu0 0
      %4221 = vmatprep.subr.bf16.mxu0 0
      %4222 = vmatpush1.bf16.msra.mxu0 0
      %4223 = vmatprep.subr.bf16.mxu0 0
      %4224 = vmatpush1.bf16.msra.mxu0 0
      %4225 = vmatprep.subr.bf16.mxu0 0
      %4226 = vmatpush1.bf16.msra.mxu0 0
      %4227 = vmatprep.subr.bf16.mxu0 0
      %4228 = vmatpush1.bf16.msra.mxu0 0
      %4229 = vmatprep.mubr.bf16.mxu0 0
      %4230 = vmatmul.mubr.bf16.gmra.mrb[0].mxu0 %v4181
      %v4231 = vpop.f32.mrb[0].mxu0
      %v4232 = vadd.f32 %v4072, %v4231
      %v4233 = vpop.f32.mrb[0].mxu0
      %v4234 = vpop.f32.mrb[0].mxu0
      %v4235 = vadd.f32 %v4077, %v4234
      %v4236 = vpop.f32.mrb[0].mxu0
      %4237 = vmatprep.mubr.bf16.mxu0 0
      %4238 = vmatmul.mubr.bf16.gmra.mrb[0].mxu0 %v4182
      %v4239 = vpop.f32.mrb[0].mxu0
      %v4240 = vadd.f32 %v4082, %v4239
      %v4241 = vpop.f32.mrb[0].mxu0
      %v4242 = vpop.f32.mrb[0].mxu0
      %v4243 = vadd.f32 %v4087, %v4242
      %v4244 = vpop.f32.mrb[0].mxu0
      %4245 = vmatprep.mubr.bf16.mxu0 0
      %4246 = vmatmul.mubr.bf16.gmra.mrb[0].mxu0 %v4183
      %v4247 = vpop.f32.mrb[0].mxu0
      %v4248 = vadd.f32 %v4092, %v4247
      %v4249 = vpop.f32.mrb[0].mxu0
      %v4250 = vpop.f32.mrb[0].mxu0
      %v4251 = vadd.f32 %v4097, %v4250
      %v4252 = vpop.f32.mrb[0].mxu0
      %4253 = vmatprep.mubr.bf16.mxu0 0
      %4254 = vmatmul.mubr.bf16.gmra.mrb[0].mxu0 %v4184
      %v4255 = vpop.f32.mrb[0].mxu0
      %v4256 = vadd.f32 %v4102, %v4255
      %v4257 = vpop.f32.mrb[0].mxu0
      %v4258 = vpop.f32.mrb[0].mxu0
      %v4259 = vadd.f32 %v4107, %v4258
      %v4260 = vpop.f32.mrb[0].mxu0
      %4261 = vmatprep.mubr.bf16.mxu0 0
      %4262 = vmatmul.mubr.bf16.gmra.mrb[0].mxu0 %v4185
      %v4263 = vpop.f32.mrb[0].mxu0
      %v4264 = vadd.f32 %v4112, %v4263
      %v4265 = vpop.f32.mrb[0].mxu0
      %v4266 = vpop.f32.mrb[0].mxu0
      %v4267 = vadd.f32 %v4117, %v4266
      %v4268 = vpop.f32.mrb[0].mxu0
      %4269 = vmatprep.mubr.bf16.mxu0 0
      %4270 = vmatmul.mubr.bf16.gmra.mrb[0].mxu0 %v4186
      %v4271 = vpop.f32.mrb[0].mxu0
      %v4272 = vadd.f32 %v4122, %v4271
      %v4273 = vpop.f32.mrb[0].mxu0
      %v4274 = vpop.f32.mrb[0].mxu0
      %v4275 = vadd.f32 %v4127, %v4274
      %v4276 = vpop.f32.mrb[0].mxu0
      %4277 = vmatprep.mubr.bf16.mxu0 0
      %4278 = vmatmul.mubr.bf16.gmra.mrb[0].mxu0 %v4187
      %v4279 = vpop.f32.mrb[0].mxu0
      %v4280 = vadd.f32 %v4132, %v4279
      %v4281 = vpop.f32.mrb[0].mxu0
      %v4282 = vpop.f32.mrb[0].mxu0
      %v4283 = vadd.f32 %v4137, %v4282
      %v4284 = vpop.f32.mrb[0].mxu0
      %4285 = vmatprep.mubr.bf16.mxu0 0
      %4286 = vmatmul.mubr.bf16.gmra.mrb[0].mxu0 %v4188
      %v4287 = vpop.f32.mrb[0].mxu0
      %v4288 = vadd.f32 %v4142, %v4287
      %v4289 = vpop.f32.mrb[0].mxu0
      %v4290 = vpop.f32.mrb[0].mxu0
      %v4291 = vadd.f32 %v4147, %v4290
      %v4292 = vpop.f32.mrb[0].mxu0
      %4293 = vdwg.mxu0
      %4294 = vxpose.xlu0.b32.start [1/16] %v4232, 128
      %4295 = vxpose.xlu0.b32.cont [2/16] %v4235, 128
      %4296 = vxpose.xlu0.b32.cont [3/16] %v4240, 128
      %4297 = vxpose.xlu0.b32.cont [4/16] %v4243, 128
      %4298 = vxpose.xlu0.b32.cont [5/16] %v4248, 128
      %4299 = vxpose.xlu0.b32.cont [6/16] %v4251, 128
      %4300 = vxpose.xlu0.b32.cont [7/16] %v4256, 128
      %4301 = vxpose.xlu0.b32.cont [8/16] %v4259, 128
      %4302 = vxpose.xlu0.b32.cont [9/16] %v4264, 128
      %4303 = vxpose.xlu0.b32.cont [10/16] %v4267, 128
      %4304 = vxpose.xlu0.b32.cont [11/16] %v4272, 128
      %4305 = vxpose.xlu0.b32.cont [12/16] %v4275, 128
      %4306 = vxpose.xlu0.b32.cont [13/16] %v4280, 128
      %4307 = vxpose.xlu0.b32.cont [14/16] %v4283, 128
      %4308 = vxpose.xlu0.b32.cont [15/16] %v4288, 128
      %4309 = vxpose.xlu0.b32.end [16/16] %v4291, 128
      %v4310 = vpop.trf.xlu0
      %v4311 = vpop.trf.xlu0
      %v4312 = vpop.trf.xlu0
      %v4313 = vpop.trf.xlu0
      %v4314 = vpop.trf.xlu0
      %v4315 = vpop.trf.xlu0
      %v4316 = vpop.trf.xlu0
      %v4317 = vpop.trf.xlu0
      %v4318 = vpop.trf.xlu0
      %v4319 = vpop.trf.xlu0
      %v4320 = vpop.trf.xlu0
      %v4321 = vpop.trf.xlu0
      %v4322 = vpop.trf.xlu0
      %v4323 = vpop.trf.xlu0
      %v4324 = vpop.trf.xlu0
      %v4325 = vpop.trf.xlu0
      %v4326 = vadd.f32 %v854, %v4310
      %v4327 = vadd.f32 %v855, %v4311
      %v4328 = vld [vmem:[%s750] sm:$0x1]
      %v4329 = vld [vmem:[%s753] sm:$0x1]
      %4330 = vadd.xlane.f32.xlu0 %v4326
      %v4331 = vpop.xlane.xlu0 %4330
      %4332 = vadd.xlane.f32.xlu0 %v4327
      %v4333 = vpop.xlane.xlu0 %4332
      %v4334 = vrcp.pop 128.0
      %v4335 = vmul.f32 %v4331, %v4334
      %v4336 = vmul.f32 %v4333, %v4334
      %v4337 = vsub.f32 %v4326, %v4335
      %v4338 = vsub.f32 %v4327, %v4336
      %v4339 = vmul.f32 %v4337, %v4337
      %v4340 = vmul.f32 %v4338, %v4338
      %4341 = vadd.xlane.f32.xlu0 %v4339
      %v4342 = vpop.xlane.xlu0 %4341
      %4343 = vadd.xlane.f32.xlu0 %v4340
      %v4344 = vpop.xlane.xlu0 %4343
      %v4345 = vmul.f32 %v4342, %v4334
      %v4346 = vmul.f32 %v4344, %v4334
      %v4347 = vadd.f32 %v4345, 1e-05
      %v4348 = vadd.f32 %v4346, 1e-05
      %v4349 = vrsqrt.pop %v4347
      %v4350 = vrsqrt.pop %v4348
      %v4351 = vmul.f32 %v4337, %v4349
      %v4352 = vmul.f32 %v4338, %v4350
      %v4354 = vlaneseq
      %v4355 = vshrl.u32 %v4354, 7
      %v4356 = vsub.s32 0, %v4355
      %v4357 = vrot.slane %v4328, %v4356
      %v4359 = vmul.f32 %v4351, %v4357
      %v4360 = vmul.f32 %v4352, %v4357
      %v4362 = vlaneseq
      %v4363 = vshrl.u32 %v4362, 7
      %v4364 = vsub.s32 0, %v4363
      %v4365 = vrot.slane %v4329, %v4364
      %v4367 = vadd.f32 %v4359, %v4365
      %v4368 = vadd.f32 %v4360, %v4365
      %v4369 = vld [vmem:[%s758] sm:$0xf]
      %v4370 = vld [vmem:[%s758 + $0x4] sm:$0xf]
      %v4371 = vld [vmem:[%s758 + $0x8] sm:$0xf]
      %v4372 = vld [vmem:[%s758 + $0xc] sm:$0xf]
      %v4373 = vld [vmem:[%s758 + $0x10] sm:$0xf]
      %v4374 = vld [vmem:[%s758 + $0x14] sm:$0xf]
      %v4375 = vld [vmem:[%s758 + $0x18] sm:$0xf]
      %v4376 = vld [vmem:[%s758 + $0x1c] sm:$0xf]
      %v4377 = vld [vmem:[%s758 + $0x20] sm:$0xf]
      %v4378 = vld [vmem:[%s758 + $0x24] sm:$0xf]
      %v4379 = vld [vmem:[%s758 + $0x28] sm:$0xf]
      %v4380 = vld [vmem:[%s758 + $0x2c] sm:$0xf]
      %v4381 = vld [vmem:[%s758 + $0x30] sm:$0xf]
      %v4382 = vld [vmem:[%s758 + $0x34] sm:$0xf]
      %v4383 = vld [vmem:[%s758 + $0x38] sm:$0xf]
      %v4384 = vld [vmem:[%s758 + $0x3c] sm:$0xf]
      %v4385 = vld [vmem:[%s758 + $0x40] sm:$0xf]
      %v4386 = vld [vmem:[%s758 + $0x44] sm:$0xf]
      %v4387 = vld [vmem:[%s758 + $0x48] sm:$0xf]
      %v4388 = vld [vmem:[%s758 + $0x4c] sm:$0xf]
      %v4389 = vld [vmem:[%s758 + $0x50] sm:$0xf]
      %v4390 = vld [vmem:[%s758 + $0x54] sm:$0xf]
      %v4391 = vld [vmem:[%s758 + $0x58] sm:$0xf]
      %v4392 = vld [vmem:[%s758 + $0x5c] sm:$0xf]
      %v4393 = vld [vmem:[%s758 + $0x60] sm:$0xf]
      %v4394 = vld [vmem:[%s758 + $0x64] sm:$0xf]
      %v4395 = vld [vmem:[%s758 + $0x68] sm:$0xf]
      %v4396 = vld [vmem:[%s758 + $0x6c] sm:$0xf]
      %v4397 = vld [vmem:[%s758 + $0x70] sm:$0xf]
      %v4398 = vld [vmem:[%s758 + $0x74] sm:$0xf]
      %v4399 = vld [vmem:[%s758 + $0x78] sm:$0xf]
      %v4400 = vld [vmem:[%s758 + $0x7c] sm:$0xf]
      %v4401 = vld [vmem:[%s758 + $0x80] sm:$0xf]
      %v4402 = vld [vmem:[%s758 + $0x84] sm:$0xf]
      %v4403 = vld [vmem:[%s758 + $0x88] sm:$0xf]
      %v4404 = vld [vmem:[%s758 + $0x8c] sm:$0xf]
      %v4405 = vld [vmem:[%s758 + $0x90] sm:$0xf]
      %v4406 = vld [vmem:[%s758 + $0x94] sm:$0xf]
      %v4407 = vld [vmem:[%s758 + $0x98] sm:$0xf]
      %v4408 = vld [vmem:[%s758 + $0x9c] sm:$0xf]
      %v4409 = vld [vmem:[%s758 + $0xa0] sm:$0xf]
      %v4410 = vld [vmem:[%s758 + $0xa4] sm:$0xf]
      %v4411 = vld [vmem:[%s758 + $0xa8] sm:$0xf]
      %v4412 = vld [vmem:[%s758 + $0xac] sm:$0xf]
      %v4413 = vld [vmem:[%s758 + $0xb0] sm:$0xf]
      %v4414 = vld [vmem:[%s758 + $0xb4] sm:$0xf]
      %v4415 = vld [vmem:[%s758 + $0xb8] sm:$0xf]
      %v4416 = vld [vmem:[%s758 + $0xbc] sm:$0xf]
      %v4417 = vld [vmem:[%s758 + $0xc0] sm:$0xf]
      %v4418 = vld [vmem:[%s758 + $0xc4] sm:$0xf]
      %v4419 = vld [vmem:[%s758 + $0xc8] sm:$0xf]
      %v4420 = vld [vmem:[%s758 + $0xcc] sm:$0xf]
      %v4421 = vld [vmem:[%s758 + $0xd0] sm:$0xf]
      %v4422 = vld [vmem:[%s758 + $0xd4] sm:$0xf]
      %v4423 = vld [vmem:[%s758 + $0xd8] sm:$0xf]
      %v4424 = vld [vmem:[%s758 + $0xdc] sm:$0xf]
      %v4425 = vld [vmem:[%s758 + $0xe0] sm:$0xf]
      %v4426 = vld [vmem:[%s758 + $0xe4] sm:$0xf]
      %v4427 = vld [vmem:[%s758 + $0xe8] sm:$0xf]
      %v4428 = vld [vmem:[%s758 + $0xec] sm:$0xf]
      %v4429 = vld [vmem:[%s758 + $0xf0] sm:$0xf]
      %v4430 = vld [vmem:[%s758 + $0xf4] sm:$0xf]
      %v4431 = vld [vmem:[%s758 + $0xf8] sm:$0xf]
      %v4432 = vld [vmem:[%s758 + $0xfc] sm:$0xf]
      %v4433 = vpack.c.bf16 %v4368, %v4367
      %v4434 = vld [vmem:[%s762] sm:$0xf]
      %v4436 = vlaneseq
      %v4437 = vshrl.u32 %v4436, 7
      %v4438 = vsub.s32 0, %v4437
      %v4439 = vrot.slane %v4434, %v4438
      %v4440 = vlaneseq
      %v4441 = vshrl.u32 %v4440, 7
      %v4442 = vsub.s32 1, %v4441
      %v4443 = vrot.slane %v4434, %v4442
      %v4444 = vlaneseq
      %v4445 = vshrl.u32 %v4444, 7
      %v4446 = vsub.s32 2, %v4445
      %v4447 = vrot.slane %v4434, %v4446
      %v4448 = vlaneseq
      %v4449 = vshrl.u32 %v4448, 7
      %v4450 = vsub.s32 3, %v4449
      %v4451 = vrot.slane %v4434, %v4450
      %v4520 = vunpack.c.l.b16 %v4369
      %v4521 = vunpack.c.l.b16 %v4370
      %v4522 = vunpack.c.l.b16 %v4371
      %v4523 = vunpack.c.l.b16 %v4372
      %v4524 = vunpack.c.l.b16 %v4373
      %v4525 = vunpack.c.l.b16 %v4374
      %v4526 = vunpack.c.l.b16 %v4375
      %v4527 = vunpack.c.l.b16 %v4376
      %v4528 = vunpack.c.l.b16 %v4377
      %v4529 = vunpack.c.l.b16 %v4378
      %v4530 = vunpack.c.l.b16 %v4379
      %v4531 = vunpack.c.l.b16 %v4380
      %v4532 = vunpack.c.l.b16 %v4381
      %v4533 = vunpack.c.l.b16 %v4382
      %v4534 = vunpack.c.l.b16 %v4383
      %v4535 = vunpack.c.l.b16 %v4384
      %v4536 = vunpack.c.l.b16 %v4385
      %v4537 = vunpack.c.l.b16 %v4386
      %v4538 = vunpack.c.l.b16 %v4387
      %v4539 = vunpack.c.l.b16 %v4388
      %v4540 = vunpack.c.l.b16 %v4389
      %v4541 = vunpack.c.l.b16 %v4390
      %v4542 = vunpack.c.l.b16 %v4391
      %v4543 = vunpack.c.l.b16 %v4392
      %v4544 = vunpack.c.l.b16 %v4393
      %v4545 = vunpack.c.l.b16 %v4394
      %v4546 = vunpack.c.l.b16 %v4395
      %v4547 = vunpack.c.l.b16 %v4396
      %v4548 = vunpack.c.l.b16 %v4397
      %v4549 = vunpack.c.l.b16 %v4398
      %v4550 = vunpack.c.l.b16 %v4399
      %v4551 = vunpack.c.l.b16 %v4400
      %v4552 = vunpack.c.l.b16 %v4401
      %v4553 = vunpack.c.l.b16 %v4402
      %v4554 = vunpack.c.l.b16 %v4403
      %v4555 = vunpack.c.l.b16 %v4404
      %v4556 = vunpack.c.l.b16 %v4405
      %v4557 = vunpack.c.l.b16 %v4406
      %v4558 = vunpack.c.l.b16 %v4407
      %v4559 = vunpack.c.l.b16 %v4408
      %v4560 = vunpack.c.l.b16 %v4409
      %v4561 = vunpack.c.l.b16 %v4410
      %v4562 = vunpack.c.l.b16 %v4411
      %v4563 = vunpack.c.l.b16 %v4412
      %v4564 = vunpack.c.l.b16 %v4413
      %v4565 = vunpack.c.l.b16 %v4414
      %v4566 = vunpack.c.l.b16 %v4415
      %v4567 = vunpack.c.l.b16 %v4416
      %v4568 = vunpack.c.l.b16 %v4417
      %v4569 = vunpack.c.l.b16 %v4418
      %v4570 = vunpack.c.l.b16 %v4419
      %v4571 = vunpack.c.l.b16 %v4420
      %v4572 = vunpack.c.l.b16 %v4421
      %v4573 = vunpack.c.l.b16 %v4422
      %v4574 = vunpack.c.l.b16 %v4423
      %v4575 = vunpack.c.l.b16 %v4424
      %v4576 = vunpack.c.l.b16 %v4425
      %v4577 = vunpack.c.l.b16 %v4426
      %v4578 = vunpack.c.l.b16 %v4427
      %v4579 = vunpack.c.l.b16 %v4428
      %v4580 = vunpack.c.l.b16 %v4429
      %v4581 = vunpack.c.l.b16 %v4430
      %v4582 = vunpack.c.l.b16 %v4431
      %v4583 = vunpack.c.l.b16 %v4432
      %v4584 = vpack.c.b16 %v4521, %v4520
      %v4585 = vpack.c.b16 %v4523, %v4522
      %v4586 = vpack.c.b16 %v4525, %v4524
      %v4587 = vpack.c.b16 %v4527, %v4526
      %v4588 = vpack.c.b16 %v4529, %v4528
      %v4589 = vpack.c.b16 %v4531, %v4530
      %v4590 = vpack.c.b16 %v4533, %v4532
      %v4591 = vpack.c.b16 %v4535, %v4534
      %v4592 = vpack.c.b16 %v4537, %v4536
      %v4593 = vpack.c.b16 %v4539, %v4538
      %v4594 = vpack.c.b16 %v4541, %v4540
      %v4595 = vpack.c.b16 %v4543, %v4542
      %v4596 = vpack.c.b16 %v4545, %v4544
      %v4597 = vpack.c.b16 %v4547, %v4546
      %v4598 = vpack.c.b16 %v4549, %v4548
      %v4599 = vpack.c.b16 %v4551, %v4550
      %v4600 = vpack.c.b16 %v4553, %v4552
      %v4601 = vpack.c.b16 %v4555, %v4554
      %v4602 = vpack.c.b16 %v4557, %v4556
      %v4603 = vpack.c.b16 %v4559, %v4558
      %v4604 = vpack.c.b16 %v4561, %v4560
      %v4605 = vpack.c.b16 %v4563, %v4562
      %v4606 = vpack.c.b16 %v4565, %v4564
      %v4607 = vpack.c.b16 %v4567, %v4566
      %v4608 = vpack.c.b16 %v4569, %v4568
      %v4609 = vpack.c.b16 %v4571, %v4570
      %v4610 = vpack.c.b16 %v4573, %v4572
      %v4611 = vpack.c.b16 %v4575, %v4574
      %v4612 = vpack.c.b16 %v4577, %v4576
      %v4613 = vpack.c.b16 %v4579, %v4578
      %v4614 = vpack.c.b16 %v4581, %v4580
      %v4615 = vpack.c.b16 %v4583, %v4582
      %4648 = vmatprep.subr.bf16.mxu0 0
      %4649 = vmatpush1.bf16.xpose.msra.mxu0 %v4584
      %4650 = vmatprep.subr.bf16.mxu0 0
      %4651 = vmatpush1.bf16.xpose.msra.mxu0 %v4585
      %4652 = vmatprep.subr.bf16.mxu0 0
      %4653 = vmatpush1.bf16.xpose.msra.mxu0 %v4586
      %4654 = vmatprep.subr.bf16.mxu0 0
      %4655 = vmatpush1.bf16.xpose.msra.mxu0 %v4587
      %4656 = vmatprep.subr.bf16.mxu0 0
      %4657 = vmatpush1.bf16.xpose.msra.mxu0 %v4588
      %4658 = vmatprep.subr.bf16.mxu0 0
      %4659 = vmatpush1.bf16.xpose.msra.mxu0 %v4589
      %4660 = vmatprep.subr.bf16.mxu0 0
      %4661 = vmatpush1.bf16.xpose.msra.mxu0 %v4590
      %4662 = vmatprep.subr.bf16.mxu0 0
      %4663 = vmatpush1.bf16.xpose.msra.mxu0 %v4591
      %4664 = vmatprep.subr.bf16.mxu0 0
      %4665 = vmatpush1.bf16.xpose.msra.mxu0 %v4592
      %4666 = vmatprep.subr.bf16.mxu0 0
      %4667 = vmatpush1.bf16.xpose.msra.mxu0 %v4593
      %4668 = vmatprep.subr.bf16.mxu0 0
      %4669 = vmatpush1.bf16.xpose.msra.mxu0 %v4594
      %4670 = vmatprep.subr.bf16.mxu0 0
      %4671 = vmatpush1.bf16.xpose.msra.mxu0 %v4595
      %4672 = vmatprep.subr.bf16.mxu0 0
      %4673 = vmatpush1.bf16.xpose.msra.mxu0 %v4596
      %4674 = vmatprep.subr.bf16.mxu0 0
      %4675 = vmatpush1.bf16.xpose.msra.mxu0 %v4597
      %4676 = vmatprep.subr.bf16.mxu0 0
      %4677 = vmatpush1.bf16.xpose.msra.mxu0 %v4598
      %4678 = vmatprep.subr.bf16.mxu0 0
      %4679 = vmatpush1.bf16.xpose.msra.mxu0 %v4599
      %4680 = vmatprep.mubr.bf16.mxu0 0
      %4681 = vmatmul.mubr.bf16.gmra.mrb[0].mxu0 %v4433
      %v4682 = vpop.f32.mrb[0].mxu0
      %v4683 = vadd.f32 %v4439, %v4682
      %v4684 = vpop.f32.mrb[0].mxu0
      %v4685 = vadd.f32 %v4443, %v4684
      %v4686 = vpop.f32.mrb[0].mxu0
      %v4687 = vadd.f32 %v4439, %v4686
      %v4688 = vpop.f32.mrb[0].mxu0
      %v4689 = vadd.f32 %v4443, %v4688
      %4690 = vdwg.mxu0
      %4691 = vmatprep.subr.bf16.mxu0 0
      %4692 = vmatpush1.bf16.xpose.msra.mxu0 %v4600
      %4693 = vmatprep.subr.bf16.mxu0 0
      %4694 = vmatpush1.bf16.xpose.msra.mxu0 %v4601
      %4695 = vmatprep.subr.bf16.mxu0 0
      %4696 = vmatpush1.bf16.xpose.msra.mxu0 %v4602
      %4697 = vmatprep.subr.bf16.mxu0 0
      %4698 = vmatpush1.bf16.xpose.msra.mxu0 %v4603
      %4699 = vmatprep.subr.bf16.mxu0 0
      %4700 = vmatpush1.bf16.xpose.msra.mxu0 %v4604
      %4701 = vmatprep.subr.bf16.mxu0 0
      %4702 = vmatpush1.bf16.xpose.msra.mxu0 %v4605
      %4703 = vmatprep.subr.bf16.mxu0 0
      %4704 = vmatpush1.bf16.xpose.msra.mxu0 %v4606
      %4705 = vmatprep.subr.bf16.mxu0 0
      %4706 = vmatpush1.bf16.xpose.msra.mxu0 %v4607
      %4707 = vmatprep.subr.bf16.mxu0 0
      %4708 = vmatpush1.bf16.xpose.msra.mxu0 %v4608
      %4709 = vmatprep.subr.bf16.mxu0 0
      %4710 = vmatpush1.bf16.xpose.msra.mxu0 %v4609
      %4711 = vmatprep.subr.bf16.mxu0 0
      %4712 = vmatpush1.bf16.xpose.msra.mxu0 %v4610
      %4713 = vmatprep.subr.bf16.mxu0 0
      %4714 = vmatpush1.bf16.xpose.msra.mxu0 %v4611
      %4715 = vmatprep.subr.bf16.mxu0 0
      %4716 = vmatpush1.bf16.xpose.msra.mxu0 %v4612
      %4717 = vmatprep.subr.bf16.mxu0 0
      %4718 = vmatpush1.bf16.xpose.msra.mxu0 %v4613
      %4719 = vmatprep.subr.bf16.mxu0 0
      %4720 = vmatpush1.bf16.xpose.msra.mxu0 %v4614
      %4721 = vmatprep.subr.bf16.mxu0 0
      %4722 = vmatpush1.bf16.xpose.msra.mxu0 %v4615
      %4723 = vmatprep.mubr.bf16.mxu0 0
      %4724 = vmatmul.mubr.bf16.gmra.mrb[0].mxu0 %v4433
      %v4725 = vpop.f32.mrb[0].mxu0
      %v4726 = vadd.f32 %v4447, %v4725
      %v4727 = vpop.f32.mrb[0].mxu0
      %v4728 = vadd.f32 %v4451, %v4727
      %v4729 = vpop.f32.mrb[0].mxu0
      %v4730 = vadd.f32 %v4447, %v4729
      %v4731 = vpop.f32.mrb[0].mxu0
      %v4732 = vadd.f32 %v4451, %v4731
      %4733 = vdwg.mxu0
      %v4734 = vmax.f32 %v4683, 0.0
      %v4735 = vmax.f32 %v4685, 0.0
      %v4736 = vmax.f32 %v4726, 0.0
      %v4737 = vmax.f32 %v4728, 0.0
      %v4738 = vmax.f32 %v4687, 0.0
      %v4739 = vmax.f32 %v4689, 0.0
      %v4740 = vmax.f32 %v4730, 0.0
      %v4741 = vmax.f32 %v4732, 0.0
      %v4742 = vld [vmem:[%s767] sm:$0xff]
      %v4743 = vld [vmem:[%s767 + $0x8] sm:$0xff]
      %v4744 = vld [vmem:[%s767 + $0x10] sm:$0xff]
      %v4745 = vld [vmem:[%s767 + $0x18] sm:$0xff]
      %v4746 = vld [vmem:[%s767 + $0x20] sm:$0xff]
      %v4747 = vld [vmem:[%s767 + $0x28] sm:$0xff]
      %v4748 = vld [vmem:[%s767 + $0x30] sm:$0xff]
      %v4749 = vld [vmem:[%s767 + $0x38] sm:$0xff]
      %v4750 = vld [vmem:[%s767 + $0x40] sm:$0xff]
      %v4751 = vld [vmem:[%s767 + $0x48] sm:$0xff]
      %v4752 = vld [vmem:[%s767 + $0x50] sm:$0xff]
      %v4753 = vld [vmem:[%s767 + $0x58] sm:$0xff]
      %v4754 = vld [vmem:[%s767 + $0x60] sm:$0xff]
      %v4755 = vld [vmem:[%s767 + $0x68] sm:$0xff]
      %v4756 = vld [vmem:[%s767 + $0x70] sm:$0xff]
      %v4757 = vld [vmem:[%s767 + $0x78] sm:$0xff]
      %v4758 = vld [vmem:[%s767 + $0x80] sm:$0xff]
      %v4759 = vld [vmem:[%s767 + $0x88] sm:$0xff]
      %v4760 = vld [vmem:[%s767 + $0x90] sm:$0xff]
      %v4761 = vld [vmem:[%s767 + $0x98] sm:$0xff]
      %v4762 = vld [vmem:[%s767 + $0xa0] sm:$0xff]
      %v4763 = vld [vmem:[%s767 + $0xa8] sm:$0xff]
      %v4764 = vld [vmem:[%s767 + $0xb0] sm:$0xff]
      %v4765 = vld [vmem:[%s767 + $0xb8] sm:$0xff]
      %v4766 = vld [vmem:[%s767 + $0xc0] sm:$0xff]
      %v4767 = vld [vmem:[%s767 + $0xc8] sm:$0xff]
      %v4768 = vld [vmem:[%s767 + $0xd0] sm:$0xff]
      %v4769 = vld [vmem:[%s767 + $0xd8] sm:$0xff]
      %v4770 = vld [vmem:[%s767 + $0xe0] sm:$0xff]
      %v4771 = vld [vmem:[%s767 + $0xe8] sm:$0xff]
      %v4772 = vld [vmem:[%s767 + $0xf0] sm:$0xff]
      %v4773 = vld [vmem:[%s767 + $0xf8] sm:$0xff]
      %v4774 = vpack.c.bf16 %v4738, %v4734
      %v4775 = vpack.c.bf16 %v4739, %v4735
      %v4776 = vpack.c.bf16 %v4740, %v4736
      %v4777 = vpack.c.bf16 %v4741, %v4737
      %v4778 = vld [vmem:[%s770] sm:$0x1]
      %v4780 = vlaneseq
      %v4781 = vshrl.u32 %v4780, 7
      %v4782 = vsub.s32 0, %v4781
      %v4783 = vrot.slane %v4778, %v4782
      %v4817 = vunpack.c.l.b16 %v4742
      %v4818 = vunpack.c.h.b16 %v4742
      %v4819 = vunpack.c.l.b16 %v4743
      %v4820 = vunpack.c.h.b16 %v4743
      %v4821 = vunpack.c.l.b16 %v4744
      %v4822 = vunpack.c.h.b16 %v4744
      %v4823 = vunpack.c.l.b16 %v4745
      %v4824 = vunpack.c.h.b16 %v4745
      %v4825 = vunpack.c.l.b16 %v4746
      %v4826 = vunpack.c.h.b16 %v4746
      %v4827 = vunpack.c.l.b16 %v4747
      %v4828 = vunpack.c.h.b16 %v4747
      %v4829 = vunpack.c.l.b16 %v4748
      %v4830 = vunpack.c.h.b16 %v4748
      %v4831 = vunpack.c.l.b16 %v4749
      %v4832 = vunpack.c.h.b16 %v4749
      %v4833 = vunpack.c.l.b16 %v4750
      %v4834 = vunpack.c.h.b16 %v4750
      %v4835 = vunpack.c.l.b16 %v4751
      %v4836 = vunpack.c.h.b16 %v4751
      %v4837 = vunpack.c.l.b16 %v4752
      %v4838 = vunpack.c.h.b16 %v4752
      %v4839 = vunpack.c.l.b16 %v4753
      %v4840 = vunpack.c.h.b16 %v4753
      %v4841 = vunpack.c.l.b16 %v4754
      %v4842 = vunpack.c.h.b16 %v4754
      %v4843 = vunpack.c.l.b16 %v4755
      %v4844 = vunpack.c.h.b16 %v4755
      %v4845 = vunpack.c.l.b16 %v4756
      %v4846 = vunpack.c.h.b16 %v4756
      %v4847 = vunpack.c.l.b16 %v4757
      %v4848 = vunpack.c.h.b16 %v4757
      %v4849 = vunpack.c.l.b16 %v4758
      %v4850 = vunpack.c.h.b16 %v4758
      %v4851 = vunpack.c.l.b16 %v4759
      %v4852 = vunpack.c.h.b16 %v4759
      %v4853 = vunpack.c.l.b16 %v4760
      %v4854 = vunpack.c.h.b16 %v4760
      %v4855 = vunpack.c.l.b16 %v4761
      %v4856 = vunpack.c.h.b16 %v4761
      %v4857 = vunpack.c.l.b16 %v4762
      %v4858 = vunpack.c.h.b16 %v4762
      %v4859 = vunpack.c.l.b16 %v4763
      %v4860 = vunpack.c.h.b16 %v4763
      %v4861 = vunpack.c.l.b16 %v4764
      %v4862 = vunpack.c.h.b16 %v4764
      %v4863 = vunpack.c.l.b16 %v4765
      %v4864 = vunpack.c.h.b16 %v4765
      %v4865 = vunpack.c.l.b16 %v4766
      %v4866 = vunpack.c.h.b16 %v4766
      %v4867 = vunpack.c.l.b16 %v4767
      %v4868 = vunpack.c.h.b16 %v4767
      %v4869 = vunpack.c.l.b16 %v4768
      %v4870 = vunpack.c.h.b16 %v4768
      %v4871 = vunpack.c.l.b16 %v4769
      %v4872 = vunpack.c.h.b16 %v4769
      %v4873 = vunpack.c.l.b16 %v4770
      %v4874 = vunpack.c.h.b16 %v4770
      %v4875 = vunpack.c.l.b16 %v4771
      %v4876 = vunpack.c.h.b16 %v4771
      %v4877 = vunpack.c.l.b16 %v4772
      %v4878 = vunpack.c.h.b16 %v4772
      %v4879 = vunpack.c.l.b16 %v4773
      %v4880 = vunpack.c.h.b16 %v4773
      %v4881 = vpack.c.b16 %v4821, %v4817
      %v4882 = vpack.c.b16 %v4822, %v4818
      %v4883 = vpack.c.b16 %v4823, %v4819
      %v4884 = vpack.c.b16 %v4824, %v4820
      %v4885 = vpack.c.b16 %v4829, %v4825
      %v4886 = vpack.c.b16 %v4830, %v4826
      %v4887 = vpack.c.b16 %v4831, %v4827
      %v4888 = vpack.c.b16 %v4832, %v4828
      %v4889 = vpack.c.b16 %v4837, %v4833
      %v4890 = vpack.c.b16 %v4838, %v4834
      %v4891 = vpack.c.b16 %v4839, %v4835
      %v4892 = vpack.c.b16 %v4840, %v4836
      %v4893 = vpack.c.b16 %v4845, %v4841
      %v4894 = vpack.c.b16 %v4846, %v4842
      %v4895 = vpack.c.b16 %v4847, %v4843
      %v4896 = vpack.c.b16 %v4848, %v4844
      %v4897 = vpack.c.b16 %v4853, %v4849
      %v4898 = vpack.c.b16 %v4854, %v4850
      %v4899 = vpack.c.b16 %v4855, %v4851
      %v4900 = vpack.c.b16 %v4856, %v4852
      %v4901 = vpack.c.b16 %v4861, %v4857
      %v4902 = vpack.c.b16 %v4862, %v4858
      %v4903 = vpack.c.b16 %v4863, %v4859
      %v4904 = vpack.c.b16 %v4864, %v4860
      %v4905 = vpack.c.b16 %v4869, %v4865
      %v4906 = vpack.c.b16 %v4870, %v4866
      %v4907 = vpack.c.b16 %v4871, %v4867
      %v4908 = vpack.c.b16 %v4872, %v4868
      %v4909 = vpack.c.b16 %v4877, %v4873
      %v4910 = vpack.c.b16 %v4878, %v4874
      %v4911 = vpack.c.b16 %v4879, %v4875
      %v4912 = vpack.c.b16 %v4880, %v4876
      %4945 = vmatprep.subr.bf16.mxu0 %v4882
      %4946 = vmatpush1.bf16.xpose.msra.mxu0 %v4881
      %4947 = vmatprep.subr.bf16.mxu0 %v4886
      %4948 = vmatpush1.bf16.xpose.msra.mxu0 %v4885
      %4949 = vmatprep.subr.bf16.mxu0 %v4890
      %4950 = vmatpush1.bf16.xpose.msra.mxu0 %v4889
      %4951 = vmatprep.subr.bf16.mxu0 %v4894
      %4952 = vmatpush1.bf16.xpose.msra.mxu0 %v4893
      %4953 = vmatprep.subr.bf16.mxu0 %v4898
      %4954 = vmatpush1.bf16.xpose.msra.mxu0 %v4897
      %4955 = vmatprep.subr.bf16.mxu0 %v4902
      %4956 = vmatpush1.bf16.xpose.msra.mxu0 %v4901
      %4957 = vmatprep.subr.bf16.mxu0 %v4906
      %4958 = vmatpush1.bf16.xpose.msra.mxu0 %v4905
      %4959 = vmatprep.subr.bf16.mxu0 %v4910
      %4960 = vmatpush1.bf16.xpose.msra.mxu0 %v4909
      %4961 = vmatprep.subr.bf16.mxu0 0
      %4962 = vmatpush1.bf16.xpose.msra.mxu0 0
      %4963 = vmatprep.subr.bf16.mxu0 0
      %4964 = vmatpush1.bf16.xpose.msra.mxu0 0
      %4965 = vmatprep.subr.bf16.mxu0 0
      %4966 = vmatpush1.bf16.xpose.msra.mxu0 0
      %4967 = vmatprep.subr.bf16.mxu0 0
      %4968 = vmatpush1.bf16.xpose.msra.mxu0 0
      %4969 = vmatprep.subr.bf16.mxu0 0
      %4970 = vmatpush1.bf16.xpose.msra.mxu0 0
      %4971 = vmatprep.subr.bf16.mxu0 0
      %4972 = vmatpush1.bf16.xpose.msra.mxu0 0
      %4973 = vmatprep.subr.bf16.mxu0 0
      %4974 = vmatpush1.bf16.xpose.msra.mxu0 0
      %4975 = vmatprep.subr.bf16.mxu0 0
      %4976 = vmatpush1.bf16.xpose.msra.mxu0 0
      %4977 = vmatprep.mubr.bf16.mxu0 %v4775
      %4978 = vmatmul.mubr.bf16.gmra.mrb[0].mxu0 %v4774
      %v4979 = vpop.f32.mrb[0].mxu0
      %v4980 = vadd.f32 %v4783, %v4979
      %v4981 = vpop.f32.mrb[0].mxu0
      %v4982 = vpop.f32.mrb[0].mxu0
      %v4983 = vadd.f32 %v4783, %v4982
      %v4984 = vpop.f32.mrb[0].mxu0
      %4985 = vdwg.mxu0
      %4986 = vmatprep.subr.bf16.mxu0 %v4884
      %4987 = vmatpush1.bf16.xpose.msra.mxu0 %v4883
      %4988 = vmatprep.subr.bf16.mxu0 %v4888
      %4989 = vmatpush1.bf16.xpose.msra.mxu0 %v4887
      %4990 = vmatprep.subr.bf16.mxu0 %v4892
      %4991 = vmatpush1.bf16.xpose.msra.mxu0 %v4891
      %4992 = vmatprep.subr.bf16.mxu0 %v4896
      %4993 = vmatpush1.bf16.xpose.msra.mxu0 %v4895
      %4994 = vmatprep.subr.bf16.mxu0 %v4900
      %4995 = vmatpush1.bf16.xpose.msra.mxu0 %v4899
      %4996 = vmatprep.subr.bf16.mxu0 %v4904
      %4997 = vmatpush1.bf16.xpose.msra.mxu0 %v4903
      %4998 = vmatprep.subr.bf16.mxu0 %v4908
      %4999 = vmatpush1.bf16.xpose.msra.mxu0 %v4907
      %5000 = vmatprep.subr.bf16.mxu0 %v4912
      %5001 = vmatpush1.bf16.xpose.msra.mxu0 %v4911
      %5002 = vmatprep.subr.bf16.mxu0 0
      %5003 = vmatpush1.bf16.xpose.msra.mxu0 0
      %5004 = vmatprep.subr.bf16.mxu0 0
      %5005 = vmatpush1.bf16.xpose.msra.mxu0 0
      %5006 = vmatprep.subr.bf16.mxu0 0
      %5007 = vmatpush1.bf16.xpose.msra.mxu0 0
      %5008 = vmatprep.subr.bf16.mxu0 0
      %5009 = vmatpush1.bf16.xpose.msra.mxu0 0
      %5010 = vmatprep.subr.bf16.mxu0 0
      %5011 = vmatpush1.bf16.xpose.msra.mxu0 0
      %5012 = vmatprep.subr.bf16.mxu0 0
      %5013 = vmatpush1.bf16.xpose.msra.mxu0 0
      %5014 = vmatprep.subr.bf16.mxu0 0
      %5015 = vmatpush1.bf16.xpose.msra.mxu0 0
      %5016 = vmatprep.subr.bf16.mxu0 0
      %5017 = vmatpush1.bf16.xpose.msra.mxu0 0
      %5018 = vmatprep.mubr.bf16.mxu0 %v4777
      %5019 = vmatmul.mubr.bf16.gmra.mrb[0].mxu0 %v4776
      %v5020 = vpop.f32.mrb[0].mxu0
      %v5021 = vadd.f32 %v4980, %v5020
      %v5022 = vpop.f32.mrb[0].mxu0
      %v5023 = vpop.f32.mrb[0].mxu0
      %v5024 = vadd.f32 %v4983, %v5023
      %v5025 = vpop.f32.mrb[0].mxu0
      %5026 = vdwg.mxu0
      %v5027 = vadd.f32 %v4367, %v5021
      %v5028 = vadd.f32 %v4368, %v5024
      %v5029 = vld [vmem:[%s773] sm:$0x1]
      %v5030 = vld [vmem:[%s776] sm:$0x1]
      %5031 = vadd.xlane.f32.xlu0 %v5027
      %v5032 = vpop.xlane.xlu0 %5031
      %5033 = vadd.xlane.f32.xlu0 %v5028
      %v5034 = vpop.xlane.xlu0 %5033
      %v5035 = vmul.f32 %v5032, %v4334
      %v5036 = vmul.f32 %v5034, %v4334
      %v5037 = vsub.f32 %v5027, %v5035
      %v5038 = vsub.f32 %v5028, %v5036
      %v5039 = vmul.f32 %v5037, %v5037
      %v5040 = vmul.f32 %v5038, %v5038
      %5041 = vadd.xlane.f32.xlu0 %v5039
      %v5042 = vpop.xlane.xlu0 %5041
      %5043 = vadd.xlane.f32.xlu0 %v5040
      %v5044 = vpop.xlane.xlu0 %5043
      %v5045 = vmul.f32 %v5042, %v4334
      %v5046 = vmul.f32 %v5044, %v4334
      %v5047 = vadd.f32 %v5045, 1e-05
      %v5048 = vadd.f32 %v5046, 1e-05
      %v5049 = vrsqrt.pop %v5047
      %v5050 = vrsqrt.pop %v5048
      %v5051 = vmul.f32 %v5037, %v5049
      %v5052 = vmul.f32 %v5038, %v5050
      %v5054 = vlaneseq
      %v5055 = vshrl.u32 %v5054, 7
      %v5056 = vsub.s32 0, %v5055
      %v5057 = vrot.slane %v5029, %v5056
      %v5059 = vmul.f32 %v5051, %v5057
      %v5060 = vmul.f32 %v5052, %v5057
      %v5062 = vlaneseq
      %v5063 = vshrl.u32 %v5062, 7
      %v5064 = vsub.s32 0, %v5063
      %v5065 = vrot.slane %v5030, %v5064
      %v5067 = vadd.f32 %v5059, %v5065
      %v5068 = vadd.f32 %v5060, %v5065
      %5069 = vst [vmem:[#allocation2] sm:$0xff] %v5067
      %5070 = vst [vmem:[#allocation2 + $0x8] sm:$0xff] %v5068
      %p5071 = scmp.eq.s32.totalorder %s32, 1
      // Predicated region
      $region101: #{spectral_temporal_forward.2} parent=95 // pred_check
        %p5072 = pneg %p5071
      $region102: #{spectral_temporal_forward.2} parent=95 // pred_check_branch
        %5074 = sbr.rel (%p5072) target = $region104
      $region103: #{spectral_temporal_forward.2} parent=95 // pred_region
        %v5075 = vld [vmem:[%s15] sm:$0x1]
        %v5077 = vlaneseq
        %v5078 = vshrl.u32 %v5077, 7
        %v5079 = vsub.s32 0, %v5078
        %v5080 = vrot.slane %v5075, %v5079
        %v5082 = vmul.f32 %v5067, %v5080
        %v5083 = vmul.f32 %v5068, %v5080
        %5084 = vadd.xlane.f32.xlu0 %v5082
        %v5085 = vpop.xlane.xlu0 %5084
        %5086 = vadd.xlane.f32.xlu0 %v5083
        %v5087 = vpop.xlane.xlu0 %5086
        %v5088 = vld [vmem:[#allocation3] sm:$0x1]
        %v5090 = vlaneseq
        %v5091 = vshrl.u32 %v5090, 7
        %v5092 = vsub.s32 0, %v5091
        %v5093 = vrot.slane %v5088, %v5092
        %5094 = vset.pattern.permute.xlu0 0
        %5095 = vperm.xlu0 %5094, %v5093
        %v5096 = vpop.permute.xlu0 %5095
        %v5098 = vadd.f32 %v5085, %v5096
        %v5099 = vadd.f32 %v5087, %v5096
        %v5102 = vlaneseq
        %v5103 = vand.u32 %v5102, 127
        %v5104 = vlaneseq
        %v5105 = vshrl.u32 %v5104, 7
        %v5106 = vsub.s32 %v5103, %v5105
        %v5107 = vrot.slane %v5098, %v5106
        %v5108 = vlaneseq
        %v5109 = vshrl.u32 %v5108, 7
        %v5110 = vsub.s32 %v5103, %v5109
        %v5111 = vrot.slane %v5099, %v5110
        %vm5112 = vcmask 1041409
        %v5113 = vsel %vm5112, %v5111, %v5107
        %vm5115 = vcmask 58368
        %v5116 = vsel %vm5115, %v5113, -inf
        %5117 = vmax.xlane.f32.xlu0 %v5116
        %v5118 = vpop.xlane.xlu0 %5117
        %v5120 = vlaneseq
        %v5121 = vshrl.u32 %v5120, 7
        %v5122 = vsub.s32 0, %v5121
        %v5123 = vrot.slane %v5118, %v5122
        %v5124 = vlaneseq
        %v5125 = vshrl.u32 %v5124, 7
        %v5126 = vsub.s32 1, %v5125
        %v5127 = vrot.slane %v5118, %v5126
        %v5130 = vsub.f32 %v5098, %v5123
        %v5131 = vsub.f32 %v5099, %v5127
        %v5132 = vmul.f32 %v5130, 1.442695
        %v5133 = vpow.pop %v5132
        %v5134 = vmul.f32 %v5131, 1.442695
        %v5135 = vpow.pop %v5134
        %5138 = vset.pattern.permute.xlu0 0
        %5139 = vperm.xlu0 %5138, %v5133
        %v5140 = vpop.permute.xlu0 %5139
        %5141 = vset.pattern.permute.xlu0 0
        %5142 = vperm.xlu0 %5141, %v5135
        %v5143 = vpop.permute.xlu0 %5142
        %v5144 = vlaneseq
        %v5145 = vshrl.u32 %v5144, 7
        %v5146 = vsub.s32 %v5103, %v5145
        %v5147 = vrot.slane %v5140, %v5146
        %v5148 = vlaneseq
        %v5149 = vshrl.u32 %v5148, 7
        %v5150 = vsub.s32 %v5103, %v5149
        %v5151 = vrot.slane %v5143, %v5150
        %v5152 = vsel %vm5112, %v5151, %v5147
        %v5154 = vsel %vm5115, %v5152, 0.0
        %5155 = vadd.xlane.f32.xlu0 %v5154
        %v5156 = vpop.xlane.xlu0 %5155
        %v5158 = vlaneseq
        %v5159 = vshrl.u32 %v5158, 7
        %v5160 = vsub.s32 0, %v5159
        %v5161 = vrot.slane %v5156, %v5160
        %v5162 = vlaneseq
        %v5163 = vshrl.u32 %v5162, 7
        %v5164 = vsub.s32 1, %v5163
        %v5165 = vrot.slane %v5156, %v5164
        %v5168 = vrcp.pop %v5161
        %v5169 = vmul.f32 %v5133, %v5168
        %v5170 = vrcp.pop %v5165
        %v5171 = vmul.f32 %v5135, %v5170
        %5173 = vset.pattern.permute.xlu0 0
        %5174 = vperm.xlu0 %5173, %v5169
        %v5175 = vpop.permute.xlu0 %5174
        %5178 = vset.pattern.permute.xlu0 0
        %5179 = vperm.xlu0 %5178, %v5171
        %v5180 = vpop.permute.xlu0 %5179
        %v5182 = vmul.f32 %v5175, %v5067
        %v5183 = vmul.f32 %v5180, %v5068
        %v5184 = vrot.slane %v5182, 4
        %v5185 = vadd.f32 %v5182, %v5184
        %v5186 = vrot.slane %v5185, 2
        %v5187 = vadd.f32 %v5185, %v5186
        %v5188 = vrot.slane %v5187, 1
        %v5189 = vadd.f32 %v5187, %v5188
        %v5190 = vrot.slane %v5183, 4
        %v5191 = vadd.f32 %v5183, %v5190
        %v5192 = vrot.slane %v5191, 2
        %v5193 = vadd.f32 %v5191, %v5192
        %v5194 = vrot.slane %v5193, 1
        %v5195 = vadd.f32 %v5193, %v5194
        %v5196 = vld [vmem:[%s17] sm:$0xf]
        %v5197 = vld [vmem:[%s17 + $0x4] sm:$0xf]
        %v5198 = vld [vmem:[%s17 + $0x8] sm:$0xf]
        %v5199 = vld [vmem:[%s17 + $0xc] sm:$0xf]
        %v5200 = vld [vmem:[%s17 + $0x10] sm:$0xf]
        %v5201 = vld [vmem:[%s17 + $0x14] sm:$0xf]
        %v5202 = vld [vmem:[%s17 + $0x18] sm:$0xf]
        %v5203 = vld [vmem:[%s17 + $0x1c] sm:$0xf]
        %v5204 = vld [vmem:[%s17 + $0x20] sm:$0xf]
        %v5205 = vld [vmem:[%s17 + $0x24] sm:$0xf]
        %v5206 = vld [vmem:[%s17 + $0x28] sm:$0xf]
        %v5207 = vld [vmem:[%s17 + $0x2c] sm:$0xf]
        %v5208 = vld [vmem:[%s17 + $0x30] sm:$0xf]
        %v5209 = vld [vmem:[%s17 + $0x34] sm:$0xf]
        %v5210 = vld [vmem:[%s17 + $0x38] sm:$0xf]
        %v5211 = vld [vmem:[%s17 + $0x3c] sm:$0xf]
        %v5212 = vpack.c.bf16 %v5189, %v5189
        %v5213 = vpack.c.bf16 %v5195, %v5195
        %v5214 = vld [vmem:[%s18] sm:$0x1]
        %v5216 = vlaneseq
        %v5217 = vshrl.u32 %v5216, 7
        %v5218 = vsub.s32 0, %v5217
        %v5219 = vrot.slane %v5214, %v5218
        %v5223 = vunpack.c.l.b16 %v5212
        %v5224 = vunpack.c.l.b16 %v5213
        %v5225 = vsel %vm5112, %v5224, %v5223
        %v5226 = vpack.c.b16 %v5225, %v5225
        %v5244 = vunpack.c.l.b16 %v5196
        %v5245 = vunpack.c.l.b16 %v5197
        %v5246 = vunpack.c.l.b16 %v5198
        %v5247 = vunpack.c.l.b16 %v5199
        %v5248 = vunpack.c.l.b16 %v5200
        %v5249 = vunpack.c.l.b16 %v5201
        %v5250 = vunpack.c.l.b16 %v5202
        %v5251 = vunpack.c.l.b16 %v5203
        %v5252 = vunpack.c.l.b16 %v5204
        %v5253 = vunpack.c.l.b16 %v5205
        %v5254 = vunpack.c.l.b16 %v5206
        %v5255 = vunpack.c.l.b16 %v5207
        %v5256 = vunpack.c.l.b16 %v5208
        %v5257 = vunpack.c.l.b16 %v5209
        %v5258 = vunpack.c.l.b16 %v5210
        %v5259 = vunpack.c.l.b16 %v5211
        %v5260 = vpack.c.b16 %v5245, %v5244
        %v5261 = vpack.c.b16 %v5247, %v5246
        %v5262 = vpack.c.b16 %v5249, %v5248
        %v5263 = vpack.c.b16 %v5251, %v5250
        %v5264 = vpack.c.b16 %v5253, %v5252
        %v5265 = vpack.c.b16 %v5255, %v5254
        %v5266 = vpack.c.b16 %v5257, %v5256
        %v5267 = vpack.c.b16 %v5259, %v5258
        %5276 = vmatprep.subr.bf16.mxu0 0
        %5277 = vmatpush1.bf16.xpose.msra.mxu0 %v5260
        %5278 = vmatprep.subr.bf16.mxu0 0
        %5279 = vmatpush1.bf16.xpose.msra.mxu0 %v5261
        %5280 = vmatprep.subr.bf16.mxu0 0
        %5281 = vmatpush1.bf16.xpose.msra.mxu0 %v5262
        %5282 = vmatprep.subr.bf16.mxu0 0
        %5283 = vmatpush1.bf16.xpose.msra.mxu0 %v5263
        %5284 = vmatprep.subr.bf16.mxu0 0
        %5285 = vmatpush1.bf16.xpose.msra.mxu0 %v5264
        %5286 = vmatprep.subr.bf16.mxu0 0
        %5287 = vmatpush1.bf16.xpose.msra.mxu0 %v5265
        %5288 = vmatprep.subr.bf16.mxu0 0
        %5289 = vmatpush1.bf16.xpose.msra.mxu0 %v5266
        %5290 = vmatprep.subr.bf16.mxu0 0
        %5291 = vmatpush1.bf16.xpose.msra.mxu0 %v5267
        %5292 = vmatprep.subr.bf16.mxu0 0
        %5293 = vmatpush1.bf16.xpose.msra.mxu0 0
        %5294 = vmatprep.subr.bf16.mxu0 0
        %5295 = vmatpush1.bf16.xpose.msra.mxu0 0
        %5296 = vmatprep.subr.bf16.mxu0 0
        %5297 = vmatpush1.bf16.xpose.msra.mxu0 0
        %5298 = vmatprep.subr.bf16.mxu0 0
        %5299 = vmatpush1.bf16.xpose.msra.mxu0 0
        %5300 = vmatprep.subr.bf16.mxu0 0
        %5301 = vmatpush1.bf16.xpose.msra.mxu0 0
        %5302 = vmatprep.subr.bf16.mxu0 0
        %5303 = vmatpush1.bf16.xpose.msra.mxu0 0
        %5304 = vmatprep.subr.bf16.mxu0 0
        %5305 = vmatpush1.bf16.xpose.msra.mxu0 0
        %5306 = vmatprep.subr.bf16.mxu0 0
        %5307 = vmatpush1.bf16.xpose.msra.mxu0 0
        %5308 = vmatprep.mubr.bf16.mxu0 0
        %5309 = vmatmul.mubr.bf16.gmra.mrb[0].mxu0 %v5226
        %v5310 = vpop.f32.mrb[0].mxu0
        %v5311 = vadd.f32 %v5219, %v5310
        %v5312 = vpop.f32.mrb[0].mxu0
        %v5313 = vpop.f32.mrb[0].mxu0
        %v5314 = vpop.f32.mrb[0].mxu0
        %5315 = vdwg.mxu0
        %5316 = vst [vmem:[%s19] sm:$0x3] %v5311
      $region104: #{spectral_temporal_forward.2} parent=95 // pred_fallthru
        _
      // Predicated region
      $region105: #{spectral_temporal_forward.2} parent=95 // pred_check
        %p5317 = pneg %p504
      $region106: #{spectral_temporal_forward.2} parent=95 // pred_check_branch
        %5319 = sbr.rel (%p5317) target = $region108
      $region107: #{spectral_temporal_forward.2} parent=95 // pred_region
        _
      $region108: #{spectral_temporal_forward.2} parent=95 // pred_fallthru
        _
      // Predicated region
      $region109: #{spectral_temporal_forward.2} parent=95 // pred_check
        %p5320 = pneg %p504
      $region110: #{spectral_temporal_forward.2} parent=95 // pred_check_branch
        %5322 = sbr.rel (%p5320) target = $region112
      $region111: #{spectral_temporal_forward.2} parent=95 // pred_region
        _
      $region112: #{spectral_temporal_forward.2} parent=95 // pred_fallthru
        _
    $region96: #{spectral_temporal_forward.2} parent=5 // pred_fallthru
      _
    %p5323 = scmp.le.s32.totalorder 2, %s27
    // Predicated region
    $region113: #{spectral_temporal_forward.2} parent=5 // pred_check
      %p5324 = pneg %p5323
    $region114: #{spectral_temporal_forward.2} parent=5 // pred_check_branch
      %5326 = sbr.rel (%p5324) target = $region116
    $region115: #{spectral_temporal_forward.2} parent=5 // pred_region
      %s5327 = ssub.s32 %s27, 2
    $region116: #{spectral_temporal_forward.2} parent=5 // pred_fallthru
      _
  $region6: #{spectral_temporal_forward.2} parent=0 // loop_footer
    %s31 = sadd.s32 1, %s27
  $region7: #{spectral_temporal_forward.2} parent=0 // loop_footer_branch
    %26 = sbr.rel target = $region3
  $region8: #{spectral_temporal_forward.2} parent=0 // loop_exit
    _

</llo_original>
